<compile_context>
chip_gen: v7x
topology: tpu7x:2x2x1
jax: 0.10.0
libtpu: 0.0.40
codegen_flags: <defaults>
</compile_context>

<pallas_src>
import functools

import jax
import jax.numpy as jnp
from jax.experimental import pallas as pl
from jax.experimental.pallas import tpu as pltpu

CIN = 3              # xyz
CIN_PAD = 4          # [x, y, z, 1]  (homogeneous)
H1 = 32              # logical hidden widths of the (synthetic, small) PointNet
H2 = 32
EMB = 64             # logical PointNet embedding dim (emb_dims)
W_PAD = 128          # every layer width zero-padded to one lane-dense slab
DELTA = 0.01         # finite-difference twist step (module __init__ delta)
XTOL = 1e-7
POINT_MULTIPLE = 16  # point count padded (by replicating a real point)

# Hidden-layer MXU operand dtype for the per-iteration source calls.  The
# one-shot Jacobian call always runs in float32 (see pointnetlk_forward).
MXU_DTYPE = jnp.bfloat16


# ----------------------------------------------------------------------------
# Pallas kernel: fused rigid transform(s) + per-point MLP + running max-pool
# ----------------------------------------------------------------------------
def _pointnet_pool_kernel(x_ref, g_ref, w1_ref, b_ref, w23_ref, o_ref, *,
                          mxu_dtype):
    """x_ref  : (bblk, npt, 4)     f32  homogeneous point tile [x, y, z, 1]
       g_ref  : (bblk, T, 4, 4)    f32  per-cloud right-multiply SE(3) mats
       w1_ref : (4, 128)           f32  first-layer weights (row 3 is zero)
       b_ref  : (3, 128)           f32  the three biases, one per row
       w23_ref: (2, 128, 128)      f32  second / third layer weights
       o_ref  : (bblk, T, 128)     f32  pooled features (accumulates over the
                                        point-axis grid; resident across it)
    """
    p = pl.program_id(1)
    bblk, npt, _ = x_ref.shape
    tcnt = g_ref.shape[1]

    @pl.when(p == 0)
    def _init():
        # ReLU features are non-negative, so zero is a valid max identity
        # (padded lane columns are exactly zero too: zero weights + biases).
        o_ref[...] = jnp.zeros_like(o_ref)

    x = x_ref[...]                                    # (bblk, npt, 4)
    g = g_ref[...]                                    # (bblk, T, 4, 4)
    w1 = w1_ref[...]                                  # (4, 128)
    b = b_ref[...]                                    # (3, 128)
    w2 = w23_ref[0].astype(mxu_dtype)                 # (128, 128)
    w3 = w23_ref[1].astype(mxu_dtype)

    pooled = []
    for t in range(tcnt):                             # static unroll (T = 7 or 1)
        g_t = g[:, t]                                 # (bblk, 4, 4)
        # Fold the rigid transform into layer 1:
        #   relu(((x @ G) @ W1) + b1) == relu((x @ (G @ W1)) + b1)
        # G @ W1 is tiny ((4,4) @ (4,128) per cloud); keep the whole K=4 layer
        # on the VPU via broadcast-accumulate (4 FMAs of (npt,128) vregs per
        # cloud) — it rides in slack under the layer-2/3 MXU pushes.
        gw_t = sum(g_t[:, :, k:k + 1] * w1[k][None, None, :]
                   for k in range(CIN_PAD))           # (bblk, 4, 128)
        h = sum(x[:, :, c:c + 1] * gw_t[:, c][:, None, :]
                for c in range(CIN_PAD))              # (bblk, npt, 128)  f32
        h = jnp.maximum(h + b[0][None, None, :], 0.0)
        h = h.reshape(bblk * npt, W_PAD)              # free view (npt % 16 == 0)

        # Layers 2 / 3 on the MXU: (rows,128) x (128,128), f32 accumulation.
        h = jnp.maximum(
            jnp.dot(h.astype(mxu_dtype), w2,
                    preferred_element_type=jnp.float32) + b[1][None, :], 0.0)
        h = jnp.maximum(
            jnp.dot(h.astype(mxu_dtype), w3,
                    preferred_element_type=jnp.float32) + b[2][None, :], 0.0)

        # Max-pool this point tile (Pooling('max')).
        pooled.append(jnp.max(h.reshape(bblk, npt, W_PAD), axis=1))

    # Fold into the running max held in the resident output block.
    o_ref[...] = jnp.maximum(o_ref[...], jnp.stack(pooled, axis=1))


# ----------------------------------------------------------------------------
# Generation-aware tiling policy
# ----------------------------------------------------------------------------
@functools.lru_cache(maxsize=1)
def _tpu_config():
    """Returns (tensorcores per device, vmem_limit_bytes or None)."""
    kind = ""
    try:
        kind = jax.devices()[0].device_kind.lower()
    except Exception:
        pass
    if "v7" in kind or "7x" in kind:
        # v7x: 2 TensorCores per chip, only 64 MiB VMEM per TC.
        return 2, 48 * 1024 * 1024
    if "v6" in kind or "v5e" in kind or "v5 lite" in kind or "v5lite" in kind:
        # Single TensorCore, 128 MiB physical VMEM: big blocks, high limit.
        return 1, 96 * 1024 * 1024
    # Unknown chip: assume 1 TC, keep the compiler's default scoped limit.
    return 1, None


def _choose_tiling(num_clouds, num_points_pad, num_tc, vmem_limit_bytes):
    """Pick (clouds per step, points per step).  Both are exact divisors of
    the (padded) array sizes, so no remainder padding / HBM copies needed."""
    vmem_budget = vmem_limit_bytes or (16 * 1024 * 1024)
    # MXU-row target per grid step: big on 1-TC chips (amortize ~0.35us/step
    # overhead, long MXU M runs); smaller on v7x so the parallel batch axis
    # is sharded across both TensorCores.  Cap so the (rows,128) f32
    # intermediates stay well inside the scoped VMEM limit.
    target_rows = 512 if (num_tc >= 2 and num_clouds >= 2) else 4096
    target_rows = min(target_rows, max(256, vmem_budget // (32 * 128 * 4)))

    # Point tile: largest multiple of 16 dividing the padded point count.
    npt = num_points_pad
    if npt > target_rows:
        npt, d = POINT_MULTIPLE, POINT_MULTIPLE
        while d <= target_rows:
            if num_points_pad % d == 0:
                npt = d
            d += POINT_MULTIPLE

    # Batch block: largest divisor of num_clouds with bblk * npt <= target.
    bmax = max(1, target_rows // npt)
    bblk = max(d for d in range(1, min(num_clouds, bmax) + 1)
               if num_clouds % d == 0)
    # v7x: keep >= 2 batch blocks so both TensorCores get work.
    if num_tc >= 2 and num_clouds >= 2 and num_clouds // bblk < 2:
        bblk = max(d for d in range(1, num_clouds)
                   if num_clouds % d == 0 and num_clouds // d >= 2)
    return bblk, npt


# ----------------------------------------------------------------------------
# Wrapper: points + rigid transforms -> pooled PointNet features
# ----------------------------------------------------------------------------
def to_homogeneous(points):
    """(F, N, 3) xyz -> (F, N_pad, 4) [x,y,z,1] with N padded to a multiple of
    16 by replicating the last point (exact under max-pooling)."""
    f, n, _ = points.shape
    hom = jnp.concatenate([points, jnp.ones((f, n, 1), points.dtype)], axis=-1)
    n_pad = ((n + POINT_MULTIPLE - 1) // POINT_MULTIPLE) * POINT_MULTIPLE
    if n_pad != n:
        tail = jnp.broadcast_to(hom[:, -1:, :], (f, n_pad - n, CIN_PAD))
        hom = jnp.concatenate([hom, tail], axis=1)
    return hom


def transforms_to_right_mat(T):
    """(..., 4, 4) SE(3) -> (..., 4, 4) G with [x,y,z,1] @ G = [R x + t, 1]."""
    R = T[..., :3, :3]
    t = T[..., :3, 3]
    G = jnp.zeros(T.shape, T.dtype)
    G = G.at[..., :3, :3].set(jnp.swapaxes(R, -1, -2))   # R^T
    G = G.at[..., 3, :3].set(t)                          # t
    G = G.at[..., 3, 3].set(1.0)
    return G


def pointnet_features(points_hom, transforms, packed_params,
                      mxu_dtype=MXU_DTYPE):
    """points_hom: (F, N_pad, 4) homogeneous clouds; transforms: (F, T, 4, 4)
    rigid transforms applied in-kernel.  Returns (F, T, EMB) f32 features."""
    w1p, b_all, w23p = packed_params
    f, n_pad, _ = points_hom.shape
    t = transforms.shape[1]
    G = transforms_to_right_mat(transforms).astype(jnp.float32)

    num_tc, vmem_limit = _tpu_config()
    bblk, npt = _choose_tiling(f, n_pad, num_tc, vmem_limit)
    nblk = f // bblk
    pblk = n_pad // npt

    kernel = functools.partial(_pointnet_pool_kernel, mxu_dtype=mxu_dtype)
    out = pl.pallas_call(
        kernel,
        out_shape=jax.ShapeDtypeStruct((f, t, W_PAD), jnp.float32),
        grid=(nblk, pblk),
        in_specs=[
            pl.BlockSpec((bblk, npt, CIN_PAD), lambda i, p: (i, p, 0)),
            pl.BlockSpec((bblk, t, 4, 4), lambda i, p: (i, 0, 0, 0)),
            pl.BlockSpec((CIN_PAD, W_PAD), lambda i, p: (0, 0)),
            pl.BlockSpec((3, W_PAD), lambda i, p: (0, 0)),
            pl.BlockSpec((2, W_PAD, W_PAD), lambda i, p: (0, 0, 0)),
        ],
        out_specs=pl.BlockSpec((bblk, t, W_PAD), lambda i, p: (i, 0, 0)),
        compiler_params=pltpu.CompilerParams(
            dimension_semantics=("parallel", "arbitrary"),
            vmem_limit_bytes=vmem_limit),
    )(points_hom, G, w1p, b_all, w23p)
    return out[..., :EMB]


# ----------------------------------------------------------------------------
# SE(3) helpers (se3.Exp, se3.transform) — plain JAX glue
# ----------------------------------------------------------------------------
def _skew(w):
    wx, wy, wz = w[..., 0], w[..., 1], w[..., 2]
    z = jnp.zeros_like(wx)
    return jnp.stack([
        jnp.stack([z, -wz, wy], axis=-1),
        jnp.stack([wz, z, -wx], axis=-1),
        jnp.stack([-wy, wx, z], axis=-1)], axis=-2)


def _sinc1(t):
    s = jnp.where(t < 1e-6, 1.0, t)
    return jnp.where(t < 1e-6, 1.0 - t * t / 6.0, jnp.sin(s) / s)


def _sinc2(t):
    s = jnp.where(t < 1e-6, 1.0, t)
    return jnp.where(t < 1e-6, 0.5 - t * t / 24.0, (1.0 - jnp.cos(s)) / (s * s))


def _sinc3(t):
    s = jnp.where(t < 1e-6, 1.0, t)
    return jnp.where(t < 1e-6, 1.0 / 6.0 - t * t / 120.0,
                     (s - jnp.sin(s)) / (s * s * s))


def se3_exp(x):
    """x: (..., 6) twist (w, v) -> (..., 4, 4) SE(3) matrix."""
    w, v = x[..., :3], x[..., 3:]
    t = jnp.linalg.norm(w, axis=-1)
    W = _skew(w)
    S = jnp.matmul(W, W)
    I = jnp.eye(3, dtype=x.dtype)
    s1 = _sinc1(t)[..., None, None]
    s2 = _sinc2(t)[..., None, None]
    s3 = _sinc3(t)[..., None, None]
    R = I + s1 * W + s2 * S
    V = I + s2 * W + s3 * S
    p = jnp.einsum('...ij,...j->...i', V, v)
    top = jnp.concatenate([R, p[..., None]], axis=-1)               # (..., 3, 4)
    bottom = jnp.broadcast_to(
        jnp.array([0.0, 0.0, 0.0, 1.0], dtype=x.dtype),
        top.shape[:-2] + (1, 4))
    return jnp.concatenate([top, bottom], axis=-2)


def se3_transform(g, a):
    """g: (..., 4, 4), a: (..., 3); broadcasting over leading dims."""
    R = g[..., :3, :3]
    t = g[..., :3, 3]
    return jnp.einsum('...ij,...j->...i', R, a) + t


# ----------------------------------------------------------------------------
# data_utils.mean_shift / postprocess_data
# ----------------------------------------------------------------------------
def mean_shift(template, source, p0_zero_mean, p1_zero_mean):
    B = template.shape[0]
    eye = jnp.broadcast_to(jnp.eye(4, dtype=template.dtype), (B, 4, 4))
    template_mean = eye
    source_mean = eye
    if p0_zero_mean:
        p0_m = jnp.mean(template, axis=1)                    # (B, 3)
        template_mean = eye.at[:, 0:3, 3].set(p0_m)
        template = template - p0_m[:, None, :]
    if p1_zero_mean:
        p1_m = jnp.mean(source, axis=1)
        source_mean = eye.at[:, 0:3, 3].set(-p1_m)
        source = source - p1_m[:, None, :]
    return template, source, template_mean, source_mean


def postprocess_data(result, template_mean, source_mean,
                     p0_zero_mean, p1_zero_mean):
    est_g = result['est_T']
    if p0_zero_mean:
        est_g = jnp.matmul(template_mean, est_g)
    if p1_zero_mean:
        est_g = jnp.matmul(est_g, source_mean)
    result['est_T'] = est_g

    est_gs = result['est_T_series']                          # (M, B, 4, 4)
    if p0_zero_mean:
        est_gs = jnp.matmul(template_mean[None], est_gs)
    if p1_zero_mean:
        est_gs = jnp.matmul(est_gs, source_mean[None])
    result['est_T_series'] = est_gs
    return result


# ----------------------------------------------------------------------------
# PointNetLK forward (iclk)
# ----------------------------------------------------------------------------
def compute_inverse_jacobian(J):
    # TODO(synk): the torch version catches RuntimeError from InvMatrix and
    # falls back to returning {}; here jnp.linalg.inv never raises, so instead
    # a small Tikhonov damping keeps J^T J invertible under dead-ReLU features.
    Jt = jnp.swapaxes(J, 1, 2)                                # (B, 6, EMB)
    H = jnp.matmul(Jt, J)                                     # (B, 6, 6)
    lam = 1e-7 * (jnp.trace(H, axis1=-2, axis2=-1) / 6.0)[..., None, None] + 1e-12
    H = H + lam * jnp.eye(6, dtype=H.dtype)
    Binv = jnp.linalg.inv(H)
    return jnp.matmul(Binv, Jt)                               # (B, 6, EMB)


@functools.partial(jax.jit,
                   static_argnames=("maxiter", "p0_zero_mean", "p1_zero_mean"))
def pointnetlk_forward(template, source, packed_params, maxiter=10,
                       p0_zero_mean=True, p1_zero_mean=True, xtol=XTOL):
    template, source, template_mean, source_mean = mean_shift(
        template, source, p0_zero_mean, p1_zero_mean)

    B, N, _ = template.shape
    eye4 = jnp.eye(4, dtype=template.dtype)
    est_T0 = jnp.broadcast_to(eye4, (B, 4, 4))

    # Homogeneous (channel- and point-padded) clouds are built ONCE; every
    # rigid transform (Jacobian perturbations and per-iteration est_T) is
    # applied inside the Pallas kernel, so the Gauss-Newton loop has zero
    # wrapper-side HBM passes over the point clouds.
    t_hom = to_homogeneous(template)
    s_hom = to_homogeneous(source)

    # TODO(synk): handle_batchNorm toggles feature_model.train/eval; the
    # synthetic PointNet here has no BatchNorm, so it is a no-op.

    # Template features + the 6 finite-difference perturbations (approx_Jic)
    # in a SINGLE pallas_call: 7 transforms per cloud, slot 0 = identity.
    # The template cloud is read from HBM exactly once (no 7x materialized
    # broadcast).  Hidden layers run in f32 here: it runs once per forward and
    # the dt=0.01 finite-difference signal is too small for bf16 rounding.
    dt = jnp.full((B, 6), DELTA, dtype=jnp.float32)
    d = dt[:, :, None] * jnp.eye(6, dtype=dt.dtype)           # (B, 6, 6)
    D = se3_exp(-d)                                           # (B, 6, 4, 4)
    g_all = jnp.concatenate(
        [jnp.broadcast_to(eye4, (B, 1, 4, 4)), D], axis=1)    # (B, 7, 4, 4)
    f_all = pointnet_features(t_hom, g_all, packed_params,
                              mxu_dtype=jnp.float32)          # (B, 7, EMB)
    template_features = f_all[:, 0]                           # (B, EMB)
    f = jnp.swapaxes(f_all[:, 1:], 1, 2)                      # (B, EMB, 6)
    df = template_features[..., None] - f                     # (B, EMB, 6)
    J = df / dt[:, None, :]                                   # (B, EMB, 6)
    pinv = compute_inverse_jacobian(J)                        # (B, 6, EMB)

    def gn_step(carry, _):
        est_T, done, itr_count = carry
        # est_T is applied to the source inside the kernel (fused transform);
        # the per-iteration hidden layers use bf16 MXU operands / f32 acc.
        source_features = pointnet_features(
            s_hom, est_T[:, None], packed_params, mxu_dtype=MXU_DTYPE)[:, 0]
        r = source_features - template_features               # (B, EMB)
        pose = -jnp.einsum('bik,bk->bi', pinv, r)             # (B, 6)
        check = jnp.max(jnp.linalg.norm(pose, axis=1))
        itr_count = itr_count + jnp.where(done, 0, 1).astype(jnp.int32)
        # TODO(synk): torch uses a data-dependent Python `break` on xtol;
        # emulated by freezing est_T once converged (the series then repeats
        # the converged transform, matching the torch tail-fill).
        done = jnp.logical_or(done, check < xtol)
        est_T = jnp.where(done, est_T, jnp.matmul(se3_exp(pose), est_T))
        return (est_T, done, itr_count), (est_T, r)

    carry0 = (est_T0, jnp.array(False), jnp.array(0, jnp.int32))
    (est_T, _, itr_count), (est_T_seq, r_seq) = jax.lax.scan(
        gn_step, carry0, xs=None, length=maxiter)
    r = r_seq[-1]
    est_T_series = jnp.concatenate([est_T0[None], est_T_seq], axis=0)

    result = {
        'est_R': est_T[:, 0:3, 0:3],
        'est_t': est_T[:, 0:3, 3],
        'est_T': est_T,
        'r': r,
        'transformed_source': se3_transform(est_T[:, None], source),
        'itr': itr_count,
        'est_T_series': est_T_series,
    }
    result = postprocess_data(result, template_mean, source_mean,
                              p0_zero_mean, p1_zero_mean)
    return result


# ----------------------------------------------------------------------------
# Deterministic parameter init (synthetic PointNet weights) + packing
# ----------------------------------------------------------------------------
def init_params(key):
    ks = jax.random.split(key, 6)
    w1 = 0.2 * jax.random.normal(ks[0], (CIN, H1), jnp.float32)
    b1 = 0.05 * jax.random.normal(ks[1], (H1,), jnp.float32)
    w2 = 0.2 * jax.random.normal(ks[2], (H1, H2), jnp.float32)
    b2 = 0.05 * jax.random.normal(ks[3], (H2,), jnp.float32)
    w3 = 0.2 * jax.random.normal(ks[4], (H2, EMB), jnp.float32)
    b3 = 0.05 * jax.random.normal(ks[5], (EMB,), jnp.float32)
    return (w1, b1, w2, b2, w3, b3)


def pack_params(params):
    """Zero-pad all widths to 128 lanes and pack biases / hidden weights into
    single operands (kept in f32; the MXU dtype is chosen per call in-kernel).
    Padded rows/columns are zero, so the math is identical to the logical
    (3 -> 32 -> 32 -> 64) network."""
    w1, b1, w2, b2, w3, b3 = params
    w1p = jnp.zeros((CIN_PAD, W_PAD), jnp.float32).at[:CIN, :H1].set(w1)
    b_all = jnp.zeros((3, W_PAD), jnp.float32)
    b_all = b_all.at[0, :H1].set(b1).at[1, :H2].set(b2).at[2, :EMB].set(b3)
    w23p = jnp.zeros((2, W_PAD, W_PAD), jnp.float32)
    w23p = w23p.at[0, :H1, :H2].set(w2).at[1, :H2, :EMB].set(w3)
    return (w1p, b_all, w23p)


if __name__ == "__main__":
    key = jax.random.PRNGKey(0)
    k_par, k_t, k_s = jax.random.split(key, 3)

    B, N = 2, 64
    packed = pack_params(init_params(k_par))
    template = jax.random.normal(k_t, (B, N, 3), jnp.float32)
    # source = slightly perturbed / shifted copy of template
    source = template + 0.05 * jax.random.normal(k_s, (B, N, 3), jnp.float32) + 0.1

    result = pointnetlk_forward(template, source, packed, maxiter=10)
    jax.block_until_ready(result['est_T'])
    jax.block_until_ready(result['est_T_series'])
    jax.block_until_ready(result['transformed_source'])
    print("KERNEL_OK")
</pallas_src>

<mosaic_0001>
module attributes {stable_mosaic.version = 11 : i64} {
  func.func @_pointnet_pool_kernel(%arg0: i32, %arg1: i32, %arg2: memref<2x64x4xf32, #tpu.memory_space<vmem>>, %arg3: memref<2x7x4x4xf32, #tpu.memory_space<vmem>>, %arg4: memref<4x128xf32, #tpu.memory_space<vmem>>, %arg5: memref<3x128xf32, #tpu.memory_space<vmem>>, %arg6: memref<2x128x128xf32, #tpu.memory_space<vmem>>, %arg7: memref<2x7x128xf32, #tpu.memory_space<vmem>>) attributes {dimension_semantics = [#tpu.dimension_semantics<parallel>, #tpu.dimension_semantics<arbitrary>], iteration_bounds = array<i64: 1, 1>, scalar_prefetch = 0 : i64, scratch_operands = 0 : i64, tpu.core_type = #tpu.core_type<tc>, window_params = [{transform_indices = @transform_0, window_bounds = array<i64: 2, 64, 4>}, {transform_indices = @transform_1, window_bounds = array<i64: 2, 7, 4, 4>}, {pipeline_mode = #tpu.pipeline_mode<synchronous>, transform_indices = @transform_2, window_bounds = array<i64: 4, 128>}, {pipeline_mode = #tpu.pipeline_mode<synchronous>, transform_indices = @transform_3, window_bounds = array<i64: 3, 128>}, {pipeline_mode = #tpu.pipeline_mode<synchronous>, transform_indices = @transform_4, window_bounds = array<i64: 2, 128, 128>}, {transform_indices = @transform_5, window_bounds = array<i64: 2, 7, 128>}]} {
    %c0_i32 = arith.constant 0 : i32
    %0 = arith.cmpi eq, %arg1, %c0_i32 : i32
    %1 = arith.extui %0 : i1 to i32
    %c0_i32_0 = arith.constant 0 : i32
    %2 = arith.cmpi ne, %1, %c0_i32_0 : i32
    scf.if %2 {
      %cst_77 = arith.constant 0.000000e+00 : f32
      %680 = vector.broadcast %cst_77 : f32 to vector<2x7x128xf32>
      %c0_78 = arith.constant 0 : index
      %c0_79 = arith.constant 0 : index
      %c0_80 = arith.constant 0 : index
      %681 = vector.load %arg7[%c0_78, %c0_79, %c0_80] : memref<2x7x128xf32, #tpu.memory_space<vmem>>, vector<2x7x128xf32>
      tpu.vector_store %arg7[%c0_78, %c0_79, %c0_80], %680 {strides = array<i32>} : memref<2x7x128xf32, #tpu.memory_space<vmem>>, vector<2x7x128xf32>,
    } else {
    }
    %c0 = arith.constant 0 : index
    %c0_1 = arith.constant 0 : index
    %c0_2 = arith.constant 0 : index
    %3 = vector.load %arg2[%c0, %c0_1, %c0_2] : memref<2x64x4xf32, #tpu.memory_space<vmem>>, vector<2x64x4xf32>
    %c0_3 = arith.constant 0 : index
    %c0_4 = arith.constant 0 : index
    %c0_5 = arith.constant 0 : index
    %c0_6 = arith.constant 0 : index
    %4 = vector.load %arg3[%c0_3, %c0_4, %c0_5, %c0_6] : memref<2x7x4x4xf32, #tpu.memory_space<vmem>>, vector<2x7x4x4xf32>
    %c0_7 = arith.constant 0 : index
    %c0_8 = arith.constant 0 : index
    %5 = vector.load %arg4[%c0_7, %c0_8] : memref<4x128xf32, #tpu.memory_space<vmem>>, vector<4x128xf32>
    %c0_9 = arith.constant 0 : index
    %c0_10 = arith.constant 0 : index
    %6 = vector.load %arg5[%c0_9, %c0_10] : memref<3x128xf32, #tpu.memory_space<vmem>>, vector<3x128xf32>
    %c0_11 = arith.constant 0 : index
    %c0_12 = arith.constant 0 : index
    %c0_13 = arith.constant 0 : index
    %7 = vector.load %arg6[%c0_11, %c0_12, %c0_13] : memref<2x128x128xf32, #tpu.memory_space<vmem>>, vector<1x128x128xf32>
    %8 = vector.shape_cast %7 : vector<1x128x128xf32> to vector<128x128xf32>
    %c1 = arith.constant 1 : index
    %c0_14 = arith.constant 0 : index
    %c0_15 = arith.constant 0 : index
    %9 = vector.load %arg6[%c1, %c0_14, %c0_15] : memref<2x128x128xf32, #tpu.memory_space<vmem>>, vector<1x128x128xf32>
    %10 = vector.shape_cast %9 : vector<1x128x128xf32> to vector<128x128xf32>
    %11 = vector.extract_strided_slice %4 {offsets = [0, 0, 0, 0], sizes = [2, 1, 4, 4], strides = [1, 1, 1, 1]} : vector<2x7x4x4xf32> to vector<2x1x4x4xf32>
    %12 = vector.shape_cast %11 : vector<2x1x4x4xf32> to vector<2x4x4xf32>
    %13 = vector.extract_strided_slice %12 {offsets = [0, 0, 0], sizes = [2, 4, 1], strides = [1, 1, 1]} : vector<2x4x4xf32> to vector<2x4x1xf32>
    %14 = vector.extract_strided_slice %5 {offsets = [0, 0], sizes = [1, 128], strides = [1, 1]} : vector<4x128xf32> to vector<1x128xf32>
    %15 = vector.shape_cast %14 : vector<1x128xf32> to vector<128xf32>
    %16 = vector.shape_cast %15 : vector<128xf32> to vector<1x1x128xf32>
    %17 = vector.broadcast %13 : vector<2x4x1xf32> to vector<2x4x128xf32>
    %18 = vector.broadcast %16 : vector<1x1x128xf32> to vector<2x4x128xf32>
    %19 = arith.mulf %17, %18 : vector<2x4x128xf32>
    %cst = arith.constant 0.000000e+00 : f32
    %20 = vector.broadcast %cst : f32 to vector<2x4x128xf32>
    %21 = arith.addf %20, %19 : vector<2x4x128xf32>
    %22 = vector.extract_strided_slice %12 {offsets = [0, 0, 1], sizes = [2, 4, 1], strides = [1, 1, 1]} : vector<2x4x4xf32> to vector<2x4x1xf32>
    %23 = vector.extract_strided_slice %5 {offsets = [1, 0], sizes = [1, 128], strides = [1, 1]} : vector<4x128xf32> to vector<1x128xf32>
    %24 = vector.shape_cast %23 : vector<1x128xf32> to vector<128xf32>
    %25 = vector.shape_cast %24 : vector<128xf32> to vector<1x1x128xf32>
    %26 = vector.broadcast %22 : vector<2x4x1xf32> to vector<2x4x128xf32>
    %27 = vector.broadcast %25 : vector<1x1x128xf32> to vector<2x4x128xf32>
    %28 = arith.mulf %26, %27 : vector<2x4x128xf32>
    %29 = arith.addf %21, %28 : vector<2x4x128xf32>
    %30 = vector.extract_strided_slice %12 {offsets = [0, 0, 2], sizes = [2, 4, 1], strides = [1, 1, 1]} : vector<2x4x4xf32> to vector<2x4x1xf32>
    %31 = vector.extract_strided_slice %5 {offsets = [2, 0], sizes = [1, 128], strides = [1, 1]} : vector<4x128xf32> to vector<1x128xf32>
    %32 = vector.shape_cast %31 : vector<1x128xf32> to vector<128xf32>
    %33 = vector.shape_cast %32 : vector<128xf32> to vector<1x1x128xf32>
    %34 = vector.broadcast %30 : vector<2x4x1xf32> to vector<2x4x128xf32>
    %35 = vector.broadcast %33 : vector<1x1x128xf32> to vector<2x4x128xf32>
    %36 = arith.mulf %34, %35 : vector<2x4x128xf32>
    %37 = arith.addf %29, %36 : vector<2x4x128xf32>
    %38 = vector.extract_strided_slice %12 {offsets = [0, 0, 3], sizes = [2, 4, 1], strides = [1, 1, 1]} : vector<2x4x4xf32> to vector<2x4x1xf32>
    %39 = vector.extract_strided_slice %5 {offsets = [3, 0], sizes = [1, 128], strides = [1, 1]} : vector<4x128xf32> to vector<1x128xf32>
    %40 = vector.shape_cast %39 : vector<1x128xf32> to vector<128xf32>
    %41 = vector.shape_cast %40 : vector<128xf32> to vector<1x1x128xf32>
    %42 = vector.broadcast %38 : vector<2x4x1xf32> to vector<2x4x128xf32>
    %43 = vector.broadcast %41 : vector<1x1x128xf32> to vector<2x4x128xf32>
    %44 = arith.mulf %42, %43 : vector<2x4x128xf32>
    %45 = arith.addf %37, %44 : vector<2x4x128xf32>
    %46 = vector.extract_strided_slice %3 {offsets = [0, 0, 0], sizes = [2, 64, 1], strides = [1, 1, 1]} : vector<2x64x4xf32> to vector<2x64x1xf32>
    %47 = vector.extract_strided_slice %45 {offsets = [0, 0, 0], sizes = [2, 1, 128], strides = [1, 1, 1]} : vector<2x4x128xf32> to vector<2x1x128xf32>
    %48 = vector.shape_cast %47 : vector<2x1x128xf32> to vector<2x128xf32>
    %49 = vector.shape_cast %48 : vector<2x128xf32> to vector<2x1x128xf32>
    %50 = vector.broadcast %46 : vector<2x64x1xf32> to vector<2x64x128xf32>
    %51 = vector.broadcast %49 : vector<2x1x128xf32> to vector<2x64x128xf32>
    %52 = arith.mulf %50, %51 : vector<2x64x128xf32>
    %cst_16 = arith.constant 0.000000e+00 : f32
    %53 = vector.broadcast %cst_16 : f32 to vector<2x64x128xf32>
    %54 = arith.addf %53, %52 : vector<2x64x128xf32>
    %55 = vector.extract_strided_slice %3 {offsets = [0, 0, 1], sizes = [2, 64, 1], strides = [1, 1, 1]} : vector<2x64x4xf32> to vector<2x64x1xf32>
    %56 = vector.extract_strided_slice %45 {offsets = [0, 1, 0], sizes = [2, 1, 128], strides = [1, 1, 1]} : vector<2x4x128xf32> to vector<2x1x128xf32>
    %57 = vector.shape_cast %56 : vector<2x1x128xf32> to vector<2x128xf32>
    %58 = vector.shape_cast %57 : vector<2x128xf32> to vector<2x1x128xf32>
    %59 = vector.broadcast %55 : vector<2x64x1xf32> to vector<2x64x128xf32>
    %60 = vector.broadcast %58 : vector<2x1x128xf32> to vector<2x64x128xf32>
    %61 = arith.mulf %59, %60 : vector<2x64x128xf32>
    %62 = arith.addf %54, %61 : vector<2x64x128xf32>
    %63 = vector.extract_strided_slice %3 {offsets = [0, 0, 2], sizes = [2, 64, 1], strides = [1, 1, 1]} : vector<2x64x4xf32> to vector<2x64x1xf32>
    %64 = vector.extract_strided_slice %45 {offsets = [0, 2, 0], sizes = [2, 1, 128], strides = [1, 1, 1]} : vector<2x4x128xf32> to vector<2x1x128xf32>
    %65 = vector.shape_cast %64 : vector<2x1x128xf32> to vector<2x128xf32>
    %66 = vector.shape_cast %65 : vector<2x128xf32> to vector<2x1x128xf32>
    %67 = vector.broadcast %63 : vector<2x64x1xf32> to vector<2x64x128xf32>
    %68 = vector.broadcast %66 : vector<2x1x128xf32> to vector<2x64x128xf32>
    %69 = arith.mulf %67, %68 : vector<2x64x128xf32>
    %70 = arith.addf %62, %69 : vector<2x64x128xf32>
    %71 = vector.extract_strided_slice %3 {offsets = [0, 0, 3], sizes = [2, 64, 1], strides = [1, 1, 1]} : vector<2x64x4xf32> to vector<2x64x1xf32>
    %72 = vector.extract_strided_slice %45 {offsets = [0, 3, 0], sizes = [2, 1, 128], strides = [1, 1, 1]} : vector<2x4x128xf32> to vector<2x1x128xf32>
    %73 = vector.shape_cast %72 : vector<2x1x128xf32> to vector<2x128xf32>
    %74 = vector.shape_cast %73 : vector<2x128xf32> to vector<2x1x128xf32>
    %75 = vector.broadcast %71 : vector<2x64x1xf32> to vector<2x64x128xf32>
    %76 = vector.broadcast %74 : vector<2x1x128xf32> to vector<2x64x128xf32>
    %77 = arith.mulf %75, %76 : vector<2x64x128xf32>
    %78 = arith.addf %70, %77 : vector<2x64x128xf32>
    %79 = vector.extract_strided_slice %6 {offsets = [0, 0], sizes = [1, 128], strides = [1, 1]} : vector<3x128xf32> to vector<1x128xf32>
    %80 = vector.shape_cast %79 : vector<1x128xf32> to vector<128xf32>
    %81 = vector.shape_cast %80 : vector<128xf32> to vector<1x1x128xf32>
    %82 = vector.broadcast %81 : vector<1x1x128xf32> to vector<2x64x128xf32>
    %83 = arith.addf %78, %82 : vector<2x64x128xf32>
    %cst_17 = arith.constant 0.000000e+00 : f32
    %84 = vector.broadcast %cst_17 : f32 to vector<2x64x128xf32>
    %85 = arith.maximumf %83, %84 : vector<2x64x128xf32>
    %86 = vector.shape_cast %85 : vector<2x64x128xf32> to vector<128x128xf32>
    %cst_18 = arith.constant dense<0.000000e+00> : vector<128x128xf32>
    %87 = tpu.matmul %86, %8, %cst_18 {dimension_numbers = #tpu.dot_dimension_numbers<[1], [0], [0], [1], [0, 0, 1, 1], [], []>} : vector<128x128xf32>, vector<128x128xf32>, vector<128x128xf32> -> vector<128x128xf32>
    %88 = vector.extract_strided_slice %6 {offsets = [1, 0], sizes = [1, 128], strides = [1, 1]} : vector<3x128xf32> to vector<1x128xf32>
    %89 = vector.shape_cast %88 : vector<1x128xf32> to vector<128xf32>
    %90 = vector.shape_cast %89 : vector<128xf32> to vector<1x128xf32>
    %91 = vector.broadcast %90 : vector<1x128xf32> to vector<128x128xf32>
    %92 = arith.addf %87, %91 : vector<128x128xf32>
    %cst_19 = arith.constant 0.000000e+00 : f32
    %93 = vector.broadcast %cst_19 : f32 to vector<128x128xf32>
    %94 = arith.maximumf %92, %93 : vector<128x128xf32>
    %cst_20 = arith.constant dense<0.000000e+00> : vector<128x128xf32>
    %95 = tpu.matmul %94, %10, %cst_20 {dimension_numbers = #tpu.dot_dimension_numbers<[1], [0], [0], [1], [0, 0, 1, 1], [], []>} : vector<128x128xf32>, vector<128x128xf32>, vector<128x128xf32> -> vector<128x128xf32>
    %96 = vector.extract_strided_slice %6 {offsets = [2, 0], sizes = [1, 128], strides = [1, 1]} : vector<3x128xf32> to vector<1x128xf32>
    %97 = vector.shape_cast %96 : vector<1x128xf32> to vector<128xf32>
    %98 = vector.shape_cast %97 : vector<128xf32> to vector<1x128xf32>
    %99 = vector.broadcast %98 : vector<1x128xf32> to vector<128x128xf32>
    %100 = arith.addf %95, %99 : vector<128x128xf32>
    %cst_21 = arith.constant 0.000000e+00 : f32
    %101 = vector.broadcast %cst_21 : f32 to vector<128x128xf32>
    %102 = arith.maximumf %100, %101 : vector<128x128xf32>
    %103 = vector.shape_cast %102 : vector<128x128xf32> to vector<2x64x128xf32>
    %cst_22 = arith.constant dense<0xFF800000> : vector<2x128xf32>
    %104 = vector.multi_reduction <maximumf>, %103, %cst_22 [1] : vector<2x64x128xf32> to vector<2x128xf32>
    %105 = vector.extract_strided_slice %4 {offsets = [0, 1, 0, 0], sizes = [2, 1, 4, 4], strides = [1, 1, 1, 1]} : vector<2x7x4x4xf32> to vector<2x1x4x4xf32>
    %106 = vector.shape_cast %105 : vector<2x1x4x4xf32> to vector<2x4x4xf32>
    %107 = vector.extract_strided_slice %106 {offsets = [0, 0, 0], sizes = [2, 4, 1], strides = [1, 1, 1]} : vector<2x4x4xf32> to vector<2x4x1xf32>
    %108 = vector.extract_strided_slice %5 {offsets = [0, 0], sizes = [1, 128], strides = [1, 1]} : vector<4x128xf32> to vector<1x128xf32>
    %109 = vector.shape_cast %108 : vector<1x128xf32> to vector<128xf32>
    %110 = vector.shape_cast %109 : vector<128xf32> to vector<1x1x128xf32>
    %111 = vector.broadcast %107 : vector<2x4x1xf32> to vector<2x4x128xf32>
    %112 = vector.broadcast %110 : vector<1x1x128xf32> to vector<2x4x128xf32>
    %113 = arith.mulf %111, %112 : vector<2x4x128xf32>
    %cst_23 = arith.constant 0.000000e+00 : f32
    %114 = vector.broadcast %cst_23 : f32 to vector<2x4x128xf32>
    %115 = arith.addf %114, %113 : vector<2x4x128xf32>
    %116 = vector.extract_strided_slice %106 {offsets = [0, 0, 1], sizes = [2, 4, 1], strides = [1, 1, 1]} : vector<2x4x4xf32> to vector<2x4x1xf32>
    %117 = vector.extract_strided_slice %5 {offsets = [1, 0], sizes = [1, 128], strides = [1, 1]} : vector<4x128xf32> to vector<1x128xf32>
    %118 = vector.shape_cast %117 : vector<1x128xf32> to vector<128xf32>
    %119 = vector.shape_cast %118 : vector<128xf32> to vector<1x1x128xf32>
    %120 = vector.broadcast %116 : vector<2x4x1xf32> to vector<2x4x128xf32>
    %121 = vector.broadcast %119 : vector<1x1x128xf32> to vector<2x4x128xf32>
    %122 = arith.mulf %120, %121 : vector<2x4x128xf32>
    %123 = arith.addf %115, %122 : vector<2x4x128xf32>
    %124 = vector.extract_strided_slice %106 {offsets = [0, 0, 2], sizes = [2, 4, 1], strides = [1, 1, 1]} : vector<2x4x4xf32> to vector<2x4x1xf32>
    %125 = vector.extract_strided_slice %5 {offsets = [2, 0], sizes = [1, 128], strides = [1, 1]} : vector<4x128xf32> to vector<1x128xf32>
    %126 = vector.shape_cast %125 : vector<1x128xf32> to vector<128xf32>
    %127 = vector.shape_cast %126 : vector<128xf32> to vector<1x1x128xf32>
    %128 = vector.broadcast %124 : vector<2x4x1xf32> to vector<2x4x128xf32>
    %129 = vector.broadcast %127 : vector<1x1x128xf32> to vector<2x4x128xf32>
    %130 = arith.mulf %128, %129 : vector<2x4x128xf32>
    %131 = arith.addf %123, %130 : vector<2x4x128xf32>
    %132 = vector.extract_strided_slice %106 {offsets = [0, 0, 3], sizes = [2, 4, 1], strides = [1, 1, 1]} : vector<2x4x4xf32> to vector<2x4x1xf32>
    %133 = vector.extract_strided_slice %5 {offsets = [3, 0], sizes = [1, 128], strides = [1, 1]} : vector<4x128xf32> to vector<1x128xf32>
    %134 = vector.shape_cast %133 : vector<1x128xf32> to vector<128xf32>
    %135 = vector.shape_cast %134 : vector<128xf32> to vector<1x1x128xf32>
    %136 = vector.broadcast %132 : vector<2x4x1xf32> to vector<2x4x128xf32>
    %137 = vector.broadcast %135 : vector<1x1x128xf32> to vector<2x4x128xf32>
    %138 = arith.mulf %136, %137 : vector<2x4x128xf32>
    %139 = arith.addf %131, %138 : vector<2x4x128xf32>
    %140 = vector.extract_strided_slice %3 {offsets = [0, 0, 0], sizes = [2, 64, 1], strides = [1, 1, 1]} : vector<2x64x4xf32> to vector<2x64x1xf32>
    %141 = vector.extract_strided_slice %139 {offsets = [0, 0, 0], sizes = [2, 1, 128], strides = [1, 1, 1]} : vector<2x4x128xf32> to vector<2x1x128xf32>
    %142 = vector.shape_cast %141 : vector<2x1x128xf32> to vector<2x128xf32>
    %143 = vector.shape_cast %142 : vector<2x128xf32> to vector<2x1x128xf32>
    %144 = vector.broadcast %140 : vector<2x64x1xf32> to vector<2x64x128xf32>
    %145 = vector.broadcast %143 : vector<2x1x128xf32> to vector<2x64x128xf32>
    %146 = arith.mulf %144, %145 : vector<2x64x128xf32>
    %cst_24 = arith.constant 0.000000e+00 : f32
    %147 = vector.broadcast %cst_24 : f32 to vector<2x64x128xf32>
    %148 = arith.addf %147, %146 : vector<2x64x128xf32>
    %149 = vector.extract_strided_slice %3 {offsets = [0, 0, 1], sizes = [2, 64, 1], strides = [1, 1, 1]} : vector<2x64x4xf32> to vector<2x64x1xf32>
    %150 = vector.extract_strided_slice %139 {offsets = [0, 1, 0], sizes = [2, 1, 128], strides = [1, 1, 1]} : vector<2x4x128xf32> to vector<2x1x128xf32>
    %151 = vector.shape_cast %150 : vector<2x1x128xf32> to vector<2x128xf32>
    %152 = vector.shape_cast %151 : vector<2x128xf32> to vector<2x1x128xf32>
    %153 = vector.broadcast %149 : vector<2x64x1xf32> to vector<2x64x128xf32>
    %154 = vector.broadcast %152 : vector<2x1x128xf32> to vector<2x64x128xf32>
    %155 = arith.mulf %153, %154 : vector<2x64x128xf32>
    %156 = arith.addf %148, %155 : vector<2x64x128xf32>
    %157 = vector.extract_strided_slice %3 {offsets = [0, 0, 2], sizes = [2, 64, 1], strides = [1, 1, 1]} : vector<2x64x4xf32> to vector<2x64x1xf32>
    %158 = vector.extract_strided_slice %139 {offsets = [0, 2, 0], sizes = [2, 1, 128], strides = [1, 1, 1]} : vector<2x4x128xf32> to vector<2x1x128xf32>
    %159 = vector.shape_cast %158 : vector<2x1x128xf32> to vector<2x128xf32>
    %160 = vector.shape_cast %159 : vector<2x128xf32> to vector<2x1x128xf32>
    %161 = vector.broadcast %157 : vector<2x64x1xf32> to vector<2x64x128xf32>
    %162 = vector.broadcast %160 : vector<2x1x128xf32> to vector<2x64x128xf32>
    %163 = arith.mulf %161, %162 : vector<2x64x128xf32>
    %164 = arith.addf %156, %163 : vector<2x64x128xf32>
    %165 = vector.extract_strided_slice %3 {offsets = [0, 0, 3], sizes = [2, 64, 1], strides = [1, 1, 1]} : vector<2x64x4xf32> to vector<2x64x1xf32>
    %166 = vector.extract_strided_slice %139 {offsets = [0, 3, 0], sizes = [2, 1, 128], strides = [1, 1, 1]} : vector<2x4x128xf32> to vector<2x1x128xf32>
    %167 = vector.shape_cast %166 : vector<2x1x128xf32> to vector<2x128xf32>
    %168 = vector.shape_cast %167 : vector<2x128xf32> to vector<2x1x128xf32>
    %169 = vector.broadcast %165 : vector<2x64x1xf32> to vector<2x64x128xf32>
    %170 = vector.broadcast %168 : vector<2x1x128xf32> to vector<2x64x128xf32>
    %171 = arith.mulf %169, %170 : vector<2x64x128xf32>
    %172 = arith.addf %164, %171 : vector<2x64x128xf32>
    %173 = vector.extract_strided_slice %6 {offsets = [0, 0], sizes = [1, 128], strides = [1, 1]} : vector<3x128xf32> to vector<1x128xf32>
    %174 = vector.shape_cast %173 : vector<1x128xf32> to vector<128xf32>
    %175 = vector.shape_cast %174 : vector<128xf32> to vector<1x1x128xf32>
    %176 = vector.broadcast %175 : vector<1x1x128xf32> to vector<2x64x128xf32>
    %177 = arith.addf %172, %176 : vector<2x64x128xf32>
    %cst_25 = arith.constant 0.000000e+00 : f32
    %178 = vector.broadcast %cst_25 : f32 to vector<2x64x128xf32>
    %179 = arith.maximumf %177, %178 : vector<2x64x128xf32>
    %180 = vector.shape_cast %179 : vector<2x64x128xf32> to vector<128x128xf32>
    %cst_26 = arith.constant dense<0.000000e+00> : vector<128x128xf32>
    %181 = tpu.matmul %180, %8, %cst_26 {dimension_numbers = #tpu.dot_dimension_numbers<[1], [0], [0], [1], [0, 0, 1, 1], [], []>} : vector<128x128xf32>, vector<128x128xf32>, vector<128x128xf32> -> vector<128x128xf32>
    %182 = vector.extract_strided_slice %6 {offsets = [1, 0], sizes = [1, 128], strides = [1, 1]} : vector<3x128xf32> to vector<1x128xf32>
    %183 = vector.shape_cast %182 : vector<1x128xf32> to vector<128xf32>
    %184 = vector.shape_cast %183 : vector<128xf32> to vector<1x128xf32>
    %185 = vector.broadcast %184 : vector<1x128xf32> to vector<128x128xf32>
    %186 = arith.addf %181, %185 : vector<128x128xf32>
    %cst_27 = arith.constant 0.000000e+00 : f32
    %187 = vector.broadcast %cst_27 : f32 to vector<128x128xf32>
    %188 = arith.maximumf %186, %187 : vector<128x128xf32>
    %cst_28 = arith.constant dense<0.000000e+00> : vector<128x128xf32>
    %189 = tpu.matmul %188, %10, %cst_28 {dimension_numbers = #tpu.dot_dimension_numbers<[1], [0], [0], [1], [0, 0, 1, 1], [], []>} : vector<128x128xf32>, vector<128x128xf32>, vector<128x128xf32> -> vector<128x128xf32>
    %190 = vector.extract_strided_slice %6 {offsets = [2, 0], sizes = [1, 128], strides = [1, 1]} : vector<3x128xf32> to vector<1x128xf32>
    %191 = vector.shape_cast %190 : vector<1x128xf32> to vector<128xf32>
    %192 = vector.shape_cast %191 : vector<128xf32> to vector<1x128xf32>
    %193 = vector.broadcast %192 : vector<1x128xf32> to vector<128x128xf32>
    %194 = arith.addf %189, %193 : vector<128x128xf32>
    %cst_29 = arith.constant 0.000000e+00 : f32
    %195 = vector.broadcast %cst_29 : f32 to vector<128x128xf32>
    %196 = arith.maximumf %194, %195 : vector<128x128xf32>
    %197 = vector.shape_cast %196 : vector<128x128xf32> to vector<2x64x128xf32>
    %cst_30 = arith.constant dense<0xFF800000> : vector<2x128xf32>
    %198 = vector.multi_reduction <maximumf>, %197, %cst_30 [1] : vector<2x64x128xf32> to vector<2x128xf32>
    %199 = vector.extract_strided_slice %4 {offsets = [0, 2, 0, 0], sizes = [2, 1, 4, 4], strides = [1, 1, 1, 1]} : vector<2x7x4x4xf32> to vector<2x1x4x4xf32>
    %200 = vector.shape_cast %199 : vector<2x1x4x4xf32> to vector<2x4x4xf32>
    %201 = vector.extract_strided_slice %200 {offsets = [0, 0, 0], sizes = [2, 4, 1], strides = [1, 1, 1]} : vector<2x4x4xf32> to vector<2x4x1xf32>
    %202 = vector.extract_strided_slice %5 {offsets = [0, 0], sizes = [1, 128], strides = [1, 1]} : vector<4x128xf32> to vector<1x128xf32>
    %203 = vector.shape_cast %202 : vector<1x128xf32> to vector<128xf32>
    %204 = vector.shape_cast %203 : vector<128xf32> to vector<1x1x128xf32>
    %205 = vector.broadcast %201 : vector<2x4x1xf32> to vector<2x4x128xf32>
    %206 = vector.broadcast %204 : vector<1x1x128xf32> to vector<2x4x128xf32>
    %207 = arith.mulf %205, %206 : vector<2x4x128xf32>
    %cst_31 = arith.constant 0.000000e+00 : f32
    %208 = vector.broadcast %cst_31 : f32 to vector<2x4x128xf32>
    %209 = arith.addf %208, %207 : vector<2x4x128xf32>
    %210 = vector.extract_strided_slice %200 {offsets = [0, 0, 1], sizes = [2, 4, 1], strides = [1, 1, 1]} : vector<2x4x4xf32> to vector<2x4x1xf32>
    %211 = vector.extract_strided_slice %5 {offsets = [1, 0], sizes = [1, 128], strides = [1, 1]} : vector<4x128xf32> to vector<1x128xf32>
    %212 = vector.shape_cast %211 : vector<1x128xf32> to vector<128xf32>
    %213 = vector.shape_cast %212 : vector<128xf32> to vector<1x1x128xf32>
    %214 = vector.broadcast %210 : vector<2x4x1xf32> to vector<2x4x128xf32>
    %215 = vector.broadcast %213 : vector<1x1x128xf32> to vector<2x4x128xf32>
    %216 = arith.mulf %214, %215 : vector<2x4x128xf32>
    %217 = arith.addf %209, %216 : vector<2x4x128xf32>
    %218 = vector.extract_strided_slice %200 {offsets = [0, 0, 2], sizes = [2, 4, 1], strides = [1, 1, 1]} : vector<2x4x4xf32> to vector<2x4x1xf32>
    %219 = vector.extract_strided_slice %5 {offsets = [2, 0], sizes = [1, 128], strides = [1, 1]} : vector<4x128xf32> to vector<1x128xf32>
    %220 = vector.shape_cast %219 : vector<1x128xf32> to vector<128xf32>
    %221 = vector.shape_cast %220 : vector<128xf32> to vector<1x1x128xf32>
    %222 = vector.broadcast %218 : vector<2x4x1xf32> to vector<2x4x128xf32>
    %223 = vector.broadcast %221 : vector<1x1x128xf32> to vector<2x4x128xf32>
    %224 = arith.mulf %222, %223 : vector<2x4x128xf32>
    %225 = arith.addf %217, %224 : vector<2x4x128xf32>
    %226 = vector.extract_strided_slice %200 {offsets = [0, 0, 3], sizes = [2, 4, 1], strides = [1, 1, 1]} : vector<2x4x4xf32> to vector<2x4x1xf32>
    %227 = vector.extract_strided_slice %5 {offsets = [3, 0], sizes = [1, 128], strides = [1, 1]} : vector<4x128xf32> to vector<1x128xf32>
    %228 = vector.shape_cast %227 : vector<1x128xf32> to vector<128xf32>
    %229 = vector.shape_cast %228 : vector<128xf32> to vector<1x1x128xf32>
    %230 = vector.broadcast %226 : vector<2x4x1xf32> to vector<2x4x128xf32>
    %231 = vector.broadcast %229 : vector<1x1x128xf32> to vector<2x4x128xf32>
    %232 = arith.mulf %230, %231 : vector<2x4x128xf32>
    %233 = arith.addf %225, %232 : vector<2x4x128xf32>
    %234 = vector.extract_strided_slice %3 {offsets = [0, 0, 0], sizes = [2, 64, 1], strides = [1, 1, 1]} : vector<2x64x4xf32> to vector<2x64x1xf32>
    %235 = vector.extract_strided_slice %233 {offsets = [0, 0, 0], sizes = [2, 1, 128], strides = [1, 1, 1]} : vector<2x4x128xf32> to vector<2x1x128xf32>
    %236 = vector.shape_cast %235 : vector<2x1x128xf32> to vector<2x128xf32>
    %237 = vector.shape_cast %236 : vector<2x128xf32> to vector<2x1x128xf32>
    %238 = vector.broadcast %234 : vector<2x64x1xf32> to vector<2x64x128xf32>
    %239 = vector.broadcast %237 : vector<2x1x128xf32> to vector<2x64x128xf32>
    %240 = arith.mulf %238, %239 : vector<2x64x128xf32>
    %cst_32 = arith.constant 0.000000e+00 : f32
    %241 = vector.broadcast %cst_32 : f32 to vector<2x64x128xf32>
    %242 = arith.addf %241, %240 : vector<2x64x128xf32>
    %243 = vector.extract_strided_slice %3 {offsets = [0, 0, 1], sizes = [2, 64, 1], strides = [1, 1, 1]} : vector<2x64x4xf32> to vector<2x64x1xf32>
    %244 = vector.extract_strided_slice %233 {offsets = [0, 1, 0], sizes = [2, 1, 128], strides = [1, 1, 1]} : vector<2x4x128xf32> to vector<2x1x128xf32>
    %245 = vector.shape_cast %244 : vector<2x1x128xf32> to vector<2x128xf32>
    %246 = vector.shape_cast %245 : vector<2x128xf32> to vector<2x1x128xf32>
    %247 = vector.broadcast %243 : vector<2x64x1xf32> to vector<2x64x128xf32>
    %248 = vector.broadcast %246 : vector<2x1x128xf32> to vector<2x64x128xf32>
    %249 = arith.mulf %247, %248 : vector<2x64x128xf32>
    %250 = arith.addf %242, %249 : vector<2x64x128xf32>
    %251 = vector.extract_strided_slice %3 {offsets = [0, 0, 2], sizes = [2, 64, 1], strides = [1, 1, 1]} : vector<2x64x4xf32> to vector<2x64x1xf32>
    %252 = vector.extract_strided_slice %233 {offsets = [0, 2, 0], sizes = [2, 1, 128], strides = [1, 1, 1]} : vector<2x4x128xf32> to vector<2x1x128xf32>
    %253 = vector.shape_cast %252 : vector<2x1x128xf32> to vector<2x128xf32>
    %254 = vector.shape_cast %253 : vector<2x128xf32> to vector<2x1x128xf32>
    %255 = vector.broadcast %251 : vector<2x64x1xf32> to vector<2x64x128xf32>
    %256 = vector.broadcast %254 : vector<2x1x128xf32> to vector<2x64x128xf32>
    %257 = arith.mulf %255, %256 : vector<2x64x128xf32>
    %258 = arith.addf %250, %257 : vector<2x64x128xf32>
    %259 = vector.extract_strided_slice %3 {offsets = [0, 0, 3], sizes = [2, 64, 1], strides = [1, 1, 1]} : vector<2x64x4xf32> to vector<2x64x1xf32>
    %260 = vector.extract_strided_slice %233 {offsets = [0, 3, 0], sizes = [2, 1, 128], strides = [1, 1, 1]} : vector<2x4x128xf32> to vector<2x1x128xf32>
    %261 = vector.shape_cast %260 : vector<2x1x128xf32> to vector<2x128xf32>
    %262 = vector.shape_cast %261 : vector<2x128xf32> to vector<2x1x128xf32>
    %263 = vector.broadcast %259 : vector<2x64x1xf32> to vector<2x64x128xf32>
    %264 = vector.broadcast %262 : vector<2x1x128xf32> to vector<2x64x128xf32>
    %265 = arith.mulf %263, %264 : vector<2x64x128xf32>
    %266 = arith.addf %258, %265 : vector<2x64x128xf32>
    %267 = vector.extract_strided_slice %6 {offsets = [0, 0], sizes = [1, 128], strides = [1, 1]} : vector<3x128xf32> to vector<1x128xf32>
    %268 = vector.shape_cast %267 : vector<1x128xf32> to vector<128xf32>
    %269 = vector.shape_cast %268 : vector<128xf32> to vector<1x1x128xf32>
    %270 = vector.broadcast %269 : vector<1x1x128xf32> to vector<2x64x128xf32>
    %271 = arith.addf %266, %270 : vector<2x64x128xf32>
    %cst_33 = arith.constant 0.000000e+00 : f32
    %272 = vector.broadcast %cst_33 : f32 to vector<2x64x128xf32>
    %273 = arith.maximumf %271, %272 : vector<2x64x128xf32>
    %274 = vector.shape_cast %273 : vector<2x64x128xf32> to vector<128x128xf32>
    %cst_34 = arith.constant dense<0.000000e+00> : vector<128x128xf32>
    %275 = tpu.matmul %274, %8, %cst_34 {dimension_numbers = #tpu.dot_dimension_numbers<[1], [0], [0], [1], [0, 0, 1, 1], [], []>} : vector<128x128xf32>, vector<128x128xf32>, vector<128x128xf32> -> vector<128x128xf32>
    %276 = vector.extract_strided_slice %6 {offsets = [1, 0], sizes = [1, 128], strides = [1, 1]} : vector<3x128xf32> to vector<1x128xf32>
    %277 = vector.shape_cast %276 : vector<1x128xf32> to vector<128xf32>
    %278 = vector.shape_cast %277 : vector<128xf32> to vector<1x128xf32>
    %279 = vector.broadcast %278 : vector<1x128xf32> to vector<128x128xf32>
    %280 = arith.addf %275, %279 : vector<128x128xf32>
    %cst_35 = arith.constant 0.000000e+00 : f32
    %281 = vector.broadcast %cst_35 : f32 to vector<128x128xf32>
    %282 = arith.maximumf %280, %281 : vector<128x128xf32>
    %cst_36 = arith.constant dense<0.000000e+00> : vector<128x128xf32>
    %283 = tpu.matmul %282, %10, %cst_36 {dimension_numbers = #tpu.dot_dimension_numbers<[1], [0], [0], [1], [0, 0, 1, 1], [], []>} : vector<128x128xf32>, vector<128x128xf32>, vector<128x128xf32> -> vector<128x128xf32>
    %284 = vector.extract_strided_slice %6 {offsets = [2, 0], sizes = [1, 128], strides = [1, 1]} : vector<3x128xf32> to vector<1x128xf32>
    %285 = vector.shape_cast %284 : vector<1x128xf32> to vector<128xf32>
    %286 = vector.shape_cast %285 : vector<128xf32> to vector<1x128xf32>
    %287 = vector.broadcast %286 : vector<1x128xf32> to vector<128x128xf32>
    %288 = arith.addf %283, %287 : vector<128x128xf32>
    %cst_37 = arith.constant 0.000000e+00 : f32
    %289 = vector.broadcast %cst_37 : f32 to vector<128x128xf32>
    %290 = arith.maximumf %288, %289 : vector<128x128xf32>
    %291 = vector.shape_cast %290 : vector<128x128xf32> to vector<2x64x128xf32>
    %cst_38 = arith.constant dense<0xFF800000> : vector<2x128xf32>
    %292 = vector.multi_reduction <maximumf>, %291, %cst_38 [1] : vector<2x64x128xf32> to vector<2x128xf32>
    %293 = vector.extract_strided_slice %4 {offsets = [0, 3, 0, 0], sizes = [2, 1, 4, 4], strides = [1, 1, 1, 1]} : vector<2x7x4x4xf32> to vector<2x1x4x4xf32>
    %294 = vector.shape_cast %293 : vector<2x1x4x4xf32> to vector<2x4x4xf32>
    %295 = vector.extract_strided_slice %294 {offsets = [0, 0, 0], sizes = [2, 4, 1], strides = [1, 1, 1]} : vector<2x4x4xf32> to vector<2x4x1xf32>
    %296 = vector.extract_strided_slice %5 {offsets = [0, 0], sizes = [1, 128], strides = [1, 1]} : vector<4x128xf32> to vector<1x128xf32>
    %297 = vector.shape_cast %296 : vector<1x128xf32> to vector<128xf32>
    %298 = vector.shape_cast %297 : vector<128xf32> to vector<1x1x128xf32>
    %299 = vector.broadcast %295 : vector<2x4x1xf32> to vector<2x4x128xf32>
    %300 = vector.broadcast %298 : vector<1x1x128xf32> to vector<2x4x128xf32>
    %301 = arith.mulf %299, %300 : vector<2x4x128xf32>
    %cst_39 = arith.constant 0.000000e+00 : f32
    %302 = vector.broadcast %cst_39 : f32 to vector<2x4x128xf32>
    %303 = arith.addf %302, %301 : vector<2x4x128xf32>
    %304 = vector.extract_strided_slice %294 {offsets = [0, 0, 1], sizes = [2, 4, 1], strides = [1, 1, 1]} : vector<2x4x4xf32> to vector<2x4x1xf32>
    %305 = vector.extract_strided_slice %5 {offsets = [1, 0], sizes = [1, 128], strides = [1, 1]} : vector<4x128xf32> to vector<1x128xf32>
    %306 = vector.shape_cast %305 : vector<1x128xf32> to vector<128xf32>
    %307 = vector.shape_cast %306 : vector<128xf32> to vector<1x1x128xf32>
    %308 = vector.broadcast %304 : vector<2x4x1xf32> to vector<2x4x128xf32>
    %309 = vector.broadcast %307 : vector<1x1x128xf32> to vector<2x4x128xf32>
    %310 = arith.mulf %308, %309 : vector<2x4x128xf32>
    %311 = arith.addf %303, %310 : vector<2x4x128xf32>
    %312 = vector.extract_strided_slice %294 {offsets = [0, 0, 2], sizes = [2, 4, 1], strides = [1, 1, 1]} : vector<2x4x4xf32> to vector<2x4x1xf32>
    %313 = vector.extract_strided_slice %5 {offsets = [2, 0], sizes = [1, 128], strides = [1, 1]} : vector<4x128xf32> to vector<1x128xf32>
    %314 = vector.shape_cast %313 : vector<1x128xf32> to vector<128xf32>
    %315 = vector.shape_cast %314 : vector<128xf32> to vector<1x1x128xf32>
    %316 = vector.broadcast %312 : vector<2x4x1xf32> to vector<2x4x128xf32>
    %317 = vector.broadcast %315 : vector<1x1x128xf32> to vector<2x4x128xf32>
    %318 = arith.mulf %316, %317 : vector<2x4x128xf32>
    %319 = arith.addf %311, %318 : vector<2x4x128xf32>
    %320 = vector.extract_strided_slice %294 {offsets = [0, 0, 3], sizes = [2, 4, 1], strides = [1, 1, 1]} : vector<2x4x4xf32> to vector<2x4x1xf32>
    %321 = vector.extract_strided_slice %5 {offsets = [3, 0], sizes = [1, 128], strides = [1, 1]} : vector<4x128xf32> to vector<1x128xf32>
    %322 = vector.shape_cast %321 : vector<1x128xf32> to vector<128xf32>
    %323 = vector.shape_cast %322 : vector<128xf32> to vector<1x1x128xf32>
    %324 = vector.broadcast %320 : vector<2x4x1xf32> to vector<2x4x128xf32>
    %325 = vector.broadcast %323 : vector<1x1x128xf32> to vector<2x4x128xf32>
    %326 = arith.mulf %324, %325 : vector<2x4x128xf32>
    %327 = arith.addf %319, %326 : vector<2x4x128xf32>
    %328 = vector.extract_strided_slice %3 {offsets = [0, 0, 0], sizes = [2, 64, 1], strides = [1, 1, 1]} : vector<2x64x4xf32> to vector<2x64x1xf32>
    %329 = vector.extract_strided_slice %327 {offsets = [0, 0, 0], sizes = [2, 1, 128], strides = [1, 1, 1]} : vector<2x4x128xf32> to vector<2x1x128xf32>
    %330 = vector.shape_cast %329 : vector<2x1x128xf32> to vector<2x128xf32>
    %331 = vector.shape_cast %330 : vector<2x128xf32> to vector<2x1x128xf32>
    %332 = vector.broadcast %328 : vector<2x64x1xf32> to vector<2x64x128xf32>
    %333 = vector.broadcast %331 : vector<2x1x128xf32> to vector<2x64x128xf32>
    %334 = arith.mulf %332, %333 : vector<2x64x128xf32>
    %cst_40 = arith.constant 0.000000e+00 : f32
    %335 = vector.broadcast %cst_40 : f32 to vector<2x64x128xf32>
    %336 = arith.addf %335, %334 : vector<2x64x128xf32>
    %337 = vector.extract_strided_slice %3 {offsets = [0, 0, 1], sizes = [2, 64, 1], strides = [1, 1, 1]} : vector<2x64x4xf32> to vector<2x64x1xf32>
    %338 = vector.extract_strided_slice %327 {offsets = [0, 1, 0], sizes = [2, 1, 128], strides = [1, 1, 1]} : vector<2x4x128xf32> to vector<2x1x128xf32>
    %339 = vector.shape_cast %338 : vector<2x1x128xf32> to vector<2x128xf32>
    %340 = vector.shape_cast %339 : vector<2x128xf32> to vector<2x1x128xf32>
    %341 = vector.broadcast %337 : vector<2x64x1xf32> to vector<2x64x128xf32>
    %342 = vector.broadcast %340 : vector<2x1x128xf32> to vector<2x64x128xf32>
    %343 = arith.mulf %341, %342 : vector<2x64x128xf32>
    %344 = arith.addf %336, %343 : vector<2x64x128xf32>
    %345 = vector.extract_strided_slice %3 {offsets = [0, 0, 2], sizes = [2, 64, 1], strides = [1, 1, 1]} : vector<2x64x4xf32> to vector<2x64x1xf32>
    %346 = vector.extract_strided_slice %327 {offsets = [0, 2, 0], sizes = [2, 1, 128], strides = [1, 1, 1]} : vector<2x4x128xf32> to vector<2x1x128xf32>
    %347 = vector.shape_cast %346 : vector<2x1x128xf32> to vector<2x128xf32>
    %348 = vector.shape_cast %347 : vector<2x128xf32> to vector<2x1x128xf32>
    %349 = vector.broadcast %345 : vector<2x64x1xf32> to vector<2x64x128xf32>
    %350 = vector.broadcast %348 : vector<2x1x128xf32> to vector<2x64x128xf32>
    %351 = arith.mulf %349, %350 : vector<2x64x128xf32>
    %352 = arith.addf %344, %351 : vector<2x64x128xf32>
    %353 = vector.extract_strided_slice %3 {offsets = [0, 0, 3], sizes = [2, 64, 1], strides = [1, 1, 1]} : vector<2x64x4xf32> to vector<2x64x1xf32>
    %354 = vector.extract_strided_slice %327 {offsets = [0, 3, 0], sizes = [2, 1, 128], strides = [1, 1, 1]} : vector<2x4x128xf32> to vector<2x1x128xf32>
    %355 = vector.shape_cast %354 : vector<2x1x128xf32> to vector<2x128xf32>
    %356 = vector.shape_cast %355 : vector<2x128xf32> to vector<2x1x128xf32>
    %357 = vector.broadcast %353 : vector<2x64x1xf32> to vector<2x64x128xf32>
    %358 = vector.broadcast %356 : vector<2x1x128xf32> to vector<2x64x128xf32>
    %359 = arith.mulf %357, %358 : vector<2x64x128xf32>
    %360 = arith.addf %352, %359 : vector<2x64x128xf32>
    %361 = vector.extract_strided_slice %6 {offsets = [0, 0], sizes = [1, 128], strides = [1, 1]} : vector<3x128xf32> to vector<1x128xf32>
    %362 = vector.shape_cast %361 : vector<1x128xf32> to vector<128xf32>
    %363 = vector.shape_cast %362 : vector<128xf32> to vector<1x1x128xf32>
    %364 = vector.broadcast %363 : vector<1x1x128xf32> to vector<2x64x128xf32>
    %365 = arith.addf %360, %364 : vector<2x64x128xf32>
    %cst_41 = arith.constant 0.000000e+00 : f32
    %366 = vector.broadcast %cst_41 : f32 to vector<2x64x128xf32>
    %367 = arith.maximumf %365, %366 : vector<2x64x128xf32>
    %368 = vector.shape_cast %367 : vector<2x64x128xf32> to vector<128x128xf32>
    %cst_42 = arith.constant dense<0.000000e+00> : vector<128x128xf32>
    %369 = tpu.matmul %368, %8, %cst_42 {dimension_numbers = #tpu.dot_dimension_numbers<[1], [0], [0], [1], [0, 0, 1, 1], [], []>} : vector<128x128xf32>, vector<128x128xf32>, vector<128x128xf32> -> vector<128x128xf32>
    %370 = vector.extract_strided_slice %6 {offsets = [1, 0], sizes = [1, 128], strides = [1, 1]} : vector<3x128xf32> to vector<1x128xf32>
    %371 = vector.shape_cast %370 : vector<1x128xf32> to vector<128xf32>
    %372 = vector.shape_cast %371 : vector<128xf32> to vector<1x128xf32>
    %373 = vector.broadcast %372 : vector<1x128xf32> to vector<128x128xf32>
    %374 = arith.addf %369, %373 : vector<128x128xf32>
    %cst_43 = arith.constant 0.000000e+00 : f32
    %375 = vector.broadcast %cst_43 : f32 to vector<128x128xf32>
    %376 = arith.maximumf %374, %375 : vector<128x128xf32>
    %cst_44 = arith.constant dense<0.000000e+00> : vector<128x128xf32>
    %377 = tpu.matmul %376, %10, %cst_44 {dimension_numbers = #tpu.dot_dimension_numbers<[1], [0], [0], [1], [0, 0, 1, 1], [], []>} : vector<128x128xf32>, vector<128x128xf32>, vector<128x128xf32> -> vector<128x128xf32>
    %378 = vector.extract_strided_slice %6 {offsets = [2, 0], sizes = [1, 128], strides = [1, 1]} : vector<3x128xf32> to vector<1x128xf32>
    %379 = vector.shape_cast %378 : vector<1x128xf32> to vector<128xf32>
    %380 = vector.shape_cast %379 : vector<128xf32> to vector<1x128xf32>
    %381 = vector.broadcast %380 : vector<1x128xf32> to vector<128x128xf32>
    %382 = arith.addf %377, %381 : vector<128x128xf32>
    %cst_45 = arith.constant 0.000000e+00 : f32
    %383 = vector.broadcast %cst_45 : f32 to vector<128x128xf32>
    %384 = arith.maximumf %382, %383 : vector<128x128xf32>
    %385 = vector.shape_cast %384 : vector<128x128xf32> to vector<2x64x128xf32>
    %cst_46 = arith.constant dense<0xFF800000> : vector<2x128xf32>
    %386 = vector.multi_reduction <maximumf>, %385, %cst_46 [1] : vector<2x64x128xf32> to vector<2x128xf32>
    %387 = vector.extract_strided_slice %4 {offsets = [0, 4, 0, 0], sizes = [2, 1, 4, 4], strides = [1, 1, 1, 1]} : vector<2x7x4x4xf32> to vector<2x1x4x4xf32>
    %388 = vector.shape_cast %387 : vector<2x1x4x4xf32> to vector<2x4x4xf32>
    %389 = vector.extract_strided_slice %388 {offsets = [0, 0, 0], sizes = [2, 4, 1], strides = [1, 1, 1]} : vector<2x4x4xf32> to vector<2x4x1xf32>
    %390 = vector.extract_strided_slice %5 {offsets = [0, 0], sizes = [1, 128], strides = [1, 1]} : vector<4x128xf32> to vector<1x128xf32>
    %391 = vector.shape_cast %390 : vector<1x128xf32> to vector<128xf32>
    %392 = vector.shape_cast %391 : vector<128xf32> to vector<1x1x128xf32>
    %393 = vector.broadcast %389 : vector<2x4x1xf32> to vector<2x4x128xf32>
    %394 = vector.broadcast %392 : vector<1x1x128xf32> to vector<2x4x128xf32>
    %395 = arith.mulf %393, %394 : vector<2x4x128xf32>
    %cst_47 = arith.constant 0.000000e+00 : f32
    %396 = vector.broadcast %cst_47 : f32 to vector<2x4x128xf32>
    %397 = arith.addf %396, %395 : vector<2x4x128xf32>
    %398 = vector.extract_strided_slice %388 {offsets = [0, 0, 1], sizes = [2, 4, 1], strides = [1, 1, 1]} : vector<2x4x4xf32> to vector<2x4x1xf32>
    %399 = vector.extract_strided_slice %5 {offsets = [1, 0], sizes = [1, 128], strides = [1, 1]} : vector<4x128xf32> to vector<1x128xf32>
    %400 = vector.shape_cast %399 : vector<1x128xf32> to vector<128xf32>
    %401 = vector.shape_cast %400 : vector<128xf32> to vector<1x1x128xf32>
    %402 = vector.broadcast %398 : vector<2x4x1xf32> to vector<2x4x128xf32>
    %403 = vector.broadcast %401 : vector<1x1x128xf32> to vector<2x4x128xf32>
    %404 = arith.mulf %402, %403 : vector<2x4x128xf32>
    %405 = arith.addf %397, %404 : vector<2x4x128xf32>
    %406 = vector.extract_strided_slice %388 {offsets = [0, 0, 2], sizes = [2, 4, 1], strides = [1, 1, 1]} : vector<2x4x4xf32> to vector<2x4x1xf32>
    %407 = vector.extract_strided_slice %5 {offsets = [2, 0], sizes = [1, 128], strides = [1, 1]} : vector<4x128xf32> to vector<1x128xf32>
    %408 = vector.shape_cast %407 : vector<1x128xf32> to vector<128xf32>
    %409 = vector.shape_cast %408 : vector<128xf32> to vector<1x1x128xf32>
    %410 = vector.broadcast %406 : vector<2x4x1xf32> to vector<2x4x128xf32>
    %411 = vector.broadcast %409 : vector<1x1x128xf32> to vector<2x4x128xf32>
    %412 = arith.mulf %410, %411 : vector<2x4x128xf32>
    %413 = arith.addf %405, %412 : vector<2x4x128xf32>
    %414 = vector.extract_strided_slice %388 {offsets = [0, 0, 3], sizes = [2, 4, 1], strides = [1, 1, 1]} : vector<2x4x4xf32> to vector<2x4x1xf32>
    %415 = vector.extract_strided_slice %5 {offsets = [3, 0], sizes = [1, 128], strides = [1, 1]} : vector<4x128xf32> to vector<1x128xf32>
    %416 = vector.shape_cast %415 : vector<1x128xf32> to vector<128xf32>
    %417 = vector.shape_cast %416 : vector<128xf32> to vector<1x1x128xf32>
    %418 = vector.broadcast %414 : vector<2x4x1xf32> to vector<2x4x128xf32>
    %419 = vector.broadcast %417 : vector<1x1x128xf32> to vector<2x4x128xf32>
    %420 = arith.mulf %418, %419 : vector<2x4x128xf32>
    %421 = arith.addf %413, %420 : vector<2x4x128xf32>
    %422 = vector.extract_strided_slice %3 {offsets = [0, 0, 0], sizes = [2, 64, 1], strides = [1, 1, 1]} : vector<2x64x4xf32> to vector<2x64x1xf32>
    %423 = vector.extract_strided_slice %421 {offsets = [0, 0, 0], sizes = [2, 1, 128], strides = [1, 1, 1]} : vector<2x4x128xf32> to vector<2x1x128xf32>
    %424 = vector.shape_cast %423 : vector<2x1x128xf32> to vector<2x128xf32>
    %425 = vector.shape_cast %424 : vector<2x128xf32> to vector<2x1x128xf32>
    %426 = vector.broadcast %422 : vector<2x64x1xf32> to vector<2x64x128xf32>
    %427 = vector.broadcast %425 : vector<2x1x128xf32> to vector<2x64x128xf32>
    %428 = arith.mulf %426, %427 : vector<2x64x128xf32>
    %cst_48 = arith.constant 0.000000e+00 : f32
    %429 = vector.broadcast %cst_48 : f32 to vector<2x64x128xf32>
    %430 = arith.addf %429, %428 : vector<2x64x128xf32>
    %431 = vector.extract_strided_slice %3 {offsets = [0, 0, 1], sizes = [2, 64, 1], strides = [1, 1, 1]} : vector<2x64x4xf32> to vector<2x64x1xf32>
    %432 = vector.extract_strided_slice %421 {offsets = [0, 1, 0], sizes = [2, 1, 128], strides = [1, 1, 1]} : vector<2x4x128xf32> to vector<2x1x128xf32>
    %433 = vector.shape_cast %432 : vector<2x1x128xf32> to vector<2x128xf32>
    %434 = vector.shape_cast %433 : vector<2x128xf32> to vector<2x1x128xf32>
    %435 = vector.broadcast %431 : vector<2x64x1xf32> to vector<2x64x128xf32>
    %436 = vector.broadcast %434 : vector<2x1x128xf32> to vector<2x64x128xf32>
    %437 = arith.mulf %435, %436 : vector<2x64x128xf32>
    %438 = arith.addf %430, %437 : vector<2x64x128xf32>
    %439 = vector.extract_strided_slice %3 {offsets = [0, 0, 2], sizes = [2, 64, 1], strides = [1, 1, 1]} : vector<2x64x4xf32> to vector<2x64x1xf32>
    %440 = vector.extract_strided_slice %421 {offsets = [0, 2, 0], sizes = [2, 1, 128], strides = [1, 1, 1]} : vector<2x4x128xf32> to vector<2x1x128xf32>
    %441 = vector.shape_cast %440 : vector<2x1x128xf32> to vector<2x128xf32>
    %442 = vector.shape_cast %441 : vector<2x128xf32> to vector<2x1x128xf32>
    %443 = vector.broadcast %439 : vector<2x64x1xf32> to vector<2x64x128xf32>
    %444 = vector.broadcast %442 : vector<2x1x128xf32> to vector<2x64x128xf32>
    %445 = arith.mulf %443, %444 : vector<2x64x128xf32>
    %446 = arith.addf %438, %445 : vector<2x64x128xf32>
    %447 = vector.extract_strided_slice %3 {offsets = [0, 0, 3], sizes = [2, 64, 1], strides = [1, 1, 1]} : vector<2x64x4xf32> to vector<2x64x1xf32>
    %448 = vector.extract_strided_slice %421 {offsets = [0, 3, 0], sizes = [2, 1, 128], strides = [1, 1, 1]} : vector<2x4x128xf32> to vector<2x1x128xf32>
    %449 = vector.shape_cast %448 : vector<2x1x128xf32> to vector<2x128xf32>
    %450 = vector.shape_cast %449 : vector<2x128xf32> to vector<2x1x128xf32>
    %451 = vector.broadcast %447 : vector<2x64x1xf32> to vector<2x64x128xf32>
    %452 = vector.broadcast %450 : vector<2x1x128xf32> to vector<2x64x128xf32>
    %453 = arith.mulf %451, %452 : vector<2x64x128xf32>
    %454 = arith.addf %446, %453 : vector<2x64x128xf32>
    %455 = vector.extract_strided_slice %6 {offsets = [0, 0], sizes = [1, 128], strides = [1, 1]} : vector<3x128xf32> to vector<1x128xf32>
    %456 = vector.shape_cast %455 : vector<1x128xf32> to vector<128xf32>
    %457 = vector.shape_cast %456 : vector<128xf32> to vector<1x1x128xf32>
    %458 = vector.broadcast %457 : vector<1x1x128xf32> to vector<2x64x128xf32>
    %459 = arith.addf %454, %458 : vector<2x64x128xf32>
    %cst_49 = arith.constant 0.000000e+00 : f32
    %460 = vector.broadcast %cst_49 : f32 to vector<2x64x128xf32>
    %461 = arith.maximumf %459, %460 : vector<2x64x128xf32>
    %462 = vector.shape_cast %461 : vector<2x64x128xf32> to vector<128x128xf32>
    %cst_50 = arith.constant dense<0.000000e+00> : vector<128x128xf32>
    %463 = tpu.matmul %462, %8, %cst_50 {dimension_numbers = #tpu.dot_dimension_numbers<[1], [0], [0], [1], [0, 0, 1, 1], [], []>} : vector<128x128xf32>, vector<128x128xf32>, vector<128x128xf32> -> vector<128x128xf32>
    %464 = vector.extract_strided_slice %6 {offsets = [1, 0], sizes = [1, 128], strides = [1, 1]} : vector<3x128xf32> to vector<1x128xf32>
    %465 = vector.shape_cast %464 : vector<1x128xf32> to vector<128xf32>
    %466 = vector.shape_cast %465 : vector<128xf32> to vector<1x128xf32>
    %467 = vector.broadcast %466 : vector<1x128xf32> to vector<128x128xf32>
    %468 = arith.addf %463, %467 : vector<128x128xf32>
    %cst_51 = arith.constant 0.000000e+00 : f32
    %469 = vector.broadcast %cst_51 : f32 to vector<128x128xf32>
    %470 = arith.maximumf %468, %469 : vector<128x128xf32>
    %cst_52 = arith.constant dense<0.000000e+00> : vector<128x128xf32>
    %471 = tpu.matmul %470, %10, %cst_52 {dimension_numbers = #tpu.dot_dimension_numbers<[1], [0], [0], [1], [0, 0, 1, 1], [], []>} : vector<128x128xf32>, vector<128x128xf32>, vector<128x128xf32> -> vector<128x128xf32>
    %472 = vector.extract_strided_slice %6 {offsets = [2, 0], sizes = [1, 128], strides = [1, 1]} : vector<3x128xf32> to vector<1x128xf32>
    %473 = vector.shape_cast %472 : vector<1x128xf32> to vector<128xf32>
    %474 = vector.shape_cast %473 : vector<128xf32> to vector<1x128xf32>
    %475 = vector.broadcast %474 : vector<1x128xf32> to vector<128x128xf32>
    %476 = arith.addf %471, %475 : vector<128x128xf32>
    %cst_53 = arith.constant 0.000000e+00 : f32
    %477 = vector.broadcast %cst_53 : f32 to vector<128x128xf32>
    %478 = arith.maximumf %476, %477 : vector<128x128xf32>
    %479 = vector.shape_cast %478 : vector<128x128xf32> to vector<2x64x128xf32>
    %cst_54 = arith.constant dense<0xFF800000> : vector<2x128xf32>
    %480 = vector.multi_reduction <maximumf>, %479, %cst_54 [1] : vector<2x64x128xf32> to vector<2x128xf32>
    %481 = vector.extract_strided_slice %4 {offsets = [0, 5, 0, 0], sizes = [2, 1, 4, 4], strides = [1, 1, 1, 1]} : vector<2x7x4x4xf32> to vector<2x1x4x4xf32>
    %482 = vector.shape_cast %481 : vector<2x1x4x4xf32> to vector<2x4x4xf32>
    %483 = vector.extract_strided_slice %482 {offsets = [0, 0, 0], sizes = [2, 4, 1], strides = [1, 1, 1]} : vector<2x4x4xf32> to vector<2x4x1xf32>
    %484 = vector.extract_strided_slice %5 {offsets = [0, 0], sizes = [1, 128], strides = [1, 1]} : vector<4x128xf32> to vector<1x128xf32>
    %485 = vector.shape_cast %484 : vector<1x128xf32> to vector<128xf32>
    %486 = vector.shape_cast %485 : vector<128xf32> to vector<1x1x128xf32>
    %487 = vector.broadcast %483 : vector<2x4x1xf32> to vector<2x4x128xf32>
    %488 = vector.broadcast %486 : vector<1x1x128xf32> to vector<2x4x128xf32>
    %489 = arith.mulf %487, %488 : vector<2x4x128xf32>
    %cst_55 = arith.constant 0.000000e+00 : f32
    %490 = vector.broadcast %cst_55 : f32 to vector<2x4x128xf32>
    %491 = arith.addf %490, %489 : vector<2x4x128xf32>
    %492 = vector.extract_strided_slice %482 {offsets = [0, 0, 1], sizes = [2, 4, 1], strides = [1, 1, 1]} : vector<2x4x4xf32> to vector<2x4x1xf32>
    %493 = vector.extract_strided_slice %5 {offsets = [1, 0], sizes = [1, 128], strides = [1, 1]} : vector<4x128xf32> to vector<1x128xf32>
    %494 = vector.shape_cast %493 : vector<1x128xf32> to vector<128xf32>
    %495 = vector.shape_cast %494 : vector<128xf32> to vector<1x1x128xf32>
    %496 = vector.broadcast %492 : vector<2x4x1xf32> to vector<2x4x128xf32>
    %497 = vector.broadcast %495 : vector<1x1x128xf32> to vector<2x4x128xf32>
    %498 = arith.mulf %496, %497 : vector<2x4x128xf32>
    %499 = arith.addf %491, %498 : vector<2x4x128xf32>
    %500 = vector.extract_strided_slice %482 {offsets = [0, 0, 2], sizes = [2, 4, 1], strides = [1, 1, 1]} : vector<2x4x4xf32> to vector<2x4x1xf32>
    %501 = vector.extract_strided_slice %5 {offsets = [2, 0], sizes = [1, 128], strides = [1, 1]} : vector<4x128xf32> to vector<1x128xf32>
    %502 = vector.shape_cast %501 : vector<1x128xf32> to vector<128xf32>
    %503 = vector.shape_cast %502 : vector<128xf32> to vector<1x1x128xf32>
    %504 = vector.broadcast %500 : vector<2x4x1xf32> to vector<2x4x128xf32>
    %505 = vector.broadcast %503 : vector<1x1x128xf32> to vector<2x4x128xf32>
    %506 = arith.mulf %504, %505 : vector<2x4x128xf32>
    %507 = arith.addf %499, %506 : vector<2x4x128xf32>
    %508 = vector.extract_strided_slice %482 {offsets = [0, 0, 3], sizes = [2, 4, 1], strides = [1, 1, 1]} : vector<2x4x4xf32> to vector<2x4x1xf32>
    %509 = vector.extract_strided_slice %5 {offsets = [3, 0], sizes = [1, 128], strides = [1, 1]} : vector<4x128xf32> to vector<1x128xf32>
    %510 = vector.shape_cast %509 : vector<1x128xf32> to vector<128xf32>
    %511 = vector.shape_cast %510 : vector<128xf32> to vector<1x1x128xf32>
    %512 = vector.broadcast %508 : vector<2x4x1xf32> to vector<2x4x128xf32>
    %513 = vector.broadcast %511 : vector<1x1x128xf32> to vector<2x4x128xf32>
    %514 = arith.mulf %512, %513 : vector<2x4x128xf32>
    %515 = arith.addf %507, %514 : vector<2x4x128xf32>
    %516 = vector.extract_strided_slice %3 {offsets = [0, 0, 0], sizes = [2, 64, 1], strides = [1, 1, 1]} : vector<2x64x4xf32> to vector<2x64x1xf32>
    %517 = vector.extract_strided_slice %515 {offsets = [0, 0, 0], sizes = [2, 1, 128], strides = [1, 1, 1]} : vector<2x4x128xf32> to vector<2x1x128xf32>
    %518 = vector.shape_cast %517 : vector<2x1x128xf32> to vector<2x128xf32>
    %519 = vector.shape_cast %518 : vector<2x128xf32> to vector<2x1x128xf32>
    %520 = vector.broadcast %516 : vector<2x64x1xf32> to vector<2x64x128xf32>
    %521 = vector.broadcast %519 : vector<2x1x128xf32> to vector<2x64x128xf32>
    %522 = arith.mulf %520, %521 : vector<2x64x128xf32>
    %cst_56 = arith.constant 0.000000e+00 : f32
    %523 = vector.broadcast %cst_56 : f32 to vector<2x64x128xf32>
    %524 = arith.addf %523, %522 : vector<2x64x128xf32>
    %525 = vector.extract_strided_slice %3 {offsets = [0, 0, 1], sizes = [2, 64, 1], strides = [1, 1, 1]} : vector<2x64x4xf32> to vector<2x64x1xf32>
    %526 = vector.extract_strided_slice %515 {offsets = [0, 1, 0], sizes = [2, 1, 128], strides = [1, 1, 1]} : vector<2x4x128xf32> to vector<2x1x128xf32>
    %527 = vector.shape_cast %526 : vector<2x1x128xf32> to vector<2x128xf32>
    %528 = vector.shape_cast %527 : vector<2x128xf32> to vector<2x1x128xf32>
    %529 = vector.broadcast %525 : vector<2x64x1xf32> to vector<2x64x128xf32>
    %530 = vector.broadcast %528 : vector<2x1x128xf32> to vector<2x64x128xf32>
    %531 = arith.mulf %529, %530 : vector<2x64x128xf32>
    %532 = arith.addf %524, %531 : vector<2x64x128xf32>
    %533 = vector.extract_strided_slice %3 {offsets = [0, 0, 2], sizes = [2, 64, 1], strides = [1, 1, 1]} : vector<2x64x4xf32> to vector<2x64x1xf32>
    %534 = vector.extract_strided_slice %515 {offsets = [0, 2, 0], sizes = [2, 1, 128], strides = [1, 1, 1]} : vector<2x4x128xf32> to vector<2x1x128xf32>
    %535 = vector.shape_cast %534 : vector<2x1x128xf32> to vector<2x128xf32>
    %536 = vector.shape_cast %535 : vector<2x128xf32> to vector<2x1x128xf32>
    %537 = vector.broadcast %533 : vector<2x64x1xf32> to vector<2x64x128xf32>
    %538 = vector.broadcast %536 : vector<2x1x128xf32> to vector<2x64x128xf32>
    %539 = arith.mulf %537, %538 : vector<2x64x128xf32>
    %540 = arith.addf %532, %539 : vector<2x64x128xf32>
    %541 = vector.extract_strided_slice %3 {offsets = [0, 0, 3], sizes = [2, 64, 1], strides = [1, 1, 1]} : vector<2x64x4xf32> to vector<2x64x1xf32>
    %542 = vector.extract_strided_slice %515 {offsets = [0, 3, 0], sizes = [2, 1, 128], strides = [1, 1, 1]} : vector<2x4x128xf32> to vector<2x1x128xf32>
    %543 = vector.shape_cast %542 : vector<2x1x128xf32> to vector<2x128xf32>
    %544 = vector.shape_cast %543 : vector<2x128xf32> to vector<2x1x128xf32>
    %545 = vector.broadcast %541 : vector<2x64x1xf32> to vector<2x64x128xf32>
    %546 = vector.broadcast %544 : vector<2x1x128xf32> to vector<2x64x128xf32>
    %547 = arith.mulf %545, %546 : vector<2x64x128xf32>
    %548 = arith.addf %540, %547 : vector<2x64x128xf32>
    %549 = vector.extract_strided_slice %6 {offsets = [0, 0], sizes = [1, 128], strides = [1, 1]} : vector<3x128xf32> to vector<1x128xf32>
    %550 = vector.shape_cast %549 : vector<1x128xf32> to vector<128xf32>
    %551 = vector.shape_cast %550 : vector<128xf32> to vector<1x1x128xf32>
    %552 = vector.broadcast %551 : vector<1x1x128xf32> to vector<2x64x128xf32>
    %553 = arith.addf %548, %552 : vector<2x64x128xf32>
    %cst_57 = arith.constant 0.000000e+00 : f32
    %554 = vector.broadcast %cst_57 : f32 to vector<2x64x128xf32>
    %555 = arith.maximumf %553, %554 : vector<2x64x128xf32>
    %556 = vector.shape_cast %555 : vector<2x64x128xf32> to vector<128x128xf32>
    %cst_58 = arith.constant dense<0.000000e+00> : vector<128x128xf32>
    %557 = tpu.matmul %556, %8, %cst_58 {dimension_numbers = #tpu.dot_dimension_numbers<[1], [0], [0], [1], [0, 0, 1, 1], [], []>} : vector<128x128xf32>, vector<128x128xf32>, vector<128x128xf32> -> vector<128x128xf32>
    %558 = vector.extract_strided_slice %6 {offsets = [1, 0], sizes = [1, 128], strides = [1, 1]} : vector<3x128xf32> to vector<1x128xf32>
    %559 = vector.shape_cast %558 : vector<1x128xf32> to vector<128xf32>
    %560 = vector.shape_cast %559 : vector<128xf32> to vector<1x128xf32>
    %561 = vector.broadcast %560 : vector<1x128xf32> to vector<128x128xf32>
    %562 = arith.addf %557, %561 : vector<128x128xf32>
    %cst_59 = arith.constant 0.000000e+00 : f32
    %563 = vector.broadcast %cst_59 : f32 to vector<128x128xf32>
    %564 = arith.maximumf %562, %563 : vector<128x128xf32>
    %cst_60 = arith.constant dense<0.000000e+00> : vector<128x128xf32>
    %565 = tpu.matmul %564, %10, %cst_60 {dimension_numbers = #tpu.dot_dimension_numbers<[1], [0], [0], [1], [0, 0, 1, 1], [], []>} : vector<128x128xf32>, vector<128x128xf32>, vector<128x128xf32> -> vector<128x128xf32>
    %566 = vector.extract_strided_slice %6 {offsets = [2, 0], sizes = [1, 128], strides = [1, 1]} : vector<3x128xf32> to vector<1x128xf32>
    %567 = vector.shape_cast %566 : vector<1x128xf32> to vector<128xf32>
    %568 = vector.shape_cast %567 : vector<128xf32> to vector<1x128xf32>
    %569 = vector.broadcast %568 : vector<1x128xf32> to vector<128x128xf32>
    %570 = arith.addf %565, %569 : vector<128x128xf32>
    %cst_61 = arith.constant 0.000000e+00 : f32
    %571 = vector.broadcast %cst_61 : f32 to vector<128x128xf32>
    %572 = arith.maximumf %570, %571 : vector<128x128xf32>
    %573 = vector.shape_cast %572 : vector<128x128xf32> to vector<2x64x128xf32>
    %cst_62 = arith.constant dense<0xFF800000> : vector<2x128xf32>
    %574 = vector.multi_reduction <maximumf>, %573, %cst_62 [1] : vector<2x64x128xf32> to vector<2x128xf32>
    %575 = vector.extract_strided_slice %4 {offsets = [0, 6, 0, 0], sizes = [2, 1, 4, 4], strides = [1, 1, 1, 1]} : vector<2x7x4x4xf32> to vector<2x1x4x4xf32>
    %576 = vector.shape_cast %575 : vector<2x1x4x4xf32> to vector<2x4x4xf32>
    %577 = vector.extract_strided_slice %576 {offsets = [0, 0, 0], sizes = [2, 4, 1], strides = [1, 1, 1]} : vector<2x4x4xf32> to vector<2x4x1xf32>
    %578 = vector.extract_strided_slice %5 {offsets = [0, 0], sizes = [1, 128], strides = [1, 1]} : vector<4x128xf32> to vector<1x128xf32>
    %579 = vector.shape_cast %578 : vector<1x128xf32> to vector<128xf32>
    %580 = vector.shape_cast %579 : vector<128xf32> to vector<1x1x128xf32>
    %581 = vector.broadcast %577 : vector<2x4x1xf32> to vector<2x4x128xf32>
    %582 = vector.broadcast %580 : vector<1x1x128xf32> to vector<2x4x128xf32>
    %583 = arith.mulf %581, %582 : vector<2x4x128xf32>
    %cst_63 = arith.constant 0.000000e+00 : f32
    %584 = vector.broadcast %cst_63 : f32 to vector<2x4x128xf32>
    %585 = arith.addf %584, %583 : vector<2x4x128xf32>
    %586 = vector.extract_strided_slice %576 {offsets = [0, 0, 1], sizes = [2, 4, 1], strides = [1, 1, 1]} : vector<2x4x4xf32> to vector<2x4x1xf32>
    %587 = vector.extract_strided_slice %5 {offsets = [1, 0], sizes = [1, 128], strides = [1, 1]} : vector<4x128xf32> to vector<1x128xf32>
    %588 = vector.shape_cast %587 : vector<1x128xf32> to vector<128xf32>
    %589 = vector.shape_cast %588 : vector<128xf32> to vector<1x1x128xf32>
    %590 = vector.broadcast %586 : vector<2x4x1xf32> to vector<2x4x128xf32>
    %591 = vector.broadcast %589 : vector<1x1x128xf32> to vector<2x4x128xf32>
    %592 = arith.mulf %590, %591 : vector<2x4x128xf32>
    %593 = arith.addf %585, %592 : vector<2x4x128xf32>
    %594 = vector.extract_strided_slice %576 {offsets = [0, 0, 2], sizes = [2, 4, 1], strides = [1, 1, 1]} : vector<2x4x4xf32> to vector<2x4x1xf32>
    %595 = vector.extract_strided_slice %5 {offsets = [2, 0], sizes = [1, 128], strides = [1, 1]} : vector<4x128xf32> to vector<1x128xf32>
    %596 = vector.shape_cast %595 : vector<1x128xf32> to vector<128xf32>
    %597 = vector.shape_cast %596 : vector<128xf32> to vector<1x1x128xf32>
    %598 = vector.broadcast %594 : vector<2x4x1xf32> to vector<2x4x128xf32>
    %599 = vector.broadcast %597 : vector<1x1x128xf32> to vector<2x4x128xf32>
    %600 = arith.mulf %598, %599 : vector<2x4x128xf32>
    %601 = arith.addf %593, %600 : vector<2x4x128xf32>
    %602 = vector.extract_strided_slice %576 {offsets = [0, 0, 3], sizes = [2, 4, 1], strides = [1, 1, 1]} : vector<2x4x4xf32> to vector<2x4x1xf32>
    %603 = vector.extract_strided_slice %5 {offsets = [3, 0], sizes = [1, 128], strides = [1, 1]} : vector<4x128xf32> to vector<1x128xf32>
    %604 = vector.shape_cast %603 : vector<1x128xf32> to vector<128xf32>
    %605 = vector.shape_cast %604 : vector<128xf32> to vector<1x1x128xf32>
    %606 = vector.broadcast %602 : vector<2x4x1xf32> to vector<2x4x128xf32>
    %607 = vector.broadcast %605 : vector<1x1x128xf32> to vector<2x4x128xf32>
    %608 = arith.mulf %606, %607 : vector<2x4x128xf32>
    %609 = arith.addf %601, %608 : vector<2x4x128xf32>
    %610 = vector.extract_strided_slice %3 {offsets = [0, 0, 0], sizes = [2, 64, 1], strides = [1, 1, 1]} : vector<2x64x4xf32> to vector<2x64x1xf32>
    %611 = vector.extract_strided_slice %609 {offsets = [0, 0, 0], sizes = [2, 1, 128], strides = [1, 1, 1]} : vector<2x4x128xf32> to vector<2x1x128xf32>
    %612 = vector.shape_cast %611 : vector<2x1x128xf32> to vector<2x128xf32>
    %613 = vector.shape_cast %612 : vector<2x128xf32> to vector<2x1x128xf32>
    %614 = vector.broadcast %610 : vector<2x64x1xf32> to vector<2x64x128xf32>
    %615 = vector.broadcast %613 : vector<2x1x128xf32> to vector<2x64x128xf32>
    %616 = arith.mulf %614, %615 : vector<2x64x128xf32>
    %cst_64 = arith.constant 0.000000e+00 : f32
    %617 = vector.broadcast %cst_64 : f32 to vector<2x64x128xf32>
    %618 = arith.addf %617, %616 : vector<2x64x128xf32>
    %619 = vector.extract_strided_slice %3 {offsets = [0, 0, 1], sizes = [2, 64, 1], strides = [1, 1, 1]} : vector<2x64x4xf32> to vector<2x64x1xf32>
    %620 = vector.extract_strided_slice %609 {offsets = [0, 1, 0], sizes = [2, 1, 128], strides = [1, 1, 1]} : vector<2x4x128xf32> to vector<2x1x128xf32>
    %621 = vector.shape_cast %620 : vector<2x1x128xf32> to vector<2x128xf32>
    %622 = vector.shape_cast %621 : vector<2x128xf32> to vector<2x1x128xf32>
    %623 = vector.broadcast %619 : vector<2x64x1xf32> to vector<2x64x128xf32>
    %624 = vector.broadcast %622 : vector<2x1x128xf32> to vector<2x64x128xf32>
    %625 = arith.mulf %623, %624 : vector<2x64x128xf32>
    %626 = arith.addf %618, %625 : vector<2x64x128xf32>
    %627 = vector.extract_strided_slice %3 {offsets = [0, 0, 2], sizes = [2, 64, 1], strides = [1, 1, 1]} : vector<2x64x4xf32> to vector<2x64x1xf32>
    %628 = vector.extract_strided_slice %609 {offsets = [0, 2, 0], sizes = [2, 1, 128], strides = [1, 1, 1]} : vector<2x4x128xf32> to vector<2x1x128xf32>
    %629 = vector.shape_cast %628 : vector<2x1x128xf32> to vector<2x128xf32>
    %630 = vector.shape_cast %629 : vector<2x128xf32> to vector<2x1x128xf32>
    %631 = vector.broadcast %627 : vector<2x64x1xf32> to vector<2x64x128xf32>
    %632 = vector.broadcast %630 : vector<2x1x128xf32> to vector<2x64x128xf32>
    %633 = arith.mulf %631, %632 : vector<2x64x128xf32>
    %634 = arith.addf %626, %633 : vector<2x64x128xf32>
    %635 = vector.extract_strided_slice %3 {offsets = [0, 0, 3], sizes = [2, 64, 1], strides = [1, 1, 1]} : vector<2x64x4xf32> to vector<2x64x1xf32>
    %636 = vector.extract_strided_slice %609 {offsets = [0, 3, 0], sizes = [2, 1, 128], strides = [1, 1, 1]} : vector<2x4x128xf32> to vector<2x1x128xf32>
    %637 = vector.shape_cast %636 : vector<2x1x128xf32> to vector<2x128xf32>
    %638 = vector.shape_cast %637 : vector<2x128xf32> to vector<2x1x128xf32>
    %639 = vector.broadcast %635 : vector<2x64x1xf32> to vector<2x64x128xf32>
    %640 = vector.broadcast %638 : vector<2x1x128xf32> to vector<2x64x128xf32>
    %641 = arith.mulf %639, %640 : vector<2x64x128xf32>
    %642 = arith.addf %634, %641 : vector<2x64x128xf32>
    %643 = vector.extract_strided_slice %6 {offsets = [0, 0], sizes = [1, 128], strides = [1, 1]} : vector<3x128xf32> to vector<1x128xf32>
    %644 = vector.shape_cast %643 : vector<1x128xf32> to vector<128xf32>
    %645 = vector.shape_cast %644 : vector<128xf32> to vector<1x1x128xf32>
    %646 = vector.broadcast %645 : vector<1x1x128xf32> to vector<2x64x128xf32>
    %647 = arith.addf %642, %646 : vector<2x64x128xf32>
    %cst_65 = arith.constant 0.000000e+00 : f32
    %648 = vector.broadcast %cst_65 : f32 to vector<2x64x128xf32>
    %649 = arith.maximumf %647, %648 : vector<2x64x128xf32>
    %650 = vector.shape_cast %649 : vector<2x64x128xf32> to vector<128x128xf32>
    %cst_66 = arith.constant dense<0.000000e+00> : vector<128x128xf32>
    %651 = tpu.matmul %650, %8, %cst_66 {dimension_numbers = #tpu.dot_dimension_numbers<[1], [0], [0], [1], [0, 0, 1, 1], [], []>} : vector<128x128xf32>, vector<128x128xf32>, vector<128x128xf32> -> vector<128x128xf32>
    %652 = vector.extract_strided_slice %6 {offsets = [1, 0], sizes = [1, 128], strides = [1, 1]} : vector<3x128xf32> to vector<1x128xf32>
    %653 = vector.shape_cast %652 : vector<1x128xf32> to vector<128xf32>
    %654 = vector.shape_cast %653 : vector<128xf32> to vector<1x128xf32>
    %655 = vector.broadcast %654 : vector<1x128xf32> to vector<128x128xf32>
    %656 = arith.addf %651, %655 : vector<128x128xf32>
    %cst_67 = arith.constant 0.000000e+00 : f32
    %657 = vector.broadcast %cst_67 : f32 to vector<128x128xf32>
    %658 = arith.maximumf %656, %657 : vector<128x128xf32>
    %cst_68 = arith.constant dense<0.000000e+00> : vector<128x128xf32>
    %659 = tpu.matmul %658, %10, %cst_68 {dimension_numbers = #tpu.dot_dimension_numbers<[1], [0], [0], [1], [0, 0, 1, 1], [], []>} : vector<128x128xf32>, vector<128x128xf32>, vector<128x128xf32> -> vector<128x128xf32>
    %660 = vector.extract_strided_slice %6 {offsets = [2, 0], sizes = [1, 128], strides = [1, 1]} : vector<3x128xf32> to vector<1x128xf32>
    %661 = vector.shape_cast %660 : vector<1x128xf32> to vector<128xf32>
    %662 = vector.shape_cast %661 : vector<128xf32> to vector<1x128xf32>
    %663 = vector.broadcast %662 : vector<1x128xf32> to vector<128x128xf32>
    %664 = arith.addf %659, %663 : vector<128x128xf32>
    %cst_69 = arith.constant 0.000000e+00 : f32
    %665 = vector.broadcast %cst_69 : f32 to vector<128x128xf32>
    %666 = arith.maximumf %664, %665 : vector<128x128xf32>
    %667 = vector.shape_cast %666 : vector<128x128xf32> to vector<2x64x128xf32>
    %cst_70 = arith.constant dense<0xFF800000> : vector<2x128xf32>
    %668 = vector.multi_reduction <maximumf>, %667, %cst_70 [1] : vector<2x64x128xf32> to vector<2x128xf32>
    %c0_71 = arith.constant 0 : index
    %c0_72 = arith.constant 0 : index
    %c0_73 = arith.constant 0 : index
    %669 = vector.load %arg7[%c0_71, %c0_72, %c0_73] : memref<2x7x128xf32, #tpu.memory_space<vmem>>, vector<2x7x128xf32>
    %670 = vector.shape_cast %104 : vector<2x128xf32> to vector<2x1x128xf32>
    %671 = vector.shape_cast %198 : vector<2x128xf32> to vector<2x1x128xf32>
    %672 = vector.shape_cast %292 : vector<2x128xf32> to vector<2x1x128xf32>
    %673 = vector.shape_cast %386 : vector<2x128xf32> to vector<2x1x128xf32>
    %674 = vector.shape_cast %480 : vector<2x128xf32> to vector<2x1x128xf32>
    %675 = vector.shape_cast %574 : vector<2x128xf32> to vector<2x1x128xf32>
    %676 = vector.shape_cast %668 : vector<2x128xf32> to vector<2x1x128xf32>
    %677 = tpu.concatenate %670, %671, %672, %673, %674, %675, %676 in 1 : vector<2x1x128xf32>, vector<2x1x128xf32>, vector<2x1x128xf32>, vector<2x1x128xf32>, vector<2x1x128xf32>, vector<2x1x128xf32>, vector<2x1x128xf32> -> vector<2x7x128xf32>
    %678 = arith.maximumf %669, %677 : vector<2x7x128xf32>
    %c0_74 = arith.constant 0 : index
    %c0_75 = arith.constant 0 : index
    %c0_76 = arith.constant 0 : index
    %679 = vector.load %arg7[%c0_74, %c0_75, %c0_76] : memref<2x7x128xf32, #tpu.memory_space<vmem>>, vector<2x7x128xf32>
    tpu.vector_store %arg7[%c0_74, %c0_75, %c0_76], %678 {strides = array<i32>} : memref<2x7x128xf32, #tpu.memory_space<vmem>>, vector<2x7x128xf32>,
    return
  }
  func.func @transform_0(%arg0: i32, %arg1: i32) -> (i32, i32, i32) {
    %c0_i32 = arith.constant 0 : i32
    %c0_i32_0 = arith.constant 0 : i32
    return %arg0, %arg1, %c0_i32 : i32, i32, i32
  }
  func.func @transform_1(%arg0: i32, %arg1: i32) -> (i32, i32, i32, i32) {
    %c0_i32 = arith.constant 0 : i32
    %c0_i32_0 = arith.constant 0 : i32
    %c0_i32_1 = arith.constant 0 : i32
    %c0_i32_2 = arith.constant 0 : i32
    return %arg0, %c0_i32, %c0_i32_0, %c0_i32_1 : i32, i32, i32, i32
  }
  func.func @transform_2(%arg0: i32, %arg1: i32) -> (i32, i32) {
    %c0_i32 = arith.constant 0 : i32
    %c0_i32_0 = arith.constant 0 : i32
    %c0_i32_1 = arith.constant 0 : i32
    return %c0_i32, %c0_i32_0 : i32, i32
  }
  func.func @transform_3(%arg0: i32, %arg1: i32) -> (i32, i32) {
    %c0_i32 = arith.constant 0 : i32
    %c0_i32_0 = arith.constant 0 : i32
    %c0_i32_1 = arith.constant 0 : i32
    return %c0_i32, %c0_i32_0 : i32, i32
  }
  func.func @transform_4(%arg0: i32, %arg1: i32) -> (i32, i32, i32) {
    %c0_i32 = arith.constant 0 : i32
    %c0_i32_0 = arith.constant 0 : i32
    %c0_i32_1 = arith.constant 0 : i32
    %c0_i32_2 = arith.constant 0 : i32
    return %c0_i32, %c0_i32_0, %c0_i32_1 : i32, i32, i32
  }
  func.func @transform_5(%arg0: i32, %arg1: i32) -> (i32, i32, i32) {
    %c0_i32 = arith.constant 0 : i32
    %c0_i32_0 = arith.constant 0 : i32
    %c0_i32_1 = arith.constant 0 : i32
    return %arg0, %c0_i32, %c0_i32_0 : i32, i32, i32
  }
}

module attributes {stable_mosaic.version = 11 : i64} {
  func.func @_pointnet_pool_kernel(%arg0: i32, %arg1: i32, %arg2: memref<2x64x4xf32, #tpu.memory_space<vmem>>, %arg3: memref<2x1x4x4xf32, #tpu.memory_space<vmem>>, %arg4: memref<4x128xf32, #tpu.memory_space<vmem>>, %arg5: memref<3x128xf32, #tpu.memory_space<vmem>>, %arg6: memref<2x128x128xf32, #tpu.memory_space<vmem>>, %arg7: memref<2x1x128xf32, #tpu.memory_space<vmem>>) attributes {dimension_semantics = [#tpu.dimension_semantics<parallel>, #tpu.dimension_semantics<arbitrary>], iteration_bounds = array<i64: 1, 1>, scalar_prefetch = 0 : i64, scratch_operands = 0 : i64, tpu.core_type = #tpu.core_type<tc>, window_params = [{transform_indices = @transform_0, window_bounds = array<i64: 2, 64, 4>}, {transform_indices = @transform_1, window_bounds = array<i64: 2, 1, 4, 4>}, {pipeline_mode = #tpu.pipeline_mode<synchronous>, transform_indices = @transform_2, window_bounds = array<i64: 4, 128>}, {pipeline_mode = #tpu.pipeline_mode<synchronous>, transform_indices = @transform_3, window_bounds = array<i64: 3, 128>}, {pipeline_mode = #tpu.pipeline_mode<synchronous>, transform_indices = @transform_4, window_bounds = array<i64: 2, 128, 128>}, {transform_indices = @transform_5, window_bounds = array<i64: 2, 1, 128>}]} {
    %c0_i32 = arith.constant 0 : i32
    %0 = arith.cmpi eq, %arg1, %c0_i32 : i32
    %1 = arith.extui %0 : i1 to i32
    %c0_i32_0 = arith.constant 0 : i32
    %2 = arith.cmpi ne, %1, %c0_i32_0 : i32
    scf.if %2 {
      %cst_29 = arith.constant 0.000000e+00 : f32
      %112 = vector.broadcast %cst_29 : f32 to vector<2x1x128xf32>
      %c0_30 = arith.constant 0 : index
      %c0_31 = arith.constant 0 : index
      %c0_32 = arith.constant 0 : index
      %113 = vector.load %arg7[%c0_30, %c0_31, %c0_32] : memref<2x1x128xf32, #tpu.memory_space<vmem>>, vector<2x1x128xf32>
      tpu.vector_store %arg7[%c0_30, %c0_31, %c0_32], %112 {strides = array<i32>} : memref<2x1x128xf32, #tpu.memory_space<vmem>>, vector<2x1x128xf32>,
    } else {
    }
    %c0 = arith.constant 0 : index
    %c0_1 = arith.constant 0 : index
    %c0_2 = arith.constant 0 : index
    %3 = vector.load %arg2[%c0, %c0_1, %c0_2] : memref<2x64x4xf32, #tpu.memory_space<vmem>>, vector<2x64x4xf32>
    %c0_3 = arith.constant 0 : index
    %c0_4 = arith.constant 0 : index
    %c0_5 = arith.constant 0 : index
    %c0_6 = arith.constant 0 : index
    %4 = vector.load %arg3[%c0_3, %c0_4, %c0_5, %c0_6] : memref<2x1x4x4xf32, #tpu.memory_space<vmem>>, vector<2x1x4x4xf32>
    %c0_7 = arith.constant 0 : index
    %c0_8 = arith.constant 0 : index
    %5 = vector.load %arg4[%c0_7, %c0_8] : memref<4x128xf32, #tpu.memory_space<vmem>>, vector<4x128xf32>
    %c0_9 = arith.constant 0 : index
    %c0_10 = arith.constant 0 : index
    %6 = vector.load %arg5[%c0_9, %c0_10] : memref<3x128xf32, #tpu.memory_space<vmem>>, vector<3x128xf32>
    %c0_11 = arith.constant 0 : index
    %c0_12 = arith.constant 0 : index
    %c0_13 = arith.constant 0 : index
    %7 = vector.load %arg6[%c0_11, %c0_12, %c0_13] : memref<2x128x128xf32, #tpu.memory_space<vmem>>, vector<1x128x128xf32>
    %8 = vector.shape_cast %7 : vector<1x128x128xf32> to vector<128x128xf32>
    %9 = arith.truncf %8 : vector<128x128xf32> to vector<128x128xbf16>
    %c1 = arith.constant 1 : index
    %c0_14 = arith.constant 0 : index
    %c0_15 = arith.constant 0 : index
    %10 = vector.load %arg6[%c1, %c0_14, %c0_15] : memref<2x128x128xf32, #tpu.memory_space<vmem>>, vector<1x128x128xf32>
    %11 = vector.shape_cast %10 : vector<1x128x128xf32> to vector<128x128xf32>
    %12 = arith.truncf %11 : vector<128x128xf32> to vector<128x128xbf16>
    %13 = vector.shape_cast %4 : vector<2x1x4x4xf32> to vector<2x4x4xf32>
    %14 = vector.extract_strided_slice %13 {offsets = [0, 0, 0], sizes = [2, 4, 1], strides = [1, 1, 1]} : vector<2x4x4xf32> to vector<2x4x1xf32>
    %15 = vector.extract_strided_slice %5 {offsets = [0, 0], sizes = [1, 128], strides = [1, 1]} : vector<4x128xf32> to vector<1x128xf32>
    %16 = vector.shape_cast %15 : vector<1x128xf32> to vector<128xf32>
    %17 = vector.shape_cast %16 : vector<128xf32> to vector<1x1x128xf32>
    %18 = vector.broadcast %14 : vector<2x4x1xf32> to vector<2x4x128xf32>
    %19 = vector.broadcast %17 : vector<1x1x128xf32> to vector<2x4x128xf32>
    %20 = arith.mulf %18, %19 : vector<2x4x128xf32>
    %cst = arith.constant 0.000000e+00 : f32
    %21 = vector.broadcast %cst : f32 to vector<2x4x128xf32>
    %22 = arith.addf %21, %20 : vector<2x4x128xf32>
    %23 = vector.extract_strided_slice %13 {offsets = [0, 0, 1], sizes = [2, 4, 1], strides = [1, 1, 1]} : vector<2x4x4xf32> to vector<2x4x1xf32>
    %24 = vector.extract_strided_slice %5 {offsets = [1, 0], sizes = [1, 128], strides = [1, 1]} : vector<4x128xf32> to vector<1x128xf32>
    %25 = vector.shape_cast %24 : vector<1x128xf32> to vector<128xf32>
    %26 = vector.shape_cast %25 : vector<128xf32> to vector<1x1x128xf32>
    %27 = vector.broadcast %23 : vector<2x4x1xf32> to vector<2x4x128xf32>
    %28 = vector.broadcast %26 : vector<1x1x128xf32> to vector<2x4x128xf32>
    %29 = arith.mulf %27, %28 : vector<2x4x128xf32>
    %30 = arith.addf %22, %29 : vector<2x4x128xf32>
    %31 = vector.extract_strided_slice %13 {offsets = [0, 0, 2], sizes = [2, 4, 1], strides = [1, 1, 1]} : vector<2x4x4xf32> to vector<2x4x1xf32>
    %32 = vector.extract_strided_slice %5 {offsets = [2, 0], sizes = [1, 128], strides = [1, 1]} : vector<4x128xf32> to vector<1x128xf32>
    %33 = vector.shape_cast %32 : vector<1x128xf32> to vector<128xf32>
    %34 = vector.shape_cast %33 : vector<128xf32> to vector<1x1x128xf32>
    %35 = vector.broadcast %31 : vector<2x4x1xf32> to vector<2x4x128xf32>
    %36 = vector.broadcast %34 : vector<1x1x128xf32> to vector<2x4x128xf32>
    %37 = arith.mulf %35, %36 : vector<2x4x128xf32>
    %38 = arith.addf %30, %37 : vector<2x4x128xf32>
    %39 = vector.extract_strided_slice %13 {offsets = [0, 0, 3], sizes = [2, 4, 1], strides = [1, 1, 1]} : vector<2x4x4xf32> to vector<2x4x1xf32>
    %40 = vector.extract_strided_slice %5 {offsets = [3, 0], sizes = [1, 128], strides = [1, 1]} : vector<4x128xf32> to vector<1x128xf32>
    %41 = vector.shape_cast %40 : vector<1x128xf32> to vector<128xf32>
    %42 = vector.shape_cast %41 : vector<128xf32> to vector<1x1x128xf32>
    %43 = vector.broadcast %39 : vector<2x4x1xf32> to vector<2x4x128xf32>
    %44 = vector.broadcast %42 : vector<1x1x128xf32> to vector<2x4x128xf32>
    %45 = arith.mulf %43, %44 : vector<2x4x128xf32>
    %46 = arith.addf %38, %45 : vector<2x4x128xf32>
    %47 = vector.extract_strided_slice %3 {offsets = [0, 0, 0], sizes = [2, 64, 1], strides = [1, 1, 1]} : vector<2x64x4xf32> to vector<2x64x1xf32>
    %48 = vector.extract_strided_slice %46 {offsets = [0, 0, 0], sizes = [2, 1, 128], strides = [1, 1, 1]} : vector<2x4x128xf32> to vector<2x1x128xf32>
    %49 = vector.shape_cast %48 : vector<2x1x128xf32> to vector<2x128xf32>
    %50 = vector.shape_cast %49 : vector<2x128xf32> to vector<2x1x128xf32>
    %51 = vector.broadcast %47 : vector<2x64x1xf32> to vector<2x64x128xf32>
    %52 = vector.broadcast %50 : vector<2x1x128xf32> to vector<2x64x128xf32>
    %53 = arith.mulf %51, %52 : vector<2x64x128xf32>
    %cst_16 = arith.constant 0.000000e+00 : f32
    %54 = vector.broadcast %cst_16 : f32 to vector<2x64x128xf32>
    %55 = arith.addf %54, %53 : vector<2x64x128xf32>
    %56 = vector.extract_strided_slice %3 {offsets = [0, 0, 1], sizes = [2, 64, 1], strides = [1, 1, 1]} : vector<2x64x4xf32> to vector<2x64x1xf32>
    %57 = vector.extract_strided_slice %46 {offsets = [0, 1, 0], sizes = [2, 1, 128], strides = [1, 1, 1]} : vector<2x4x128xf32> to vector<2x1x128xf32>
    %58 = vector.shape_cast %57 : vector<2x1x128xf32> to vector<2x128xf32>
    %59 = vector.shape_cast %58 : vector<2x128xf32> to vector<2x1x128xf32>
    %60 = vector.broadcast %56 : vector<2x64x1xf32> to vector<2x64x128xf32>
    %61 = vector.broadcast %59 : vector<2x1x128xf32> to vector<2x64x128xf32>
    %62 = arith.mulf %60, %61 : vector<2x64x128xf32>
    %63 = arith.addf %55, %62 : vector<2x64x128xf32>
    %64 = vector.extract_strided_slice %3 {offsets = [0, 0, 2], sizes = [2, 64, 1], strides = [1, 1, 1]} : vector<2x64x4xf32> to vector<2x64x1xf32>
    %65 = vector.extract_strided_slice %46 {offsets = [0, 2, 0], sizes = [2, 1, 128], strides = [1, 1, 1]} : vector<2x4x128xf32> to vector<2x1x128xf32>
    %66 = vector.shape_cast %65 : vector<2x1x128xf32> to vector<2x128xf32>
    %67 = vector.shape_cast %66 : vector<2x128xf32> to vector<2x1x128xf32>
    %68 = vector.broadcast %64 : vector<2x64x1xf32> to vector<2x64x128xf32>
    %69 = vector.broadcast %67 : vector<2x1x128xf32> to vector<2x64x128xf32>
    %70 = arith.mulf %68, %69 : vector<2x64x128xf32>
    %71 = arith.addf %63, %70 : vector<2x64x128xf32>
    %72 = vector.extract_strided_slice %3 {offsets = [0, 0, 3], sizes = [2, 64, 1], strides = [1, 1, 1]} : vector<2x64x4xf32> to vector<2x64x1xf32>
    %73 = vector.extract_strided_slice %46 {offsets = [0, 3, 0], sizes = [2, 1, 128], strides = [1, 1, 1]} : vector<2x4x128xf32> to vector<2x1x128xf32>
    %74 = vector.shape_cast %73 : vector<2x1x128xf32> to vector<2x128xf32>
    %75 = vector.shape_cast %74 : vector<2x128xf32> to vector<2x1x128xf32>
    %76 = vector.broadcast %72 : vector<2x64x1xf32> to vector<2x64x128xf32>
    %77 = vector.broadcast %75 : vector<2x1x128xf32> to vector<2x64x128xf32>
    %78 = arith.mulf %76, %77 : vector<2x64x128xf32>
    %79 = arith.addf %71, %78 : vector<2x64x128xf32>
    %80 = vector.extract_strided_slice %6 {offsets = [0, 0], sizes = [1, 128], strides = [1, 1]} : vector<3x128xf32> to vector<1x128xf32>
    %81 = vector.shape_cast %80 : vector<1x128xf32> to vector<128xf32>
    %82 = vector.shape_cast %81 : vector<128xf32> to vector<1x1x128xf32>
    %83 = vector.broadcast %82 : vector<1x1x128xf32> to vector<2x64x128xf32>
    %84 = arith.addf %79, %83 : vector<2x64x128xf32>
    %cst_17 = arith.constant 0.000000e+00 : f32
    %85 = vector.broadcast %cst_17 : f32 to vector<2x64x128xf32>
    %86 = arith.maximumf %84, %85 : vector<2x64x128xf32>
    %87 = vector.shape_cast %86 : vector<2x64x128xf32> to vector<128x128xf32>
    %88 = arith.truncf %87 : vector<128x128xf32> to vector<128x128xbf16>
    %cst_18 = arith.constant dense<0.000000e+00> : vector<128x128xf32>
    %89 = tpu.matmul %88, %9, %cst_18 {dimension_numbers = #tpu.dot_dimension_numbers<[1], [0], [0], [1], [0, 0, 1, 1], [], []>} : vector<128x128xbf16>, vector<128x128xbf16>, vector<128x128xf32> -> vector<128x128xf32>
    %90 = vector.extract_strided_slice %6 {offsets = [1, 0], sizes = [1, 128], strides = [1, 1]} : vector<3x128xf32> to vector<1x128xf32>
    %91 = vector.shape_cast %90 : vector<1x128xf32> to vector<128xf32>
    %92 = vector.shape_cast %91 : vector<128xf32> to vector<1x128xf32>
    %93 = vector.broadcast %92 : vector<1x128xf32> to vector<128x128xf32>
    %94 = arith.addf %89, %93 : vector<128x128xf32>
    %cst_19 = arith.constant 0.000000e+00 : f32
    %95 = vector.broadcast %cst_19 : f32 to vector<128x128xf32>
    %96 = arith.maximumf %94, %95 : vector<128x128xf32>
    %97 = arith.truncf %96 : vector<128x128xf32> to vector<128x128xbf16>
    %cst_20 = arith.constant dense<0.000000e+00> : vector<128x128xf32>
    %98 = tpu.matmul %97, %12, %cst_20 {dimension_numbers = #tpu.dot_dimension_numbers<[1], [0], [0], [1], [0, 0, 1, 1], [], []>} : vector<128x128xbf16>, vector<128x128xbf16>, vector<128x128xf32> -> vector<128x128xf32>
    %99 = vector.extract_strided_slice %6 {offsets = [2, 0], sizes = [1, 128], strides = [1, 1]} : vector<3x128xf32> to vector<1x128xf32>
    %100 = vector.shape_cast %99 : vector<1x128xf32> to vector<128xf32>
    %101 = vector.shape_cast %100 : vector<128xf32> to vector<1x128xf32>
    %102 = vector.broadcast %101 : vector<1x128xf32> to vector<128x128xf32>
    %103 = arith.addf %98, %102 : vector<128x128xf32>
    %cst_21 = arith.constant 0.000000e+00 : f32
    %104 = vector.broadcast %cst_21 : f32 to vector<128x128xf32>
    %105 = arith.maximumf %103, %104 : vector<128x128xf32>
    %106 = vector.shape_cast %105 : vector<128x128xf32> to vector<2x64x128xf32>
    %cst_22 = arith.constant dense<0xFF800000> : vector<2x128xf32>
    %107 = vector.multi_reduction <maximumf>, %106, %cst_22 [1] : vector<2x64x128xf32> to vector<2x128xf32>
    %c0_23 = arith.constant 0 : index
    %c0_24 = arith.constant 0 : index
    %c0_25 = arith.constant 0 : index
    %108 = vector.load %arg7[%c0_23, %c0_24, %c0_25] : memref<2x1x128xf32, #tpu.memory_space<vmem>>, vector<2x1x128xf32>
    %109 = vector.shape_cast %107 : vector<2x128xf32> to vector<2x1x128xf32>
    %110 = arith.maximumf %108, %109 : vector<2x1x128xf32>
    %c0_26 = arith.constant 0 : index
    %c0_27 = arith.constant 0 : index
    %c0_28 = arith.constant 0 : index
    %111 = vector.load %arg7[%c0_26, %c0_27, %c0_28] : memref<2x1x128xf32, #tpu.memory_space<vmem>>, vector<2x1x128xf32>
    tpu.vector_store %arg7[%c0_26, %c0_27, %c0_28], %110 {strides = array<i32>} : memref<2x1x128xf32, #tpu.memory_space<vmem>>, vector<2x1x128xf32>,
    return
  }
  func.func @transform_0(%arg0: i32, %arg1: i32) -> (i32, i32, i32) {
    %c0_i32 = arith.constant 0 : i32
    %c0_i32_0 = arith.constant 0 : i32
    return %arg0, %arg1, %c0_i32 : i32, i32, i32
  }
  func.func @transform_1(%arg0: i32, %arg1: i32) -> (i32, i32, i32, i32) {
    %c0_i32 = arith.constant 0 : i32
    %c0_i32_0 = arith.constant 0 : i32
    %c0_i32_1 = arith.constant 0 : i32
    %c0_i32_2 = arith.constant 0 : i32
    return %arg0, %c0_i32, %c0_i32_0, %c0_i32_1 : i32, i32, i32, i32
  }
  func.func @transform_2(%arg0: i32, %arg1: i32) -> (i32, i32) {
    %c0_i32 = arith.constant 0 : i32
    %c0_i32_0 = arith.constant 0 : i32
    %c0_i32_1 = arith.constant 0 : i32
    return %c0_i32, %c0_i32_0 : i32, i32
  }
  func.func @transform_3(%arg0: i32, %arg1: i32) -> (i32, i32) {
    %c0_i32 = arith.constant 0 : i32
    %c0_i32_0 = arith.constant 0 : i32
    %c0_i32_1 = arith.constant 0 : i32
    return %c0_i32, %c0_i32_0 : i32, i32
  }
  func.func @transform_4(%arg0: i32, %arg1: i32) -> (i32, i32, i32) {
    %c0_i32 = arith.constant 0 : i32
    %c0_i32_0 = arith.constant 0 : i32
    %c0_i32_1 = arith.constant 0 : i32
    %c0_i32_2 = arith.constant 0 : i32
    return %c0_i32, %c0_i32_0, %c0_i32_1 : i32, i32, i32
  }
  func.func @transform_5(%arg0: i32, %arg1: i32) -> (i32, i32, i32) {
    %c0_i32 = arith.constant 0 : i32
    %c0_i32_0 = arith.constant 0 : i32
    %c0_i32_1 = arith.constant 0 : i32
    return %arg0, %c0_i32, %c0_i32_0 : i32, i32, i32
  }
}

</mosaic_0001>

<llo_original>
// kernel: custom-call.11
$region0: #{custom-call.11}
  %s0 = inlined_call_operand.vmem [shape: f32[2,6,6], index: 0, kind: input, shape index: {}]
  %s1 = inlined_call_operand.vmem [shape: f32[2,6,6], index: 1, kind: output, shape index: {0}]
  %s2 = inlined_call_operand.hbm [shape: s32[2,6], index: 2, kind: output, shape index: {1}]
  %s3 = inlined_call_operand.vmem [shape: s32[2,6], index: 3, kind: output, shape index: {2}]
  %4 = xla_tuple %s1, %s2, %s3
  $region1: #{custom-call.11} parent=0
    #allocation0 [shape = 'u8[8192]{0}', space=vmem, size = 0x2000, scoped, tag = 'operand span for operand 0']
    #allocation1 [shape = 'u8[8192]{0}', space=vmem, size = 0x2000, scoped, tag = 'operand span for operand 1']
    #allocation2 [shape = 'u8[4096]{0}', space=vmem, size = 0x1000, scoped, tag = 'operand span for operand 2']
    #allocation3 [shape = 'u8[2048]{0}', space=vmem, size = 0x800, scoped, tag = 'packed  for operand 2']
    #allocation4 [shape = 's32[2]{0}', space=sflag, size = 0x8, scoped, tag = 'scoped memory for custom-call.11']
    #allocation5 [shape = 'u8[4096]{0}', space=vmem, size = 0x1000, scoped, tag = 'operand span for operand 3']
    #allocation6 [shape = 'u8[2048]{0}', space=vmem, size = 0x800, scoped, tag = 'packed  for operand 3']
    %5 = vsyncpa [#allocation4], 0
    %s6 = scalar_lea.sflag [#allocation4], 1
    %7 = vsyncpa %s6, 0
    loop: start=0, step=1, limit=4
    $region2: #{custom-call.11} parent=1 // loop_pre_header
      _
    $region3: #{custom-call.11} parent=1 // loop_header
      %s9 = sphi 0, %s13
      %p10 = scmp.ge.s32.totalorder %s9, 4
      %s21 = sphi 0, %s23
      %s24 = sphi 0, %s21
      %s25 = sphi 0, %s24
      %s41 = sphi 0, %s25
      %s49 = sphi 0, %s51
      %s52 = sphi 0, %s49
      %s53 = sphi 0, %s52
      %s69 = sphi 0, %s53
    $region4: #{custom-call.11} parent=1 // loop_header_branch
      %12 = sbr.rel (%p10) target = $region8
    $region5: #{custom-call.11} parent=1 // loop_body
      %s14 = ssub.s32 %s9, 1
      %s15 = ssub.s32 %s9, 2
      %s16 = sadd.s32 %s9, 1
      %s17 = sshrl.u32 %s9, 3
      %s18 = sshrl.u32 %s16, 3
      %s19 = ssub.s32 %s17, %s18
      %p20 = scmp.eq.s32.totalorder %s19, 0
      %s22 = sadd.s32 %s21, 1
      %s23 = scalar_select %p20, %s21, %s22
      %p26 = pneg %p20
      %p27 = scmp.eq.s32.totalorder %s9, 1
      %p28 = por %p26, %p27
      %p29 = scmp.ne.s32.totalorder %s21, %s24
      %p30 = scmp.eq.s32.totalorder %s9, 0
      %p31 = por %p29, %p30
      %p32 = scmp.ne.s32.totalorder %s21, %s24
      %p33 = scmp.eq.s32.totalorder %s14, 1
      %p34 = por %p32, %p33
      %p35 = scmp.ne.s32.totalorder %s24, %s25
      %p36 = scmp.eq.s32.totalorder %s14, 0
      %p37 = por %p35, %p36
      %p38 = scmp.ne.s32.totalorder %s24, %s25
      %p39 = scmp.eq.s32.totalorder %s15, 1
      %p40 = por %p38, %p39
      %p42 = scmp.ne.s32.totalorder %s25, %s41
      %p43 = scmp.eq.s32.totalorder %s15, 0
      %p44 = por %p42, %p43
      %s45 = sshrl.u32 %s9, 3
      %s46 = sshrl.u32 %s16, 3
      %s47 = ssub.s32 %s45, %s46
      %p48 = scmp.eq.s32.totalorder %s47, 0
      %s50 = sadd.s32 %s49, 1
      %s51 = scalar_select %p48, %s49, %s50
      %p54 = pneg %p48
      %p55 = scmp.eq.s32.totalorder %s9, 1
      %p56 = por %p54, %p55
      %p57 = scmp.ne.s32.totalorder %s49, %s52
      %p58 = scmp.eq.s32.totalorder %s9, 0
      %p59 = por %p57, %p58
      %p60 = scmp.ne.s32.totalorder %s49, %s52
      %p61 = scmp.eq.s32.totalorder %s14, 1
      %p62 = por %p60, %p61
      %p63 = scmp.ne.s32.totalorder %s52, %s53
      %p64 = scmp.eq.s32.totalorder %s14, 0
      %p65 = por %p63, %p64
      %p66 = scmp.ne.s32.totalorder %s52, %s53
      %p67 = scmp.eq.s32.totalorder %s15, 1
      %p68 = por %p66, %p67
      %p70 = scmp.ne.s32.totalorder %s53, %s69
      %p71 = scmp.eq.s32.totalorder %s15, 0
      %p72 = por %p70, %p71
      %p73 = scmp.le.s32.totalorder 1, %s9
      %p74 = scmp.lt.s32.totalorder %s9, 3
      %p75 = pnand %p73, %p74
      %p76 = pneg %p75
      // Predicated region
      $region9: #{custom-call.11} parent=5 // pred_check
        _
      $region10: #{custom-call.11} parent=5 // pred_check_branch
        %78 = sbr.rel (%p75) target = $region12
      $region11: #{custom-call.11} parent=5 // pred_region
        %s79 = ssub.s32 %s9, 1
      $region12: #{custom-call.11} parent=5 // pred_fallthru
        _
      %p80 = scmp.lt.s32.totalorder %s9, 2
      // Predicated region
      $region13: #{custom-call.11} parent=5 // pred_check
        %p81 = pneg %p80
      $region14: #{custom-call.11} parent=5 // pred_check_branch
        %83 = sbr.rel (%p81) target = $region16
      $region15: #{custom-call.11} parent=5 // pred_region
        %s84 = sand.u32 %s9, 1
        %s85 = sand.u32 %s9, 1
        %s86 = smul.addr %s85, 8
        %s87 = scalar_lea.vmem [#allocation0], %s86
        %s88 = smul.addr %s9, 8
        %s89 = scalar_lea.vmem %s0, %s88
        // Predicated region
        $region17: #{custom-call.11} parent=15 // pred_check
          _
        $region18: #{custom-call.11} parent=15 // pred_check_branch
          %91 = sbr.rel (0) target = $region20
        $region19: #{custom-call.11} parent=15 // pred_region
          // Predicated region
          $region21: #{custom-call.11} parent=19 // pred_check
            _
          $region22: #{custom-call.11} parent=19 // pred_check_branch
            %93 = sbr.rel (0) target = $region24
          $region23: #{custom-call.11} parent=19 // pred_region
            // Predicated region
            $region36: #{custom-call.11} parent=23 // pred_check
              _
            $region37: #{custom-call.11} parent=23 // pred_check_branch
              %108 = sbr.rel (0) target = $region39
            $region38: #{custom-call.11} parent=23 // pred_region
              loop: start=0, step=1, limit=1
              $region40: #{custom-call.11} parent=38 // loop_pre_header
                _
              $region41: #{custom-call.11} parent=38 // loop_header
                %s110 = sphi 0, %s114
                %p111 = scmp.ge.s32.totalorder %s110, 1
                %s115 = sphi %s89, %s89
                %s116 = sphi %s87, %s87
              $region42: #{custom-call.11} parent=38 // loop_header_branch
                %113 = sbr.rel (%p111) target = $region46
              $region43: #{custom-call.11} parent=38 // loop_body
                %v117 = vld [vmem:[%s115] sm:$0xff]
                %118 = vst [vmem:[%s116] sm:$0xff] %v117
              $region44: #{custom-call.11} parent=38 // loop_footer
                %s114 = sadd.s32 1, %s110
              $region45: #{custom-call.11} parent=38 // loop_footer_branch
                %109 = sbr.rel target = $region41
              $region46: #{custom-call.11} parent=38 // loop_exit
                _
            $region39: #{custom-call.11} parent=23 // pred_fallthru
              _
            // Predicated region
            $region47: #{custom-call.11} parent=23 // pred_check
              _
            $region48: #{custom-call.11} parent=23 // pred_check_branch
              %120 = sbr.rel target = $region50
            $region49: #{custom-call.11} parent=23 // pred_region
              _
            $region50: #{custom-call.11} parent=23 // pred_fallthru
              _
          $region24: #{custom-call.11} parent=19 // pred_fallthru
            _
          // Predicated region
          $region25: #{custom-call.11} parent=19 // pred_check
            _
          $region26: #{custom-call.11} parent=19 // pred_check_branch
            %95 = sbr.rel target = $region28
          $region27: #{custom-call.11} parent=19 // pred_region
            loop: start=0, step=1, limit=1
            $region29: #{custom-call.11} parent=27 // loop_pre_header
              _
            $region30: #{custom-call.11} parent=27 // loop_header
              %s98 = sphi 0, %s102
              %p99 = scmp.ge.s32.totalorder %s98, 1
              %s103 = sphi %s89, %s89
              %s104 = sphi %s87, %s87
            $region31: #{custom-call.11} parent=27 // loop_header_branch
              %101 = sbr.rel (%p99) target = $region35
            $region32: #{custom-call.11} parent=27 // loop_body
              %v105 = vld [vmem:[%s103] sm:$0xff]
              %106 = vst [vmem:[%s104] sm:$0xff] %v105
            $region33: #{custom-call.11} parent=27 // loop_footer
              %s102 = sadd.s32 1, %s98
            $region34: #{custom-call.11} parent=27 // loop_footer_branch
              %97 = sbr.rel target = $region30
            $region35: #{custom-call.11} parent=27 // loop_exit
              _
          $region28: #{custom-call.11} parent=19 // pred_fallthru
            _
        $region20: #{custom-call.11} parent=15 // pred_fallthru
          _
        %121 = vnop
      $region16: #{custom-call.11} parent=5 // pred_fallthru
        _
      %p122 = scmp.le.s32.totalorder 1, %s9
      %p123 = scmp.lt.s32.totalorder %s9, 3
      %p124 = pnand %p122, %p123
      %p125 = pneg %p124
      // Predicated region
      $region51: #{custom-call.11} parent=5 // pred_check
        _
      $region52: #{custom-call.11} parent=5 // pred_check_branch
        %127 = sbr.rel (%p124) target = $region54
      $region53: #{custom-call.11} parent=5 // pred_region
        #allocation7 [shape = 's32[6,128]{1,0}', space=vmem, size = 0x1000, scoped, tag = 'scratch for permutations']
        %s128 = ssub.s32 %s9, 1
        %s129 = sand.u32 %s14, 1
        %s130 = sand.u32 %s14, 1
        %s131 = smul.addr %s130, 8
        %s132 = scalar_lea.vmem [#allocation0], %s131
        %s133 = sand.u32 %s14, 1
        %s134 = sand.u32 %s14, 1
        %s135 = smul.addr %s134, 8
        %s136 = scalar_lea.vmem [#allocation0], %s135
        %s137 = sand.u32 %s14, 1
        %s138 = sand.u32 %s14, 1
        %s139 = smul.addr %s138, 8
        %s140 = scalar_lea.vmem [#allocation1], %s139
        %p141 = pneg %p37
        %p142 = pneg %p34
        %s143 = sand.u32 %s24, 1
        %s144 = scalar_lea.sflag [#allocation4], %s143
        %s145 = sand.u32 %s24, 1
        %s146 = smul.addr %s145, 2
        %s147 = scalar_lea.vmem [#allocation3], %s146
        %p148 = pneg %p65
        %p149 = pneg %p62
        %s150 = sand.u32 %s52, 1
        %s151 = sand.u32 %s52, 1
        %s152 = smul.addr %s151, 2
        %s153 = scalar_lea.vmem [#allocation6], %s152
        %s154 = sshrl.u32 %s14, 3
        %s155 = sshrl.u32 %s14, 3
        %v156 = vld [vmem:[%s132] sm:$0xff]
        %157 = vst [vmem:[%s140] sm:$0xff] %v156
        %s158 = sand.u32 %s14, 7
        %s159 = scalar_lea.vmem [#allocation2], %s158
        %s160 = sand.u32 %s14, 7
        %s161 = scalar_lea.vmem [#allocation5], %s160
        %162 = vst [vmem:[%s159] sm:$0x1] 0
        %v163 = vlaneseq
        %v164 = vshrl.u32 %v163, 7
        %v165 = vmov %v164
        %167 = vst [vmem:[#allocation7] sm:$0xff] %v165
        loop: start=0, step=1, limit=6
        $region56: #{custom-call.11} parent=53 // loop_pre_header
          _
        $region57: #{custom-call.11} parent=53 // loop_header
          %s169 = sphi 0, %s173
          %p170 = scmp.ge.s32.totalorder %s169, 6
        $region58: #{custom-call.11} parent=53 // loop_header_branch
          %172 = sbr.rel (%p170) target = $region62
        $region59: #{custom-call.11} parent=53 // loop_body
          %v174 = vstv %s169
          %v175 = vlaneseq
          %v176 = vshrl.u32 %v175, 7
          %v177 = vmov %v176
          %v178 = vld [vmem:[%s140] sm:$0xff]
          %v179 = vand.u32 2147483647, %v178
          %v181 = vstv %s169
          %vm182 = vcmp.ge.s32.totalorder %v177, %v181
          %vm183 = vcmp.lt.s32.totalorder %v177, 6
          %vm184 = vmand %vm182, %vm183
          %vm185 = vcmp.lt.f32.partialorder -inf, %v179
          %vm186 = vmand %vm184, %vm185
          %v187 = vsel %vm186, %v177, %v174
          %v188 = vsel %vm186, %v179, -inf
          %v189 = vrot.slane %v188, 1
          %v190 = vrot.slane %v187, 1
          %vm191 = vcmp.ge.f32.partialorder %v189, %v188
          %v192 = vsel %vm191, %v189, %v188
          %v193 = vsel %vm191, %v190, %v187
          %v194 = vrot.slane %v189, 1
          %v195 = vrot.slane %v190, 1
          %vm196 = vcmp.ge.f32.partialorder %v194, %v192
          %v197 = vsel %vm196, %v194, %v192
          %v198 = vsel %vm196, %v195, %v193
          %v199 = vrot.slane %v194, 1
          %v200 = vrot.slane %v195, 1
          %vm201 = vcmp.ge.f32.partialorder %v199, %v197
          %v202 = vsel %vm201, %v199, %v197
          %v203 = vsel %vm201, %v200, %v198
          %v204 = vrot.slane %v199, 1
          %v205 = vrot.slane %v200, 1
          %vm206 = vcmp.ge.f32.partialorder %v204, %v202
          %v207 = vsel %vm206, %v204, %v202
          %v208 = vsel %vm206, %v205, %v203
          %v209 = vrot.slane %v204, 1
          %v210 = vrot.slane %v205, 1
          %vm211 = vcmp.ge.f32.partialorder %v209, %v207
          %v212 = vsel %vm211, %v209, %v207
          %v213 = vsel %vm211, %v210, %v208
          %v214 = vrot.slane %v209, 1
          %v215 = vrot.slane %v210, 1
          %vm216 = vcmp.ge.f32.partialorder %v214, %v212
          %v217 = vsel %vm216, %v214, %v212
          %v218 = vsel %vm216, %v215, %v213
          %v219 = vrot.slane %v214, 1
          %v220 = vrot.slane %v215, 1
          %vm221 = vcmp.ge.f32.partialorder %v219, %v217
          %v222 = vsel %vm221, %v219, %v217
          %v223 = vsel %vm221, %v220, %v218
          %s224 = ssub.s32 128, %s169
          %225 = vrot.lane.b32.xlu0 %v223, %s224
          %v226 = vpop.permute.xlu0 %225
          %s227 = vtos %v226
          %v228 = vstv %s169
          %v229 = vlaneseq
          %v230 = vand.u32 %v229, 127
          %vm231 = vcmp.eq.s32.totalorder %v230, %v228
          %v232 = vstv %s227
          %v233 = vld [vmem:[%s159] ss:$0 sm:$0xff]
          %v234 = vsel %vm231, %v232, %v233
          %235 = vst [vmem:[%s159] sm:$0x1] %v234
          %s236 = scalar_lea.vmem %s140, %s169 [#allocation1]
          %s237 = scalar_lea.vmem %s140, %s227 [#allocation1]
          %v238 = vld [vmem:[%s236] ss:$0 sm:$0xff]
          %v239 = vld [vmem:[%s237] ss:$0 sm:$0xff]
          %240 = vst [vmem:[%s237] sm:$0x1] %v238
          %241 = vst [vmem:[%s236] sm:$0x1] %v239
          %s242 = scalar_lea.vmem [#allocation7], %s169
          %s243 = scalar_lea.vmem [#allocation7], %s227
          %v244 = vld [vmem:[%s242] ss:$0 sm:$0xff]
          %v245 = vld [vmem:[%s243] ss:$0 sm:$0xff]
          %246 = vst [vmem:[%s243] sm:$0x1] %v244
          %247 = vst [vmem:[%s242] sm:$0x1] %v245
          %vm248 = vcmp.ne.f32.partialorder %v239, 0.0
          %vm249 = vmand %vm231, %vm248
          %v250 = vsel %vm249, %v239, 1.0
          %v251 = vlaneseq
          %v252 = vand.u32 %v251, 127
          %v253 = vstv %s169
          %vm254 = vcmp.gt.s32.totalorder %v252, %v253
          %v255 = vsel %vm254, %v239, 0.0
          %v256 = vlaneseq
          %v257 = vshrl.u32 %v256, 7
          %v258 = vmov %v257
          %v259 = vld [vmem:[%s140] sm:$0xff]
          %v261 = vstv %s169
          %vm262 = vcmp.gt.s32.totalorder %v258, %v261
          %v263 = vsel %vm262, %v250, 1.0
          %v264 = vrcp.pop %v263
          %v265 = vmul.f32 %v259, %v264
          %vm266 = vmand %vm262, %vm231
          %v267 = vsel %vm266, %v265, 0.0
          %268 = vadd.xlane.f32.xlu0 %v267
          %v269 = vpop.xlane.xlu0 %268
          %v270 = vmul.f32 %v269, %v255
          %v271 = vsub.f32 %v265, %v270
          %272 = vst [vmem:[%s140] sm:$0xff] %v271
        $region60: #{custom-call.11} parent=53 // loop_footer
          %s173 = sadd.s32 1, %s169
        $region61: #{custom-call.11} parent=53 // loop_footer_branch
          %168 = sbr.rel target = $region57
        $region62: #{custom-call.11} parent=53 // loop_exit
          _
        %v273 = vld [vmem:[#allocation7] sm:$0xff]
        %s274 = scalar_lea.vmem [#allocation7], 8
        %s275 = scalar_lea.vmem [#allocation7], 16
        %s276 = scalar_lea.vmem [#allocation7], 24
        %s277 = scalar_lea.vmem [#allocation7], 32
        %s278 = scalar_lea.vmem [#allocation7], 40
        %s279 = scalar_lea.vmem [#allocation7], 48
        %s280 = scalar_lea.vmem [#allocation7], 56
        %s281 = scalar_lea.vmem [#allocation7], 64
        %s282 = scalar_lea.vmem [#allocation7], 72
        %s283 = scalar_lea.vmem [#allocation7], 80
        %s284 = scalar_lea.vmem [#allocation7], 88
        %s285 = scalar_lea.vmem [#allocation7], 96
        %s286 = scalar_lea.vmem [#allocation7], 104
        %s287 = scalar_lea.vmem [#allocation7], 112
        %s288 = scalar_lea.vmem [#allocation7], 120
        %289 = vxpose.xlu0.b32.start [1/16] %v273, 128
        %290 = vxpose.xlu0.b32.cont [2/16] 0, 128
        %291 = vxpose.xlu0.b32.cont [3/16] 0, 128
        %292 = vxpose.xlu0.b32.cont [4/16] 0, 128
        %293 = vxpose.xlu0.b32.cont [5/16] 0, 128
        %294 = vxpose.xlu0.b32.cont [6/16] 0, 128
        %295 = vxpose.xlu0.b32.cont [7/16] 0, 128
        %296 = vxpose.xlu0.b32.cont [8/16] 0, 128
        %297 = vxpose.xlu0.b32.cont [9/16] 0, 128
        %298 = vxpose.xlu0.b32.cont [10/16] 0, 128
        %299 = vxpose.xlu0.b32.cont [11/16] 0, 128
        %300 = vxpose.xlu0.b32.cont [12/16] 0, 128
        %301 = vxpose.xlu0.b32.cont [13/16] 0, 128
        %302 = vxpose.xlu0.b32.cont [14/16] 0, 128
        %303 = vxpose.xlu0.b32.cont [15/16] 0, 128
        %304 = vxpose.xlu0.b32.end [16/16] 0, 128
        %v305 = vpop.trf.xlu0
        %v306 = vpop.trf.xlu0
        %v307 = vpop.trf.xlu0
        %v308 = vpop.trf.xlu0
        %v309 = vpop.trf.xlu0
        %v310 = vpop.trf.xlu0
        %v311 = vpop.trf.xlu0
        %v312 = vpop.trf.xlu0
        %v313 = vpop.trf.xlu0
        %v314 = vpop.trf.xlu0
        %v315 = vpop.trf.xlu0
        %v316 = vpop.trf.xlu0
        %v317 = vpop.trf.xlu0
        %v318 = vpop.trf.xlu0
        %v319 = vpop.trf.xlu0
        %v320 = vpop.trf.xlu0
        %321 = vst [vmem:[%s161] sm:$0x1] %v305
        %s323 = sshllo.u32 0, 2
        %v325 = vld [vmem:[#allocation2] sm:%s323]
        %s326 = sshllo.u32 0, 2
        %327 = vst [vmem:[%s147] sm:%s326] %v325
        %s329 = sshllo.u32 0, 2
        %v331 = vld [vmem:[#allocation5] sm:%s329]
        %s332 = sshllo.u32 0, 2
        %333 = vst [vmem:[%s153] sm:%s332] %v331
        %s334 = sand.u32 %s14, 1
        %s335 = sand.u32 %s14, 1
        %s336 = smul.addr %s335, 8
        %s337 = scalar_lea.vmem [#allocation1], %s336
        %s338 = sand.u32 %s24, 1
        %s339 = scalar_lea.sflag [#allocation4], %s338
        %s340 = sand.u32 %s24, 1
        %s341 = smul.addr %s340, 2
        %s342 = scalar_lea.vmem [#allocation3], %s341
        %s343 = sand.u32 %s52, 1
        %s344 = sand.u32 %s52, 1
        %s345 = smul.addr %s344, 2
        %s346 = scalar_lea.vmem [#allocation6], %s345
        %s347 = smul.addr %s14, 8
        %s348 = scalar_lea.vmem %s1, %s347
        // Predicated region
        $region63: #{custom-call.11} parent=53 // pred_check
          _
        $region64: #{custom-call.11} parent=53 // pred_check_branch
          %350 = sbr.rel (0) target = $region66
        $region65: #{custom-call.11} parent=53 // pred_region
          // Predicated region
          $region67: #{custom-call.11} parent=65 // pred_check
            _
          $region68: #{custom-call.11} parent=65 // pred_check_branch
            %352 = sbr.rel (0) target = $region70
          $region69: #{custom-call.11} parent=65 // pred_region
            // Predicated region
            $region82: #{custom-call.11} parent=69 // pred_check
              _
            $region83: #{custom-call.11} parent=69 // pred_check_branch
              %367 = sbr.rel (0) target = $region85
            $region84: #{custom-call.11} parent=69 // pred_region
              loop: start=0, step=1, limit=1
              $region86: #{custom-call.11} parent=84 // loop_pre_header
                _
              $region87: #{custom-call.11} parent=84 // loop_header
                %s369 = sphi 0, %s373
                %p370 = scmp.ge.s32.totalorder %s369, 1
                %s374 = sphi %s337, %s337
                %s375 = sphi %s348, %s348
              $region88: #{custom-call.11} parent=84 // loop_header_branch
                %372 = sbr.rel (%p370) target = $region92
              $region89: #{custom-call.11} parent=84 // loop_body
                %v376 = vld [vmem:[%s374] sm:$0xff]
                %377 = vst [vmem:[%s375] sm:$0xff] %v376
              $region90: #{custom-call.11} parent=84 // loop_footer
                %s373 = sadd.s32 1, %s369
              $region91: #{custom-call.11} parent=84 // loop_footer_branch
                %368 = sbr.rel target = $region87
              $region92: #{custom-call.11} parent=84 // loop_exit
                _
            $region85: #{custom-call.11} parent=69 // pred_fallthru
              _
            // Predicated region
            $region93: #{custom-call.11} parent=69 // pred_check
              _
            $region94: #{custom-call.11} parent=69 // pred_check_branch
              %379 = sbr.rel target = $region96
            $region95: #{custom-call.11} parent=69 // pred_region
              _
            $region96: #{custom-call.11} parent=69 // pred_fallthru
              _
          $region70: #{custom-call.11} parent=65 // pred_fallthru
            _
          // Predicated region
          $region71: #{custom-call.11} parent=65 // pred_check
            _
          $region72: #{custom-call.11} parent=65 // pred_check_branch
            %354 = sbr.rel target = $region74
          $region73: #{custom-call.11} parent=65 // pred_region
            loop: start=0, step=1, limit=1
            $region75: #{custom-call.11} parent=73 // loop_pre_header
              _
            $region76: #{custom-call.11} parent=73 // loop_header
              %s357 = sphi 0, %s361
              %p358 = scmp.ge.s32.totalorder %s357, 1
              %s362 = sphi %s337, %s337
              %s363 = sphi %s348, %s348
            $region77: #{custom-call.11} parent=73 // loop_header_branch
              %360 = sbr.rel (%p358) target = $region81
            $region78: #{custom-call.11} parent=73 // loop_body
              %v364 = vld [vmem:[%s362] sm:$0xff]
              %365 = vst [vmem:[%s363] sm:$0xff] %v364
            $region79: #{custom-call.11} parent=73 // loop_footer
              %s361 = sadd.s32 1, %s357
            $region80: #{custom-call.11} parent=73 // loop_footer_branch
              %356 = sbr.rel target = $region76
            $region81: #{custom-call.11} parent=73 // loop_exit
              _
          $region74: #{custom-call.11} parent=65 // pred_fallthru
            _
        $region66: #{custom-call.11} parent=53 // pred_fallthru
          _
        %380 = vnop
        // Predicated region
        $region97: #{custom-call.11} parent=53 // pred_check
          %p381 = pneg %p34
        $region98: #{custom-call.11} parent=53 // pred_check_branch
          %383 = sbr.rel (%p381) target = $region100
        $region99: #{custom-call.11} parent=53 // pred_region
          %s384 = sshrl.u32 %s14, 3
          %s386 = ssub.s32 32, 32
          %387 = vsyncadd %s339, %s386
          %s388 = smul.addr %s384, 32
          %s389 = scalar_lea.hbm %s2, %s388
          %s391 = sshll.u32 %s342, 4
          %s392 = int_to_ptr.vmem [resolvable:$true] %s391
          %394 = dma.vmem_to_hbm [thread:$0]  %s392, 32, %s389, %s339
        $region100: #{custom-call.11} parent=53 // pred_fallthru
          _
        // Predicated region
        $region101: #{custom-call.11} parent=53 // pred_check
          %p395 = pneg %p62
        $region102: #{custom-call.11} parent=53 // pred_check_branch
          %397 = sbr.rel (%p395) target = $region104
        $region103: #{custom-call.11} parent=53 // pred_region
          %s398 = sshrl.u32 %s14, 3
          %s399 = smul.addr %s398, 2
          %s400 = scalar_lea.vmem %s3, %s399
          // Predicated region
          $region105: #{custom-call.11} parent=103 // pred_check
            _
          $region106: #{custom-call.11} parent=103 // pred_check_branch
            %402 = sbr.rel (0) target = $region108
          $region107: #{custom-call.11} parent=103 // pred_region
            // Predicated region
            $region109: #{custom-call.11} parent=107 // pred_check
              _
            $region110: #{custom-call.11} parent=107 // pred_check_branch
              %404 = sbr.rel target = $region112
            $region111: #{custom-call.11} parent=107 // pred_region
              // Predicated region
              $region124: #{custom-call.11} parent=111 // pred_check
                _
              $region125: #{custom-call.11} parent=111 // pred_check_branch
                %419 = sbr.rel (0) target = $region127
              $region126: #{custom-call.11} parent=111 // pred_region
                loop: start=0, step=1, limit=1
                $region128: #{custom-call.11} parent=126 // loop_pre_header
                  _
                $region129: #{custom-call.11} parent=126 // loop_header
                  %s422 = sphi 0, %s426
                  %p423 = scmp.ge.s32.totalorder %s422, 1
                  %s427 = sphi %s346, %s346
                  %s428 = sphi %s400, %s400
                $region130: #{custom-call.11} parent=126 // loop_header_branch
                  %425 = sbr.rel (%p423) target = $region134
                $region131: #{custom-call.11} parent=126 // loop_body
                  %v429 = vld [vmem:[%s427] sm:$0x3]
                  %430 = vst [vmem:[%s428] sm:$0x3] %v429
                $region132: #{custom-call.11} parent=126 // loop_footer
                  %s426 = sadd.s32 1, %s422
                $region133: #{custom-call.11} parent=126 // loop_footer_branch
                  %421 = sbr.rel target = $region129
                $region134: #{custom-call.11} parent=126 // loop_exit
                  _
              $region127: #{custom-call.11} parent=111 // pred_fallthru
                _
            $region112: #{custom-call.11} parent=107 // pred_fallthru
              _
            // Predicated region
            $region113: #{custom-call.11} parent=107 // pred_check
              _
            $region114: #{custom-call.11} parent=107 // pred_check_branch
              %406 = sbr.rel (0) target = $region116
            $region115: #{custom-call.11} parent=107 // pred_region
              loop: start=0, step=1, limit=1
              $region117: #{custom-call.11} parent=115 // loop_pre_header
                _
              $region118: #{custom-call.11} parent=115 // loop_header
                %s409 = sphi 0, %s413
                %p410 = scmp.ge.s32.totalorder %s409, 1
                %s414 = sphi %s346, %s346
                %s415 = sphi %s400, %s400
              $region119: #{custom-call.11} parent=115 // loop_header_branch
                %412 = sbr.rel (%p410) target = $region123
              $region120: #{custom-call.11} parent=115 // loop_body
                %v416 = vld [vmem:[%s414] sm:$0x3]
                %417 = vst [vmem:[%s415] sm:$0x3] %v416
              $region121: #{custom-call.11} parent=115 // loop_footer
                %s413 = sadd.s32 1, %s409
              $region122: #{custom-call.11} parent=115 // loop_footer_branch
                %408 = sbr.rel target = $region118
              $region123: #{custom-call.11} parent=115 // loop_exit
                _
            $region116: #{custom-call.11} parent=107 // pred_fallthru
              _
          $region108: #{custom-call.11} parent=103 // pred_fallthru
            _
          %431 = vnop
        $region104: #{custom-call.11} parent=53 // pred_fallthru
          _
      $region54: #{custom-call.11} parent=5 // pred_fallthru
        _
      %p432 = scmp.le.s32.totalorder 2, %s9
      // Predicated region
      $region135: #{custom-call.11} parent=5 // pred_check
        %p433 = pneg %p432
      $region136: #{custom-call.11} parent=5 // pred_check_branch
        %435 = sbr.rel (%p433) target = $region138
      $region137: #{custom-call.11} parent=5 // pred_region
        %s436 = ssub.s32 %s9, 2
        %s437 = sand.u32 %s15, 1
        %s438 = sand.u32 %s15, 1
        %s439 = smul.addr %s438, 8
        %s440 = scalar_lea.vmem [#allocation1], %s439
        // Predicated region
        $region139: #{custom-call.11} parent=137 // pred_check
          %p441 = pneg %p40
        $region140: #{custom-call.11} parent=137 // pred_check_branch
          %443 = sbr.rel (%p441) target = $region142
        $region141: #{custom-call.11} parent=137 // pred_region
          %s444 = sand.u32 %s25, 1
          %s445 = scalar_lea.sflag [#allocation4], %s444
          %s446 = sand.u32 %s25, 1
          %s447 = smul.addr %s446, 2
          %s448 = scalar_lea.vmem [#allocation3], %s447
          %449 = dma.done %s445, 32
        $region142: #{custom-call.11} parent=137 // pred_fallthru
          _
        // Predicated region
        $region143: #{custom-call.11} parent=137 // pred_check
          %p450 = pneg %p68
        $region144: #{custom-call.11} parent=137 // pred_check_branch
          %452 = sbr.rel (%p450) target = $region146
        $region145: #{custom-call.11} parent=137 // pred_region
          %s453 = sand.u32 %s53, 1
          %s454 = sand.u32 %s53, 1
          %s455 = smul.addr %s454, 2
          %s456 = scalar_lea.vmem [#allocation6], %s455
        $region146: #{custom-call.11} parent=137 // pred_fallthru
          _
      $region138: #{custom-call.11} parent=5 // pred_fallthru
        _
    $region6: #{custom-call.11} parent=1 // loop_footer
      %s13 = sadd.s32 1, %s9
    $region7: #{custom-call.11} parent=1 // loop_footer_branch
      %8 = sbr.rel target = $region3
    $region8: #{custom-call.11} parent=1 // loop_exit
      _
    %457 = vsyncpa [#allocation4], 1
    %s458 = scalar_lea.sflag [#allocation4], 1
    %459 = vsyncpa %s458, 1

// kernel: custom-call.13
$region0: #{custom-call.13}
  %s0 = inlined_call_operand.vmem [shape: f32[2,1,6,6], index: 0, kind: input, shape index: {}]
  %s1 = inlined_call_operand.vmem [shape: f32[2,1,6,6], index: 1, kind: output, shape index: {}]
  $region1: #{custom-call.13} parent=0
    #allocation0 [shape = 'u8[8192]{0}', space=vmem, size = 0x2000, scoped, tag = 'operand span for operand 0']
    #allocation1 [shape = 'u8[8192]{0}', space=vmem, size = 0x2000, scoped, tag = 'operand span for operand 1']
    loop: start=0, step=1, limit=4
    $region2: #{custom-call.13} parent=1 // loop_pre_header
      _
    $region3: #{custom-call.13} parent=1 // loop_header
      %s3 = sphi 0, %s7
      %p4 = scmp.ge.s32.totalorder %s3, 4
      %s10 = sphi 0, %s36
      %s11 = sphi 0, %s32
      %s12 = sphi 0, %s28
      %s13 = sphi 0, %s24
      %s14 = sphi 0, %s10
      %s15 = sphi 0, %s11
      %s16 = sphi 0, %s12
      %s17 = sphi 0, %s13
      %s18 = sphi 0, %s14
      %s19 = sphi 0, %s15
      %s20 = sphi 0, %s16
      %s21 = sphi 0, %s17
    $region4: #{custom-call.13} parent=1 // loop_header_branch
      %6 = sbr.rel (%p4) target = $region8
    $region5: #{custom-call.13} parent=1 // loop_body
      %s8 = ssub.s32 %s3, 1
      %s9 = ssub.s32 %s3, 2
      %s22 = sadd.s32 1, %s13
      %p23 = scmp.ge.s32.totalorder %s22, 1
      %s24 = scalar_select %p23, 0, %s22
      %s25 = sadd.s32 1, %s12
      %s26 = scalar_select %p23, %s25, %s12
      %p27 = scmp.ge.s32.totalorder %s26, 1
      %s28 = scalar_select %p27, 0, %s26
      %s29 = sadd.s32 1, %s11
      %s30 = scalar_select %p27, %s29, %s11
      %p31 = scmp.ge.s32.totalorder %s30, 1
      %s32 = scalar_select %p31, 0, %s30
      %s33 = sadd.s32 1, %s10
      %s34 = scalar_select %p31, %s33, %s10
      %p35 = scmp.ge.s32.totalorder %s34, 2
      %s36 = scalar_select %p35, 0, %s34
      %p37 = scmp.le.s32.totalorder 1, %s3
      %p38 = scmp.lt.s32.totalorder %s3, 3
      %p39 = pnand %p37, %p38
      %p40 = pneg %p39
      // Predicated region
      $region9: #{custom-call.13} parent=5 // pred_check
        _
      $region10: #{custom-call.13} parent=5 // pred_check_branch
        %42 = sbr.rel (%p39) target = $region12
      $region11: #{custom-call.13} parent=5 // pred_region
        %s43 = ssub.s32 %s3, 1
      $region12: #{custom-call.13} parent=5 // pred_fallthru
        _
      %p44 = scmp.lt.s32.totalorder %s3, 2
      // Predicated region
      $region13: #{custom-call.13} parent=5 // pred_check
        %p45 = pneg %p44
      $region14: #{custom-call.13} parent=5 // pred_check_branch
        %47 = sbr.rel (%p45) target = $region16
      $region15: #{custom-call.13} parent=5 // pred_region
        %s48 = sand.u32 %s3, 1
        %s49 = sand.u32 %s3, 1
        %s50 = smul.addr %s49, 8
        %s51 = scalar_lea.vmem [#allocation0], %s50
        %s52 = sadd.s32 %s13, %s12
        %s53 = sadd.s32 %s52, %s11
        %s54 = sadd.s32 %s53, %s10
        %s55 = smul.addr %s54, 8
        %s56 = scalar_lea.vmem %s0, %s55
        // Predicated region
        $region17: #{custom-call.13} parent=15 // pred_check
          _
        $region18: #{custom-call.13} parent=15 // pred_check_branch
          %58 = sbr.rel (0) target = $region20
        $region19: #{custom-call.13} parent=15 // pred_region
          // Predicated region
          $region21: #{custom-call.13} parent=19 // pred_check
            _
          $region22: #{custom-call.13} parent=19 // pred_check_branch
            %60 = sbr.rel (0) target = $region24
          $region23: #{custom-call.13} parent=19 // pred_region
            // Predicated region
            $region36: #{custom-call.13} parent=23 // pred_check
              _
            $region37: #{custom-call.13} parent=23 // pred_check_branch
              %75 = sbr.rel (0) target = $region39
            $region38: #{custom-call.13} parent=23 // pred_region
              loop: start=0, step=1, limit=1
              $region40: #{custom-call.13} parent=38 // loop_pre_header
                _
              $region41: #{custom-call.13} parent=38 // loop_header
                %s77 = sphi 0, %s81
                %p78 = scmp.ge.s32.totalorder %s77, 1
                %s82 = sphi %s56, %s56
                %s83 = sphi %s51, %s51
              $region42: #{custom-call.13} parent=38 // loop_header_branch
                %80 = sbr.rel (%p78) target = $region46
              $region43: #{custom-call.13} parent=38 // loop_body
                %v84 = vld [vmem:[%s82] sm:$0xff]
                %85 = vst [vmem:[%s83] sm:$0xff] %v84
              $region44: #{custom-call.13} parent=38 // loop_footer
                %s81 = sadd.s32 1, %s77
              $region45: #{custom-call.13} parent=38 // loop_footer_branch
                %76 = sbr.rel target = $region41
              $region46: #{custom-call.13} parent=38 // loop_exit
                _
            $region39: #{custom-call.13} parent=23 // pred_fallthru
              _
            // Predicated region
            $region47: #{custom-call.13} parent=23 // pred_check
              _
            $region48: #{custom-call.13} parent=23 // pred_check_branch
              %87 = sbr.rel target = $region50
            $region49: #{custom-call.13} parent=23 // pred_region
              _
            $region50: #{custom-call.13} parent=23 // pred_fallthru
              _
          $region24: #{custom-call.13} parent=19 // pred_fallthru
            _
          // Predicated region
          $region25: #{custom-call.13} parent=19 // pred_check
            _
          $region26: #{custom-call.13} parent=19 // pred_check_branch
            %62 = sbr.rel target = $region28
          $region27: #{custom-call.13} parent=19 // pred_region
            loop: start=0, step=1, limit=1
            $region29: #{custom-call.13} parent=27 // loop_pre_header
              _
            $region30: #{custom-call.13} parent=27 // loop_header
              %s65 = sphi 0, %s69
              %p66 = scmp.ge.s32.totalorder %s65, 1
              %s70 = sphi %s56, %s56
              %s71 = sphi %s51, %s51
            $region31: #{custom-call.13} parent=27 // loop_header_branch
              %68 = sbr.rel (%p66) target = $region35
            $region32: #{custom-call.13} parent=27 // loop_body
              %v72 = vld [vmem:[%s70] sm:$0xff]
              %73 = vst [vmem:[%s71] sm:$0xff] %v72
            $region33: #{custom-call.13} parent=27 // loop_footer
              %s69 = sadd.s32 1, %s65
            $region34: #{custom-call.13} parent=27 // loop_footer_branch
              %64 = sbr.rel target = $region30
            $region35: #{custom-call.13} parent=27 // loop_exit
              _
          $region28: #{custom-call.13} parent=19 // pred_fallthru
            _
        $region20: #{custom-call.13} parent=15 // pred_fallthru
          _
        %88 = vnop
      $region16: #{custom-call.13} parent=5 // pred_fallthru
        _
      %p89 = scmp.le.s32.totalorder 1, %s3
      %p90 = scmp.lt.s32.totalorder %s3, 3
      %p91 = pnand %p89, %p90
      %p92 = pneg %p91
      // Predicated region
      $region51: #{custom-call.13} parent=5 // pred_check
        _
      $region52: #{custom-call.13} parent=5 // pred_check_branch
        %94 = sbr.rel (%p91) target = $region54
      $region53: #{custom-call.13} parent=5 // pred_region
        #allocation2 [shape = 'f32[6,6]{1,0}', space=vmem, size = 0x1000, scoped, tag = 'rescaled input a']
        %s95 = ssub.s32 %s3, 1
        %s96 = sand.u32 %s8, 1
        %s97 = sand.u32 %s8, 1
        %s98 = smul.addr %s97, 8
        %s99 = scalar_lea.vmem [#allocation0], %s98
        %s100 = sand.u32 %s8, 1
        %s101 = sand.u32 %s8, 1
        %s102 = smul.addr %s101, 8
        %s103 = scalar_lea.vmem [#allocation0], %s102
        %s104 = sand.u32 %s8, 1
        %s105 = sand.u32 %s8, 1
        %s106 = smul.addr %s105, 8
        %s107 = scalar_lea.vmem [#allocation1], %s106
        %v108 = vlaneseq
        %v109 = vand.u32 %v108, 127
        %vm110 = vcmp.lt.s32.totalorder %v109, 6
        %v111 = vlaneseq
        %v112 = vshrl.u32 %v111, 7
        %vm114 = vcmp.eq.s32.totalorder %v112, %v109
        %v115 = vld [vmem:[%s99] sm:$0xff]
        %v116 = vsel %vm114, %v115, 0.0
        %117 = vadd.xlane.f32.xlu0 %v116
        %v118 = vpop.xlane.xlu0 %117
        %vm119 = vcmp.ge.s32.totalorder %v112, %v109
        %vm120 = vmand %vm119, %vm110
        %v121 = vsel %vm120, %v115, 0.0
        %v122 = vrcp.pop %v118
        %v123 = vmul.f32 %v121, %v122
        %124 = vst [vmem:[#allocation2] sm:$0xff] %v123
        %v125 = vlaneseq
        %v126 = vand.u32 %v125, 127
        %v127 = vlaneseq
        %v128 = vshrl.u32 %v127, 7
        %vm130 = vcmp.eq.s32.totalorder %v126, %v128
        %v131 = vlaneseq
        %v132 = vand.u32 %v131, 127
        %vm133 = vcmp.eq.s32.totalorder %v132, 0
        %v134 = vsel %vm133, 1.0, -1.0
        %v135 = vsel %vm130, %v134, 0.0
        %s136 = scalar_lea.vmem [#allocation2], 1
        %v137 = vld [vmem:[%s136] ss:$0 sm:$0xff]
        %v138 = vxor.u32 %v137, 2147483648
        %v139 = vlaneseq
        %v140 = vand.u32 %v139, 127
        %vm141 = vcmp.eq.s32.totalorder %v140, 1
        %v142 = vmul.f32 %v138, %v135
        %143 = vadd.xlane.f32.xlu0 %v142
        %v144 = vpop.xlane.xlu0 %143
        %v145 = vsel %vm141, %v144, %v135
        %s146 = scalar_lea.vmem [#allocation2], 2
        %v147 = vld [vmem:[%s146] ss:$0 sm:$0xff]
        %v148 = vxor.u32 %v147, 2147483648
        %v149 = vlaneseq
        %v150 = vand.u32 %v149, 127
        %vm151 = vcmp.eq.s32.totalorder %v150, 2
        %v152 = vmul.f32 %v148, %v145
        %153 = vadd.xlane.f32.xlu0 %v152
        %v154 = vpop.xlane.xlu0 %153
        %v155 = vsel %vm151, %v154, %v145
        %s156 = scalar_lea.vmem [#allocation2], 3
        %v157 = vld [vmem:[%s156] ss:$0 sm:$0xff]
        %v158 = vxor.u32 %v157, 2147483648
        %v159 = vlaneseq
        %v160 = vand.u32 %v159, 127
        %vm161 = vcmp.eq.s32.totalorder %v160, 3
        %v162 = vmul.f32 %v158, %v155
        %163 = vadd.xlane.f32.xlu0 %v162
        %v164 = vpop.xlane.xlu0 %163
        %v165 = vsel %vm161, %v164, %v155
        %s166 = scalar_lea.vmem [#allocation2], 4
        %v167 = vld [vmem:[%s166] ss:$0 sm:$0xff]
        %v168 = vxor.u32 %v167, 2147483648
        %v169 = vlaneseq
        %v170 = vand.u32 %v169, 127
        %vm171 = vcmp.eq.s32.totalorder %v170, 4
        %v172 = vmul.f32 %v168, %v165
        %173 = vadd.xlane.f32.xlu0 %v172
        %v174 = vpop.xlane.xlu0 %173
        %v175 = vsel %vm171, %v174, %v165
        %s176 = scalar_lea.vmem [#allocation2], 5
        %v177 = vld [vmem:[%s176] ss:$0 sm:$0xff]
        %v178 = vxor.u32 %v177, 2147483648
        %v179 = vlaneseq
        %v180 = vand.u32 %v179, 127
        %vm181 = vcmp.eq.s32.totalorder %v180, 5
        %v182 = vmul.f32 %v178, %v175
        %183 = vadd.xlane.f32.xlu0 %v182
        %v184 = vpop.xlane.xlu0 %183
        %v185 = vsel %vm181, %v184, %v175
        %v186 = vrcp.pop %v118
        %v187 = vmul.f32 %v185, %v186
        %vm188 = vweird.f32 %v118
        %v189 = vsel %vm188, %v185, %v187
        %190 = vst [vmem:[%s107] sm:$0xff] %v189
        %s191 = sand.u32 %s8, 1
        %s192 = sand.u32 %s8, 1
        %s193 = smul.addr %s192, 8
        %s194 = scalar_lea.vmem [#allocation1], %s193
        %s195 = sadd.s32 %s17, %s16
        %s196 = sadd.s32 %s195, %s15
        %s197 = sadd.s32 %s196, %s14
        %s198 = smul.addr %s197, 8
        %s199 = scalar_lea.vmem %s1, %s198
        // Predicated region
        $region55: #{custom-call.13} parent=53 // pred_check
          _
        $region56: #{custom-call.13} parent=53 // pred_check_branch
          %201 = sbr.rel (0) target = $region58
        $region57: #{custom-call.13} parent=53 // pred_region
          // Predicated region
          $region59: #{custom-call.13} parent=57 // pred_check
            _
          $region60: #{custom-call.13} parent=57 // pred_check_branch
            %203 = sbr.rel (0) target = $region62
          $region61: #{custom-call.13} parent=57 // pred_region
            // Predicated region
            $region74: #{custom-call.13} parent=61 // pred_check
              _
            $region75: #{custom-call.13} parent=61 // pred_check_branch
              %218 = sbr.rel (0) target = $region77
            $region76: #{custom-call.13} parent=61 // pred_region
              loop: start=0, step=1, limit=1
              $region78: #{custom-call.13} parent=76 // loop_pre_header
                _
              $region79: #{custom-call.13} parent=76 // loop_header
                %s220 = sphi 0, %s224
                %p221 = scmp.ge.s32.totalorder %s220, 1
                %s225 = sphi %s194, %s194
                %s226 = sphi %s199, %s199
              $region80: #{custom-call.13} parent=76 // loop_header_branch
                %223 = sbr.rel (%p221) target = $region84
              $region81: #{custom-call.13} parent=76 // loop_body
                %v227 = vld [vmem:[%s225] sm:$0xff]
                %228 = vst [vmem:[%s226] sm:$0xff] %v227
              $region82: #{custom-call.13} parent=76 // loop_footer
                %s224 = sadd.s32 1, %s220
              $region83: #{custom-call.13} parent=76 // loop_footer_branch
                %219 = sbr.rel target = $region79
              $region84: #{custom-call.13} parent=76 // loop_exit
                _
            $region77: #{custom-call.13} parent=61 // pred_fallthru
              _
            // Predicated region
            $region85: #{custom-call.13} parent=61 // pred_check
              _
            $region86: #{custom-call.13} parent=61 // pred_check_branch
              %230 = sbr.rel target = $region88
            $region87: #{custom-call.13} parent=61 // pred_region
              _
            $region88: #{custom-call.13} parent=61 // pred_fallthru
              _
          $region62: #{custom-call.13} parent=57 // pred_fallthru
            _
          // Predicated region
          $region63: #{custom-call.13} parent=57 // pred_check
            _
          $region64: #{custom-call.13} parent=57 // pred_check_branch
            %205 = sbr.rel target = $region66
          $region65: #{custom-call.13} parent=57 // pred_region
            loop: start=0, step=1, limit=1
            $region67: #{custom-call.13} parent=65 // loop_pre_header
              _
            $region68: #{custom-call.13} parent=65 // loop_header
              %s208 = sphi 0, %s212
              %p209 = scmp.ge.s32.totalorder %s208, 1
              %s213 = sphi %s194, %s194
              %s214 = sphi %s199, %s199
            $region69: #{custom-call.13} parent=65 // loop_header_branch
              %211 = sbr.rel (%p209) target = $region73
            $region70: #{custom-call.13} parent=65 // loop_body
              %v215 = vld [vmem:[%s213] sm:$0xff]
              %216 = vst [vmem:[%s214] sm:$0xff] %v215
            $region71: #{custom-call.13} parent=65 // loop_footer
              %s212 = sadd.s32 1, %s208
            $region72: #{custom-call.13} parent=65 // loop_footer_branch
              %207 = sbr.rel target = $region68
            $region73: #{custom-call.13} parent=65 // loop_exit
              _
          $region66: #{custom-call.13} parent=57 // pred_fallthru
            _
        $region58: #{custom-call.13} parent=53 // pred_fallthru
          _
        %231 = vnop
      $region54: #{custom-call.13} parent=5 // pred_fallthru
        _
      %p232 = scmp.le.s32.totalorder 2, %s3
      // Predicated region
      $region89: #{custom-call.13} parent=5 // pred_check
        %p233 = pneg %p232
      $region90: #{custom-call.13} parent=5 // pred_check_branch
        %235 = sbr.rel (%p233) target = $region92
      $region91: #{custom-call.13} parent=5 // pred_region
        %s236 = ssub.s32 %s3, 2
        %s237 = sand.u32 %s9, 1
        %s238 = sand.u32 %s9, 1
        %s239 = smul.addr %s238, 8
        %s240 = scalar_lea.vmem [#allocation1], %s239
      $region92: #{custom-call.13} parent=5 // pred_fallthru
        _
    $region6: #{custom-call.13} parent=1 // loop_footer
      %s7 = sadd.s32 1, %s3
    $region7: #{custom-call.13} parent=1 // loop_footer_branch
      %2 = sbr.rel target = $region3
    $region8: #{custom-call.13} parent=1 // loop_exit
      _

// kernel: custom-call.12
$region0: #{custom-call.12}
  %s0 = inlined_call_operand.vmem [shape: f32[2,1,6,6], index: 0, kind: input, shape index: {}]
  %s1 = inlined_call_operand.vmem [shape: f32[2,1,6,6], index: 1, kind: output, shape index: {}]
  $region1: #{custom-call.12} parent=0
    #allocation0 [shape = 'u8[8192]{0}', space=vmem, size = 0x2000, scoped, tag = 'operand span for operand 0']
    #allocation1 [shape = 'u8[8192]{0}', space=vmem, size = 0x2000, scoped, tag = 'operand span for operand 1']
    loop: start=0, step=1, limit=4
    $region2: #{custom-call.12} parent=1 // loop_pre_header
      _
    $region3: #{custom-call.12} parent=1 // loop_header
      %s3 = sphi 0, %s7
      %p4 = scmp.ge.s32.totalorder %s3, 4
      %s10 = sphi 0, %s36
      %s11 = sphi 0, %s32
      %s12 = sphi 0, %s28
      %s13 = sphi 0, %s24
      %s14 = sphi 0, %s10
      %s15 = sphi 0, %s11
      %s16 = sphi 0, %s12
      %s17 = sphi 0, %s13
      %s18 = sphi 0, %s14
      %s19 = sphi 0, %s15
      %s20 = sphi 0, %s16
      %s21 = sphi 0, %s17
    $region4: #{custom-call.12} parent=1 // loop_header_branch
      %6 = sbr.rel (%p4) target = $region8
    $region5: #{custom-call.12} parent=1 // loop_body
      %s8 = ssub.s32 %s3, 1
      %s9 = ssub.s32 %s3, 2
      %s22 = sadd.s32 1, %s13
      %p23 = scmp.ge.s32.totalorder %s22, 1
      %s24 = scalar_select %p23, 0, %s22
      %s25 = sadd.s32 1, %s12
      %s26 = scalar_select %p23, %s25, %s12
      %p27 = scmp.ge.s32.totalorder %s26, 1
      %s28 = scalar_select %p27, 0, %s26
      %s29 = sadd.s32 1, %s11
      %s30 = scalar_select %p27, %s29, %s11
      %p31 = scmp.ge.s32.totalorder %s30, 1
      %s32 = scalar_select %p31, 0, %s30
      %s33 = sadd.s32 1, %s10
      %s34 = scalar_select %p31, %s33, %s10
      %p35 = scmp.ge.s32.totalorder %s34, 2
      %s36 = scalar_select %p35, 0, %s34
      %p37 = scmp.le.s32.totalorder 1, %s3
      %p38 = scmp.lt.s32.totalorder %s3, 3
      %p39 = pnand %p37, %p38
      %p40 = pneg %p39
      // Predicated region
      $region9: #{custom-call.12} parent=5 // pred_check
        _
      $region10: #{custom-call.12} parent=5 // pred_check_branch
        %42 = sbr.rel (%p39) target = $region12
      $region11: #{custom-call.12} parent=5 // pred_region
        %s43 = ssub.s32 %s3, 1
      $region12: #{custom-call.12} parent=5 // pred_fallthru
        _
      %p44 = scmp.lt.s32.totalorder %s3, 2
      // Predicated region
      $region13: #{custom-call.12} parent=5 // pred_check
        %p45 = pneg %p44
      $region14: #{custom-call.12} parent=5 // pred_check_branch
        %47 = sbr.rel (%p45) target = $region16
      $region15: #{custom-call.12} parent=5 // pred_region
        %s48 = sand.u32 %s3, 1
        %s49 = sand.u32 %s3, 1
        %s50 = smul.addr %s49, 8
        %s51 = scalar_lea.vmem [#allocation0], %s50
        %s52 = sadd.s32 %s13, %s12
        %s53 = sadd.s32 %s52, %s11
        %s54 = sadd.s32 %s53, %s10
        %s55 = smul.addr %s54, 8
        %s56 = scalar_lea.vmem %s0, %s55
        // Predicated region
        $region17: #{custom-call.12} parent=15 // pred_check
          _
        $region18: #{custom-call.12} parent=15 // pred_check_branch
          %58 = sbr.rel (0) target = $region20
        $region19: #{custom-call.12} parent=15 // pred_region
          // Predicated region
          $region21: #{custom-call.12} parent=19 // pred_check
            _
          $region22: #{custom-call.12} parent=19 // pred_check_branch
            %60 = sbr.rel (0) target = $region24
          $region23: #{custom-call.12} parent=19 // pred_region
            // Predicated region
            $region36: #{custom-call.12} parent=23 // pred_check
              _
            $region37: #{custom-call.12} parent=23 // pred_check_branch
              %75 = sbr.rel (0) target = $region39
            $region38: #{custom-call.12} parent=23 // pred_region
              loop: start=0, step=1, limit=1
              $region40: #{custom-call.12} parent=38 // loop_pre_header
                _
              $region41: #{custom-call.12} parent=38 // loop_header
                %s77 = sphi 0, %s81
                %p78 = scmp.ge.s32.totalorder %s77, 1
                %s82 = sphi %s56, %s56
                %s83 = sphi %s51, %s51
              $region42: #{custom-call.12} parent=38 // loop_header_branch
                %80 = sbr.rel (%p78) target = $region46
              $region43: #{custom-call.12} parent=38 // loop_body
                %v84 = vld [vmem:[%s82] sm:$0xff]
                %85 = vst [vmem:[%s83] sm:$0xff] %v84
              $region44: #{custom-call.12} parent=38 // loop_footer
                %s81 = sadd.s32 1, %s77
              $region45: #{custom-call.12} parent=38 // loop_footer_branch
                %76 = sbr.rel target = $region41
              $region46: #{custom-call.12} parent=38 // loop_exit
                _
            $region39: #{custom-call.12} parent=23 // pred_fallthru
              _
            // Predicated region
            $region47: #{custom-call.12} parent=23 // pred_check
              _
            $region48: #{custom-call.12} parent=23 // pred_check_branch
              %87 = sbr.rel target = $region50
            $region49: #{custom-call.12} parent=23 // pred_region
              _
            $region50: #{custom-call.12} parent=23 // pred_fallthru
              _
          $region24: #{custom-call.12} parent=19 // pred_fallthru
            _
          // Predicated region
          $region25: #{custom-call.12} parent=19 // pred_check
            _
          $region26: #{custom-call.12} parent=19 // pred_check_branch
            %62 = sbr.rel target = $region28
          $region27: #{custom-call.12} parent=19 // pred_region
            loop: start=0, step=1, limit=1
            $region29: #{custom-call.12} parent=27 // loop_pre_header
              _
            $region30: #{custom-call.12} parent=27 // loop_header
              %s65 = sphi 0, %s69
              %p66 = scmp.ge.s32.totalorder %s65, 1
              %s70 = sphi %s56, %s56
              %s71 = sphi %s51, %s51
            $region31: #{custom-call.12} parent=27 // loop_header_branch
              %68 = sbr.rel (%p66) target = $region35
            $region32: #{custom-call.12} parent=27 // loop_body
              %v72 = vld [vmem:[%s70] sm:$0xff]
              %73 = vst [vmem:[%s71] sm:$0xff] %v72
            $region33: #{custom-call.12} parent=27 // loop_footer
              %s69 = sadd.s32 1, %s65
            $region34: #{custom-call.12} parent=27 // loop_footer_branch
              %64 = sbr.rel target = $region30
            $region35: #{custom-call.12} parent=27 // loop_exit
              _
          $region28: #{custom-call.12} parent=19 // pred_fallthru
            _
        $region20: #{custom-call.12} parent=15 // pred_fallthru
          _
        %88 = vnop
      $region16: #{custom-call.12} parent=5 // pred_fallthru
        _
      %p89 = scmp.le.s32.totalorder 1, %s3
      %p90 = scmp.lt.s32.totalorder %s3, 3
      %p91 = pnand %p89, %p90
      %p92 = pneg %p91
      // Predicated region
      $region51: #{custom-call.12} parent=5 // pred_check
        _
      $region52: #{custom-call.12} parent=5 // pred_check_branch
        %94 = sbr.rel (%p91) target = $region54
      $region53: #{custom-call.12} parent=5 // pred_region
        #allocation2 [shape = 'f32[6,6]{1,0}', space=vmem, size = 0x1000, scoped, tag = 'rescaled input a']
        %s95 = ssub.s32 %s3, 1
        %s96 = sand.u32 %s8, 1
        %s97 = sand.u32 %s8, 1
        %s98 = smul.addr %s97, 8
        %s99 = scalar_lea.vmem [#allocation0], %s98
        %s100 = sand.u32 %s8, 1
        %s101 = sand.u32 %s8, 1
        %s102 = smul.addr %s101, 8
        %s103 = scalar_lea.vmem [#allocation0], %s102
        %s104 = sand.u32 %s8, 1
        %s105 = sand.u32 %s8, 1
        %s106 = smul.addr %s105, 8
        %s107 = scalar_lea.vmem [#allocation1], %s106
        %v108 = vlaneseq
        %v109 = vand.u32 %v108, 127
        %vm110 = vcmp.lt.s32.totalorder %v109, 6
        %v111 = vlaneseq
        %v112 = vshrl.u32 %v111, 7
        %vm114 = vcmp.eq.s32.totalorder %v112, %v109
        %v115 = vld [vmem:[%s99] sm:$0xff]
        %v116 = vsel %vm114, %v115, 0.0
        %117 = vadd.xlane.f32.xlu0 %v116
        %v118 = vpop.xlane.xlu0 %117
        %vm119 = vcmp.le.s32.totalorder %v112, %v109
        %vm120 = vmand %vm119, %vm110
        %v121 = vsel %vm120, %v115, 0.0
        %v122 = vrcp.pop %v118
        %v123 = vmul.f32 %v121, %v122
        %124 = vst [vmem:[#allocation2] sm:$0xff] %v123
        %v125 = vlaneseq
        %v126 = vand.u32 %v125, 127
        %v127 = vlaneseq
        %v128 = vshrl.u32 %v127, 7
        %vm130 = vcmp.eq.s32.totalorder %v126, %v128
        %v131 = vlaneseq
        %v132 = vand.u32 %v131, 127
        %vm133 = vcmp.eq.s32.totalorder %v132, 5
        %v134 = vsel %vm133, 1.0, -1.0
        %v135 = vsel %vm130, %v134, 0.0
        %s136 = scalar_lea.vmem [#allocation2], 4
        %v137 = vld [vmem:[%s136] ss:$0 sm:$0xff]
        %v138 = vxor.u32 %v137, 2147483648
        %v139 = vlaneseq
        %v140 = vand.u32 %v139, 127
        %vm141 = vcmp.eq.s32.totalorder %v140, 4
        %v142 = vmul.f32 %v138, %v135
        %143 = vadd.xlane.f32.xlu0 %v142
        %v144 = vpop.xlane.xlu0 %143
        %v145 = vsel %vm141, %v144, %v135
        %s146 = scalar_lea.vmem [#allocation2], 3
        %v147 = vld [vmem:[%s146] ss:$0 sm:$0xff]
        %v148 = vxor.u32 %v147, 2147483648
        %v149 = vlaneseq
        %v150 = vand.u32 %v149, 127
        %vm151 = vcmp.eq.s32.totalorder %v150, 3
        %v152 = vmul.f32 %v148, %v145
        %153 = vadd.xlane.f32.xlu0 %v152
        %v154 = vpop.xlane.xlu0 %153
        %v155 = vsel %vm151, %v154, %v145
        %s156 = scalar_lea.vmem [#allocation2], 2
        %v157 = vld [vmem:[%s156] ss:$0 sm:$0xff]
        %v158 = vxor.u32 %v157, 2147483648
        %v159 = vlaneseq
        %v160 = vand.u32 %v159, 127
        %vm161 = vcmp.eq.s32.totalorder %v160, 2
        %v162 = vmul.f32 %v158, %v155
        %163 = vadd.xlane.f32.xlu0 %v162
        %v164 = vpop.xlane.xlu0 %163
        %v165 = vsel %vm161, %v164, %v155
        %s166 = scalar_lea.vmem [#allocation2], 1
        %v167 = vld [vmem:[%s166] ss:$0 sm:$0xff]
        %v168 = vxor.u32 %v167, 2147483648
        %v169 = vlaneseq
        %v170 = vand.u32 %v169, 127
        %vm171 = vcmp.eq.s32.totalorder %v170, 1
        %v172 = vmul.f32 %v168, %v165
        %173 = vadd.xlane.f32.xlu0 %v172
        %v174 = vpop.xlane.xlu0 %173
        %v175 = vsel %vm171, %v174, %v165
        %v176 = vld [vmem:[#allocation2] ss:$0 sm:$0xff]
        %v177 = vxor.u32 %v176, 2147483648
        %v178 = vlaneseq
        %v179 = vand.u32 %v178, 127
        %vm180 = vcmp.eq.s32.totalorder %v179, 0
        %v181 = vmul.f32 %v177, %v175
        %182 = vadd.xlane.f32.xlu0 %v181
        %v183 = vpop.xlane.xlu0 %182
        %v184 = vsel %vm180, %v183, %v175
        %v185 = vrcp.pop %v118
        %v186 = vmul.f32 %v184, %v185
        %vm187 = vweird.f32 %v118
        %v188 = vsel %vm187, %v184, %v186
        %189 = vst [vmem:[%s107] sm:$0xff] %v188
        %s190 = sand.u32 %s8, 1
        %s191 = sand.u32 %s8, 1
        %s192 = smul.addr %s191, 8
        %s193 = scalar_lea.vmem [#allocation1], %s192
        %s194 = sadd.s32 %s17, %s16
        %s195 = sadd.s32 %s194, %s15
        %s196 = sadd.s32 %s195, %s14
        %s197 = smul.addr %s196, 8
        %s198 = scalar_lea.vmem %s1, %s197
        // Predicated region
        $region55: #{custom-call.12} parent=53 // pred_check
          _
        $region56: #{custom-call.12} parent=53 // pred_check_branch
          %200 = sbr.rel (0) target = $region58
        $region57: #{custom-call.12} parent=53 // pred_region
          // Predicated region
          $region59: #{custom-call.12} parent=57 // pred_check
            _
          $region60: #{custom-call.12} parent=57 // pred_check_branch
            %202 = sbr.rel (0) target = $region62
          $region61: #{custom-call.12} parent=57 // pred_region
            // Predicated region
            $region74: #{custom-call.12} parent=61 // pred_check
              _
            $region75: #{custom-call.12} parent=61 // pred_check_branch
              %217 = sbr.rel (0) target = $region77
            $region76: #{custom-call.12} parent=61 // pred_region
              loop: start=0, step=1, limit=1
              $region78: #{custom-call.12} parent=76 // loop_pre_header
                _
              $region79: #{custom-call.12} parent=76 // loop_header
                %s219 = sphi 0, %s223
                %p220 = scmp.ge.s32.totalorder %s219, 1
                %s224 = sphi %s193, %s193
                %s225 = sphi %s198, %s198
              $region80: #{custom-call.12} parent=76 // loop_header_branch
                %222 = sbr.rel (%p220) target = $region84
              $region81: #{custom-call.12} parent=76 // loop_body
                %v226 = vld [vmem:[%s224] sm:$0xff]
                %227 = vst [vmem:[%s225] sm:$0xff] %v226
              $region82: #{custom-call.12} parent=76 // loop_footer
                %s223 = sadd.s32 1, %s219
              $region83: #{custom-call.12} parent=76 // loop_footer_branch
                %218 = sbr.rel target = $region79
              $region84: #{custom-call.12} parent=76 // loop_exit
                _
            $region77: #{custom-call.12} parent=61 // pred_fallthru
              _
            // Predicated region
            $region85: #{custom-call.12} parent=61 // pred_check
              _
            $region86: #{custom-call.12} parent=61 // pred_check_branch
              %229 = sbr.rel target = $region88
            $region87: #{custom-call.12} parent=61 // pred_region
              _
            $region88: #{custom-call.12} parent=61 // pred_fallthru
              _
          $region62: #{custom-call.12} parent=57 // pred_fallthru
            _
          // Predicated region
          $region63: #{custom-call.12} parent=57 // pred_check
            _
          $region64: #{custom-call.12} parent=57 // pred_check_branch
            %204 = sbr.rel target = $region66
          $region65: #{custom-call.12} parent=57 // pred_region
            loop: start=0, step=1, limit=1
            $region67: #{custom-call.12} parent=65 // loop_pre_header
              _
            $region68: #{custom-call.12} parent=65 // loop_header
              %s207 = sphi 0, %s211
              %p208 = scmp.ge.s32.totalorder %s207, 1
              %s212 = sphi %s193, %s193
              %s213 = sphi %s198, %s198
            $region69: #{custom-call.12} parent=65 // loop_header_branch
              %210 = sbr.rel (%p208) target = $region73
            $region70: #{custom-call.12} parent=65 // loop_body
              %v214 = vld [vmem:[%s212] sm:$0xff]
              %215 = vst [vmem:[%s213] sm:$0xff] %v214
            $region71: #{custom-call.12} parent=65 // loop_footer
              %s211 = sadd.s32 1, %s207
            $region72: #{custom-call.12} parent=65 // loop_footer_branch
              %206 = sbr.rel target = $region68
            $region73: #{custom-call.12} parent=65 // loop_exit
              _
          $region66: #{custom-call.12} parent=57 // pred_fallthru
            _
        $region58: #{custom-call.12} parent=53 // pred_fallthru
          _
        %230 = vnop
      $region54: #{custom-call.12} parent=5 // pred_fallthru
        _
      %p231 = scmp.le.s32.totalorder 2, %s3
      // Predicated region
      $region89: #{custom-call.12} parent=5 // pred_check
        %p232 = pneg %p231
      $region90: #{custom-call.12} parent=5 // pred_check_branch
        %234 = sbr.rel (%p232) target = $region92
      $region91: #{custom-call.12} parent=5 // pred_region
        %s235 = ssub.s32 %s3, 2
        %s236 = sand.u32 %s9, 1
        %s237 = sand.u32 %s9, 1
        %s238 = smul.addr %s237, 8
        %s239 = scalar_lea.vmem [#allocation1], %s238
      $region92: #{custom-call.12} parent=5 // pred_fallthru
        _
    $region6: #{custom-call.12} parent=1 // loop_footer
      %s7 = sadd.s32 1, %s3
    $region7: #{custom-call.12} parent=1 // loop_footer_branch
      %2 = sbr.rel target = $region3
    $region8: #{custom-call.12} parent=1 // loop_exit
      _

// kernel: custom-call.18
$region0: #{custom-call.18}
  %s0 = inlined_call_operand.vmem [shape: bf16[10,2,4,4], index: 0, kind: output, shape index: {}]

// kernel: custom-call.19
$region0: #{custom-call.19}
  %s0 = inlined_call_operand.vmem [shape: f32[10,2,64], index: 0, kind: output, shape index: {}]

// kernel: sub.134
$region0: #{sub.134}
  #allocation0 [shape = 's32[1]{0}', space=sflag, size = 0x4, scoped, tag = 'scoped memory for sub.134']
  %s0 = inlined_call_operand.vmem [shape: f32[2,64], index: 0, kind: input, shape index: {}]
  %s1 = inlined_call_operand.vmem [shape: f32[2,64], index: 1, kind: input, shape index: {}]
  %s2 = inlined_call_operand.vmem [shape: f32[2,64], index: 2, kind: output, shape index: {}]
  %v3 = vld [vmem:[%s0] sm:$0x3]
  %v4 = vld [vmem:[%s1] sm:$0x3]
  %5 = xla_tuple %v3, %v4
  %6 = xla_tuple %5
  %v7 = vsub.f32 %v3, %v4
  %8 = xla_tuple %v7
  %9 = vst [vmem:[%s2] sm:$0x3] %v7

// kernel: closed_call.13
$region0: #{closed_call.13}
  #allocation0 [shape = 'u32[]', space=smem, size = 0x4, offset = 0x4, fixed_abs, tag = 'smem constant byte address 0x4 - core index']
  #allocation1 [shape = 'u32[144,128]{1,0:T(1,128)}', space=vmem, size = 0x12000, scoped, tag = 'internal scratch']
  %s0 = inlined_call_operand.vmem [shape: f32[2,64,4], index: 0, kind: input, shape index: {}]
  %s1 = inlined_call_operand.vmem [shape: f32[2,1,4,4], index: 1, kind: input, shape index: {}]
  %s2 = inlined_call_operand.vmem [shape: f32[4,128], index: 2, kind: input, shape index: {}]
  %s3 = inlined_call_operand.vmem [shape: f32[3,128], index: 3, kind: input, shape index: {}]
  %s4 = inlined_call_operand.vmem [shape: f32[2,128,128], index: 4, kind: input, shape index: {}]
  %s5 = inlined_call_operand.vmem [shape: f32[2,1,128], index: 5, kind: output, shape index: {}]
  %s6 = sld [smem:[#allocation0]]
  $region34: #{closed_call.13} parent=0
    _
  %s8 = ssub.s32 1, %s6
  %s9 = scalar_select 0, %s8, %s6
  // Predicated region
  $region2: #{closed_call.13} parent=0 // pred_check
    _
  $region3: #{closed_call.13} parent=0 // pred_check_branch
    %11 = sbr.rel (0) target = $region5
  $region4: #{closed_call.13} parent=0 // pred_region
    _
  $region5: #{closed_call.13} parent=0 // pred_fallthru
    _
  // Predicated region
  $region6: #{closed_call.13} parent=0 // pred_check
    _
  $region7: #{closed_call.13} parent=0 // pred_check_branch
    %13 = sbr.rel (0) target = $region9
  $region8: #{closed_call.13} parent=0 // pred_region
    _
  $region9: #{closed_call.13} parent=0 // pred_fallthru
    _
  // Predicated region
  $region10: #{closed_call.13} parent=0 // pred_check
    _
  $region11: #{closed_call.13} parent=0 // pred_check_branch
    %15 = sbr.rel (0) target = $region13
  $region12: #{closed_call.13} parent=0 // pred_region
    _
  $region13: #{closed_call.13} parent=0 // pred_fallthru
    _
  // Predicated region
  $region14: #{closed_call.13} parent=0 // pred_check
    _
  $region15: #{closed_call.13} parent=0 // pred_check_branch
    %17 = sbr.rel (0) target = $region17
  $region16: #{closed_call.13} parent=0 // pred_region
    _
  $region17: #{closed_call.13} parent=0 // pred_fallthru
    _
  // Predicated region
  $region18: #{closed_call.13} parent=0 // pred_check
    _
  $region19: #{closed_call.13} parent=0 // pred_check_branch
    %19 = sbr.rel (0) target = $region21
  $region20: #{closed_call.13} parent=0 // pred_region
    _
  $region21: #{closed_call.13} parent=0 // pred_fallthru
    _
  %p21 = scmp.eq.s32.totalorder 0, 0
  // Predicated region
  $region22: #{closed_call.13} parent=0 // pred_check
    %p22 = pneg %p21
  $region23: #{closed_call.13} parent=0 // pred_check_branch
    %24 = sbr.rel (%p22) target = $region25
  $region24: #{closed_call.13} parent=0 // pred_region
    %25 = vst [vmem:[%s5] sm:$0x1] 0.0
    %26 = vst [vmem:[%s5 + $0x1] sm:$0x1] 0.0
  $region25: #{closed_call.13} parent=0 // pred_fallthru
    _
  %v27 = vld [vmem:[%s0] sm:$0xff]
  %v28 = vld [vmem:[%s0 + $0x8] sm:$0xff]
  %v29 = vld [vmem:[%s0 + $0x10] sm:$0xff]
  %v30 = vld [vmem:[%s0 + $0x18] sm:$0xff]
  %v31 = vld [vmem:[%s0 + $0x20] sm:$0xff]
  %v32 = vld [vmem:[%s0 + $0x28] sm:$0xff]
  %v33 = vld [vmem:[%s0 + $0x30] sm:$0xff]
  %v34 = vld [vmem:[%s0 + $0x38] sm:$0xff]
  %v35 = vld [vmem:[%s0 + $0x40] sm:$0xff]
  %v36 = vld [vmem:[%s0 + $0x48] sm:$0xff]
  %v37 = vld [vmem:[%s0 + $0x50] sm:$0xff]
  %v38 = vld [vmem:[%s0 + $0x58] sm:$0xff]
  %v39 = vld [vmem:[%s0 + $0x60] sm:$0xff]
  %v40 = vld [vmem:[%s0 + $0x68] sm:$0xff]
  %v41 = vld [vmem:[%s0 + $0x70] sm:$0xff]
  %v42 = vld [vmem:[%s0 + $0x78] sm:$0xff]
  %v43 = vld [vmem:[%s1] sm:$0xf]
  %v44 = vld [vmem:[%s1 + $0x4] sm:$0xf]
  %v45 = vld [vmem:[%s2] sm:$0xf]
  %v46 = vld [vmem:[%s3] sm:$0x7]
  %v47 = vld [vmem:[%s4] sm:$0xff]
  %v48 = vld [vmem:[%s4 + $0x8] sm:$0xff]
  %v49 = vld [vmem:[%s4 + $0x10] sm:$0xff]
  %v50 = vld [vmem:[%s4 + $0x18] sm:$0xff]
  %v51 = vld [vmem:[%s4 + $0x20] sm:$0xff]
  %v52 = vld [vmem:[%s4 + $0x28] sm:$0xff]
  %v53 = vld [vmem:[%s4 + $0x30] sm:$0xff]
  %v54 = vld [vmem:[%s4 + $0x38] sm:$0xff]
  %v55 = vld [vmem:[%s4 + $0x40] sm:$0xff]
  %v56 = vld [vmem:[%s4 + $0x48] sm:$0xff]
  %v57 = vld [vmem:[%s4 + $0x50] sm:$0xff]
  %v58 = vld [vmem:[%s4 + $0x58] sm:$0xff]
  %v59 = vld [vmem:[%s4 + $0x60] sm:$0xff]
  %v60 = vld [vmem:[%s4 + $0x68] sm:$0xff]
  %v61 = vld [vmem:[%s4 + $0x70] sm:$0xff]
  %v62 = vld [vmem:[%s4 + $0x78] sm:$0xff]
  %v63 = vpack.c.bf16 %v48, %v47
  %v64 = vpack.c.bf16 %v50, %v49
  %v65 = vpack.c.bf16 %v52, %v51
  %v66 = vpack.c.bf16 %v54, %v53
  %v67 = vpack.c.bf16 %v56, %v55
  %v68 = vpack.c.bf16 %v58, %v57
  %v69 = vpack.c.bf16 %v60, %v59
  %v70 = vpack.c.bf16 %v62, %v61
  %s71 = scalar_lea.vmem %s4, 128
  %v72 = vld [vmem:[%s71] sm:$0xff]
  %v73 = vld [vmem:[%s71 + $0x8] sm:$0xff]
  %v74 = vld [vmem:[%s71 + $0x10] sm:$0xff]
  %v75 = vld [vmem:[%s71 + $0x18] sm:$0xff]
  %v76 = vld [vmem:[%s71 + $0x20] sm:$0xff]
  %v77 = vld [vmem:[%s71 + $0x28] sm:$0xff]
  %v78 = vld [vmem:[%s71 + $0x30] sm:$0xff]
  %v79 = vld [vmem:[%s71 + $0x38] sm:$0xff]
  %v80 = vld [vmem:[%s71 + $0x40] sm:$0xff]
  %v81 = vld [vmem:[%s71 + $0x48] sm:$0xff]
  %v82 = vld [vmem:[%s71 + $0x50] sm:$0xff]
  %v83 = vld [vmem:[%s71 + $0x58] sm:$0xff]
  %v84 = vld [vmem:[%s71 + $0x60] sm:$0xff]
  %v85 = vld [vmem:[%s71 + $0x68] sm:$0xff]
  %v86 = vld [vmem:[%s71 + $0x70] sm:$0xff]
  %v87 = vld [vmem:[%s71 + $0x78] sm:$0xff]
  %v88 = vpack.c.bf16 %v73, %v72
  %v89 = vpack.c.bf16 %v75, %v74
  %v90 = vpack.c.bf16 %v77, %v76
  %v91 = vpack.c.bf16 %v79, %v78
  %v92 = vpack.c.bf16 %v81, %v80
  %v93 = vpack.c.bf16 %v83, %v82
  %v94 = vpack.c.bf16 %v85, %v84
  %v95 = vpack.c.bf16 %v87, %v86
  %97 = vset.pattern.permute.xlu0 0
  %98 = vperm.xlu0 %97, %v43
  %v99 = vpop.permute.xlu0 %98
  %102 = vset.pattern.permute.xlu0 0
  %103 = vperm.xlu0 %102, %v44
  %v104 = vpop.permute.xlu0 %103
  %v106 = vlaneseq
  %v107 = vshrl.u32 %v106, 7
  %v108 = vsub.s32 0, %v107
  %v109 = vrot.slane %v45, %v108
  %v110 = vmul.f32 %v99, %v109
  %v111 = vmul.f32 %v104, %v109
  %v112 = vadd.f32 %v110, 0.0
  %v113 = vadd.f32 %v111, 0.0
  %114 = vset.pattern.permute.xlu0 1
  %115 = vperm.xlu0 %114, %v43
  %v116 = vpop.permute.xlu0 %115
  %118 = vset.pattern.permute.xlu0 1
  %119 = vperm.xlu0 %118, %v44
  %v120 = vpop.permute.xlu0 %119
  %v122 = vlaneseq
  %v123 = vshrl.u32 %v122, 7
  %v124 = vsub.s32 1, %v123
  %v125 = vrot.slane %v45, %v124
  %v126 = vmul.f32 %v116, %v125
  %v127 = vmul.f32 %v120, %v125
  %v128 = vadd.f32 %v112, %v126
  %v129 = vadd.f32 %v113, %v127
  %130 = vset.pattern.permute.xlu0 2
  %131 = vperm.xlu0 %130, %v43
  %v132 = vpop.permute.xlu0 %131
  %134 = vset.pattern.permute.xlu0 2
  %135 = vperm.xlu0 %134, %v44
  %v136 = vpop.permute.xlu0 %135
  %v138 = vlaneseq
  %v139 = vshrl.u32 %v138, 7
  %v140 = vsub.s32 2, %v139
  %v141 = vrot.slane %v45, %v140
  %v142 = vmul.f32 %v132, %v141
  %v143 = vmul.f32 %v136, %v141
  %v144 = vadd.f32 %v128, %v142
  %v145 = vadd.f32 %v129, %v143
  %146 = vset.pattern.permute.xlu0 3
  %147 = vperm.xlu0 %146, %v43
  %v148 = vpop.permute.xlu0 %147
  %150 = vset.pattern.permute.xlu0 3
  %151 = vperm.xlu0 %150, %v44
  %v152 = vpop.permute.xlu0 %151
  %v154 = vlaneseq
  %v155 = vshrl.u32 %v154, 7
  %v156 = vsub.s32 3, %v155
  %v157 = vrot.slane %v45, %v156
  %v158 = vmul.f32 %v148, %v157
  %v159 = vmul.f32 %v152, %v157
  %v160 = vadd.f32 %v144, %v158
  %v161 = vadd.f32 %v145, %v159
  %163 = vset.pattern.permute.xlu0 0
  %164 = vperm.xlu0 %163, %v27
  %v165 = vpop.permute.xlu0 %164
  %168 = vset.pattern.permute.xlu0 0
  %169 = vperm.xlu0 %168, %v28
  %v170 = vpop.permute.xlu0 %169
  %173 = vset.pattern.permute.xlu0 0
  %174 = vperm.xlu0 %173, %v29
  %v175 = vpop.permute.xlu0 %174
  %178 = vset.pattern.permute.xlu0 0
  %179 = vperm.xlu0 %178, %v30
  %v180 = vpop.permute.xlu0 %179
  %183 = vset.pattern.permute.xlu0 0
  %184 = vperm.xlu0 %183, %v31
  %v185 = vpop.permute.xlu0 %184
  %188 = vset.pattern.permute.xlu0 0
  %189 = vperm.xlu0 %188, %v32
  %v190 = vpop.permute.xlu0 %189
  %193 = vset.pattern.permute.xlu0 0
  %194 = vperm.xlu0 %193, %v33
  %v195 = vpop.permute.xlu0 %194
  %198 = vset.pattern.permute.xlu0 0
  %199 = vperm.xlu0 %198, %v34
  %v200 = vpop.permute.xlu0 %199
  %203 = vset.pattern.permute.xlu0 0
  %204 = vperm.xlu0 %203, %v35
  %v205 = vpop.permute.xlu0 %204
  %208 = vset.pattern.permute.xlu0 0
  %209 = vperm.xlu0 %208, %v36
  %v210 = vpop.permute.xlu0 %209
  %213 = vset.pattern.permute.xlu0 0
  %214 = vperm.xlu0 %213, %v37
  %v215 = vpop.permute.xlu0 %214
  %218 = vset.pattern.permute.xlu0 0
  %219 = vperm.xlu0 %218, %v38
  %v220 = vpop.permute.xlu0 %219
  %223 = vset.pattern.permute.xlu0 0
  %224 = vperm.xlu0 %223, %v39
  %v225 = vpop.permute.xlu0 %224
  %228 = vset.pattern.permute.xlu0 0
  %229 = vperm.xlu0 %228, %v40
  %v230 = vpop.permute.xlu0 %229
  %233 = vset.pattern.permute.xlu0 0
  %234 = vperm.xlu0 %233, %v41
  %v235 = vpop.permute.xlu0 %234
  %238 = vset.pattern.permute.xlu0 0
  %239 = vperm.xlu0 %238, %v42
  %v240 = vpop.permute.xlu0 %239
  %v242 = vlaneseq
  %v243 = vshrl.u32 %v242, 7
  %v244 = vsub.s32 0, %v243
  %v245 = vrot.slane %v160, %v244
  %v246 = vlaneseq
  %v247 = vshrl.u32 %v246, 7
  %v248 = vsub.s32 0, %v247
  %v249 = vrot.slane %v161, %v248
  %v250 = vmul.f32 %v165, %v245
  %v251 = vmul.f32 %v170, %v245
  %v252 = vmul.f32 %v175, %v245
  %v253 = vmul.f32 %v180, %v245
  %v254 = vmul.f32 %v185, %v245
  %v255 = vmul.f32 %v190, %v245
  %v256 = vmul.f32 %v195, %v245
  %v257 = vmul.f32 %v200, %v245
  %v258 = vmul.f32 %v205, %v249
  %v259 = vmul.f32 %v210, %v249
  %v260 = vmul.f32 %v215, %v249
  %v261 = vmul.f32 %v220, %v249
  %v262 = vmul.f32 %v225, %v249
  %v263 = vmul.f32 %v230, %v249
  %v264 = vmul.f32 %v235, %v249
  %v265 = vmul.f32 %v240, %v249
  %v266 = vadd.f32 %v250, 0.0
  %v267 = vadd.f32 %v251, 0.0
  %v268 = vadd.f32 %v252, 0.0
  %v269 = vadd.f32 %v253, 0.0
  %v270 = vadd.f32 %v254, 0.0
  %v271 = vadd.f32 %v255, 0.0
  %v272 = vadd.f32 %v256, 0.0
  %v273 = vadd.f32 %v257, 0.0
  %v274 = vadd.f32 %v258, 0.0
  %v275 = vadd.f32 %v259, 0.0
  %v276 = vadd.f32 %v260, 0.0
  %v277 = vadd.f32 %v261, 0.0
  %v278 = vadd.f32 %v262, 0.0
  %v279 = vadd.f32 %v263, 0.0
  %v280 = vadd.f32 %v264, 0.0
  %v281 = vadd.f32 %v265, 0.0
  %282 = vset.pattern.permute.xlu0 1
  %283 = vperm.xlu0 %282, %v27
  %v284 = vpop.permute.xlu0 %283
  %286 = vset.pattern.permute.xlu0 1
  %287 = vperm.xlu0 %286, %v28
  %v288 = vpop.permute.xlu0 %287
  %290 = vset.pattern.permute.xlu0 1
  %291 = vperm.xlu0 %290, %v29
  %v292 = vpop.permute.xlu0 %291
  %294 = vset.pattern.permute.xlu0 1
  %295 = vperm.xlu0 %294, %v30
  %v296 = vpop.permute.xlu0 %295
  %298 = vset.pattern.permute.xlu0 1
  %299 = vperm.xlu0 %298, %v31
  %v300 = vpop.permute.xlu0 %299
  %302 = vset.pattern.permute.xlu0 1
  %303 = vperm.xlu0 %302, %v32
  %v304 = vpop.permute.xlu0 %303
  %306 = vset.pattern.permute.xlu0 1
  %307 = vperm.xlu0 %306, %v33
  %v308 = vpop.permute.xlu0 %307
  %310 = vset.pattern.permute.xlu0 1
  %311 = vperm.xlu0 %310, %v34
  %v312 = vpop.permute.xlu0 %311
  %314 = vset.pattern.permute.xlu0 1
  %315 = vperm.xlu0 %314, %v35
  %v316 = vpop.permute.xlu0 %315
  %318 = vset.pattern.permute.xlu0 1
  %319 = vperm.xlu0 %318, %v36
  %v320 = vpop.permute.xlu0 %319
  %322 = vset.pattern.permute.xlu0 1
  %323 = vperm.xlu0 %322, %v37
  %v324 = vpop.permute.xlu0 %323
  %326 = vset.pattern.permute.xlu0 1
  %327 = vperm.xlu0 %326, %v38
  %v328 = vpop.permute.xlu0 %327
  %330 = vset.pattern.permute.xlu0 1
  %331 = vperm.xlu0 %330, %v39
  %v332 = vpop.permute.xlu0 %331
  %334 = vset.pattern.permute.xlu0 1
  %335 = vperm.xlu0 %334, %v40
  %v336 = vpop.permute.xlu0 %335
  %338 = vset.pattern.permute.xlu0 1
  %339 = vperm.xlu0 %338, %v41
  %v340 = vpop.permute.xlu0 %339
  %342 = vset.pattern.permute.xlu0 1
  %343 = vperm.xlu0 %342, %v42
  %v344 = vpop.permute.xlu0 %343
  %v346 = vlaneseq
  %v347 = vshrl.u32 %v346, 7
  %v348 = vsub.s32 1, %v347
  %v349 = vrot.slane %v160, %v348
  %v350 = vlaneseq
  %v351 = vshrl.u32 %v350, 7
  %v352 = vsub.s32 1, %v351
  %v353 = vrot.slane %v161, %v352
  %v354 = vmul.f32 %v284, %v349
  %v355 = vmul.f32 %v288, %v349
  %v356 = vmul.f32 %v292, %v349
  %v357 = vmul.f32 %v296, %v349
  %v358 = vmul.f32 %v300, %v349
  %v359 = vmul.f32 %v304, %v349
  %v360 = vmul.f32 %v308, %v349
  %v361 = vmul.f32 %v312, %v349
  %v362 = vmul.f32 %v316, %v353
  %v363 = vmul.f32 %v320, %v353
  %v364 = vmul.f32 %v324, %v353
  %v365 = vmul.f32 %v328, %v353
  %v366 = vmul.f32 %v332, %v353
  %v367 = vmul.f32 %v336, %v353
  %v368 = vmul.f32 %v340, %v353
  %v369 = vmul.f32 %v344, %v353
  %v370 = vadd.f32 %v266, %v354
  %v371 = vadd.f32 %v267, %v355
  %v372 = vadd.f32 %v268, %v356
  %v373 = vadd.f32 %v269, %v357
  %v374 = vadd.f32 %v270, %v358
  %v375 = vadd.f32 %v271, %v359
  %v376 = vadd.f32 %v272, %v360
  %v377 = vadd.f32 %v273, %v361
  %v378 = vadd.f32 %v274, %v362
  %v379 = vadd.f32 %v275, %v363
  %v380 = vadd.f32 %v276, %v364
  %v381 = vadd.f32 %v277, %v365
  %v382 = vadd.f32 %v278, %v366
  %v383 = vadd.f32 %v279, %v367
  %v384 = vadd.f32 %v280, %v368
  %v385 = vadd.f32 %v281, %v369
  %386 = vset.pattern.permute.xlu0 2
  %387 = vperm.xlu0 %386, %v27
  %v388 = vpop.permute.xlu0 %387
  %390 = vset.pattern.permute.xlu0 2
  %391 = vperm.xlu0 %390, %v28
  %v392 = vpop.permute.xlu0 %391
  %394 = vset.pattern.permute.xlu0 2
  %395 = vperm.xlu0 %394, %v29
  %v396 = vpop.permute.xlu0 %395
  %398 = vset.pattern.permute.xlu0 2
  %399 = vperm.xlu0 %398, %v30
  %v400 = vpop.permute.xlu0 %399
  %402 = vset.pattern.permute.xlu0 2
  %403 = vperm.xlu0 %402, %v31
  %v404 = vpop.permute.xlu0 %403
  %406 = vset.pattern.permute.xlu0 2
  %407 = vperm.xlu0 %406, %v32
  %v408 = vpop.permute.xlu0 %407
  %410 = vset.pattern.permute.xlu0 2
  %411 = vperm.xlu0 %410, %v33
  %v412 = vpop.permute.xlu0 %411
  %414 = vset.pattern.permute.xlu0 2
  %415 = vperm.xlu0 %414, %v34
  %v416 = vpop.permute.xlu0 %415
  %418 = vset.pattern.permute.xlu0 2
  %419 = vperm.xlu0 %418, %v35
  %v420 = vpop.permute.xlu0 %419
  %422 = vset.pattern.permute.xlu0 2
  %423 = vperm.xlu0 %422, %v36
  %v424 = vpop.permute.xlu0 %423
  %426 = vset.pattern.permute.xlu0 2
  %427 = vperm.xlu0 %426, %v37
  %v428 = vpop.permute.xlu0 %427
  %430 = vset.pattern.permute.xlu0 2
  %431 = vperm.xlu0 %430, %v38
  %v432 = vpop.permute.xlu0 %431
  %434 = vset.pattern.permute.xlu0 2
  %435 = vperm.xlu0 %434, %v39
  %v436 = vpop.permute.xlu0 %435
  %438 = vset.pattern.permute.xlu0 2
  %439 = vperm.xlu0 %438, %v40
  %v440 = vpop.permute.xlu0 %439
  %442 = vset.pattern.permute.xlu0 2
  %443 = vperm.xlu0 %442, %v41
  %v444 = vpop.permute.xlu0 %443
  %446 = vset.pattern.permute.xlu0 2
  %447 = vperm.xlu0 %446, %v42
  %v448 = vpop.permute.xlu0 %447
  %v450 = vlaneseq
  %v451 = vshrl.u32 %v450, 7
  %v452 = vsub.s32 2, %v451
  %v453 = vrot.slane %v160, %v452
  %v454 = vlaneseq
  %v455 = vshrl.u32 %v454, 7
  %v456 = vsub.s32 2, %v455
  %v457 = vrot.slane %v161, %v456
  %v458 = vmul.f32 %v388, %v453
  %v459 = vmul.f32 %v392, %v453
  %v460 = vmul.f32 %v396, %v453
  %v461 = vmul.f32 %v400, %v453
  %v462 = vmul.f32 %v404, %v453
  %v463 = vmul.f32 %v408, %v453
  %v464 = vmul.f32 %v412, %v453
  %v465 = vmul.f32 %v416, %v453
  %v466 = vmul.f32 %v420, %v457
  %v467 = vmul.f32 %v424, %v457
  %v468 = vmul.f32 %v428, %v457
  %v469 = vmul.f32 %v432, %v457
  %v470 = vmul.f32 %v436, %v457
  %v471 = vmul.f32 %v440, %v457
  %v472 = vmul.f32 %v444, %v457
  %v473 = vmul.f32 %v448, %v457
  %v474 = vadd.f32 %v370, %v458
  %v475 = vadd.f32 %v371, %v459
  %v476 = vadd.f32 %v372, %v460
  %v477 = vadd.f32 %v373, %v461
  %v478 = vadd.f32 %v374, %v462
  %v479 = vadd.f32 %v375, %v463
  %v480 = vadd.f32 %v376, %v464
  %v481 = vadd.f32 %v377, %v465
  %v482 = vadd.f32 %v378, %v466
  %v483 = vadd.f32 %v379, %v467
  %v484 = vadd.f32 %v380, %v468
  %v485 = vadd.f32 %v381, %v469
  %v486 = vadd.f32 %v382, %v470
  %v487 = vadd.f32 %v383, %v471
  %v488 = vadd.f32 %v384, %v472
  %v489 = vadd.f32 %v385, %v473
  %490 = vset.pattern.permute.xlu0 3
  %491 = vperm.xlu0 %490, %v27
  %v492 = vpop.permute.xlu0 %491
  %494 = vset.pattern.permute.xlu0 3
  %495 = vperm.xlu0 %494, %v28
  %v496 = vpop.permute.xlu0 %495
  %498 = vset.pattern.permute.xlu0 3
  %499 = vperm.xlu0 %498, %v29
  %v500 = vpop.permute.xlu0 %499
  %502 = vset.pattern.permute.xlu0 3
  %503 = vperm.xlu0 %502, %v30
  %v504 = vpop.permute.xlu0 %503
  %506 = vset.pattern.permute.xlu0 3
  %507 = vperm.xlu0 %506, %v31
  %v508 = vpop.permute.xlu0 %507
  %510 = vset.pattern.permute.xlu0 3
  %511 = vperm.xlu0 %510, %v32
  %v512 = vpop.permute.xlu0 %511
  %514 = vset.pattern.permute.xlu0 3
  %515 = vperm.xlu0 %514, %v33
  %v516 = vpop.permute.xlu0 %515
  %518 = vset.pattern.permute.xlu0 3
  %519 = vperm.xlu0 %518, %v34
  %v520 = vpop.permute.xlu0 %519
  %522 = vset.pattern.permute.xlu0 3
  %523 = vperm.xlu0 %522, %v35
  %v524 = vpop.permute.xlu0 %523
  %526 = vset.pattern.permute.xlu0 3
  %527 = vperm.xlu0 %526, %v36
  %v528 = vpop.permute.xlu0 %527
  %530 = vset.pattern.permute.xlu0 3
  %531 = vperm.xlu0 %530, %v37
  %v532 = vpop.permute.xlu0 %531
  %534 = vset.pattern.permute.xlu0 3
  %535 = vperm.xlu0 %534, %v38
  %v536 = vpop.permute.xlu0 %535
  %538 = vset.pattern.permute.xlu0 3
  %539 = vperm.xlu0 %538, %v39
  %v540 = vpop.permute.xlu0 %539
  %542 = vset.pattern.permute.xlu0 3
  %543 = vperm.xlu0 %542, %v40
  %v544 = vpop.permute.xlu0 %543
  %546 = vset.pattern.permute.xlu0 3
  %547 = vperm.xlu0 %546, %v41
  %v548 = vpop.permute.xlu0 %547
  %550 = vset.pattern.permute.xlu0 3
  %551 = vperm.xlu0 %550, %v42
  %v552 = vpop.permute.xlu0 %551
  %v554 = vlaneseq
  %v555 = vshrl.u32 %v554, 7
  %v556 = vsub.s32 3, %v555
  %v557 = vrot.slane %v160, %v556
  %v558 = vlaneseq
  %v559 = vshrl.u32 %v558, 7
  %v560 = vsub.s32 3, %v559
  %v561 = vrot.slane %v161, %v560
  %v562 = vmul.f32 %v492, %v557
  %v563 = vmul.f32 %v496, %v557
  %v564 = vmul.f32 %v500, %v557
  %v565 = vmul.f32 %v504, %v557
  %v566 = vmul.f32 %v508, %v557
  %v567 = vmul.f32 %v512, %v557
  %v568 = vmul.f32 %v516, %v557
  %v569 = vmul.f32 %v520, %v557
  %v570 = vmul.f32 %v524, %v561
  %v571 = vmul.f32 %v528, %v561
  %v572 = vmul.f32 %v532, %v561
  %v573 = vmul.f32 %v536, %v561
  %v574 = vmul.f32 %v540, %v561
  %v575 = vmul.f32 %v544, %v561
  %v576 = vmul.f32 %v548, %v561
  %v577 = vmul.f32 %v552, %v561
  %v578 = vadd.f32 %v474, %v562
  %v579 = vadd.f32 %v475, %v563
  %v580 = vadd.f32 %v476, %v564
  %v581 = vadd.f32 %v477, %v565
  %v582 = vadd.f32 %v478, %v566
  %v583 = vadd.f32 %v479, %v567
  %v584 = vadd.f32 %v480, %v568
  %v585 = vadd.f32 %v481, %v569
  %v586 = vadd.f32 %v482, %v570
  %v587 = vadd.f32 %v483, %v571
  %v588 = vadd.f32 %v484, %v572
  %v589 = vadd.f32 %v485, %v573
  %v590 = vadd.f32 %v486, %v574
  %v591 = vadd.f32 %v487, %v575
  %v592 = vadd.f32 %v488, %v576
  %v593 = vadd.f32 %v489, %v577
  %v594 = vlaneseq
  %v595 = vshrl.u32 %v594, 7
  %v596 = vsub.s32 0, %v595
  %v597 = vrot.slane %v46, %v596
  %v598 = vadd.f32 %v578, %v597
  %v599 = vadd.f32 %v579, %v597
  %v600 = vadd.f32 %v580, %v597
  %v601 = vadd.f32 %v581, %v597
  %v602 = vadd.f32 %v582, %v597
  %v603 = vadd.f32 %v583, %v597
  %v604 = vadd.f32 %v584, %v597
  %v605 = vadd.f32 %v585, %v597
  %v606 = vadd.f32 %v586, %v597
  %v607 = vadd.f32 %v587, %v597
  %v608 = vadd.f32 %v588, %v597
  %v609 = vadd.f32 %v589, %v597
  %v610 = vadd.f32 %v590, %v597
  %v611 = vadd.f32 %v591, %v597
  %v612 = vadd.f32 %v592, %v597
  %v613 = vadd.f32 %v593, %v597
  %v614 = vmax.f32 %v598, 0.0
  %v615 = vmax.f32 %v599, 0.0
  %v616 = vmax.f32 %v600, 0.0
  %v617 = vmax.f32 %v601, 0.0
  %v618 = vmax.f32 %v602, 0.0
  %v619 = vmax.f32 %v603, 0.0
  %v620 = vmax.f32 %v604, 0.0
  %v621 = vmax.f32 %v605, 0.0
  %v622 = vmax.f32 %v606, 0.0
  %v623 = vmax.f32 %v607, 0.0
  %v624 = vmax.f32 %v608, 0.0
  %v625 = vmax.f32 %v609, 0.0
  %v626 = vmax.f32 %v610, 0.0
  %v627 = vmax.f32 %v611, 0.0
  %v628 = vmax.f32 %v612, 0.0
  %v629 = vmax.f32 %v613, 0.0
  %v630 = vpack.c.bf16 %v615, %v614
  %v631 = vpack.c.bf16 %v617, %v616
  %v632 = vpack.c.bf16 %v619, %v618
  %v633 = vpack.c.bf16 %v621, %v620
  %v634 = vpack.c.bf16 %v623, %v622
  %v635 = vpack.c.bf16 %v625, %v624
  %v636 = vpack.c.bf16 %v627, %v626
  %v637 = vpack.c.bf16 %v629, %v628
  %v638 = vlaneseq
  %v639 = vshrl.u32 %v638, 7
  %v640 = vsub.s32 1, %v639
  %v641 = vrot.slane %v46, %v640
  %642 = vmatprep.subr.bf16.mxu0 0
  %643 = vmatpush1.bf16.msra.mxu0 %v63
  %644 = vmatprep.subr.bf16.mxu0 0
  %645 = vmatpush1.bf16.msra.mxu0 %v64
  %646 = vmatprep.subr.bf16.mxu0 0
  %647 = vmatpush1.bf16.msra.mxu0 %v65
  %648 = vmatprep.subr.bf16.mxu0 0
  %649 = vmatpush1.bf16.msra.mxu0 %v66
  %650 = vmatprep.subr.bf16.mxu0 0
  %651 = vmatpush1.bf16.msra.mxu0 %v67
  %652 = vmatprep.subr.bf16.mxu0 0
  %653 = vmatpush1.bf16.msra.mxu0 %v68
  %654 = vmatprep.subr.bf16.mxu0 0
  %655 = vmatpush1.bf16.msra.mxu0 %v69
  %656 = vmatprep.subr.bf16.mxu0 0
  %657 = vmatpush1.bf16.msra.mxu0 %v70
  %658 = vmatprep.subr.bf16.mxu0 0
  %659 = vmatpush1.bf16.msra.mxu0 0
  %660 = vmatprep.subr.bf16.mxu0 0
  %661 = vmatpush1.bf16.msra.mxu0 0
  %662 = vmatprep.subr.bf16.mxu0 0
  %663 = vmatpush1.bf16.msra.mxu0 0
  %664 = vmatprep.subr.bf16.mxu0 0
  %665 = vmatpush1.bf16.msra.mxu0 0
  %666 = vmatprep.subr.bf16.mxu0 0
  %667 = vmatpush1.bf16.msra.mxu0 0
  %668 = vmatprep.subr.bf16.mxu0 0
  %669 = vmatpush1.bf16.msra.mxu0 0
  %670 = vmatprep.subr.bf16.mxu0 0
  %671 = vmatpush1.bf16.msra.mxu0 0
  %672 = vmatprep.subr.bf16.mxu0 0
  %673 = vmatpush1.bf16.msra.mxu0 0
  %674 = vmatprep.mubr.bf16.mxu0 0
  %675 = vmatmul.mubr.bf16.gmra.mrb[0].mxu0 %v630
  %v676 = vpop.f32.mrb[0].mxu0
  %v677 = vadd.f32 %v641, %v676
  %v678 = vpop.f32.mrb[0].mxu0
  %v679 = vpop.f32.mrb[0].mxu0
  %v680 = vadd.f32 %v641, %v679
  %v681 = vpop.f32.mrb[0].mxu0
  %682 = vmatprep.mubr.bf16.mxu0 0
  %683 = vmatmul.mubr.bf16.gmra.mrb[0].mxu0 %v631
  %v684 = vpop.f32.mrb[0].mxu0
  %v685 = vadd.f32 %v641, %v684
  %v686 = vpop.f32.mrb[0].mxu0
  %v687 = vpop.f32.mrb[0].mxu0
  %v688 = vadd.f32 %v641, %v687
  %v689 = vpop.f32.mrb[0].mxu0
  %690 = vmatprep.mubr.bf16.mxu0 0
  %691 = vmatmul.mubr.bf16.gmra.mrb[0].mxu0 %v632
  %v692 = vpop.f32.mrb[0].mxu0
  %v693 = vadd.f32 %v641, %v692
  %v694 = vpop.f32.mrb[0].mxu0
  %v695 = vpop.f32.mrb[0].mxu0
  %v696 = vadd.f32 %v641, %v695
  %v697 = vpop.f32.mrb[0].mxu0
  %698 = vmatprep.mubr.bf16.mxu0 0
  %699 = vmatmul.mubr.bf16.gmra.mrb[0].mxu0 %v633
  %v700 = vpop.f32.mrb[0].mxu0
  %v701 = vadd.f32 %v641, %v700
  %v702 = vpop.f32.mrb[0].mxu0
  %v703 = vpop.f32.mrb[0].mxu0
  %v704 = vadd.f32 %v641, %v703
  %v705 = vpop.f32.mrb[0].mxu0
  %706 = vmatprep.mubr.bf16.mxu0 0
  %707 = vmatmul.mubr.bf16.gmra.mrb[0].mxu0 %v634
  %v708 = vpop.f32.mrb[0].mxu0
  %v709 = vadd.f32 %v641, %v708
  %v710 = vpop.f32.mrb[0].mxu0
  %v711 = vpop.f32.mrb[0].mxu0
  %v712 = vadd.f32 %v641, %v711
  %v713 = vpop.f32.mrb[0].mxu0
  %714 = vmatprep.mubr.bf16.mxu0 0
  %715 = vmatmul.mubr.bf16.gmra.mrb[0].mxu0 %v635
  %v716 = vpop.f32.mrb[0].mxu0
  %v717 = vadd.f32 %v641, %v716
  %v718 = vpop.f32.mrb[0].mxu0
  %v719 = vpop.f32.mrb[0].mxu0
  %v720 = vadd.f32 %v641, %v719
  %v721 = vpop.f32.mrb[0].mxu0
  %722 = vmatprep.mubr.bf16.mxu0 0
  %723 = vmatmul.mubr.bf16.gmra.mrb[0].mxu0 %v636
  %v724 = vpop.f32.mrb[0].mxu0
  %v725 = vadd.f32 %v641, %v724
  %v726 = vpop.f32.mrb[0].mxu0
  %v727 = vpop.f32.mrb[0].mxu0
  %v728 = vadd.f32 %v641, %v727
  %v729 = vpop.f32.mrb[0].mxu0
  %730 = vmatprep.mubr.bf16.mxu0 0
  %731 = vmatmul.mubr.bf16.gmra.mrb[0].mxu0 %v637
  %v732 = vpop.f32.mrb[0].mxu0
  %v733 = vadd.f32 %v641, %v732
  %v734 = vpop.f32.mrb[0].mxu0
  %v735 = vpop.f32.mrb[0].mxu0
  %v736 = vadd.f32 %v641, %v735
  %v737 = vpop.f32.mrb[0].mxu0
  %738 = vdwg.mxu0
  %v739 = vmax.f32 %v677, 0.0
  %v740 = vmax.f32 %v680, 0.0
  %v741 = vmax.f32 %v685, 0.0
  %v742 = vmax.f32 %v688, 0.0
  %v743 = vmax.f32 %v693, 0.0
  %v744 = vmax.f32 %v696, 0.0
  %v745 = vmax.f32 %v701, 0.0
  %v746 = vmax.f32 %v704, 0.0
  %v747 = vmax.f32 %v709, 0.0
  %v748 = vmax.f32 %v712, 0.0
  %v749 = vmax.f32 %v717, 0.0
  %v750 = vmax.f32 %v720, 0.0
  %v751 = vmax.f32 %v725, 0.0
  %v752 = vmax.f32 %v728, 0.0
  %v753 = vmax.f32 %v733, 0.0
  %v754 = vmax.f32 %v736, 0.0
  %v755 = vpack.c.bf16 %v740, %v739
  %v756 = vpack.c.bf16 %v742, %v741
  %v757 = vpack.c.bf16 %v744, %v743
  %v758 = vpack.c.bf16 %v746, %v745
  %v759 = vpack.c.bf16 %v748, %v747
  %v760 = vpack.c.bf16 %v750, %v749
  %v761 = vpack.c.bf16 %v752, %v751
  %v762 = vpack.c.bf16 %v754, %v753
  %v763 = vlaneseq
  %v764 = vshrl.u32 %v763, 7
  %v765 = vsub.s32 2, %v764
  %v766 = vrot.slane %v46, %v765
  %767 = vmatprep.subr.bf16.mxu0 0
  %768 = vmatpush1.bf16.msra.mxu0 %v88
  %769 = vmatprep.subr.bf16.mxu0 0
  %770 = vmatpush1.bf16.msra.mxu0 %v89
  %771 = vmatprep.subr.bf16.mxu0 0
  %772 = vmatpush1.bf16.msra.mxu0 %v90
  %773 = vmatprep.subr.bf16.mxu0 0
  %774 = vmatpush1.bf16.msra.mxu0 %v91
  %775 = vmatprep.subr.bf16.mxu0 0
  %776 = vmatpush1.bf16.msra.mxu0 %v92
  %777 = vmatprep.subr.bf16.mxu0 0
  %778 = vmatpush1.bf16.msra.mxu0 %v93
  %779 = vmatprep.subr.bf16.mxu0 0
  %780 = vmatpush1.bf16.msra.mxu0 %v94
  %781 = vmatprep.subr.bf16.mxu0 0
  %782 = vmatpush1.bf16.msra.mxu0 %v95
  %783 = vmatprep.subr.bf16.mxu0 0
  %784 = vmatpush1.bf16.msra.mxu0 0
  %785 = vmatprep.subr.bf16.mxu0 0
  %786 = vmatpush1.bf16.msra.mxu0 0
  %787 = vmatprep.subr.bf16.mxu0 0
  %788 = vmatpush1.bf16.msra.mxu0 0
  %789 = vmatprep.subr.bf16.mxu0 0
  %790 = vmatpush1.bf16.msra.mxu0 0
  %791 = vmatprep.subr.bf16.mxu0 0
  %792 = vmatpush1.bf16.msra.mxu0 0
  %793 = vmatprep.subr.bf16.mxu0 0
  %794 = vmatpush1.bf16.msra.mxu0 0
  %795 = vmatprep.subr.bf16.mxu0 0
  %796 = vmatpush1.bf16.msra.mxu0 0
  %797 = vmatprep.subr.bf16.mxu0 0
  %798 = vmatpush1.bf16.msra.mxu0 0
  %799 = vmatprep.mubr.bf16.mxu0 0
  %800 = vmatmul.mubr.bf16.gmra.mrb[0].mxu0 %v755
  %v801 = vpop.f32.mrb[0].mxu0
  %v802 = vadd.f32 %v766, %v801
  %v803 = vpop.f32.mrb[0].mxu0
  %v804 = vpop.f32.mrb[0].mxu0
  %v805 = vadd.f32 %v766, %v804
  %v806 = vpop.f32.mrb[0].mxu0
  %807 = vmatprep.mubr.bf16.mxu0 0
  %808 = vmatmul.mubr.bf16.gmra.mrb[0].mxu0 %v756
  %v809 = vpop.f32.mrb[0].mxu0
  %v810 = vadd.f32 %v766, %v809
  %v811 = vpop.f32.mrb[0].mxu0
  %v812 = vpop.f32.mrb[0].mxu0
  %v813 = vadd.f32 %v766, %v812
  %v814 = vpop.f32.mrb[0].mxu0
  %815 = vmatprep.mubr.bf16.mxu0 0
  %816 = vmatmul.mubr.bf16.gmra.mrb[0].mxu0 %v757
  %v817 = vpop.f32.mrb[0].mxu0
  %v818 = vadd.f32 %v766, %v817
  %v819 = vpop.f32.mrb[0].mxu0
  %v820 = vpop.f32.mrb[0].mxu0
  %v821 = vadd.f32 %v766, %v820
  %v822 = vpop.f32.mrb[0].mxu0
  %823 = vmatprep.mubr.bf16.mxu0 0
  %824 = vmatmul.mubr.bf16.gmra.mrb[0].mxu0 %v758
  %v825 = vpop.f32.mrb[0].mxu0
  %v826 = vadd.f32 %v766, %v825
  %v827 = vpop.f32.mrb[0].mxu0
  %v828 = vpop.f32.mrb[0].mxu0
  %v829 = vadd.f32 %v766, %v828
  %v830 = vpop.f32.mrb[0].mxu0
  %831 = vmatprep.mubr.bf16.mxu0 0
  %832 = vmatmul.mubr.bf16.gmra.mrb[0].mxu0 %v759
  %v833 = vpop.f32.mrb[0].mxu0
  %v834 = vadd.f32 %v766, %v833
  %v835 = vpop.f32.mrb[0].mxu0
  %v836 = vpop.f32.mrb[0].mxu0
  %v837 = vadd.f32 %v766, %v836
  %v838 = vpop.f32.mrb[0].mxu0
  %839 = vmatprep.mubr.bf16.mxu0 0
  %840 = vmatmul.mubr.bf16.gmra.mrb[0].mxu0 %v760
  %v841 = vpop.f32.mrb[0].mxu0
  %v842 = vadd.f32 %v766, %v841
  %v843 = vpop.f32.mrb[0].mxu0
  %v844 = vpop.f32.mrb[0].mxu0
  %v845 = vadd.f32 %v766, %v844
  %v846 = vpop.f32.mrb[0].mxu0
  %847 = vmatprep.mubr.bf16.mxu0 0
  %848 = vmatmul.mubr.bf16.gmra.mrb[0].mxu0 %v761
  %v849 = vpop.f32.mrb[0].mxu0
  %v850 = vadd.f32 %v766, %v849
  %v851 = vpop.f32.mrb[0].mxu0
  %v852 = vpop.f32.mrb[0].mxu0
  %v853 = vadd.f32 %v766, %v852
  %v854 = vpop.f32.mrb[0].mxu0
  %855 = vmatprep.mubr.bf16.mxu0 0
  %856 = vmatmul.mubr.bf16.gmra.mrb[0].mxu0 %v762
  %v857 = vpop.f32.mrb[0].mxu0
  %v858 = vadd.f32 %v766, %v857
  %v859 = vpop.f32.mrb[0].mxu0
  %v860 = vpop.f32.mrb[0].mxu0
  %v861 = vadd.f32 %v766, %v860
  %v862 = vpop.f32.mrb[0].mxu0
  %863 = vdwg.mxu0
  %v864 = vmax.f32 %v802, 0.0
  %v865 = vmax.f32 %v805, 0.0
  %v866 = vmax.f32 %v810, 0.0
  %v867 = vmax.f32 %v813, 0.0
  %v868 = vmax.f32 %v818, 0.0
  %v869 = vmax.f32 %v821, 0.0
  %v870 = vmax.f32 %v826, 0.0
  %v871 = vmax.f32 %v829, 0.0
  %v872 = vmax.f32 %v834, 0.0
  %v873 = vmax.f32 %v837, 0.0
  %v874 = vmax.f32 %v842, 0.0
  %v875 = vmax.f32 %v845, 0.0
  %v876 = vmax.f32 %v850, 0.0
  %v877 = vmax.f32 %v853, 0.0
  %v878 = vmax.f32 %v858, 0.0
  %v879 = vmax.f32 %v861, 0.0
  %v880 = vmax.f32 %v864, %v866
  %v881 = vmax.f32 %v865, %v867
  %v882 = vmax.f32 %v880, %v868
  %v883 = vmax.f32 %v881, %v869
  %v884 = vmax.f32 %v882, %v870
  %v885 = vmax.f32 %v883, %v871
  %v886 = vmax.f32 %v884, %v885
  %v887 = vrot.slane %v886, 4
  %v888 = vmax.f32 %v886, %v887
  %v889 = vrot.slane %v888, 2
  %v890 = vmax.f32 %v888, %v889
  %v891 = vrot.slane %v890, 1
  %v892 = vmax.f32 %v890, %v891
  %v893 = vmax.f32 %v872, %v874
  %v894 = vmax.f32 %v873, %v875
  %v895 = vmax.f32 %v893, %v876
  %v896 = vmax.f32 %v894, %v877
  %v897 = vmax.f32 %v895, %v878
  %v898 = vmax.f32 %v896, %v879
  %v899 = vmax.f32 %v897, %v898
  %v900 = vrot.slane %v899, 4
  %v901 = vmax.f32 %v899, %v900
  %v902 = vrot.slane %v901, 2
  %v903 = vmax.f32 %v901, %v902
  %v904 = vrot.slane %v903, 1
  %v905 = vmax.f32 %v903, %v904
  %v906 = vld [vmem:[%s5] sm:$0x1]
  %v907 = vld [vmem:[%s5 + $0x1] sm:$0x1]
  %v908 = vmax.f32 %v906, %v892
  %v909 = vmax.f32 %v907, %v905
  %910 = vst [vmem:[%s5] sm:$0x1] %v908
  %911 = vst [vmem:[%s5 + $0x1] sm:$0x1] %v909
  // Predicated region
  $region26: #{closed_call.13} parent=0 // pred_check
    _
  $region27: #{closed_call.13} parent=0 // pred_check_branch
    %913 = sbr.rel (0) target = $region29
  $region28: #{closed_call.13} parent=0 // pred_region
    _
  $region29: #{closed_call.13} parent=0 // pred_fallthru
    _
  // Predicated region
  $region30: #{closed_call.13} parent=0 // pred_check
    _
  $region31: #{closed_call.13} parent=0 // pred_check_branch
    %915 = sbr.rel (0) target = $region33
  $region32: #{closed_call.13} parent=0 // pred_region
    _
  $region33: #{closed_call.13} parent=0 // pred_fallthru
    _

// kernel: pointnetlk_forward.1
$region0: #{pointnetlk_forward.1}
  #allocation0 [shape = 'u32[]', space=smem, size = 0x4, offset = 0x4, fixed_abs, tag = 'smem constant byte address 0x4 - core index']
  #allocation1 [shape = 'u32[144,128]{1,0:T(1,128)}', space=vmem, size = 0x12000, scoped, tag = 'internal scratch']
  %s0 = inlined_call_operand.vmem [shape: f32[2,64,4], index: 0, kind: input, shape index: {}]
  %s1 = inlined_call_operand.vmem [shape: f32[2,7,4,4], index: 1, kind: input, shape index: {}]
  %s2 = inlined_call_operand.vmem [shape: f32[4,128], index: 2, kind: input, shape index: {}]
  %s3 = inlined_call_operand.vmem [shape: f32[3,128], index: 3, kind: input, shape index: {}]
  %s4 = inlined_call_operand.vmem [shape: f32[2,128,128], index: 4, kind: input, shape index: {}]
  %s5 = inlined_call_operand.vmem [shape: f32[2,7,128], index: 5, kind: output, shape index: {}]
  %s6 = sld [smem:[#allocation0]]
  $region34: #{pointnetlk_forward.1} parent=0
    _
  %s8 = ssub.s32 1, %s6
  %s9 = scalar_select 0, %s8, %s6
  // Predicated region
  $region2: #{pointnetlk_forward.1} parent=0 // pred_check
    _
  $region3: #{pointnetlk_forward.1} parent=0 // pred_check_branch
    %11 = sbr.rel (0) target = $region5
  $region4: #{pointnetlk_forward.1} parent=0 // pred_region
    _
  $region5: #{pointnetlk_forward.1} parent=0 // pred_fallthru
    _
  // Predicated region
  $region6: #{pointnetlk_forward.1} parent=0 // pred_check
    _
  $region7: #{pointnetlk_forward.1} parent=0 // pred_check_branch
    %13 = sbr.rel (0) target = $region9
  $region8: #{pointnetlk_forward.1} parent=0 // pred_region
    _
  $region9: #{pointnetlk_forward.1} parent=0 // pred_fallthru
    _
  // Predicated region
  $region10: #{pointnetlk_forward.1} parent=0 // pred_check
    _
  $region11: #{pointnetlk_forward.1} parent=0 // pred_check_branch
    %15 = sbr.rel (0) target = $region13
  $region12: #{pointnetlk_forward.1} parent=0 // pred_region
    _
  $region13: #{pointnetlk_forward.1} parent=0 // pred_fallthru
    _
  // Predicated region
  $region14: #{pointnetlk_forward.1} parent=0 // pred_check
    _
  $region15: #{pointnetlk_forward.1} parent=0 // pred_check_branch
    %17 = sbr.rel (0) target = $region17
  $region16: #{pointnetlk_forward.1} parent=0 // pred_region
    _
  $region17: #{pointnetlk_forward.1} parent=0 // pred_fallthru
    _
  // Predicated region
  $region18: #{pointnetlk_forward.1} parent=0 // pred_check
    _
  $region19: #{pointnetlk_forward.1} parent=0 // pred_check_branch
    %19 = sbr.rel (0) target = $region21
  $region20: #{pointnetlk_forward.1} parent=0 // pred_region
    _
  $region21: #{pointnetlk_forward.1} parent=0 // pred_fallthru
    _
  %p20 = scmp.eq.s32.totalorder 0, 0
  // Predicated region
  $region22: #{pointnetlk_forward.1} parent=0 // pred_check
    %p21 = pneg %p20
  $region23: #{pointnetlk_forward.1} parent=0 // pred_check_branch
    %23 = sbr.rel (%p21) target = $region25
  $region24: #{pointnetlk_forward.1} parent=0 // pred_region
    %24 = vst [vmem:[%s5] sm:$0x7f] 0.0
    %25 = vst [vmem:[%s5 + $0x8] sm:$0x7f] 0.0
  $region25: #{pointnetlk_forward.1} parent=0 // pred_fallthru
    _
  %v26 = vld [vmem:[%s0] sm:$0xff]
  %v27 = vld [vmem:[%s0 + $0x8] sm:$0xff]
  %v28 = vld [vmem:[%s0 + $0x10] sm:$0xff]
  %v29 = vld [vmem:[%s0 + $0x18] sm:$0xff]
  %v30 = vld [vmem:[%s0 + $0x20] sm:$0xff]
  %v31 = vld [vmem:[%s0 + $0x28] sm:$0xff]
  %v32 = vld [vmem:[%s0 + $0x30] sm:$0xff]
  %v33 = vld [vmem:[%s0 + $0x38] sm:$0xff]
  %v34 = vld [vmem:[%s0 + $0x40] sm:$0xff]
  %v35 = vld [vmem:[%s0 + $0x48] sm:$0xff]
  %v36 = vld [vmem:[%s0 + $0x50] sm:$0xff]
  %v37 = vld [vmem:[%s0 + $0x58] sm:$0xff]
  %v38 = vld [vmem:[%s0 + $0x60] sm:$0xff]
  %v39 = vld [vmem:[%s0 + $0x68] sm:$0xff]
  %v40 = vld [vmem:[%s0 + $0x70] sm:$0xff]
  %v41 = vld [vmem:[%s0 + $0x78] sm:$0xff]
  %v42 = vld [vmem:[%s1] sm:$0xf]
  %v43 = vld [vmem:[%s1 + $0x4] sm:$0xf]
  %v44 = vld [vmem:[%s1 + $0x8] sm:$0xf]
  %v45 = vld [vmem:[%s1 + $0xc] sm:$0xf]
  %v46 = vld [vmem:[%s1 + $0x10] sm:$0xf]
  %v47 = vld [vmem:[%s1 + $0x14] sm:$0xf]
  %v48 = vld [vmem:[%s1 + $0x18] sm:$0xf]
  %v49 = vld [vmem:[%s1 + $0x1c] sm:$0xf]
  %v50 = vld [vmem:[%s1 + $0x20] sm:$0xf]
  %v51 = vld [vmem:[%s1 + $0x24] sm:$0xf]
  %v52 = vld [vmem:[%s1 + $0x28] sm:$0xf]
  %v53 = vld [vmem:[%s1 + $0x2c] sm:$0xf]
  %v54 = vld [vmem:[%s1 + $0x30] sm:$0xf]
  %v55 = vld [vmem:[%s1 + $0x34] sm:$0xf]
  %v56 = vld [vmem:[%s2] sm:$0xf]
  %v57 = vld [vmem:[%s3] sm:$0x7]
  %v58 = vld [vmem:[%s4] sm:$0xff]
  %v59 = vld [vmem:[%s4 + $0x8] sm:$0xff]
  %v60 = vld [vmem:[%s4 + $0x10] sm:$0xff]
  %v61 = vld [vmem:[%s4 + $0x18] sm:$0xff]
  %v62 = vld [vmem:[%s4 + $0x20] sm:$0xff]
  %v63 = vld [vmem:[%s4 + $0x28] sm:$0xff]
  %v64 = vld [vmem:[%s4 + $0x30] sm:$0xff]
  %v65 = vld [vmem:[%s4 + $0x38] sm:$0xff]
  %v66 = vld [vmem:[%s4 + $0x40] sm:$0xff]
  %v67 = vld [vmem:[%s4 + $0x48] sm:$0xff]
  %v68 = vld [vmem:[%s4 + $0x50] sm:$0xff]
  %v69 = vld [vmem:[%s4 + $0x58] sm:$0xff]
  %v70 = vld [vmem:[%s4 + $0x60] sm:$0xff]
  %v71 = vld [vmem:[%s4 + $0x68] sm:$0xff]
  %v72 = vld [vmem:[%s4 + $0x70] sm:$0xff]
  %v73 = vld [vmem:[%s4 + $0x78] sm:$0xff]
  %s74 = scalar_lea.vmem %s4, 128
  %v75 = vld [vmem:[%s74] sm:$0xff]
  %v76 = vld [vmem:[%s74 + $0x8] sm:$0xff]
  %v77 = vld [vmem:[%s74 + $0x10] sm:$0xff]
  %v78 = vld [vmem:[%s74 + $0x18] sm:$0xff]
  %v79 = vld [vmem:[%s74 + $0x20] sm:$0xff]
  %v80 = vld [vmem:[%s74 + $0x28] sm:$0xff]
  %v81 = vld [vmem:[%s74 + $0x30] sm:$0xff]
  %v82 = vld [vmem:[%s74 + $0x38] sm:$0xff]
  %v83 = vld [vmem:[%s74 + $0x40] sm:$0xff]
  %v84 = vld [vmem:[%s74 + $0x48] sm:$0xff]
  %v85 = vld [vmem:[%s74 + $0x50] sm:$0xff]
  %v86 = vld [vmem:[%s74 + $0x58] sm:$0xff]
  %v87 = vld [vmem:[%s74 + $0x60] sm:$0xff]
  %v88 = vld [vmem:[%s74 + $0x68] sm:$0xff]
  %v89 = vld [vmem:[%s74 + $0x70] sm:$0xff]
  %v90 = vld [vmem:[%s74 + $0x78] sm:$0xff]
  %92 = vset.pattern.permute.xlu0 0
  %93 = vperm.xlu0 %92, %v42
  %v94 = vpop.permute.xlu0 %93
  %97 = vset.pattern.permute.xlu0 0
  %98 = vperm.xlu0 %97, %v49
  %v99 = vpop.permute.xlu0 %98
  %v101 = vlaneseq
  %v102 = vshrl.u32 %v101, 7
  %v103 = vsub.s32 0, %v102
  %v104 = vrot.slane %v56, %v103
  %v105 = vmul.f32 %v94, %v104
  %v106 = vmul.f32 %v99, %v104
  %v107 = vadd.f32 %v105, 0.0
  %v108 = vadd.f32 %v106, 0.0
  %109 = vset.pattern.permute.xlu0 1
  %110 = vperm.xlu0 %109, %v42
  %v111 = vpop.permute.xlu0 %110
  %113 = vset.pattern.permute.xlu0 1
  %114 = vperm.xlu0 %113, %v49
  %v115 = vpop.permute.xlu0 %114
  %v117 = vlaneseq
  %v118 = vshrl.u32 %v117, 7
  %v119 = vsub.s32 1, %v118
  %v120 = vrot.slane %v56, %v119
  %v121 = vmul.f32 %v111, %v120
  %v122 = vmul.f32 %v115, %v120
  %v123 = vadd.f32 %v107, %v121
  %v124 = vadd.f32 %v108, %v122
  %125 = vset.pattern.permute.xlu0 2
  %126 = vperm.xlu0 %125, %v42
  %v127 = vpop.permute.xlu0 %126
  %129 = vset.pattern.permute.xlu0 2
  %130 = vperm.xlu0 %129, %v49
  %v131 = vpop.permute.xlu0 %130
  %v133 = vlaneseq
  %v134 = vshrl.u32 %v133, 7
  %v135 = vsub.s32 2, %v134
  %v136 = vrot.slane %v56, %v135
  %v137 = vmul.f32 %v127, %v136
  %v138 = vmul.f32 %v131, %v136
  %v139 = vadd.f32 %v123, %v137
  %v140 = vadd.f32 %v124, %v138
  %141 = vset.pattern.permute.xlu0 3
  %142 = vperm.xlu0 %141, %v42
  %v143 = vpop.permute.xlu0 %142
  %145 = vset.pattern.permute.xlu0 3
  %146 = vperm.xlu0 %145, %v49
  %v147 = vpop.permute.xlu0 %146
  %v149 = vlaneseq
  %v150 = vshrl.u32 %v149, 7
  %v151 = vsub.s32 3, %v150
  %v152 = vrot.slane %v56, %v151
  %v153 = vmul.f32 %v143, %v152
  %v154 = vmul.f32 %v147, %v152
  %v155 = vadd.f32 %v139, %v153
  %v156 = vadd.f32 %v140, %v154
  %158 = vset.pattern.permute.xlu0 0
  %159 = vperm.xlu0 %158, %v26
  %v160 = vpop.permute.xlu0 %159
  %163 = vset.pattern.permute.xlu0 0
  %164 = vperm.xlu0 %163, %v27
  %v165 = vpop.permute.xlu0 %164
  %168 = vset.pattern.permute.xlu0 0
  %169 = vperm.xlu0 %168, %v28
  %v170 = vpop.permute.xlu0 %169
  %173 = vset.pattern.permute.xlu0 0
  %174 = vperm.xlu0 %173, %v29
  %v175 = vpop.permute.xlu0 %174
  %178 = vset.pattern.permute.xlu0 0
  %179 = vperm.xlu0 %178, %v30
  %v180 = vpop.permute.xlu0 %179
  %183 = vset.pattern.permute.xlu0 0
  %184 = vperm.xlu0 %183, %v31
  %v185 = vpop.permute.xlu0 %184
  %188 = vset.pattern.permute.xlu0 0
  %189 = vperm.xlu0 %188, %v32
  %v190 = vpop.permute.xlu0 %189
  %193 = vset.pattern.permute.xlu0 0
  %194 = vperm.xlu0 %193, %v33
  %v195 = vpop.permute.xlu0 %194
  %198 = vset.pattern.permute.xlu0 0
  %199 = vperm.xlu0 %198, %v34
  %v200 = vpop.permute.xlu0 %199
  %203 = vset.pattern.permute.xlu0 0
  %204 = vperm.xlu0 %203, %v35
  %v205 = vpop.permute.xlu0 %204
  %208 = vset.pattern.permute.xlu0 0
  %209 = vperm.xlu0 %208, %v36
  %v210 = vpop.permute.xlu0 %209
  %213 = vset.pattern.permute.xlu0 0
  %214 = vperm.xlu0 %213, %v37
  %v215 = vpop.permute.xlu0 %214
  %218 = vset.pattern.permute.xlu0 0
  %219 = vperm.xlu0 %218, %v38
  %v220 = vpop.permute.xlu0 %219
  %223 = vset.pattern.permute.xlu0 0
  %224 = vperm.xlu0 %223, %v39
  %v225 = vpop.permute.xlu0 %224
  %228 = vset.pattern.permute.xlu0 0
  %229 = vperm.xlu0 %228, %v40
  %v230 = vpop.permute.xlu0 %229
  %233 = vset.pattern.permute.xlu0 0
  %234 = vperm.xlu0 %233, %v41
  %v235 = vpop.permute.xlu0 %234
  %v237 = vlaneseq
  %v238 = vshrl.u32 %v237, 7
  %v239 = vsub.s32 0, %v238
  %v240 = vrot.slane %v155, %v239
  %v241 = vlaneseq
  %v242 = vshrl.u32 %v241, 7
  %v243 = vsub.s32 0, %v242
  %v244 = vrot.slane %v156, %v243
  %v245 = vmul.f32 %v160, %v240
  %v246 = vmul.f32 %v165, %v240
  %v247 = vmul.f32 %v170, %v240
  %v248 = vmul.f32 %v175, %v240
  %v249 = vmul.f32 %v180, %v240
  %v250 = vmul.f32 %v185, %v240
  %v251 = vmul.f32 %v190, %v240
  %v252 = vmul.f32 %v195, %v240
  %v253 = vmul.f32 %v200, %v244
  %v254 = vmul.f32 %v205, %v244
  %v255 = vmul.f32 %v210, %v244
  %v256 = vmul.f32 %v215, %v244
  %v257 = vmul.f32 %v220, %v244
  %v258 = vmul.f32 %v225, %v244
  %v259 = vmul.f32 %v230, %v244
  %v260 = vmul.f32 %v235, %v244
  %v261 = vadd.f32 %v245, 0.0
  %v262 = vadd.f32 %v246, 0.0
  %v263 = vadd.f32 %v247, 0.0
  %v264 = vadd.f32 %v248, 0.0
  %v265 = vadd.f32 %v249, 0.0
  %v266 = vadd.f32 %v250, 0.0
  %v267 = vadd.f32 %v251, 0.0
  %v268 = vadd.f32 %v252, 0.0
  %v269 = vadd.f32 %v253, 0.0
  %v270 = vadd.f32 %v254, 0.0
  %v271 = vadd.f32 %v255, 0.0
  %v272 = vadd.f32 %v256, 0.0
  %v273 = vadd.f32 %v257, 0.0
  %v274 = vadd.f32 %v258, 0.0
  %v275 = vadd.f32 %v259, 0.0
  %v276 = vadd.f32 %v260, 0.0
  %277 = vset.pattern.permute.xlu0 1
  %278 = vperm.xlu0 %277, %v26
  %v279 = vpop.permute.xlu0 %278
  %281 = vset.pattern.permute.xlu0 1
  %282 = vperm.xlu0 %281, %v27
  %v283 = vpop.permute.xlu0 %282
  %285 = vset.pattern.permute.xlu0 1
  %286 = vperm.xlu0 %285, %v28
  %v287 = vpop.permute.xlu0 %286
  %289 = vset.pattern.permute.xlu0 1
  %290 = vperm.xlu0 %289, %v29
  %v291 = vpop.permute.xlu0 %290
  %293 = vset.pattern.permute.xlu0 1
  %294 = vperm.xlu0 %293, %v30
  %v295 = vpop.permute.xlu0 %294
  %297 = vset.pattern.permute.xlu0 1
  %298 = vperm.xlu0 %297, %v31
  %v299 = vpop.permute.xlu0 %298
  %301 = vset.pattern.permute.xlu0 1
  %302 = vperm.xlu0 %301, %v32
  %v303 = vpop.permute.xlu0 %302
  %305 = vset.pattern.permute.xlu0 1
  %306 = vperm.xlu0 %305, %v33
  %v307 = vpop.permute.xlu0 %306
  %309 = vset.pattern.permute.xlu0 1
  %310 = vperm.xlu0 %309, %v34
  %v311 = vpop.permute.xlu0 %310
  %313 = vset.pattern.permute.xlu0 1
  %314 = vperm.xlu0 %313, %v35
  %v315 = vpop.permute.xlu0 %314
  %317 = vset.pattern.permute.xlu0 1
  %318 = vperm.xlu0 %317, %v36
  %v319 = vpop.permute.xlu0 %318
  %321 = vset.pattern.permute.xlu0 1
  %322 = vperm.xlu0 %321, %v37
  %v323 = vpop.permute.xlu0 %322
  %325 = vset.pattern.permute.xlu0 1
  %326 = vperm.xlu0 %325, %v38
  %v327 = vpop.permute.xlu0 %326
  %329 = vset.pattern.permute.xlu0 1
  %330 = vperm.xlu0 %329, %v39
  %v331 = vpop.permute.xlu0 %330
  %333 = vset.pattern.permute.xlu0 1
  %334 = vperm.xlu0 %333, %v40
  %v335 = vpop.permute.xlu0 %334
  %337 = vset.pattern.permute.xlu0 1
  %338 = vperm.xlu0 %337, %v41
  %v339 = vpop.permute.xlu0 %338
  %v341 = vlaneseq
  %v342 = vshrl.u32 %v341, 7
  %v343 = vsub.s32 1, %v342
  %v344 = vrot.slane %v155, %v343
  %v345 = vlaneseq
  %v346 = vshrl.u32 %v345, 7
  %v347 = vsub.s32 1, %v346
  %v348 = vrot.slane %v156, %v347
  %v349 = vmul.f32 %v279, %v344
  %v350 = vmul.f32 %v283, %v344
  %v351 = vmul.f32 %v287, %v344
  %v352 = vmul.f32 %v291, %v344
  %v353 = vmul.f32 %v295, %v344
  %v354 = vmul.f32 %v299, %v344
  %v355 = vmul.f32 %v303, %v344
  %v356 = vmul.f32 %v307, %v344
  %v357 = vmul.f32 %v311, %v348
  %v358 = vmul.f32 %v315, %v348
  %v359 = vmul.f32 %v319, %v348
  %v360 = vmul.f32 %v323, %v348
  %v361 = vmul.f32 %v327, %v348
  %v362 = vmul.f32 %v331, %v348
  %v363 = vmul.f32 %v335, %v348
  %v364 = vmul.f32 %v339, %v348
  %v365 = vadd.f32 %v261, %v349
  %v366 = vadd.f32 %v262, %v350
  %v367 = vadd.f32 %v263, %v351
  %v368 = vadd.f32 %v264, %v352
  %v369 = vadd.f32 %v265, %v353
  %v370 = vadd.f32 %v266, %v354
  %v371 = vadd.f32 %v267, %v355
  %v372 = vadd.f32 %v268, %v356
  %v373 = vadd.f32 %v269, %v357
  %v374 = vadd.f32 %v270, %v358
  %v375 = vadd.f32 %v271, %v359
  %v376 = vadd.f32 %v272, %v360
  %v377 = vadd.f32 %v273, %v361
  %v378 = vadd.f32 %v274, %v362
  %v379 = vadd.f32 %v275, %v363
  %v380 = vadd.f32 %v276, %v364
  %381 = vset.pattern.permute.xlu0 2
  %382 = vperm.xlu0 %381, %v26
  %v383 = vpop.permute.xlu0 %382
  %385 = vset.pattern.permute.xlu0 2
  %386 = vperm.xlu0 %385, %v27
  %v387 = vpop.permute.xlu0 %386
  %389 = vset.pattern.permute.xlu0 2
  %390 = vperm.xlu0 %389, %v28
  %v391 = vpop.permute.xlu0 %390
  %393 = vset.pattern.permute.xlu0 2
  %394 = vperm.xlu0 %393, %v29
  %v395 = vpop.permute.xlu0 %394
  %397 = vset.pattern.permute.xlu0 2
  %398 = vperm.xlu0 %397, %v30
  %v399 = vpop.permute.xlu0 %398
  %401 = vset.pattern.permute.xlu0 2
  %402 = vperm.xlu0 %401, %v31
  %v403 = vpop.permute.xlu0 %402
  %405 = vset.pattern.permute.xlu0 2
  %406 = vperm.xlu0 %405, %v32
  %v407 = vpop.permute.xlu0 %406
  %409 = vset.pattern.permute.xlu0 2
  %410 = vperm.xlu0 %409, %v33
  %v411 = vpop.permute.xlu0 %410
  %413 = vset.pattern.permute.xlu0 2
  %414 = vperm.xlu0 %413, %v34
  %v415 = vpop.permute.xlu0 %414
  %417 = vset.pattern.permute.xlu0 2
  %418 = vperm.xlu0 %417, %v35
  %v419 = vpop.permute.xlu0 %418
  %421 = vset.pattern.permute.xlu0 2
  %422 = vperm.xlu0 %421, %v36
  %v423 = vpop.permute.xlu0 %422
  %425 = vset.pattern.permute.xlu0 2
  %426 = vperm.xlu0 %425, %v37
  %v427 = vpop.permute.xlu0 %426
  %429 = vset.pattern.permute.xlu0 2
  %430 = vperm.xlu0 %429, %v38
  %v431 = vpop.permute.xlu0 %430
  %433 = vset.pattern.permute.xlu0 2
  %434 = vperm.xlu0 %433, %v39
  %v435 = vpop.permute.xlu0 %434
  %437 = vset.pattern.permute.xlu0 2
  %438 = vperm.xlu0 %437, %v40
  %v439 = vpop.permute.xlu0 %438
  %441 = vset.pattern.permute.xlu0 2
  %442 = vperm.xlu0 %441, %v41
  %v443 = vpop.permute.xlu0 %442
  %v445 = vlaneseq
  %v446 = vshrl.u32 %v445, 7
  %v447 = vsub.s32 2, %v446
  %v448 = vrot.slane %v155, %v447
  %v449 = vlaneseq
  %v450 = vshrl.u32 %v449, 7
  %v451 = vsub.s32 2, %v450
  %v452 = vrot.slane %v156, %v451
  %v453 = vmul.f32 %v383, %v448
  %v454 = vmul.f32 %v387, %v448
  %v455 = vmul.f32 %v391, %v448
  %v456 = vmul.f32 %v395, %v448
  %v457 = vmul.f32 %v399, %v448
  %v458 = vmul.f32 %v403, %v448
  %v459 = vmul.f32 %v407, %v448
  %v460 = vmul.f32 %v411, %v448
  %v461 = vmul.f32 %v415, %v452
  %v462 = vmul.f32 %v419, %v452
  %v463 = vmul.f32 %v423, %v452
  %v464 = vmul.f32 %v427, %v452
  %v465 = vmul.f32 %v431, %v452
  %v466 = vmul.f32 %v435, %v452
  %v467 = vmul.f32 %v439, %v452
  %v468 = vmul.f32 %v443, %v452
  %v469 = vadd.f32 %v365, %v453
  %v470 = vadd.f32 %v366, %v454
  %v471 = vadd.f32 %v367, %v455
  %v472 = vadd.f32 %v368, %v456
  %v473 = vadd.f32 %v369, %v457
  %v474 = vadd.f32 %v370, %v458
  %v475 = vadd.f32 %v371, %v459
  %v476 = vadd.f32 %v372, %v460
  %v477 = vadd.f32 %v373, %v461
  %v478 = vadd.f32 %v374, %v462
  %v479 = vadd.f32 %v375, %v463
  %v480 = vadd.f32 %v376, %v464
  %v481 = vadd.f32 %v377, %v465
  %v482 = vadd.f32 %v378, %v466
  %v483 = vadd.f32 %v379, %v467
  %v484 = vadd.f32 %v380, %v468
  %485 = vset.pattern.permute.xlu0 3
  %486 = vperm.xlu0 %485, %v26
  %v487 = vpop.permute.xlu0 %486
  %489 = vset.pattern.permute.xlu0 3
  %490 = vperm.xlu0 %489, %v27
  %v491 = vpop.permute.xlu0 %490
  %493 = vset.pattern.permute.xlu0 3
  %494 = vperm.xlu0 %493, %v28
  %v495 = vpop.permute.xlu0 %494
  %497 = vset.pattern.permute.xlu0 3
  %498 = vperm.xlu0 %497, %v29
  %v499 = vpop.permute.xlu0 %498
  %501 = vset.pattern.permute.xlu0 3
  %502 = vperm.xlu0 %501, %v30
  %v503 = vpop.permute.xlu0 %502
  %505 = vset.pattern.permute.xlu0 3
  %506 = vperm.xlu0 %505, %v31
  %v507 = vpop.permute.xlu0 %506
  %509 = vset.pattern.permute.xlu0 3
  %510 = vperm.xlu0 %509, %v32
  %v511 = vpop.permute.xlu0 %510
  %513 = vset.pattern.permute.xlu0 3
  %514 = vperm.xlu0 %513, %v33
  %v515 = vpop.permute.xlu0 %514
  %517 = vset.pattern.permute.xlu0 3
  %518 = vperm.xlu0 %517, %v34
  %v519 = vpop.permute.xlu0 %518
  %521 = vset.pattern.permute.xlu0 3
  %522 = vperm.xlu0 %521, %v35
  %v523 = vpop.permute.xlu0 %522
  %525 = vset.pattern.permute.xlu0 3
  %526 = vperm.xlu0 %525, %v36
  %v527 = vpop.permute.xlu0 %526
  %529 = vset.pattern.permute.xlu0 3
  %530 = vperm.xlu0 %529, %v37
  %v531 = vpop.permute.xlu0 %530
  %533 = vset.pattern.permute.xlu0 3
  %534 = vperm.xlu0 %533, %v38
  %v535 = vpop.permute.xlu0 %534
  %537 = vset.pattern.permute.xlu0 3
  %538 = vperm.xlu0 %537, %v39
  %v539 = vpop.permute.xlu0 %538
  %541 = vset.pattern.permute.xlu0 3
  %542 = vperm.xlu0 %541, %v40
  %v543 = vpop.permute.xlu0 %542
  %545 = vset.pattern.permute.xlu0 3
  %546 = vperm.xlu0 %545, %v41
  %v547 = vpop.permute.xlu0 %546
  %v549 = vlaneseq
  %v550 = vshrl.u32 %v549, 7
  %v551 = vsub.s32 3, %v550
  %v552 = vrot.slane %v155, %v551
  %v553 = vlaneseq
  %v554 = vshrl.u32 %v553, 7
  %v555 = vsub.s32 3, %v554
  %v556 = vrot.slane %v156, %v555
  %v557 = vmul.f32 %v487, %v552
  %v558 = vmul.f32 %v491, %v552
  %v559 = vmul.f32 %v495, %v552
  %v560 = vmul.f32 %v499, %v552
  %v561 = vmul.f32 %v503, %v552
  %v562 = vmul.f32 %v507, %v552
  %v563 = vmul.f32 %v511, %v552
  %v564 = vmul.f32 %v515, %v552
  %v565 = vmul.f32 %v519, %v556
  %v566 = vmul.f32 %v523, %v556
  %v567 = vmul.f32 %v527, %v556
  %v568 = vmul.f32 %v531, %v556
  %v569 = vmul.f32 %v535, %v556
  %v570 = vmul.f32 %v539, %v556
  %v571 = vmul.f32 %v543, %v556
  %v572 = vmul.f32 %v547, %v556
  %v573 = vadd.f32 %v469, %v557
  %v574 = vadd.f32 %v470, %v558
  %v575 = vadd.f32 %v471, %v559
  %v576 = vadd.f32 %v472, %v560
  %v577 = vadd.f32 %v473, %v561
  %v578 = vadd.f32 %v474, %v562
  %v579 = vadd.f32 %v475, %v563
  %v580 = vadd.f32 %v476, %v564
  %v581 = vadd.f32 %v477, %v565
  %v582 = vadd.f32 %v478, %v566
  %v583 = vadd.f32 %v479, %v567
  %v584 = vadd.f32 %v480, %v568
  %v585 = vadd.f32 %v481, %v569
  %v586 = vadd.f32 %v482, %v570
  %v587 = vadd.f32 %v483, %v571
  %v588 = vadd.f32 %v484, %v572
  %v589 = vlaneseq
  %v590 = vshrl.u32 %v589, 7
  %v591 = vsub.s32 0, %v590
  %v592 = vrot.slane %v57, %v591
  %v593 = vadd.f32 %v573, %v592
  %v594 = vadd.f32 %v574, %v592
  %v595 = vadd.f32 %v575, %v592
  %v596 = vadd.f32 %v576, %v592
  %v597 = vadd.f32 %v577, %v592
  %v598 = vadd.f32 %v578, %v592
  %v599 = vadd.f32 %v579, %v592
  %v600 = vadd.f32 %v580, %v592
  %v601 = vadd.f32 %v581, %v592
  %v602 = vadd.f32 %v582, %v592
  %v603 = vadd.f32 %v583, %v592
  %v604 = vadd.f32 %v584, %v592
  %v605 = vadd.f32 %v585, %v592
  %v606 = vadd.f32 %v586, %v592
  %v607 = vadd.f32 %v587, %v592
  %v608 = vadd.f32 %v588, %v592
  %v609 = vmax.f32 %v593, 0.0
  %v610 = vmax.f32 %v594, 0.0
  %v611 = vmax.f32 %v595, 0.0
  %v612 = vmax.f32 %v596, 0.0
  %v613 = vmax.f32 %v597, 0.0
  %v614 = vmax.f32 %v598, 0.0
  %v615 = vmax.f32 %v599, 0.0
  %v616 = vmax.f32 %v600, 0.0
  %v617 = vmax.f32 %v601, 0.0
  %v618 = vmax.f32 %v602, 0.0
  %v619 = vmax.f32 %v603, 0.0
  %v620 = vmax.f32 %v604, 0.0
  %v621 = vmax.f32 %v605, 0.0
  %v622 = vmax.f32 %v606, 0.0
  %v623 = vmax.f32 %v607, 0.0
  %v624 = vmax.f32 %v608, 0.0
  %v625 = vlaneseq
  %v626 = vshrl.u32 %v625, 7
  %v627 = vsub.s32 1, %v626
  %v628 = vrot.slane %v57, %v627
  %629 = vmatprep.subr.mxu0 0.0
  %630 = vmatpush1.msra.mxu0 %v58
  %631 = vmatprep.subr.mxu0 0.0
  %632 = vmatpush1.msra.mxu0 %v59
  %633 = vmatprep.subr.mxu0 0.0
  %634 = vmatpush1.msra.mxu0 %v60
  %635 = vmatprep.subr.mxu0 0.0
  %636 = vmatpush1.msra.mxu0 %v61
  %637 = vmatprep.subr.mxu0 0.0
  %638 = vmatpush1.msra.mxu0 %v62
  %639 = vmatprep.subr.mxu0 0.0
  %640 = vmatpush1.msra.mxu0 %v63
  %641 = vmatprep.subr.mxu0 0.0
  %642 = vmatpush1.msra.mxu0 %v64
  %643 = vmatprep.subr.mxu0 0.0
  %644 = vmatpush1.msra.mxu0 %v65
  %645 = vmatprep.subr.mxu0 0.0
  %646 = vmatpush1.msra.mxu0 %v66
  %647 = vmatprep.subr.mxu0 0.0
  %648 = vmatpush1.msra.mxu0 %v67
  %649 = vmatprep.subr.mxu0 0.0
  %650 = vmatpush1.msra.mxu0 %v68
  %651 = vmatprep.subr.mxu0 0.0
  %652 = vmatpush1.msra.mxu0 %v69
  %653 = vmatprep.subr.mxu0 0.0
  %654 = vmatpush1.msra.mxu0 %v70
  %655 = vmatprep.subr.mxu0 0.0
  %656 = vmatpush1.msra.mxu0 %v71
  %657 = vmatprep.subr.mxu0 0.0
  %658 = vmatpush1.msra.mxu0 %v72
  %659 = vmatprep.subr.mxu0 0.0
  %660 = vmatpush1.msra.mxu0 %v73
  %661 = vmatprep.subr.mxu0 0.0
  %662 = vmatpush1.msra.mxu0 0.0
  %663 = vmatprep.subr.mxu0 0.0
  %664 = vmatpush1.msra.mxu0 0.0
  %665 = vmatprep.subr.mxu0 0.0
  %666 = vmatpush1.msra.mxu0 0.0
  %667 = vmatprep.subr.mxu0 0.0
  %668 = vmatpush1.msra.mxu0 0.0
  %669 = vmatprep.subr.mxu0 0.0
  %670 = vmatpush1.msra.mxu0 0.0
  %671 = vmatprep.subr.mxu0 0.0
  %672 = vmatpush1.msra.mxu0 0.0
  %673 = vmatprep.subr.mxu0 0.0
  %674 = vmatpush1.msra.mxu0 0.0
  %675 = vmatprep.subr.mxu0 0.0
  %676 = vmatpush1.msra.mxu0 0.0
  %677 = vmatprep.subr.mxu0 0.0
  %678 = vmatpush1.msra.mxu0 0.0
  %679 = vmatprep.subr.mxu0 0.0
  %680 = vmatpush1.msra.mxu0 0.0
  %681 = vmatprep.subr.mxu0 0.0
  %682 = vmatpush1.msra.mxu0 0.0
  %683 = vmatprep.subr.mxu0 0.0
  %684 = vmatpush1.msra.mxu0 0.0
  %685 = vmatprep.subr.mxu0 0.0
  %686 = vmatpush1.msra.mxu0 0.0
  %687 = vmatprep.subr.mxu0 0.0
  %688 = vmatpush1.msra.mxu0 0.0
  %689 = vmatprep.subr.mxu0 0.0
  %690 = vmatpush1.msra.mxu0 0.0
  %691 = vmatprep.subr.mxu0 0.0
  %692 = vmatpush1.msra.mxu0 0.0
  %693 = vmatprep.mubr.f32.mxu0 0.0
  %694 = vmatmul.mubr.f32.gmra.mrb[0].mxu0 %v609
  %v695 = vpop.f32.mrb[0].mxu0
  %v696 = vadd.f32 %v628, %v695
  %v697 = vpop.f32.mrb[0].mxu0
  %698 = vmatprep.mubr.f32.mxu0 0.0
  %699 = vmatmul.mubr.f32.gmra.mrb[0].mxu0 %v610
  %v700 = vpop.f32.mrb[0].mxu0
  %v701 = vadd.f32 %v628, %v700
  %v702 = vpop.f32.mrb[0].mxu0
  %703 = vmatprep.mubr.f32.mxu0 0.0
  %704 = vmatmul.mubr.f32.gmra.mrb[0].mxu0 %v611
  %v705 = vpop.f32.mrb[0].mxu0
  %v706 = vadd.f32 %v628, %v705
  %v707 = vpop.f32.mrb[0].mxu0
  %708 = vmatprep.mubr.f32.mxu0 0.0
  %709 = vmatmul.mubr.f32.gmra.mrb[0].mxu0 %v612
  %v710 = vpop.f32.mrb[0].mxu0
  %v711 = vadd.f32 %v628, %v710
  %v712 = vpop.f32.mrb[0].mxu0
  %713 = vmatprep.mubr.f32.mxu0 0.0
  %714 = vmatmul.mubr.f32.gmra.mrb[0].mxu0 %v613
  %v715 = vpop.f32.mrb[0].mxu0
  %v716 = vadd.f32 %v628, %v715
  %v717 = vpop.f32.mrb[0].mxu0
  %718 = vmatprep.mubr.f32.mxu0 0.0
  %719 = vmatmul.mubr.f32.gmra.mrb[0].mxu0 %v614
  %v720 = vpop.f32.mrb[0].mxu0
  %v721 = vadd.f32 %v628, %v720
  %v722 = vpop.f32.mrb[0].mxu0
  %723 = vmatprep.mubr.f32.mxu0 0.0
  %724 = vmatmul.mubr.f32.gmra.mrb[0].mxu0 %v615
  %v725 = vpop.f32.mrb[0].mxu0
  %v726 = vadd.f32 %v628, %v725
  %v727 = vpop.f32.mrb[0].mxu0
  %728 = vmatprep.mubr.f32.mxu0 0.0
  %729 = vmatmul.mubr.f32.gmra.mrb[0].mxu0 %v616
  %v730 = vpop.f32.mrb[0].mxu0
  %v731 = vadd.f32 %v628, %v730
  %v732 = vpop.f32.mrb[0].mxu0
  %733 = vmatprep.mubr.f32.mxu0 0.0
  %734 = vmatmul.mubr.f32.gmra.mrb[0].mxu0 %v617
  %v735 = vpop.f32.mrb[0].mxu0
  %v736 = vadd.f32 %v628, %v735
  %v737 = vpop.f32.mrb[0].mxu0
  %738 = vmatprep.mubr.f32.mxu0 0.0
  %739 = vmatmul.mubr.f32.gmra.mrb[0].mxu0 %v618
  %v740 = vpop.f32.mrb[0].mxu0
  %v741 = vadd.f32 %v628, %v740
  %v742 = vpop.f32.mrb[0].mxu0
  %743 = vmatprep.mubr.f32.mxu0 0.0
  %744 = vmatmul.mubr.f32.gmra.mrb[0].mxu0 %v619
  %v745 = vpop.f32.mrb[0].mxu0
  %v746 = vadd.f32 %v628, %v745
  %v747 = vpop.f32.mrb[0].mxu0
  %748 = vmatprep.mubr.f32.mxu0 0.0
  %749 = vmatmul.mubr.f32.gmra.mrb[0].mxu0 %v620
  %v750 = vpop.f32.mrb[0].mxu0
  %v751 = vadd.f32 %v628, %v750
  %v752 = vpop.f32.mrb[0].mxu0
  %753 = vmatprep.mubr.f32.mxu0 0.0
  %754 = vmatmul.mubr.f32.gmra.mrb[0].mxu0 %v621
  %v755 = vpop.f32.mrb[0].mxu0
  %v756 = vadd.f32 %v628, %v755
  %v757 = vpop.f32.mrb[0].mxu0
  %758 = vmatprep.mubr.f32.mxu0 0.0
  %759 = vmatmul.mubr.f32.gmra.mrb[0].mxu0 %v622
  %v760 = vpop.f32.mrb[0].mxu0
  %v761 = vadd.f32 %v628, %v760
  %v762 = vpop.f32.mrb[0].mxu0
  %763 = vmatprep.mubr.f32.mxu0 0.0
  %764 = vmatmul.mubr.f32.gmra.mrb[0].mxu0 %v623
  %v765 = vpop.f32.mrb[0].mxu0
  %v766 = vadd.f32 %v628, %v765
  %v767 = vpop.f32.mrb[0].mxu0
  %768 = vmatprep.mubr.f32.mxu0 0.0
  %769 = vmatmul.mubr.f32.gmra.mrb[0].mxu0 %v624
  %v770 = vpop.f32.mrb[0].mxu0
  %v771 = vadd.f32 %v628, %v770
  %v772 = vpop.f32.mrb[0].mxu0
  %773 = vdwg.mxu0
  %v774 = vmax.f32 %v696, 0.0
  %v775 = vmax.f32 %v701, 0.0
  %v776 = vmax.f32 %v706, 0.0
  %v777 = vmax.f32 %v711, 0.0
  %v778 = vmax.f32 %v716, 0.0
  %v779 = vmax.f32 %v721, 0.0
  %v780 = vmax.f32 %v726, 0.0
  %v781 = vmax.f32 %v731, 0.0
  %v782 = vmax.f32 %v736, 0.0
  %v783 = vmax.f32 %v741, 0.0
  %v784 = vmax.f32 %v746, 0.0
  %v785 = vmax.f32 %v751, 0.0
  %v786 = vmax.f32 %v756, 0.0
  %v787 = vmax.f32 %v761, 0.0
  %v788 = vmax.f32 %v766, 0.0
  %v789 = vmax.f32 %v771, 0.0
  %v790 = vlaneseq
  %v791 = vshrl.u32 %v790, 7
  %v792 = vsub.s32 2, %v791
  %v793 = vrot.slane %v57, %v792
  %794 = vmatprep.subr.mxu0 0.0
  %795 = vmatpush1.msra.mxu0 %v75
  %796 = vmatprep.subr.mxu0 0.0
  %797 = vmatpush1.msra.mxu0 %v76
  %798 = vmatprep.subr.mxu0 0.0
  %799 = vmatpush1.msra.mxu0 %v77
  %800 = vmatprep.subr.mxu0 0.0
  %801 = vmatpush1.msra.mxu0 %v78
  %802 = vmatprep.subr.mxu0 0.0
  %803 = vmatpush1.msra.mxu0 %v79
  %804 = vmatprep.subr.mxu0 0.0
  %805 = vmatpush1.msra.mxu0 %v80
  %806 = vmatprep.subr.mxu0 0.0
  %807 = vmatpush1.msra.mxu0 %v81
  %808 = vmatprep.subr.mxu0 0.0
  %809 = vmatpush1.msra.mxu0 %v82
  %810 = vmatprep.subr.mxu0 0.0
  %811 = vmatpush1.msra.mxu0 %v83
  %812 = vmatprep.subr.mxu0 0.0
  %813 = vmatpush1.msra.mxu0 %v84
  %814 = vmatprep.subr.mxu0 0.0
  %815 = vmatpush1.msra.mxu0 %v85
  %816 = vmatprep.subr.mxu0 0.0
  %817 = vmatpush1.msra.mxu0 %v86
  %818 = vmatprep.subr.mxu0 0.0
  %819 = vmatpush1.msra.mxu0 %v87
  %820 = vmatprep.subr.mxu0 0.0
  %821 = vmatpush1.msra.mxu0 %v88
  %822 = vmatprep.subr.mxu0 0.0
  %823 = vmatpush1.msra.mxu0 %v89
  %824 = vmatprep.subr.mxu0 0.0
  %825 = vmatpush1.msra.mxu0 %v90
  %826 = vmatprep.subr.mxu0 0.0
  %827 = vmatpush1.msra.mxu0 0.0
  %828 = vmatprep.subr.mxu0 0.0
  %829 = vmatpush1.msra.mxu0 0.0
  %830 = vmatprep.subr.mxu0 0.0
  %831 = vmatpush1.msra.mxu0 0.0
  %832 = vmatprep.subr.mxu0 0.0
  %833 = vmatpush1.msra.mxu0 0.0
  %834 = vmatprep.subr.mxu0 0.0
  %835 = vmatpush1.msra.mxu0 0.0
  %836 = vmatprep.subr.mxu0 0.0
  %837 = vmatpush1.msra.mxu0 0.0
  %838 = vmatprep.subr.mxu0 0.0
  %839 = vmatpush1.msra.mxu0 0.0
  %840 = vmatprep.subr.mxu0 0.0
  %841 = vmatpush1.msra.mxu0 0.0
  %842 = vmatprep.subr.mxu0 0.0
  %843 = vmatpush1.msra.mxu0 0.0
  %844 = vmatprep.subr.mxu0 0.0
  %845 = vmatpush1.msra.mxu0 0.0
  %846 = vmatprep.subr.mxu0 0.0
  %847 = vmatpush1.msra.mxu0 0.0
  %848 = vmatprep.subr.mxu0 0.0
  %849 = vmatpush1.msra.mxu0 0.0
  %850 = vmatprep.subr.mxu0 0.0
  %851 = vmatpush1.msra.mxu0 0.0
  %852 = vmatprep.subr.mxu0 0.0
  %853 = vmatpush1.msra.mxu0 0.0
  %854 = vmatprep.subr.mxu0 0.0
  %855 = vmatpush1.msra.mxu0 0.0
  %856 = vmatprep.subr.mxu0 0.0
  %857 = vmatpush1.msra.mxu0 0.0
  %858 = vmatprep.mubr.f32.mxu0 0.0
  %859 = vmatmul.mubr.f32.gmra.mrb[0].mxu0 %v774
  %v860 = vpop.f32.mrb[0].mxu0
  %v861 = vadd.f32 %v793, %v860
  %v862 = vpop.f32.mrb[0].mxu0
  %863 = vmatprep.mubr.f32.mxu0 0.0
  %864 = vmatmul.mubr.f32.gmra.mrb[0].mxu0 %v775
  %v865 = vpop.f32.mrb[0].mxu0
  %v866 = vadd.f32 %v793, %v865
  %v867 = vpop.f32.mrb[0].mxu0
  %868 = vmatprep.mubr.f32.mxu0 0.0
  %869 = vmatmul.mubr.f32.gmra.mrb[0].mxu0 %v776
  %v870 = vpop.f32.mrb[0].mxu0
  %v871 = vadd.f32 %v793, %v870
  %v872 = vpop.f32.mrb[0].mxu0
  %873 = vmatprep.mubr.f32.mxu0 0.0
  %874 = vmatmul.mubr.f32.gmra.mrb[0].mxu0 %v777
  %v875 = vpop.f32.mrb[0].mxu0
  %v876 = vadd.f32 %v793, %v875
  %v877 = vpop.f32.mrb[0].mxu0
  %878 = vmatprep.mubr.f32.mxu0 0.0
  %879 = vmatmul.mubr.f32.gmra.mrb[0].mxu0 %v778
  %v880 = vpop.f32.mrb[0].mxu0
  %v881 = vadd.f32 %v793, %v880
  %v882 = vpop.f32.mrb[0].mxu0
  %883 = vmatprep.mubr.f32.mxu0 0.0
  %884 = vmatmul.mubr.f32.gmra.mrb[0].mxu0 %v779
  %v885 = vpop.f32.mrb[0].mxu0
  %v886 = vadd.f32 %v793, %v885
  %v887 = vpop.f32.mrb[0].mxu0
  %888 = vmatprep.mubr.f32.mxu0 0.0
  %889 = vmatmul.mubr.f32.gmra.mrb[0].mxu0 %v780
  %v890 = vpop.f32.mrb[0].mxu0
  %v891 = vadd.f32 %v793, %v890
  %v892 = vpop.f32.mrb[0].mxu0
  %893 = vmatprep.mubr.f32.mxu0 0.0
  %894 = vmatmul.mubr.f32.gmra.mrb[0].mxu0 %v781
  %v895 = vpop.f32.mrb[0].mxu0
  %v896 = vadd.f32 %v793, %v895
  %v897 = vpop.f32.mrb[0].mxu0
  %898 = vmatprep.mubr.f32.mxu0 0.0
  %899 = vmatmul.mubr.f32.gmra.mrb[0].mxu0 %v782
  %v900 = vpop.f32.mrb[0].mxu0
  %v901 = vadd.f32 %v793, %v900
  %v902 = vpop.f32.mrb[0].mxu0
  %903 = vmatprep.mubr.f32.mxu0 0.0
  %904 = vmatmul.mubr.f32.gmra.mrb[0].mxu0 %v783
  %v905 = vpop.f32.mrb[0].mxu0
  %v906 = vadd.f32 %v793, %v905
  %v907 = vpop.f32.mrb[0].mxu0
  %908 = vmatprep.mubr.f32.mxu0 0.0
  %909 = vmatmul.mubr.f32.gmra.mrb[0].mxu0 %v784
  %v910 = vpop.f32.mrb[0].mxu0
  %v911 = vadd.f32 %v793, %v910
  %v912 = vpop.f32.mrb[0].mxu0
  %913 = vmatprep.mubr.f32.mxu0 0.0
  %914 = vmatmul.mubr.f32.gmra.mrb[0].mxu0 %v785
  %v915 = vpop.f32.mrb[0].mxu0
  %v916 = vadd.f32 %v793, %v915
  %v917 = vpop.f32.mrb[0].mxu0
  %918 = vmatprep.mubr.f32.mxu0 0.0
  %919 = vmatmul.mubr.f32.gmra.mrb[0].mxu0 %v786
  %v920 = vpop.f32.mrb[0].mxu0
  %v921 = vadd.f32 %v793, %v920
  %v922 = vpop.f32.mrb[0].mxu0
  %923 = vmatprep.mubr.f32.mxu0 0.0
  %924 = vmatmul.mubr.f32.gmra.mrb[0].mxu0 %v787
  %v925 = vpop.f32.mrb[0].mxu0
  %v926 = vadd.f32 %v793, %v925
  %v927 = vpop.f32.mrb[0].mxu0
  %928 = vmatprep.mubr.f32.mxu0 0.0
  %929 = vmatmul.mubr.f32.gmra.mrb[0].mxu0 %v788
  %v930 = vpop.f32.mrb[0].mxu0
  %v931 = vadd.f32 %v793, %v930
  %v932 = vpop.f32.mrb[0].mxu0
  %933 = vmatprep.mubr.f32.mxu0 0.0
  %934 = vmatmul.mubr.f32.gmra.mrb[0].mxu0 %v789
  %v935 = vpop.f32.mrb[0].mxu0
  %v936 = vadd.f32 %v793, %v935
  %v937 = vpop.f32.mrb[0].mxu0
  %938 = vdwg.mxu0
  %v939 = vmax.f32 %v861, 0.0
  %v940 = vmax.f32 %v866, 0.0
  %v941 = vmax.f32 %v871, 0.0
  %v942 = vmax.f32 %v876, 0.0
  %v943 = vmax.f32 %v881, 0.0
  %v944 = vmax.f32 %v886, 0.0
  %v945 = vmax.f32 %v891, 0.0
  %v946 = vmax.f32 %v896, 0.0
  %v947 = vmax.f32 %v901, 0.0
  %v948 = vmax.f32 %v906, 0.0
  %v949 = vmax.f32 %v911, 0.0
  %v950 = vmax.f32 %v916, 0.0
  %v951 = vmax.f32 %v921, 0.0
  %v952 = vmax.f32 %v926, 0.0
  %v953 = vmax.f32 %v931, 0.0
  %v954 = vmax.f32 %v936, 0.0
  %v955 = vmax.f32 %v939, %v941
  %v956 = vmax.f32 %v940, %v942
  %v957 = vmax.f32 %v955, %v943
  %v958 = vmax.f32 %v956, %v944
  %v959 = vmax.f32 %v957, %v945
  %v960 = vmax.f32 %v958, %v946
  %v961 = vmax.f32 %v959, %v960
  %v962 = vrot.slane %v961, 4
  %v963 = vmax.f32 %v961, %v962
  %v964 = vrot.slane %v963, 2
  %v965 = vmax.f32 %v963, %v964
  %v966 = vrot.slane %v965, 1
  %v967 = vmax.f32 %v965, %v966
  %v968 = vmax.f32 %v947, %v949
  %v969 = vmax.f32 %v948, %v950
  %v970 = vmax.f32 %v968, %v951
  %v971 = vmax.f32 %v969, %v952
  %v972 = vmax.f32 %v970, %v953
  %v973 = vmax.f32 %v971, %v954
  %v974 = vmax.f32 %v972, %v973
  %v975 = vrot.slane %v974, 4
  %v976 = vmax.f32 %v974, %v975
  %v977 = vrot.slane %v976, 2
  %v978 = vmax.f32 %v976, %v977
  %v979 = vrot.slane %v978, 1
  %v980 = vmax.f32 %v978, %v979
  %982 = vset.pattern.permute.xlu0 0
  %983 = vperm.xlu0 %982, %v43
  %v984 = vpop.permute.xlu0 %983
  %987 = vset.pattern.permute.xlu0 0
  %988 = vperm.xlu0 %987, %v50
  %v989 = vpop.permute.xlu0 %988
  %v991 = vmul.f32 %v984, %v104
  %v992 = vmul.f32 %v989, %v104
  %v993 = vadd.f32 %v991, 0.0
  %v994 = vadd.f32 %v992, 0.0
  %995 = vset.pattern.permute.xlu0 1
  %996 = vperm.xlu0 %995, %v43
  %v997 = vpop.permute.xlu0 %996
  %999 = vset.pattern.permute.xlu0 1
  %1000 = vperm.xlu0 %999, %v50
  %v1001 = vpop.permute.xlu0 %1000
  %v1003 = vmul.f32 %v997, %v120
  %v1004 = vmul.f32 %v1001, %v120
  %v1005 = vadd.f32 %v993, %v1003
  %v1006 = vadd.f32 %v994, %v1004
  %1007 = vset.pattern.permute.xlu0 2
  %1008 = vperm.xlu0 %1007, %v43
  %v1009 = vpop.permute.xlu0 %1008
  %1011 = vset.pattern.permute.xlu0 2
  %1012 = vperm.xlu0 %1011, %v50
  %v1013 = vpop.permute.xlu0 %1012
  %v1015 = vmul.f32 %v1009, %v136
  %v1016 = vmul.f32 %v1013, %v136
  %v1017 = vadd.f32 %v1005, %v1015
  %v1018 = vadd.f32 %v1006, %v1016
  %1019 = vset.pattern.permute.xlu0 3
  %1020 = vperm.xlu0 %1019, %v43
  %v1021 = vpop.permute.xlu0 %1020
  %1023 = vset.pattern.permute.xlu0 3
  %1024 = vperm.xlu0 %1023, %v50
  %v1025 = vpop.permute.xlu0 %1024
  %v1027 = vmul.f32 %v1021, %v152
  %v1028 = vmul.f32 %v1025, %v152
  %v1029 = vadd.f32 %v1017, %v1027
  %v1030 = vadd.f32 %v1018, %v1028
  %v1031 = vlaneseq
  %v1032 = vshrl.u32 %v1031, 7
  %v1033 = vsub.s32 0, %v1032
  %v1034 = vrot.slane %v1029, %v1033
  %v1035 = vlaneseq
  %v1036 = vshrl.u32 %v1035, 7
  %v1037 = vsub.s32 0, %v1036
  %v1038 = vrot.slane %v1030, %v1037
  %v1039 = vmul.f32 %v160, %v1034
  %v1040 = vmul.f32 %v165, %v1034
  %v1041 = vmul.f32 %v170, %v1034
  %v1042 = vmul.f32 %v175, %v1034
  %v1043 = vmul.f32 %v180, %v1034
  %v1044 = vmul.f32 %v185, %v1034
  %v1045 = vmul.f32 %v190, %v1034
  %v1046 = vmul.f32 %v195, %v1034
  %v1047 = vmul.f32 %v200, %v1038
  %v1048 = vmul.f32 %v205, %v1038
  %v1049 = vmul.f32 %v210, %v1038
  %v1050 = vmul.f32 %v215, %v1038
  %v1051 = vmul.f32 %v220, %v1038
  %v1052 = vmul.f32 %v225, %v1038
  %v1053 = vmul.f32 %v230, %v1038
  %v1054 = vmul.f32 %v235, %v1038
  %v1055 = vadd.f32 %v1039, 0.0
  %v1056 = vadd.f32 %v1040, 0.0
  %v1057 = vadd.f32 %v1041, 0.0
  %v1058 = vadd.f32 %v1042, 0.0
  %v1059 = vadd.f32 %v1043, 0.0
  %v1060 = vadd.f32 %v1044, 0.0
  %v1061 = vadd.f32 %v1045, 0.0
  %v1062 = vadd.f32 %v1046, 0.0
  %v1063 = vadd.f32 %v1047, 0.0
  %v1064 = vadd.f32 %v1048, 0.0
  %v1065 = vadd.f32 %v1049, 0.0
  %v1066 = vadd.f32 %v1050, 0.0
  %v1067 = vadd.f32 %v1051, 0.0
  %v1068 = vadd.f32 %v1052, 0.0
  %v1069 = vadd.f32 %v1053, 0.0
  %v1070 = vadd.f32 %v1054, 0.0
  %v1071 = vlaneseq
  %v1072 = vshrl.u32 %v1071, 7
  %v1073 = vsub.s32 1, %v1072
  %v1074 = vrot.slane %v1029, %v1073
  %v1075 = vlaneseq
  %v1076 = vshrl.u32 %v1075, 7
  %v1077 = vsub.s32 1, %v1076
  %v1078 = vrot.slane %v1030, %v1077
  %v1079 = vmul.f32 %v279, %v1074
  %v1080 = vmul.f32 %v283, %v1074
  %v1081 = vmul.f32 %v287, %v1074
  %v1082 = vmul.f32 %v291, %v1074
  %v1083 = vmul.f32 %v295, %v1074
  %v1084 = vmul.f32 %v299, %v1074
  %v1085 = vmul.f32 %v303, %v1074
  %v1086 = vmul.f32 %v307, %v1074
  %v1087 = vmul.f32 %v311, %v1078
  %v1088 = vmul.f32 %v315, %v1078
  %v1089 = vmul.f32 %v319, %v1078
  %v1090 = vmul.f32 %v323, %v1078
  %v1091 = vmul.f32 %v327, %v1078
  %v1092 = vmul.f32 %v331, %v1078
  %v1093 = vmul.f32 %v335, %v1078
  %v1094 = vmul.f32 %v339, %v1078
  %v1095 = vadd.f32 %v1055, %v1079
  %v1096 = vadd.f32 %v1056, %v1080
  %v1097 = vadd.f32 %v1057, %v1081
  %v1098 = vadd.f32 %v1058, %v1082
  %v1099 = vadd.f32 %v1059, %v1083
  %v1100 = vadd.f32 %v1060, %v1084
  %v1101 = vadd.f32 %v1061, %v1085
  %v1102 = vadd.f32 %v1062, %v1086
  %v1103 = vadd.f32 %v1063, %v1087
  %v1104 = vadd.f32 %v1064, %v1088
  %v1105 = vadd.f32 %v1065, %v1089
  %v1106 = vadd.f32 %v1066, %v1090
  %v1107 = vadd.f32 %v1067, %v1091
  %v1108 = vadd.f32 %v1068, %v1092
  %v1109 = vadd.f32 %v1069, %v1093
  %v1110 = vadd.f32 %v1070, %v1094
  %v1111 = vlaneseq
  %v1112 = vshrl.u32 %v1111, 7
  %v1113 = vsub.s32 2, %v1112
  %v1114 = vrot.slane %v1029, %v1113
  %v1115 = vlaneseq
  %v1116 = vshrl.u32 %v1115, 7
  %v1117 = vsub.s32 2, %v1116
  %v1118 = vrot.slane %v1030, %v1117
  %v1119 = vmul.f32 %v383, %v1114
  %v1120 = vmul.f32 %v387, %v1114
  %v1121 = vmul.f32 %v391, %v1114
  %v1122 = vmul.f32 %v395, %v1114
  %v1123 = vmul.f32 %v399, %v1114
  %v1124 = vmul.f32 %v403, %v1114
  %v1125 = vmul.f32 %v407, %v1114
  %v1126 = vmul.f32 %v411, %v1114
  %v1127 = vmul.f32 %v415, %v1118
  %v1128 = vmul.f32 %v419, %v1118
  %v1129 = vmul.f32 %v423, %v1118
  %v1130 = vmul.f32 %v427, %v1118
  %v1131 = vmul.f32 %v431, %v1118
  %v1132 = vmul.f32 %v435, %v1118
  %v1133 = vmul.f32 %v439, %v1118
  %v1134 = vmul.f32 %v443, %v1118
  %v1135 = vadd.f32 %v1095, %v1119
  %v1136 = vadd.f32 %v1096, %v1120
  %v1137 = vadd.f32 %v1097, %v1121
  %v1138 = vadd.f32 %v1098, %v1122
  %v1139 = vadd.f32 %v1099, %v1123
  %v1140 = vadd.f32 %v1100, %v1124
  %v1141 = vadd.f32 %v1101, %v1125
  %v1142 = vadd.f32 %v1102, %v1126
  %v1143 = vadd.f32 %v1103, %v1127
  %v1144 = vadd.f32 %v1104, %v1128
  %v1145 = vadd.f32 %v1105, %v1129
  %v1146 = vadd.f32 %v1106, %v1130
  %v1147 = vadd.f32 %v1107, %v1131
  %v1148 = vadd.f32 %v1108, %v1132
  %v1149 = vadd.f32 %v1109, %v1133
  %v1150 = vadd.f32 %v1110, %v1134
  %v1151 = vlaneseq
  %v1152 = vshrl.u32 %v1151, 7
  %v1153 = vsub.s32 3, %v1152
  %v1154 = vrot.slane %v1029, %v1153
  %v1155 = vlaneseq
  %v1156 = vshrl.u32 %v1155, 7
  %v1157 = vsub.s32 3, %v1156
  %v1158 = vrot.slane %v1030, %v1157
  %v1159 = vmul.f32 %v487, %v1154
  %v1160 = vmul.f32 %v491, %v1154
  %v1161 = vmul.f32 %v495, %v1154
  %v1162 = vmul.f32 %v499, %v1154
  %v1163 = vmul.f32 %v503, %v1154
  %v1164 = vmul.f32 %v507, %v1154
  %v1165 = vmul.f32 %v511, %v1154
  %v1166 = vmul.f32 %v515, %v1154
  %v1167 = vmul.f32 %v519, %v1158
  %v1168 = vmul.f32 %v523, %v1158
  %v1169 = vmul.f32 %v527, %v1158
  %v1170 = vmul.f32 %v531, %v1158
  %v1171 = vmul.f32 %v535, %v1158
  %v1172 = vmul.f32 %v539, %v1158
  %v1173 = vmul.f32 %v543, %v1158
  %v1174 = vmul.f32 %v547, %v1158
  %v1175 = vadd.f32 %v1135, %v1159
  %v1176 = vadd.f32 %v1136, %v1160
  %v1177 = vadd.f32 %v1137, %v1161
  %v1178 = vadd.f32 %v1138, %v1162
  %v1179 = vadd.f32 %v1139, %v1163
  %v1180 = vadd.f32 %v1140, %v1164
  %v1181 = vadd.f32 %v1141, %v1165
  %v1182 = vadd.f32 %v1142, %v1166
  %v1183 = vadd.f32 %v1143, %v1167
  %v1184 = vadd.f32 %v1144, %v1168
  %v1185 = vadd.f32 %v1145, %v1169
  %v1186 = vadd.f32 %v1146, %v1170
  %v1187 = vadd.f32 %v1147, %v1171
  %v1188 = vadd.f32 %v1148, %v1172
  %v1189 = vadd.f32 %v1149, %v1173
  %v1190 = vadd.f32 %v1150, %v1174
  %v1191 = vadd.f32 %v1175, %v592
  %v1192 = vadd.f32 %v1176, %v592
  %v1193 = vadd.f32 %v1177, %v592
  %v1194 = vadd.f32 %v1178, %v592
  %v1195 = vadd.f32 %v1179, %v592
  %v1196 = vadd.f32 %v1180, %v592
  %v1197 = vadd.f32 %v1181, %v592
  %v1198 = vadd.f32 %v1182, %v592
  %v1199 = vadd.f32 %v1183, %v592
  %v1200 = vadd.f32 %v1184, %v592
  %v1201 = vadd.f32 %v1185, %v592
  %v1202 = vadd.f32 %v1186, %v592
  %v1203 = vadd.f32 %v1187, %v592
  %v1204 = vadd.f32 %v1188, %v592
  %v1205 = vadd.f32 %v1189, %v592
  %v1206 = vadd.f32 %v1190, %v592
  %v1207 = vmax.f32 %v1191, 0.0
  %v1208 = vmax.f32 %v1192, 0.0
  %v1209 = vmax.f32 %v1193, 0.0
  %v1210 = vmax.f32 %v1194, 0.0
  %v1211 = vmax.f32 %v1195, 0.0
  %v1212 = vmax.f32 %v1196, 0.0
  %v1213 = vmax.f32 %v1197, 0.0
  %v1214 = vmax.f32 %v1198, 0.0
  %v1215 = vmax.f32 %v1199, 0.0
  %v1216 = vmax.f32 %v1200, 0.0
  %v1217 = vmax.f32 %v1201, 0.0
  %v1218 = vmax.f32 %v1202, 0.0
  %v1219 = vmax.f32 %v1203, 0.0
  %v1220 = vmax.f32 %v1204, 0.0
  %v1221 = vmax.f32 %v1205, 0.0
  %v1222 = vmax.f32 %v1206, 0.0
  %1223 = vmatprep.subr.mxu0 0.0
  %1224 = vmatpush1.msra.mxu0 %v58
  %1225 = vmatprep.subr.mxu0 0.0
  %1226 = vmatpush1.msra.mxu0 %v59
  %1227 = vmatprep.subr.mxu0 0.0
  %1228 = vmatpush1.msra.mxu0 %v60
  %1229 = vmatprep.subr.mxu0 0.0
  %1230 = vmatpush1.msra.mxu0 %v61
  %1231 = vmatprep.subr.mxu0 0.0
  %1232 = vmatpush1.msra.mxu0 %v62
  %1233 = vmatprep.subr.mxu0 0.0
  %1234 = vmatpush1.msra.mxu0 %v63
  %1235 = vmatprep.subr.mxu0 0.0
  %1236 = vmatpush1.msra.mxu0 %v64
  %1237 = vmatprep.subr.mxu0 0.0
  %1238 = vmatpush1.msra.mxu0 %v65
  %1239 = vmatprep.subr.mxu0 0.0
  %1240 = vmatpush1.msra.mxu0 %v66
  %1241 = vmatprep.subr.mxu0 0.0
  %1242 = vmatpush1.msra.mxu0 %v67
  %1243 = vmatprep.subr.mxu0 0.0
  %1244 = vmatpush1.msra.mxu0 %v68
  %1245 = vmatprep.subr.mxu0 0.0
  %1246 = vmatpush1.msra.mxu0 %v69
  %1247 = vmatprep.subr.mxu0 0.0
  %1248 = vmatpush1.msra.mxu0 %v70
  %1249 = vmatprep.subr.mxu0 0.0
  %1250 = vmatpush1.msra.mxu0 %v71
  %1251 = vmatprep.subr.mxu0 0.0
  %1252 = vmatpush1.msra.mxu0 %v72
  %1253 = vmatprep.subr.mxu0 0.0
  %1254 = vmatpush1.msra.mxu0 %v73
  %1255 = vmatprep.subr.mxu0 0.0
  %1256 = vmatpush1.msra.mxu0 0.0
  %1257 = vmatprep.subr.mxu0 0.0
  %1258 = vmatpush1.msra.mxu0 0.0
  %1259 = vmatprep.subr.mxu0 0.0
  %1260 = vmatpush1.msra.mxu0 0.0
  %1261 = vmatprep.subr.mxu0 0.0
  %1262 = vmatpush1.msra.mxu0 0.0
  %1263 = vmatprep.subr.mxu0 0.0
  %1264 = vmatpush1.msra.mxu0 0.0
  %1265 = vmatprep.subr.mxu0 0.0
  %1266 = vmatpush1.msra.mxu0 0.0
  %1267 = vmatprep.subr.mxu0 0.0
  %1268 = vmatpush1.msra.mxu0 0.0
  %1269 = vmatprep.subr.mxu0 0.0
  %1270 = vmatpush1.msra.mxu0 0.0
  %1271 = vmatprep.subr.mxu0 0.0
  %1272 = vmatpush1.msra.mxu0 0.0
  %1273 = vmatprep.subr.mxu0 0.0
  %1274 = vmatpush1.msra.mxu0 0.0
  %1275 = vmatprep.subr.mxu0 0.0
  %1276 = vmatpush1.msra.mxu0 0.0
  %1277 = vmatprep.subr.mxu0 0.0
  %1278 = vmatpush1.msra.mxu0 0.0
  %1279 = vmatprep.subr.mxu0 0.0
  %1280 = vmatpush1.msra.mxu0 0.0
  %1281 = vmatprep.subr.mxu0 0.0
  %1282 = vmatpush1.msra.mxu0 0.0
  %1283 = vmatprep.subr.mxu0 0.0
  %1284 = vmatpush1.msra.mxu0 0.0
  %1285 = vmatprep.subr.mxu0 0.0
  %1286 = vmatpush1.msra.mxu0 0.0
  %1287 = vmatprep.mubr.f32.mxu0 0.0
  %1288 = vmatmul.mubr.f32.gmra.mrb[0].mxu0 %v1207
  %v1289 = vpop.f32.mrb[0].mxu0
  %v1290 = vadd.f32 %v628, %v1289
  %v1291 = vpop.f32.mrb[0].mxu0
  %1292 = vmatprep.mubr.f32.mxu0 0.0
  %1293 = vmatmul.mubr.f32.gmra.mrb[0].mxu0 %v1208
  %v1294 = vpop.f32.mrb[0].mxu0
  %v1295 = vadd.f32 %v628, %v1294
  %v1296 = vpop.f32.mrb[0].mxu0
  %1297 = vmatprep.mubr.f32.mxu0 0.0
  %1298 = vmatmul.mubr.f32.gmra.mrb[0].mxu0 %v1209
  %v1299 = vpop.f32.mrb[0].mxu0
  %v1300 = vadd.f32 %v628, %v1299
  %v1301 = vpop.f32.mrb[0].mxu0
  %1302 = vmatprep.mubr.f32.mxu0 0.0
  %1303 = vmatmul.mubr.f32.gmra.mrb[0].mxu0 %v1210
  %v1304 = vpop.f32.mrb[0].mxu0
  %v1305 = vadd.f32 %v628, %v1304
  %v1306 = vpop.f32.mrb[0].mxu0
  %1307 = vmatprep.mubr.f32.mxu0 0.0
  %1308 = vmatmul.mubr.f32.gmra.mrb[0].mxu0 %v1211
  %v1309 = vpop.f32.mrb[0].mxu0
  %v1310 = vadd.f32 %v628, %v1309
  %v1311 = vpop.f32.mrb[0].mxu0
  %1312 = vmatprep.mubr.f32.mxu0 0.0
  %1313 = vmatmul.mubr.f32.gmra.mrb[0].mxu0 %v1212
  %v1314 = vpop.f32.mrb[0].mxu0
  %v1315 = vadd.f32 %v628, %v1314
  %v1316 = vpop.f32.mrb[0].mxu0
  %1317 = vmatprep.mubr.f32.mxu0 0.0
  %1318 = vmatmul.mubr.f32.gmra.mrb[0].mxu0 %v1213
  %v1319 = vpop.f32.mrb[0].mxu0
  %v1320 = vadd.f32 %v628, %v1319
  %v1321 = vpop.f32.mrb[0].mxu0
  %1322 = vmatprep.mubr.f32.mxu0 0.0
  %1323 = vmatmul.mubr.f32.gmra.mrb[0].mxu0 %v1214
  %v1324 = vpop.f32.mrb[0].mxu0
  %v1325 = vadd.f32 %v628, %v1324
  %v1326 = vpop.f32.mrb[0].mxu0
  %1327 = vmatprep.mubr.f32.mxu0 0.0
  %1328 = vmatmul.mubr.f32.gmra.mrb[0].mxu0 %v1215
  %v1329 = vpop.f32.mrb[0].mxu0
  %v1330 = vadd.f32 %v628, %v1329
  %v1331 = vpop.f32.mrb[0].mxu0
  %1332 = vmatprep.mubr.f32.mxu0 0.0
  %1333 = vmatmul.mubr.f32.gmra.mrb[0].mxu0 %v1216
  %v1334 = vpop.f32.mrb[0].mxu0
  %v1335 = vadd.f32 %v628, %v1334
  %v1336 = vpop.f32.mrb[0].mxu0
  %1337 = vmatprep.mubr.f32.mxu0 0.0
  %1338 = vmatmul.mubr.f32.gmra.mrb[0].mxu0 %v1217
  %v1339 = vpop.f32.mrb[0].mxu0
  %v1340 = vadd.f32 %v628, %v1339
  %v1341 = vpop.f32.mrb[0].mxu0
  %1342 = vmatprep.mubr.f32.mxu0 0.0
  %1343 = vmatmul.mubr.f32.gmra.mrb[0].mxu0 %v1218
  %v1344 = vpop.f32.mrb[0].mxu0
  %v1345 = vadd.f32 %v628, %v1344
  %v1346 = vpop.f32.mrb[0].mxu0
  %1347 = vmatprep.mubr.f32.mxu0 0.0
  %1348 = vmatmul.mubr.f32.gmra.mrb[0].mxu0 %v1219
  %v1349 = vpop.f32.mrb[0].mxu0
  %v1350 = vadd.f32 %v628, %v1349
  %v1351 = vpop.f32.mrb[0].mxu0
  %1352 = vmatprep.mubr.f32.mxu0 0.0
  %1353 = vmatmul.mubr.f32.gmra.mrb[0].mxu0 %v1220
  %v1354 = vpop.f32.mrb[0].mxu0
  %v1355 = vadd.f32 %v628, %v1354
  %v1356 = vpop.f32.mrb[0].mxu0
  %1357 = vmatprep.mubr.f32.mxu0 0.0
  %1358 = vmatmul.mubr.f32.gmra.mrb[0].mxu0 %v1221
  %v1359 = vpop.f32.mrb[0].mxu0
  %v1360 = vadd.f32 %v628, %v1359
  %v1361 = vpop.f32.mrb[0].mxu0
  %1362 = vmatprep.mubr.f32.mxu0 0.0
  %1363 = vmatmul.mubr.f32.gmra.mrb[0].mxu0 %v1222
  %v1364 = vpop.f32.mrb[0].mxu0
  %v1365 = vadd.f32 %v628, %v1364
  %v1366 = vpop.f32.mrb[0].mxu0
  %1367 = vdwg.mxu0
  %v1368 = vmax.f32 %v1290, 0.0
  %v1369 = vmax.f32 %v1295, 0.0
  %v1370 = vmax.f32 %v1300, 0.0
  %v1371 = vmax.f32 %v1305, 0.0
  %v1372 = vmax.f32 %v1310, 0.0
  %v1373 = vmax.f32 %v1315, 0.0
  %v1374 = vmax.f32 %v1320, 0.0
  %v1375 = vmax.f32 %v1325, 0.0
  %v1376 = vmax.f32 %v1330, 0.0
  %v1377 = vmax.f32 %v1335, 0.0
  %v1378 = vmax.f32 %v1340, 0.0
  %v1379 = vmax.f32 %v1345, 0.0
  %v1380 = vmax.f32 %v1350, 0.0
  %v1381 = vmax.f32 %v1355, 0.0
  %v1382 = vmax.f32 %v1360, 0.0
  %v1383 = vmax.f32 %v1365, 0.0
  %1384 = vmatprep.subr.mxu0 0.0
  %1385 = vmatpush1.msra.mxu0 %v75
  %1386 = vmatprep.subr.mxu0 0.0
  %1387 = vmatpush1.msra.mxu0 %v76
  %1388 = vmatprep.subr.mxu0 0.0
  %1389 = vmatpush1.msra.mxu0 %v77
  %1390 = vmatprep.subr.mxu0 0.0
  %1391 = vmatpush1.msra.mxu0 %v78
  %1392 = vmatprep.subr.mxu0 0.0
  %1393 = vmatpush1.msra.mxu0 %v79
  %1394 = vmatprep.subr.mxu0 0.0
  %1395 = vmatpush1.msra.mxu0 %v80
  %1396 = vmatprep.subr.mxu0 0.0
  %1397 = vmatpush1.msra.mxu0 %v81
  %1398 = vmatprep.subr.mxu0 0.0
  %1399 = vmatpush1.msra.mxu0 %v82
  %1400 = vmatprep.subr.mxu0 0.0
  %1401 = vmatpush1.msra.mxu0 %v83
  %1402 = vmatprep.subr.mxu0 0.0
  %1403 = vmatpush1.msra.mxu0 %v84
  %1404 = vmatprep.subr.mxu0 0.0
  %1405 = vmatpush1.msra.mxu0 %v85
  %1406 = vmatprep.subr.mxu0 0.0
  %1407 = vmatpush1.msra.mxu0 %v86
  %1408 = vmatprep.subr.mxu0 0.0
  %1409 = vmatpush1.msra.mxu0 %v87
  %1410 = vmatprep.subr.mxu0 0.0
  %1411 = vmatpush1.msra.mxu0 %v88
  %1412 = vmatprep.subr.mxu0 0.0
  %1413 = vmatpush1.msra.mxu0 %v89
  %1414 = vmatprep.subr.mxu0 0.0
  %1415 = vmatpush1.msra.mxu0 %v90
  %1416 = vmatprep.subr.mxu0 0.0
  %1417 = vmatpush1.msra.mxu0 0.0
  %1418 = vmatprep.subr.mxu0 0.0
  %1419 = vmatpush1.msra.mxu0 0.0
  %1420 = vmatprep.subr.mxu0 0.0
  %1421 = vmatpush1.msra.mxu0 0.0
  %1422 = vmatprep.subr.mxu0 0.0
  %1423 = vmatpush1.msra.mxu0 0.0
  %1424 = vmatprep.subr.mxu0 0.0
  %1425 = vmatpush1.msra.mxu0 0.0
  %1426 = vmatprep.subr.mxu0 0.0
  %1427 = vmatpush1.msra.mxu0 0.0
  %1428 = vmatprep.subr.mxu0 0.0
  %1429 = vmatpush1.msra.mxu0 0.0
  %1430 = vmatprep.subr.mxu0 0.0
  %1431 = vmatpush1.msra.mxu0 0.0
  %1432 = vmatprep.subr.mxu0 0.0
  %1433 = vmatpush1.msra.mxu0 0.0
  %1434 = vmatprep.subr.mxu0 0.0
  %1435 = vmatpush1.msra.mxu0 0.0
  %1436 = vmatprep.subr.mxu0 0.0
  %1437 = vmatpush1.msra.mxu0 0.0
  %1438 = vmatprep.subr.mxu0 0.0
  %1439 = vmatpush1.msra.mxu0 0.0
  %1440 = vmatprep.subr.mxu0 0.0
  %1441 = vmatpush1.msra.mxu0 0.0
  %1442 = vmatprep.subr.mxu0 0.0
  %1443 = vmatpush1.msra.mxu0 0.0
  %1444 = vmatprep.subr.mxu0 0.0
  %1445 = vmatpush1.msra.mxu0 0.0
  %1446 = vmatprep.subr.mxu0 0.0
  %1447 = vmatpush1.msra.mxu0 0.0
  %1448 = vmatprep.mubr.f32.mxu0 0.0
  %1449 = vmatmul.mubr.f32.gmra.mrb[0].mxu0 %v1368
  %v1450 = vpop.f32.mrb[0].mxu0
  %v1451 = vadd.f32 %v793, %v1450
  %v1452 = vpop.f32.mrb[0].mxu0
  %1453 = vmatprep.mubr.f32.mxu0 0.0
  %1454 = vmatmul.mubr.f32.gmra.mrb[0].mxu0 %v1369
  %v1455 = vpop.f32.mrb[0].mxu0
  %v1456 = vadd.f32 %v793, %v1455
  %v1457 = vpop.f32.mrb[0].mxu0
  %1458 = vmatprep.mubr.f32.mxu0 0.0
  %1459 = vmatmul.mubr.f32.gmra.mrb[0].mxu0 %v1370
  %v1460 = vpop.f32.mrb[0].mxu0
  %v1461 = vadd.f32 %v793, %v1460
  %v1462 = vpop.f32.mrb[0].mxu0
  %1463 = vmatprep.mubr.f32.mxu0 0.0
  %1464 = vmatmul.mubr.f32.gmra.mrb[0].mxu0 %v1371
  %v1465 = vpop.f32.mrb[0].mxu0
  %v1466 = vadd.f32 %v793, %v1465
  %v1467 = vpop.f32.mrb[0].mxu0
  %1468 = vmatprep.mubr.f32.mxu0 0.0
  %1469 = vmatmul.mubr.f32.gmra.mrb[0].mxu0 %v1372
  %v1470 = vpop.f32.mrb[0].mxu0
  %v1471 = vadd.f32 %v793, %v1470
  %v1472 = vpop.f32.mrb[0].mxu0
  %1473 = vmatprep.mubr.f32.mxu0 0.0
  %1474 = vmatmul.mubr.f32.gmra.mrb[0].mxu0 %v1373
  %v1475 = vpop.f32.mrb[0].mxu0
  %v1476 = vadd.f32 %v793, %v1475
  %v1477 = vpop.f32.mrb[0].mxu0
  %1478 = vmatprep.mubr.f32.mxu0 0.0
  %1479 = vmatmul.mubr.f32.gmra.mrb[0].mxu0 %v1374
  %v1480 = vpop.f32.mrb[0].mxu0
  %v1481 = vadd.f32 %v793, %v1480
  %v1482 = vpop.f32.mrb[0].mxu0
  %1483 = vmatprep.mubr.f32.mxu0 0.0
  %1484 = vmatmul.mubr.f32.gmra.mrb[0].mxu0 %v1375
  %v1485 = vpop.f32.mrb[0].mxu0
  %v1486 = vadd.f32 %v793, %v1485
  %v1487 = vpop.f32.mrb[0].mxu0
  %1488 = vmatprep.mubr.f32.mxu0 0.0
  %1489 = vmatmul.mubr.f32.gmra.mrb[0].mxu0 %v1376
  %v1490 = vpop.f32.mrb[0].mxu0
  %v1491 = vadd.f32 %v793, %v1490
  %v1492 = vpop.f32.mrb[0].mxu0
  %1493 = vmatprep.mubr.f32.mxu0 0.0
  %1494 = vmatmul.mubr.f32.gmra.mrb[0].mxu0 %v1377
  %v1495 = vpop.f32.mrb[0].mxu0
  %v1496 = vadd.f32 %v793, %v1495
  %v1497 = vpop.f32.mrb[0].mxu0
  %1498 = vmatprep.mubr.f32.mxu0 0.0
  %1499 = vmatmul.mubr.f32.gmra.mrb[0].mxu0 %v1378
  %v1500 = vpop.f32.mrb[0].mxu0
  %v1501 = vadd.f32 %v793, %v1500
  %v1502 = vpop.f32.mrb[0].mxu0
  %1503 = vmatprep.mubr.f32.mxu0 0.0
  %1504 = vmatmul.mubr.f32.gmra.mrb[0].mxu0 %v1379
  %v1505 = vpop.f32.mrb[0].mxu0
  %v1506 = vadd.f32 %v793, %v1505
  %v1507 = vpop.f32.mrb[0].mxu0
  %1508 = vmatprep.mubr.f32.mxu0 0.0
  %1509 = vmatmul.mubr.f32.gmra.mrb[0].mxu0 %v1380
  %v1510 = vpop.f32.mrb[0].mxu0
  %v1511 = vadd.f32 %v793, %v1510
  %v1512 = vpop.f32.mrb[0].mxu0
  %1513 = vmatprep.mubr.f32.mxu0 0.0
  %1514 = vmatmul.mubr.f32.gmra.mrb[0].mxu0 %v1381
  %v1515 = vpop.f32.mrb[0].mxu0
  %v1516 = vadd.f32 %v793, %v1515
  %v1517 = vpop.f32.mrb[0].mxu0
  %1518 = vmatprep.mubr.f32.mxu0 0.0
  %1519 = vmatmul.mubr.f32.gmra.mrb[0].mxu0 %v1382
  %v1520 = vpop.f32.mrb[0].mxu0
  %v1521 = vadd.f32 %v793, %v1520
  %v1522 = vpop.f32.mrb[0].mxu0
  %1523 = vmatprep.mubr.f32.mxu0 0.0
  %1524 = vmatmul.mubr.f32.gmra.mrb[0].mxu0 %v1383
  %v1525 = vpop.f32.mrb[0].mxu0
  %v1526 = vadd.f32 %v793, %v1525
  %v1527 = vpop.f32.mrb[0].mxu0
  %1528 = vdwg.mxu0
  %v1529 = vmax.f32 %v1451, 0.0
  %v1530 = vmax.f32 %v1456, 0.0
  %v1531 = vmax.f32 %v1461, 0.0
  %v1532 = vmax.f32 %v1466, 0.0
  %v1533 = vmax.f32 %v1471, 0.0
  %v1534 = vmax.f32 %v1476, 0.0
  %v1535 = vmax.f32 %v1481, 0.0
  %v1536 = vmax.f32 %v1486, 0.0
  %v1537 = vmax.f32 %v1491, 0.0
  %v1538 = vmax.f32 %v1496, 0.0
  %v1539 = vmax.f32 %v1501, 0.0
  %v1540 = vmax.f32 %v1506, 0.0
  %v1541 = vmax.f32 %v1511, 0.0
  %v1542 = vmax.f32 %v1516, 0.0
  %v1543 = vmax.f32 %v1521, 0.0
  %v1544 = vmax.f32 %v1526, 0.0
  %v1545 = vmax.f32 %v1529, %v1531
  %v1546 = vmax.f32 %v1530, %v1532
  %v1547 = vmax.f32 %v1545, %v1533
  %v1548 = vmax.f32 %v1546, %v1534
  %v1549 = vmax.f32 %v1547, %v1535
  %v1550 = vmax.f32 %v1548, %v1536
  %v1551 = vmax.f32 %v1549, %v1550
  %v1552 = vrot.slane %v1551, 4
  %v1553 = vmax.f32 %v1551, %v1552
  %v1554 = vrot.slane %v1553, 2
  %v1555 = vmax.f32 %v1553, %v1554
  %v1556 = vrot.slane %v1555, 1
  %v1557 = vmax.f32 %v1555, %v1556
  %v1558 = vmax.f32 %v1537, %v1539
  %v1559 = vmax.f32 %v1538, %v1540
  %v1560 = vmax.f32 %v1558, %v1541
  %v1561 = vmax.f32 %v1559, %v1542
  %v1562 = vmax.f32 %v1560, %v1543
  %v1563 = vmax.f32 %v1561, %v1544
  %v1564 = vmax.f32 %v1562, %v1563
  %v1565 = vrot.slane %v1564, 4
  %v1566 = vmax.f32 %v1564, %v1565
  %v1567 = vrot.slane %v1566, 2
  %v1568 = vmax.f32 %v1566, %v1567
  %v1569 = vrot.slane %v1568, 1
  %v1570 = vmax.f32 %v1568, %v1569
  %1572 = vset.pattern.permute.xlu0 0
  %1573 = vperm.xlu0 %1572, %v44
  %v1574 = vpop.permute.xlu0 %1573
  %1577 = vset.pattern.permute.xlu0 0
  %1578 = vperm.xlu0 %1577, %v51
  %v1579 = vpop.permute.xlu0 %1578
  %v1581 = vmul.f32 %v1574, %v104
  %v1582 = vmul.f32 %v1579, %v104
  %v1583 = vadd.f32 %v1581, 0.0
  %v1584 = vadd.f32 %v1582, 0.0
  %1585 = vset.pattern.permute.xlu0 1
  %1586 = vperm.xlu0 %1585, %v44
  %v1587 = vpop.permute.xlu0 %1586
  %1589 = vset.pattern.permute.xlu0 1
  %1590 = vperm.xlu0 %1589, %v51
  %v1591 = vpop.permute.xlu0 %1590
  %v1593 = vmul.f32 %v1587, %v120
  %v1594 = vmul.f32 %v1591, %v120
  %v1595 = vadd.f32 %v1583, %v1593
  %v1596 = vadd.f32 %v1584, %v1594
  %1597 = vset.pattern.permute.xlu0 2
  %1598 = vperm.xlu0 %1597, %v44
  %v1599 = vpop.permute.xlu0 %1598
  %1601 = vset.pattern.permute.xlu0 2
  %1602 = vperm.xlu0 %1601, %v51
  %v1603 = vpop.permute.xlu0 %1602
  %v1605 = vmul.f32 %v1599, %v136
  %v1606 = vmul.f32 %v1603, %v136
  %v1607 = vadd.f32 %v1595, %v1605
  %v1608 = vadd.f32 %v1596, %v1606
  %1609 = vset.pattern.permute.xlu0 3
  %1610 = vperm.xlu0 %1609, %v44
  %v1611 = vpop.permute.xlu0 %1610
  %1613 = vset.pattern.permute.xlu0 3
  %1614 = vperm.xlu0 %1613, %v51
  %v1615 = vpop.permute.xlu0 %1614
  %v1617 = vmul.f32 %v1611, %v152
  %v1618 = vmul.f32 %v1615, %v152
  %v1619 = vadd.f32 %v1607, %v1617
  %v1620 = vadd.f32 %v1608, %v1618
  %v1621 = vlaneseq
  %v1622 = vshrl.u32 %v1621, 7
  %v1623 = vsub.s32 0, %v1622
  %v1624 = vrot.slane %v1619, %v1623
  %v1625 = vlaneseq
  %v1626 = vshrl.u32 %v1625, 7
  %v1627 = vsub.s32 0, %v1626
  %v1628 = vrot.slane %v1620, %v1627
  %v1629 = vmul.f32 %v160, %v1624
  %v1630 = vmul.f32 %v165, %v1624
  %v1631 = vmul.f32 %v170, %v1624
  %v1632 = vmul.f32 %v175, %v1624
  %v1633 = vmul.f32 %v180, %v1624
  %v1634 = vmul.f32 %v185, %v1624
  %v1635 = vmul.f32 %v190, %v1624
  %v1636 = vmul.f32 %v195, %v1624
  %v1637 = vmul.f32 %v200, %v1628
  %v1638 = vmul.f32 %v205, %v1628
  %v1639 = vmul.f32 %v210, %v1628
  %v1640 = vmul.f32 %v215, %v1628
  %v1641 = vmul.f32 %v220, %v1628
  %v1642 = vmul.f32 %v225, %v1628
  %v1643 = vmul.f32 %v230, %v1628
  %v1644 = vmul.f32 %v235, %v1628
  %v1645 = vadd.f32 %v1629, 0.0
  %v1646 = vadd.f32 %v1630, 0.0
  %v1647 = vadd.f32 %v1631, 0.0
  %v1648 = vadd.f32 %v1632, 0.0
  %v1649 = vadd.f32 %v1633, 0.0
  %v1650 = vadd.f32 %v1634, 0.0
  %v1651 = vadd.f32 %v1635, 0.0
  %v1652 = vadd.f32 %v1636, 0.0
  %v1653 = vadd.f32 %v1637, 0.0
  %v1654 = vadd.f32 %v1638, 0.0
  %v1655 = vadd.f32 %v1639, 0.0
  %v1656 = vadd.f32 %v1640, 0.0
  %v1657 = vadd.f32 %v1641, 0.0
  %v1658 = vadd.f32 %v1642, 0.0
  %v1659 = vadd.f32 %v1643, 0.0
  %v1660 = vadd.f32 %v1644, 0.0
  %v1661 = vlaneseq
  %v1662 = vshrl.u32 %v1661, 7
  %v1663 = vsub.s32 1, %v1662
  %v1664 = vrot.slane %v1619, %v1663
  %v1665 = vlaneseq
  %v1666 = vshrl.u32 %v1665, 7
  %v1667 = vsub.s32 1, %v1666
  %v1668 = vrot.slane %v1620, %v1667
  %v1669 = vmul.f32 %v279, %v1664
  %v1670 = vmul.f32 %v283, %v1664
  %v1671 = vmul.f32 %v287, %v1664
  %v1672 = vmul.f32 %v291, %v1664
  %v1673 = vmul.f32 %v295, %v1664
  %v1674 = vmul.f32 %v299, %v1664
  %v1675 = vmul.f32 %v303, %v1664
  %v1676 = vmul.f32 %v307, %v1664
  %v1677 = vmul.f32 %v311, %v1668
  %v1678 = vmul.f32 %v315, %v1668
  %v1679 = vmul.f32 %v319, %v1668
  %v1680 = vmul.f32 %v323, %v1668
  %v1681 = vmul.f32 %v327, %v1668
  %v1682 = vmul.f32 %v331, %v1668
  %v1683 = vmul.f32 %v335, %v1668
  %v1684 = vmul.f32 %v339, %v1668
  %v1685 = vadd.f32 %v1645, %v1669
  %v1686 = vadd.f32 %v1646, %v1670
  %v1687 = vadd.f32 %v1647, %v1671
  %v1688 = vadd.f32 %v1648, %v1672
  %v1689 = vadd.f32 %v1649, %v1673
  %v1690 = vadd.f32 %v1650, %v1674
  %v1691 = vadd.f32 %v1651, %v1675
  %v1692 = vadd.f32 %v1652, %v1676
  %v1693 = vadd.f32 %v1653, %v1677
  %v1694 = vadd.f32 %v1654, %v1678
  %v1695 = vadd.f32 %v1655, %v1679
  %v1696 = vadd.f32 %v1656, %v1680
  %v1697 = vadd.f32 %v1657, %v1681
  %v1698 = vadd.f32 %v1658, %v1682
  %v1699 = vadd.f32 %v1659, %v1683
  %v1700 = vadd.f32 %v1660, %v1684
  %v1701 = vlaneseq
  %v1702 = vshrl.u32 %v1701, 7
  %v1703 = vsub.s32 2, %v1702
  %v1704 = vrot.slane %v1619, %v1703
  %v1705 = vlaneseq
  %v1706 = vshrl.u32 %v1705, 7
  %v1707 = vsub.s32 2, %v1706
  %v1708 = vrot.slane %v1620, %v1707
  %v1709 = vmul.f32 %v383, %v1704
  %v1710 = vmul.f32 %v387, %v1704
  %v1711 = vmul.f32 %v391, %v1704
  %v1712 = vmul.f32 %v395, %v1704
  %v1713 = vmul.f32 %v399, %v1704
  %v1714 = vmul.f32 %v403, %v1704
  %v1715 = vmul.f32 %v407, %v1704
  %v1716 = vmul.f32 %v411, %v1704
  %v1717 = vmul.f32 %v415, %v1708
  %v1718 = vmul.f32 %v419, %v1708
  %v1719 = vmul.f32 %v423, %v1708
  %v1720 = vmul.f32 %v427, %v1708
  %v1721 = vmul.f32 %v431, %v1708
  %v1722 = vmul.f32 %v435, %v1708
  %v1723 = vmul.f32 %v439, %v1708
  %v1724 = vmul.f32 %v443, %v1708
  %v1725 = vadd.f32 %v1685, %v1709
  %v1726 = vadd.f32 %v1686, %v1710
  %v1727 = vadd.f32 %v1687, %v1711
  %v1728 = vadd.f32 %v1688, %v1712
  %v1729 = vadd.f32 %v1689, %v1713
  %v1730 = vadd.f32 %v1690, %v1714
  %v1731 = vadd.f32 %v1691, %v1715
  %v1732 = vadd.f32 %v1692, %v1716
  %v1733 = vadd.f32 %v1693, %v1717
  %v1734 = vadd.f32 %v1694, %v1718
  %v1735 = vadd.f32 %v1695, %v1719
  %v1736 = vadd.f32 %v1696, %v1720
  %v1737 = vadd.f32 %v1697, %v1721
  %v1738 = vadd.f32 %v1698, %v1722
  %v1739 = vadd.f32 %v1699, %v1723
  %v1740 = vadd.f32 %v1700, %v1724
  %v1741 = vlaneseq
  %v1742 = vshrl.u32 %v1741, 7
  %v1743 = vsub.s32 3, %v1742
  %v1744 = vrot.slane %v1619, %v1743
  %v1745 = vlaneseq
  %v1746 = vshrl.u32 %v1745, 7
  %v1747 = vsub.s32 3, %v1746
  %v1748 = vrot.slane %v1620, %v1747
  %v1749 = vmul.f32 %v487, %v1744
  %v1750 = vmul.f32 %v491, %v1744
  %v1751 = vmul.f32 %v495, %v1744
  %v1752 = vmul.f32 %v499, %v1744
  %v1753 = vmul.f32 %v503, %v1744
  %v1754 = vmul.f32 %v507, %v1744
  %v1755 = vmul.f32 %v511, %v1744
  %v1756 = vmul.f32 %v515, %v1744
  %v1757 = vmul.f32 %v519, %v1748
  %v1758 = vmul.f32 %v523, %v1748
  %v1759 = vmul.f32 %v527, %v1748
  %v1760 = vmul.f32 %v531, %v1748
  %v1761 = vmul.f32 %v535, %v1748
  %v1762 = vmul.f32 %v539, %v1748
  %v1763 = vmul.f32 %v543, %v1748
  %v1764 = vmul.f32 %v547, %v1748
  %v1765 = vadd.f32 %v1725, %v1749
  %v1766 = vadd.f32 %v1726, %v1750
  %v1767 = vadd.f32 %v1727, %v1751
  %v1768 = vadd.f32 %v1728, %v1752
  %v1769 = vadd.f32 %v1729, %v1753
  %v1770 = vadd.f32 %v1730, %v1754
  %v1771 = vadd.f32 %v1731, %v1755
  %v1772 = vadd.f32 %v1732, %v1756
  %v1773 = vadd.f32 %v1733, %v1757
  %v1774 = vadd.f32 %v1734, %v1758
  %v1775 = vadd.f32 %v1735, %v1759
  %v1776 = vadd.f32 %v1736, %v1760
  %v1777 = vadd.f32 %v1737, %v1761
  %v1778 = vadd.f32 %v1738, %v1762
  %v1779 = vadd.f32 %v1739, %v1763
  %v1780 = vadd.f32 %v1740, %v1764
  %v1781 = vadd.f32 %v1765, %v592
  %v1782 = vadd.f32 %v1766, %v592
  %v1783 = vadd.f32 %v1767, %v592
  %v1784 = vadd.f32 %v1768, %v592
  %v1785 = vadd.f32 %v1769, %v592
  %v1786 = vadd.f32 %v1770, %v592
  %v1787 = vadd.f32 %v1771, %v592
  %v1788 = vadd.f32 %v1772, %v592
  %v1789 = vadd.f32 %v1773, %v592
  %v1790 = vadd.f32 %v1774, %v592
  %v1791 = vadd.f32 %v1775, %v592
  %v1792 = vadd.f32 %v1776, %v592
  %v1793 = vadd.f32 %v1777, %v592
  %v1794 = vadd.f32 %v1778, %v592
  %v1795 = vadd.f32 %v1779, %v592
  %v1796 = vadd.f32 %v1780, %v592
  %v1797 = vmax.f32 %v1781, 0.0
  %v1798 = vmax.f32 %v1782, 0.0
  %v1799 = vmax.f32 %v1783, 0.0
  %v1800 = vmax.f32 %v1784, 0.0
  %v1801 = vmax.f32 %v1785, 0.0
  %v1802 = vmax.f32 %v1786, 0.0
  %v1803 = vmax.f32 %v1787, 0.0
  %v1804 = vmax.f32 %v1788, 0.0
  %v1805 = vmax.f32 %v1789, 0.0
  %v1806 = vmax.f32 %v1790, 0.0
  %v1807 = vmax.f32 %v1791, 0.0
  %v1808 = vmax.f32 %v1792, 0.0
  %v1809 = vmax.f32 %v1793, 0.0
  %v1810 = vmax.f32 %v1794, 0.0
  %v1811 = vmax.f32 %v1795, 0.0
  %v1812 = vmax.f32 %v1796, 0.0
  %1813 = vmatprep.subr.mxu0 0.0
  %1814 = vmatpush1.msra.mxu0 %v58
  %1815 = vmatprep.subr.mxu0 0.0
  %1816 = vmatpush1.msra.mxu0 %v59
  %1817 = vmatprep.subr.mxu0 0.0
  %1818 = vmatpush1.msra.mxu0 %v60
  %1819 = vmatprep.subr.mxu0 0.0
  %1820 = vmatpush1.msra.mxu0 %v61
  %1821 = vmatprep.subr.mxu0 0.0
  %1822 = vmatpush1.msra.mxu0 %v62
  %1823 = vmatprep.subr.mxu0 0.0
  %1824 = vmatpush1.msra.mxu0 %v63
  %1825 = vmatprep.subr.mxu0 0.0
  %1826 = vmatpush1.msra.mxu0 %v64
  %1827 = vmatprep.subr.mxu0 0.0
  %1828 = vmatpush1.msra.mxu0 %v65
  %1829 = vmatprep.subr.mxu0 0.0
  %1830 = vmatpush1.msra.mxu0 %v66
  %1831 = vmatprep.subr.mxu0 0.0
  %1832 = vmatpush1.msra.mxu0 %v67
  %1833 = vmatprep.subr.mxu0 0.0
  %1834 = vmatpush1.msra.mxu0 %v68
  %1835 = vmatprep.subr.mxu0 0.0
  %1836 = vmatpush1.msra.mxu0 %v69
  %1837 = vmatprep.subr.mxu0 0.0
  %1838 = vmatpush1.msra.mxu0 %v70
  %1839 = vmatprep.subr.mxu0 0.0
  %1840 = vmatpush1.msra.mxu0 %v71
  %1841 = vmatprep.subr.mxu0 0.0
  %1842 = vmatpush1.msra.mxu0 %v72
  %1843 = vmatprep.subr.mxu0 0.0
  %1844 = vmatpush1.msra.mxu0 %v73
  %1845 = vmatprep.subr.mxu0 0.0
  %1846 = vmatpush1.msra.mxu0 0.0
  %1847 = vmatprep.subr.mxu0 0.0
  %1848 = vmatpush1.msra.mxu0 0.0
  %1849 = vmatprep.subr.mxu0 0.0
  %1850 = vmatpush1.msra.mxu0 0.0
  %1851 = vmatprep.subr.mxu0 0.0
  %1852 = vmatpush1.msra.mxu0 0.0
  %1853 = vmatprep.subr.mxu0 0.0
  %1854 = vmatpush1.msra.mxu0 0.0
  %1855 = vmatprep.subr.mxu0 0.0
  %1856 = vmatpush1.msra.mxu0 0.0
  %1857 = vmatprep.subr.mxu0 0.0
  %1858 = vmatpush1.msra.mxu0 0.0
  %1859 = vmatprep.subr.mxu0 0.0
  %1860 = vmatpush1.msra.mxu0 0.0
  %1861 = vmatprep.subr.mxu0 0.0
  %1862 = vmatpush1.msra.mxu0 0.0
  %1863 = vmatprep.subr.mxu0 0.0
  %1864 = vmatpush1.msra.mxu0 0.0
  %1865 = vmatprep.subr.mxu0 0.0
  %1866 = vmatpush1.msra.mxu0 0.0
  %1867 = vmatprep.subr.mxu0 0.0
  %1868 = vmatpush1.msra.mxu0 0.0
  %1869 = vmatprep.subr.mxu0 0.0
  %1870 = vmatpush1.msra.mxu0 0.0
  %1871 = vmatprep.subr.mxu0 0.0
  %1872 = vmatpush1.msra.mxu0 0.0
  %1873 = vmatprep.subr.mxu0 0.0
  %1874 = vmatpush1.msra.mxu0 0.0
  %1875 = vmatprep.subr.mxu0 0.0
  %1876 = vmatpush1.msra.mxu0 0.0
  %1877 = vmatprep.mubr.f32.mxu0 0.0
  %1878 = vmatmul.mubr.f32.gmra.mrb[0].mxu0 %v1797
  %v1879 = vpop.f32.mrb[0].mxu0
  %v1880 = vadd.f32 %v628, %v1879
  %v1881 = vpop.f32.mrb[0].mxu0
  %1882 = vmatprep.mubr.f32.mxu0 0.0
  %1883 = vmatmul.mubr.f32.gmra.mrb[0].mxu0 %v1798
  %v1884 = vpop.f32.mrb[0].mxu0
  %v1885 = vadd.f32 %v628, %v1884
  %v1886 = vpop.f32.mrb[0].mxu0
  %1887 = vmatprep.mubr.f32.mxu0 0.0
  %1888 = vmatmul.mubr.f32.gmra.mrb[0].mxu0 %v1799
  %v1889 = vpop.f32.mrb[0].mxu0
  %v1890 = vadd.f32 %v628, %v1889
  %v1891 = vpop.f32.mrb[0].mxu0
  %1892 = vmatprep.mubr.f32.mxu0 0.0
  %1893 = vmatmul.mubr.f32.gmra.mrb[0].mxu0 %v1800
  %v1894 = vpop.f32.mrb[0].mxu0
  %v1895 = vadd.f32 %v628, %v1894
  %v1896 = vpop.f32.mrb[0].mxu0
  %1897 = vmatprep.mubr.f32.mxu0 0.0
  %1898 = vmatmul.mubr.f32.gmra.mrb[0].mxu0 %v1801
  %v1899 = vpop.f32.mrb[0].mxu0
  %v1900 = vadd.f32 %v628, %v1899
  %v1901 = vpop.f32.mrb[0].mxu0
  %1902 = vmatprep.mubr.f32.mxu0 0.0
  %1903 = vmatmul.mubr.f32.gmra.mrb[0].mxu0 %v1802
  %v1904 = vpop.f32.mrb[0].mxu0
  %v1905 = vadd.f32 %v628, %v1904
  %v1906 = vpop.f32.mrb[0].mxu0
  %1907 = vmatprep.mubr.f32.mxu0 0.0
  %1908 = vmatmul.mubr.f32.gmra.mrb[0].mxu0 %v1803
  %v1909 = vpop.f32.mrb[0].mxu0
  %v1910 = vadd.f32 %v628, %v1909
  %v1911 = vpop.f32.mrb[0].mxu0
  %1912 = vmatprep.mubr.f32.mxu0 0.0
  %1913 = vmatmul.mubr.f32.gmra.mrb[0].mxu0 %v1804
  %v1914 = vpop.f32.mrb[0].mxu0
  %v1915 = vadd.f32 %v628, %v1914
  %v1916 = vpop.f32.mrb[0].mxu0
  %1917 = vmatprep.mubr.f32.mxu0 0.0
  %1918 = vmatmul.mubr.f32.gmra.mrb[0].mxu0 %v1805
  %v1919 = vpop.f32.mrb[0].mxu0
  %v1920 = vadd.f32 %v628, %v1919
  %v1921 = vpop.f32.mrb[0].mxu0
  %1922 = vmatprep.mubr.f32.mxu0 0.0
  %1923 = vmatmul.mubr.f32.gmra.mrb[0].mxu0 %v1806
  %v1924 = vpop.f32.mrb[0].mxu0
  %v1925 = vadd.f32 %v628, %v1924
  %v1926 = vpop.f32.mrb[0].mxu0
  %1927 = vmatprep.mubr.f32.mxu0 0.0
  %1928 = vmatmul.mubr.f32.gmra.mrb[0].mxu0 %v1807
  %v1929 = vpop.f32.mrb[0].mxu0
  %v1930 = vadd.f32 %v628, %v1929
  %v1931 = vpop.f32.mrb[0].mxu0
  %1932 = vmatprep.mubr.f32.mxu0 0.0
  %1933 = vmatmul.mubr.f32.gmra.mrb[0].mxu0 %v1808
  %v1934 = vpop.f32.mrb[0].mxu0
  %v1935 = vadd.f32 %v628, %v1934
  %v1936 = vpop.f32.mrb[0].mxu0
  %1937 = vmatprep.mubr.f32.mxu0 0.0
  %1938 = vmatmul.mubr.f32.gmra.mrb[0].mxu0 %v1809
  %v1939 = vpop.f32.mrb[0].mxu0
  %v1940 = vadd.f32 %v628, %v1939
  %v1941 = vpop.f32.mrb[0].mxu0
  %1942 = vmatprep.mubr.f32.mxu0 0.0
  %1943 = vmatmul.mubr.f32.gmra.mrb[0].mxu0 %v1810
  %v1944 = vpop.f32.mrb[0].mxu0
  %v1945 = vadd.f32 %v628, %v1944
  %v1946 = vpop.f32.mrb[0].mxu0
  %1947 = vmatprep.mubr.f32.mxu0 0.0
  %1948 = vmatmul.mubr.f32.gmra.mrb[0].mxu0 %v1811
  %v1949 = vpop.f32.mrb[0].mxu0
  %v1950 = vadd.f32 %v628, %v1949
  %v1951 = vpop.f32.mrb[0].mxu0
  %1952 = vmatprep.mubr.f32.mxu0 0.0
  %1953 = vmatmul.mubr.f32.gmra.mrb[0].mxu0 %v1812
  %v1954 = vpop.f32.mrb[0].mxu0
  %v1955 = vadd.f32 %v628, %v1954
  %v1956 = vpop.f32.mrb[0].mxu0
  %1957 = vdwg.mxu0
  %v1958 = vmax.f32 %v1880, 0.0
  %v1959 = vmax.f32 %v1885, 0.0
  %v1960 = vmax.f32 %v1890, 0.0
  %v1961 = vmax.f32 %v1895, 0.0
  %v1962 = vmax.f32 %v1900, 0.0
  %v1963 = vmax.f32 %v1905, 0.0
  %v1964 = vmax.f32 %v1910, 0.0
  %v1965 = vmax.f32 %v1915, 0.0
  %v1966 = vmax.f32 %v1920, 0.0
  %v1967 = vmax.f32 %v1925, 0.0
  %v1968 = vmax.f32 %v1930, 0.0
  %v1969 = vmax.f32 %v1935, 0.0
  %v1970 = vmax.f32 %v1940, 0.0
  %v1971 = vmax.f32 %v1945, 0.0
  %v1972 = vmax.f32 %v1950, 0.0
  %v1973 = vmax.f32 %v1955, 0.0
  %1974 = vmatprep.subr.mxu0 0.0
  %1975 = vmatpush1.msra.mxu0 %v75
  %1976 = vmatprep.subr.mxu0 0.0
  %1977 = vmatpush1.msra.mxu0 %v76
  %1978 = vmatprep.subr.mxu0 0.0
  %1979 = vmatpush1.msra.mxu0 %v77
  %1980 = vmatprep.subr.mxu0 0.0
  %1981 = vmatpush1.msra.mxu0 %v78
  %1982 = vmatprep.subr.mxu0 0.0
  %1983 = vmatpush1.msra.mxu0 %v79
  %1984 = vmatprep.subr.mxu0 0.0
  %1985 = vmatpush1.msra.mxu0 %v80
  %1986 = vmatprep.subr.mxu0 0.0
  %1987 = vmatpush1.msra.mxu0 %v81
  %1988 = vmatprep.subr.mxu0 0.0
  %1989 = vmatpush1.msra.mxu0 %v82
  %1990 = vmatprep.subr.mxu0 0.0
  %1991 = vmatpush1.msra.mxu0 %v83
  %1992 = vmatprep.subr.mxu0 0.0
  %1993 = vmatpush1.msra.mxu0 %v84
  %1994 = vmatprep.subr.mxu0 0.0
  %1995 = vmatpush1.msra.mxu0 %v85
  %1996 = vmatprep.subr.mxu0 0.0
  %1997 = vmatpush1.msra.mxu0 %v86
  %1998 = vmatprep.subr.mxu0 0.0
  %1999 = vmatpush1.msra.mxu0 %v87
  %2000 = vmatprep.subr.mxu0 0.0
  %2001 = vmatpush1.msra.mxu0 %v88
  %2002 = vmatprep.subr.mxu0 0.0
  %2003 = vmatpush1.msra.mxu0 %v89
  %2004 = vmatprep.subr.mxu0 0.0
  %2005 = vmatpush1.msra.mxu0 %v90
  %2006 = vmatprep.subr.mxu0 0.0
  %2007 = vmatpush1.msra.mxu0 0.0
  %2008 = vmatprep.subr.mxu0 0.0
  %2009 = vmatpush1.msra.mxu0 0.0
  %2010 = vmatprep.subr.mxu0 0.0
  %2011 = vmatpush1.msra.mxu0 0.0
  %2012 = vmatprep.subr.mxu0 0.0
  %2013 = vmatpush1.msra.mxu0 0.0
  %2014 = vmatprep.subr.mxu0 0.0
  %2015 = vmatpush1.msra.mxu0 0.0
  %2016 = vmatprep.subr.mxu0 0.0
  %2017 = vmatpush1.msra.mxu0 0.0
  %2018 = vmatprep.subr.mxu0 0.0
  %2019 = vmatpush1.msra.mxu0 0.0
  %2020 = vmatprep.subr.mxu0 0.0
  %2021 = vmatpush1.msra.mxu0 0.0
  %2022 = vmatprep.subr.mxu0 0.0
  %2023 = vmatpush1.msra.mxu0 0.0
  %2024 = vmatprep.subr.mxu0 0.0
  %2025 = vmatpush1.msra.mxu0 0.0
  %2026 = vmatprep.subr.mxu0 0.0
  %2027 = vmatpush1.msra.mxu0 0.0
  %2028 = vmatprep.subr.mxu0 0.0
  %2029 = vmatpush1.msra.mxu0 0.0
  %2030 = vmatprep.subr.mxu0 0.0
  %2031 = vmatpush1.msra.mxu0 0.0
  %2032 = vmatprep.subr.mxu0 0.0
  %2033 = vmatpush1.msra.mxu0 0.0
  %2034 = vmatprep.subr.mxu0 0.0
  %2035 = vmatpush1.msra.mxu0 0.0
  %2036 = vmatprep.subr.mxu0 0.0
  %2037 = vmatpush1.msra.mxu0 0.0
  %2038 = vmatprep.mubr.f32.mxu0 0.0
  %2039 = vmatmul.mubr.f32.gmra.mrb[0].mxu0 %v1958
  %v2040 = vpop.f32.mrb[0].mxu0
  %v2041 = vadd.f32 %v793, %v2040
  %v2042 = vpop.f32.mrb[0].mxu0
  %2043 = vmatprep.mubr.f32.mxu0 0.0
  %2044 = vmatmul.mubr.f32.gmra.mrb[0].mxu0 %v1959
  %v2045 = vpop.f32.mrb[0].mxu0
  %v2046 = vadd.f32 %v793, %v2045
  %v2047 = vpop.f32.mrb[0].mxu0
  %2048 = vmatprep.mubr.f32.mxu0 0.0
  %2049 = vmatmul.mubr.f32.gmra.mrb[0].mxu0 %v1960
  %v2050 = vpop.f32.mrb[0].mxu0
  %v2051 = vadd.f32 %v793, %v2050
  %v2052 = vpop.f32.mrb[0].mxu0
  %2053 = vmatprep.mubr.f32.mxu0 0.0
  %2054 = vmatmul.mubr.f32.gmra.mrb[0].mxu0 %v1961
  %v2055 = vpop.f32.mrb[0].mxu0
  %v2056 = vadd.f32 %v793, %v2055
  %v2057 = vpop.f32.mrb[0].mxu0
  %2058 = vmatprep.mubr.f32.mxu0 0.0
  %2059 = vmatmul.mubr.f32.gmra.mrb[0].mxu0 %v1962
  %v2060 = vpop.f32.mrb[0].mxu0
  %v2061 = vadd.f32 %v793, %v2060
  %v2062 = vpop.f32.mrb[0].mxu0
  %2063 = vmatprep.mubr.f32.mxu0 0.0
  %2064 = vmatmul.mubr.f32.gmra.mrb[0].mxu0 %v1963
  %v2065 = vpop.f32.mrb[0].mxu0
  %v2066 = vadd.f32 %v793, %v2065
  %v2067 = vpop.f32.mrb[0].mxu0
  %2068 = vmatprep.mubr.f32.mxu0 0.0
  %2069 = vmatmul.mubr.f32.gmra.mrb[0].mxu0 %v1964
  %v2070 = vpop.f32.mrb[0].mxu0
  %v2071 = vadd.f32 %v793, %v2070
  %v2072 = vpop.f32.mrb[0].mxu0
  %2073 = vmatprep.mubr.f32.mxu0 0.0
  %2074 = vmatmul.mubr.f32.gmra.mrb[0].mxu0 %v1965
  %v2075 = vpop.f32.mrb[0].mxu0
  %v2076 = vadd.f32 %v793, %v2075
  %v2077 = vpop.f32.mrb[0].mxu0
  %2078 = vmatprep.mubr.f32.mxu0 0.0
  %2079 = vmatmul.mubr.f32.gmra.mrb[0].mxu0 %v1966
  %v2080 = vpop.f32.mrb[0].mxu0
  %v2081 = vadd.f32 %v793, %v2080
  %v2082 = vpop.f32.mrb[0].mxu0
  %2083 = vmatprep.mubr.f32.mxu0 0.0
  %2084 = vmatmul.mubr.f32.gmra.mrb[0].mxu0 %v1967
  %v2085 = vpop.f32.mrb[0].mxu0
  %v2086 = vadd.f32 %v793, %v2085
  %v2087 = vpop.f32.mrb[0].mxu0
  %2088 = vmatprep.mubr.f32.mxu0 0.0
  %2089 = vmatmul.mubr.f32.gmra.mrb[0].mxu0 %v1968
  %v2090 = vpop.f32.mrb[0].mxu0
  %v2091 = vadd.f32 %v793, %v2090
  %v2092 = vpop.f32.mrb[0].mxu0
  %2093 = vmatprep.mubr.f32.mxu0 0.0
  %2094 = vmatmul.mubr.f32.gmra.mrb[0].mxu0 %v1969
  %v2095 = vpop.f32.mrb[0].mxu0
  %v2096 = vadd.f32 %v793, %v2095
  %v2097 = vpop.f32.mrb[0].mxu0
  %2098 = vmatprep.mubr.f32.mxu0 0.0
  %2099 = vmatmul.mubr.f32.gmra.mrb[0].mxu0 %v1970
  %v2100 = vpop.f32.mrb[0].mxu0
  %v2101 = vadd.f32 %v793, %v2100
  %v2102 = vpop.f32.mrb[0].mxu0
  %2103 = vmatprep.mubr.f32.mxu0 0.0
  %2104 = vmatmul.mubr.f32.gmra.mrb[0].mxu0 %v1971
  %v2105 = vpop.f32.mrb[0].mxu0
  %v2106 = vadd.f32 %v793, %v2105
  %v2107 = vpop.f32.mrb[0].mxu0
  %2108 = vmatprep.mubr.f32.mxu0 0.0
  %2109 = vmatmul.mubr.f32.gmra.mrb[0].mxu0 %v1972
  %v2110 = vpop.f32.mrb[0].mxu0
  %v2111 = vadd.f32 %v793, %v2110
  %v2112 = vpop.f32.mrb[0].mxu0
  %2113 = vmatprep.mubr.f32.mxu0 0.0
  %2114 = vmatmul.mubr.f32.gmra.mrb[0].mxu0 %v1973
  %v2115 = vpop.f32.mrb[0].mxu0
  %v2116 = vadd.f32 %v793, %v2115
  %v2117 = vpop.f32.mrb[0].mxu0
  %2118 = vdwg.mxu0
  %v2119 = vmax.f32 %v2041, 0.0
  %v2120 = vmax.f32 %v2046, 0.0
  %v2121 = vmax.f32 %v2051, 0.0
  %v2122 = vmax.f32 %v2056, 0.0
  %v2123 = vmax.f32 %v2061, 0.0
  %v2124 = vmax.f32 %v2066, 0.0
  %v2125 = vmax.f32 %v2071, 0.0
  %v2126 = vmax.f32 %v2076, 0.0
  %v2127 = vmax.f32 %v2081, 0.0
  %v2128 = vmax.f32 %v2086, 0.0
  %v2129 = vmax.f32 %v2091, 0.0
  %v2130 = vmax.f32 %v2096, 0.0
  %v2131 = vmax.f32 %v2101, 0.0
  %v2132 = vmax.f32 %v2106, 0.0
  %v2133 = vmax.f32 %v2111, 0.0
  %v2134 = vmax.f32 %v2116, 0.0
  %v2135 = vmax.f32 %v2119, %v2121
  %v2136 = vmax.f32 %v2120, %v2122
  %v2137 = vmax.f32 %v2135, %v2123
  %v2138 = vmax.f32 %v2136, %v2124
  %v2139 = vmax.f32 %v2137, %v2125
  %v2140 = vmax.f32 %v2138, %v2126
  %v2141 = vmax.f32 %v2139, %v2140
  %v2142 = vrot.slane %v2141, 4
  %v2143 = vmax.f32 %v2141, %v2142
  %v2144 = vrot.slane %v2143, 2
  %v2145 = vmax.f32 %v2143, %v2144
  %v2146 = vrot.slane %v2145, 1
  %v2147 = vmax.f32 %v2145, %v2146
  %v2148 = vmax.f32 %v2127, %v2129
  %v2149 = vmax.f32 %v2128, %v2130
  %v2150 = vmax.f32 %v2148, %v2131
  %v2151 = vmax.f32 %v2149, %v2132
  %v2152 = vmax.f32 %v2150, %v2133
  %v2153 = vmax.f32 %v2151, %v2134
  %v2154 = vmax.f32 %v2152, %v2153
  %v2155 = vrot.slane %v2154, 4
  %v2156 = vmax.f32 %v2154, %v2155
  %v2157 = vrot.slane %v2156, 2
  %v2158 = vmax.f32 %v2156, %v2157
  %v2159 = vrot.slane %v2158, 1
  %v2160 = vmax.f32 %v2158, %v2159
  %2162 = vset.pattern.permute.xlu0 0
  %2163 = vperm.xlu0 %2162, %v45
  %v2164 = vpop.permute.xlu0 %2163
  %2167 = vset.pattern.permute.xlu0 0
  %2168 = vperm.xlu0 %2167, %v52
  %v2169 = vpop.permute.xlu0 %2168
  %v2171 = vmul.f32 %v2164, %v104
  %v2172 = vmul.f32 %v2169, %v104
  %v2173 = vadd.f32 %v2171, 0.0
  %v2174 = vadd.f32 %v2172, 0.0
  %2175 = vset.pattern.permute.xlu0 1
  %2176 = vperm.xlu0 %2175, %v45
  %v2177 = vpop.permute.xlu0 %2176
  %2179 = vset.pattern.permute.xlu0 1
  %2180 = vperm.xlu0 %2179, %v52
  %v2181 = vpop.permute.xlu0 %2180
  %v2183 = vmul.f32 %v2177, %v120
  %v2184 = vmul.f32 %v2181, %v120
  %v2185 = vadd.f32 %v2173, %v2183
  %v2186 = vadd.f32 %v2174, %v2184
  %2187 = vset.pattern.permute.xlu0 2
  %2188 = vperm.xlu0 %2187, %v45
  %v2189 = vpop.permute.xlu0 %2188
  %2191 = vset.pattern.permute.xlu0 2
  %2192 = vperm.xlu0 %2191, %v52
  %v2193 = vpop.permute.xlu0 %2192
  %v2195 = vmul.f32 %v2189, %v136
  %v2196 = vmul.f32 %v2193, %v136
  %v2197 = vadd.f32 %v2185, %v2195
  %v2198 = vadd.f32 %v2186, %v2196
  %2199 = vset.pattern.permute.xlu0 3
  %2200 = vperm.xlu0 %2199, %v45
  %v2201 = vpop.permute.xlu0 %2200
  %2203 = vset.pattern.permute.xlu0 3
  %2204 = vperm.xlu0 %2203, %v52
  %v2205 = vpop.permute.xlu0 %2204
  %v2207 = vmul.f32 %v2201, %v152
  %v2208 = vmul.f32 %v2205, %v152
  %v2209 = vadd.f32 %v2197, %v2207
  %v2210 = vadd.f32 %v2198, %v2208
  %v2211 = vlaneseq
  %v2212 = vshrl.u32 %v2211, 7
  %v2213 = vsub.s32 0, %v2212
  %v2214 = vrot.slane %v2209, %v2213
  %v2215 = vlaneseq
  %v2216 = vshrl.u32 %v2215, 7
  %v2217 = vsub.s32 0, %v2216
  %v2218 = vrot.slane %v2210, %v2217
  %v2219 = vmul.f32 %v160, %v2214
  %v2220 = vmul.f32 %v165, %v2214
  %v2221 = vmul.f32 %v170, %v2214
  %v2222 = vmul.f32 %v175, %v2214
  %v2223 = vmul.f32 %v180, %v2214
  %v2224 = vmul.f32 %v185, %v2214
  %v2225 = vmul.f32 %v190, %v2214
  %v2226 = vmul.f32 %v195, %v2214
  %v2227 = vmul.f32 %v200, %v2218
  %v2228 = vmul.f32 %v205, %v2218
  %v2229 = vmul.f32 %v210, %v2218
  %v2230 = vmul.f32 %v215, %v2218
  %v2231 = vmul.f32 %v220, %v2218
  %v2232 = vmul.f32 %v225, %v2218
  %v2233 = vmul.f32 %v230, %v2218
  %v2234 = vmul.f32 %v235, %v2218
  %v2235 = vadd.f32 %v2219, 0.0
  %v2236 = vadd.f32 %v2220, 0.0
  %v2237 = vadd.f32 %v2221, 0.0
  %v2238 = vadd.f32 %v2222, 0.0
  %v2239 = vadd.f32 %v2223, 0.0
  %v2240 = vadd.f32 %v2224, 0.0
  %v2241 = vadd.f32 %v2225, 0.0
  %v2242 = vadd.f32 %v2226, 0.0
  %v2243 = vadd.f32 %v2227, 0.0
  %v2244 = vadd.f32 %v2228, 0.0
  %v2245 = vadd.f32 %v2229, 0.0
  %v2246 = vadd.f32 %v2230, 0.0
  %v2247 = vadd.f32 %v2231, 0.0
  %v2248 = vadd.f32 %v2232, 0.0
  %v2249 = vadd.f32 %v2233, 0.0
  %v2250 = vadd.f32 %v2234, 0.0
  %v2251 = vlaneseq
  %v2252 = vshrl.u32 %v2251, 7
  %v2253 = vsub.s32 1, %v2252
  %v2254 = vrot.slane %v2209, %v2253
  %v2255 = vlaneseq
  %v2256 = vshrl.u32 %v2255, 7
  %v2257 = vsub.s32 1, %v2256
  %v2258 = vrot.slane %v2210, %v2257
  %v2259 = vmul.f32 %v279, %v2254
  %v2260 = vmul.f32 %v283, %v2254
  %v2261 = vmul.f32 %v287, %v2254
  %v2262 = vmul.f32 %v291, %v2254
  %v2263 = vmul.f32 %v295, %v2254
  %v2264 = vmul.f32 %v299, %v2254
  %v2265 = vmul.f32 %v303, %v2254
  %v2266 = vmul.f32 %v307, %v2254
  %v2267 = vmul.f32 %v311, %v2258
  %v2268 = vmul.f32 %v315, %v2258
  %v2269 = vmul.f32 %v319, %v2258
  %v2270 = vmul.f32 %v323, %v2258
  %v2271 = vmul.f32 %v327, %v2258
  %v2272 = vmul.f32 %v331, %v2258
  %v2273 = vmul.f32 %v335, %v2258
  %v2274 = vmul.f32 %v339, %v2258
  %v2275 = vadd.f32 %v2235, %v2259
  %v2276 = vadd.f32 %v2236, %v2260
  %v2277 = vadd.f32 %v2237, %v2261
  %v2278 = vadd.f32 %v2238, %v2262
  %v2279 = vadd.f32 %v2239, %v2263
  %v2280 = vadd.f32 %v2240, %v2264
  %v2281 = vadd.f32 %v2241, %v2265
  %v2282 = vadd.f32 %v2242, %v2266
  %v2283 = vadd.f32 %v2243, %v2267
  %v2284 = vadd.f32 %v2244, %v2268
  %v2285 = vadd.f32 %v2245, %v2269
  %v2286 = vadd.f32 %v2246, %v2270
  %v2287 = vadd.f32 %v2247, %v2271
  %v2288 = vadd.f32 %v2248, %v2272
  %v2289 = vadd.f32 %v2249, %v2273
  %v2290 = vadd.f32 %v2250, %v2274
  %v2291 = vlaneseq
  %v2292 = vshrl.u32 %v2291, 7
  %v2293 = vsub.s32 2, %v2292
  %v2294 = vrot.slane %v2209, %v2293
  %v2295 = vlaneseq
  %v2296 = vshrl.u32 %v2295, 7
  %v2297 = vsub.s32 2, %v2296
  %v2298 = vrot.slane %v2210, %v2297
  %v2299 = vmul.f32 %v383, %v2294
  %v2300 = vmul.f32 %v387, %v2294
  %v2301 = vmul.f32 %v391, %v2294
  %v2302 = vmul.f32 %v395, %v2294
  %v2303 = vmul.f32 %v399, %v2294
  %v2304 = vmul.f32 %v403, %v2294
  %v2305 = vmul.f32 %v407, %v2294
  %v2306 = vmul.f32 %v411, %v2294
  %v2307 = vmul.f32 %v415, %v2298
  %v2308 = vmul.f32 %v419, %v2298
  %v2309 = vmul.f32 %v423, %v2298
  %v2310 = vmul.f32 %v427, %v2298
  %v2311 = vmul.f32 %v431, %v2298
  %v2312 = vmul.f32 %v435, %v2298
  %v2313 = vmul.f32 %v439, %v2298
  %v2314 = vmul.f32 %v443, %v2298
  %v2315 = vadd.f32 %v2275, %v2299
  %v2316 = vadd.f32 %v2276, %v2300
  %v2317 = vadd.f32 %v2277, %v2301
  %v2318 = vadd.f32 %v2278, %v2302
  %v2319 = vadd.f32 %v2279, %v2303
  %v2320 = vadd.f32 %v2280, %v2304
  %v2321 = vadd.f32 %v2281, %v2305
  %v2322 = vadd.f32 %v2282, %v2306
  %v2323 = vadd.f32 %v2283, %v2307
  %v2324 = vadd.f32 %v2284, %v2308
  %v2325 = vadd.f32 %v2285, %v2309
  %v2326 = vadd.f32 %v2286, %v2310
  %v2327 = vadd.f32 %v2287, %v2311
  %v2328 = vadd.f32 %v2288, %v2312
  %v2329 = vadd.f32 %v2289, %v2313
  %v2330 = vadd.f32 %v2290, %v2314
  %v2331 = vlaneseq
  %v2332 = vshrl.u32 %v2331, 7
  %v2333 = vsub.s32 3, %v2332
  %v2334 = vrot.slane %v2209, %v2333
  %v2335 = vlaneseq
  %v2336 = vshrl.u32 %v2335, 7
  %v2337 = vsub.s32 3, %v2336
  %v2338 = vrot.slane %v2210, %v2337
  %v2339 = vmul.f32 %v487, %v2334
  %v2340 = vmul.f32 %v491, %v2334
  %v2341 = vmul.f32 %v495, %v2334
  %v2342 = vmul.f32 %v499, %v2334
  %v2343 = vmul.f32 %v503, %v2334
  %v2344 = vmul.f32 %v507, %v2334
  %v2345 = vmul.f32 %v511, %v2334
  %v2346 = vmul.f32 %v515, %v2334
  %v2347 = vmul.f32 %v519, %v2338
  %v2348 = vmul.f32 %v523, %v2338
  %v2349 = vmul.f32 %v527, %v2338
  %v2350 = vmul.f32 %v531, %v2338
  %v2351 = vmul.f32 %v535, %v2338
  %v2352 = vmul.f32 %v539, %v2338
  %v2353 = vmul.f32 %v543, %v2338
  %v2354 = vmul.f32 %v547, %v2338
  %v2355 = vadd.f32 %v2315, %v2339
  %v2356 = vadd.f32 %v2316, %v2340
  %v2357 = vadd.f32 %v2317, %v2341
  %v2358 = vadd.f32 %v2318, %v2342
  %v2359 = vadd.f32 %v2319, %v2343
  %v2360 = vadd.f32 %v2320, %v2344
  %v2361 = vadd.f32 %v2321, %v2345
  %v2362 = vadd.f32 %v2322, %v2346
  %v2363 = vadd.f32 %v2323, %v2347
  %v2364 = vadd.f32 %v2324, %v2348
  %v2365 = vadd.f32 %v2325, %v2349
  %v2366 = vadd.f32 %v2326, %v2350
  %v2367 = vadd.f32 %v2327, %v2351
  %v2368 = vadd.f32 %v2328, %v2352
  %v2369 = vadd.f32 %v2329, %v2353
  %v2370 = vadd.f32 %v2330, %v2354
  %v2371 = vadd.f32 %v2355, %v592
  %v2372 = vadd.f32 %v2356, %v592
  %v2373 = vadd.f32 %v2357, %v592
  %v2374 = vadd.f32 %v2358, %v592
  %v2375 = vadd.f32 %v2359, %v592
  %v2376 = vadd.f32 %v2360, %v592
  %v2377 = vadd.f32 %v2361, %v592
  %v2378 = vadd.f32 %v2362, %v592
  %v2379 = vadd.f32 %v2363, %v592
  %v2380 = vadd.f32 %v2364, %v592
  %v2381 = vadd.f32 %v2365, %v592
  %v2382 = vadd.f32 %v2366, %v592
  %v2383 = vadd.f32 %v2367, %v592
  %v2384 = vadd.f32 %v2368, %v592
  %v2385 = vadd.f32 %v2369, %v592
  %v2386 = vadd.f32 %v2370, %v592
  %v2387 = vmax.f32 %v2371, 0.0
  %v2388 = vmax.f32 %v2372, 0.0
  %v2389 = vmax.f32 %v2373, 0.0
  %v2390 = vmax.f32 %v2374, 0.0
  %v2391 = vmax.f32 %v2375, 0.0
  %v2392 = vmax.f32 %v2376, 0.0
  %v2393 = vmax.f32 %v2377, 0.0
  %v2394 = vmax.f32 %v2378, 0.0
  %v2395 = vmax.f32 %v2379, 0.0
  %v2396 = vmax.f32 %v2380, 0.0
  %v2397 = vmax.f32 %v2381, 0.0
  %v2398 = vmax.f32 %v2382, 0.0
  %v2399 = vmax.f32 %v2383, 0.0
  %v2400 = vmax.f32 %v2384, 0.0
  %v2401 = vmax.f32 %v2385, 0.0
  %v2402 = vmax.f32 %v2386, 0.0
  %2403 = vmatprep.subr.mxu0 0.0
  %2404 = vmatpush1.msra.mxu0 %v58
  %2405 = vmatprep.subr.mxu0 0.0
  %2406 = vmatpush1.msra.mxu0 %v59
  %2407 = vmatprep.subr.mxu0 0.0
  %2408 = vmatpush1.msra.mxu0 %v60
  %2409 = vmatprep.subr.mxu0 0.0
  %2410 = vmatpush1.msra.mxu0 %v61
  %2411 = vmatprep.subr.mxu0 0.0
  %2412 = vmatpush1.msra.mxu0 %v62
  %2413 = vmatprep.subr.mxu0 0.0
  %2414 = vmatpush1.msra.mxu0 %v63
  %2415 = vmatprep.subr.mxu0 0.0
  %2416 = vmatpush1.msra.mxu0 %v64
  %2417 = vmatprep.subr.mxu0 0.0
  %2418 = vmatpush1.msra.mxu0 %v65
  %2419 = vmatprep.subr.mxu0 0.0
  %2420 = vmatpush1.msra.mxu0 %v66
  %2421 = vmatprep.subr.mxu0 0.0
  %2422 = vmatpush1.msra.mxu0 %v67
  %2423 = vmatprep.subr.mxu0 0.0
  %2424 = vmatpush1.msra.mxu0 %v68
  %2425 = vmatprep.subr.mxu0 0.0
  %2426 = vmatpush1.msra.mxu0 %v69
  %2427 = vmatprep.subr.mxu0 0.0
  %2428 = vmatpush1.msra.mxu0 %v70
  %2429 = vmatprep.subr.mxu0 0.0
  %2430 = vmatpush1.msra.mxu0 %v71
  %2431 = vmatprep.subr.mxu0 0.0
  %2432 = vmatpush1.msra.mxu0 %v72
  %2433 = vmatprep.subr.mxu0 0.0
  %2434 = vmatpush1.msra.mxu0 %v73
  %2435 = vmatprep.subr.mxu0 0.0
  %2436 = vmatpush1.msra.mxu0 0.0
  %2437 = vmatprep.subr.mxu0 0.0
  %2438 = vmatpush1.msra.mxu0 0.0
  %2439 = vmatprep.subr.mxu0 0.0
  %2440 = vmatpush1.msra.mxu0 0.0
  %2441 = vmatprep.subr.mxu0 0.0
  %2442 = vmatpush1.msra.mxu0 0.0
  %2443 = vmatprep.subr.mxu0 0.0
  %2444 = vmatpush1.msra.mxu0 0.0
  %2445 = vmatprep.subr.mxu0 0.0
  %2446 = vmatpush1.msra.mxu0 0.0
  %2447 = vmatprep.subr.mxu0 0.0
  %2448 = vmatpush1.msra.mxu0 0.0
  %2449 = vmatprep.subr.mxu0 0.0
  %2450 = vmatpush1.msra.mxu0 0.0
  %2451 = vmatprep.subr.mxu0 0.0
  %2452 = vmatpush1.msra.mxu0 0.0
  %2453 = vmatprep.subr.mxu0 0.0
  %2454 = vmatpush1.msra.mxu0 0.0
  %2455 = vmatprep.subr.mxu0 0.0
  %2456 = vmatpush1.msra.mxu0 0.0
  %2457 = vmatprep.subr.mxu0 0.0
  %2458 = vmatpush1.msra.mxu0 0.0
  %2459 = vmatprep.subr.mxu0 0.0
  %2460 = vmatpush1.msra.mxu0 0.0
  %2461 = vmatprep.subr.mxu0 0.0
  %2462 = vmatpush1.msra.mxu0 0.0
  %2463 = vmatprep.subr.mxu0 0.0
  %2464 = vmatpush1.msra.mxu0 0.0
  %2465 = vmatprep.subr.mxu0 0.0
  %2466 = vmatpush1.msra.mxu0 0.0
  %2467 = vmatprep.mubr.f32.mxu0 0.0
  %2468 = vmatmul.mubr.f32.gmra.mrb[0].mxu0 %v2387
  %v2469 = vpop.f32.mrb[0].mxu0
  %v2470 = vadd.f32 %v628, %v2469
  %v2471 = vpop.f32.mrb[0].mxu0
  %2472 = vmatprep.mubr.f32.mxu0 0.0
  %2473 = vmatmul.mubr.f32.gmra.mrb[0].mxu0 %v2388
  %v2474 = vpop.f32.mrb[0].mxu0
  %v2475 = vadd.f32 %v628, %v2474
  %v2476 = vpop.f32.mrb[0].mxu0
  %2477 = vmatprep.mubr.f32.mxu0 0.0
  %2478 = vmatmul.mubr.f32.gmra.mrb[0].mxu0 %v2389
  %v2479 = vpop.f32.mrb[0].mxu0
  %v2480 = vadd.f32 %v628, %v2479
  %v2481 = vpop.f32.mrb[0].mxu0
  %2482 = vmatprep.mubr.f32.mxu0 0.0
  %2483 = vmatmul.mubr.f32.gmra.mrb[0].mxu0 %v2390
  %v2484 = vpop.f32.mrb[0].mxu0
  %v2485 = vadd.f32 %v628, %v2484
  %v2486 = vpop.f32.mrb[0].mxu0
  %2487 = vmatprep.mubr.f32.mxu0 0.0
  %2488 = vmatmul.mubr.f32.gmra.mrb[0].mxu0 %v2391
  %v2489 = vpop.f32.mrb[0].mxu0
  %v2490 = vadd.f32 %v628, %v2489
  %v2491 = vpop.f32.mrb[0].mxu0
  %2492 = vmatprep.mubr.f32.mxu0 0.0
  %2493 = vmatmul.mubr.f32.gmra.mrb[0].mxu0 %v2392
  %v2494 = vpop.f32.mrb[0].mxu0
  %v2495 = vadd.f32 %v628, %v2494
  %v2496 = vpop.f32.mrb[0].mxu0
  %2497 = vmatprep.mubr.f32.mxu0 0.0
  %2498 = vmatmul.mubr.f32.gmra.mrb[0].mxu0 %v2393
  %v2499 = vpop.f32.mrb[0].mxu0
  %v2500 = vadd.f32 %v628, %v2499
  %v2501 = vpop.f32.mrb[0].mxu0
  %2502 = vmatprep.mubr.f32.mxu0 0.0
  %2503 = vmatmul.mubr.f32.gmra.mrb[0].mxu0 %v2394
  %v2504 = vpop.f32.mrb[0].mxu0
  %v2505 = vadd.f32 %v628, %v2504
  %v2506 = vpop.f32.mrb[0].mxu0
  %2507 = vmatprep.mubr.f32.mxu0 0.0
  %2508 = vmatmul.mubr.f32.gmra.mrb[0].mxu0 %v2395
  %v2509 = vpop.f32.mrb[0].mxu0
  %v2510 = vadd.f32 %v628, %v2509
  %v2511 = vpop.f32.mrb[0].mxu0
  %2512 = vmatprep.mubr.f32.mxu0 0.0
  %2513 = vmatmul.mubr.f32.gmra.mrb[0].mxu0 %v2396
  %v2514 = vpop.f32.mrb[0].mxu0
  %v2515 = vadd.f32 %v628, %v2514
  %v2516 = vpop.f32.mrb[0].mxu0
  %2517 = vmatprep.mubr.f32.mxu0 0.0
  %2518 = vmatmul.mubr.f32.gmra.mrb[0].mxu0 %v2397
  %v2519 = vpop.f32.mrb[0].mxu0
  %v2520 = vadd.f32 %v628, %v2519
  %v2521 = vpop.f32.mrb[0].mxu0
  %2522 = vmatprep.mubr.f32.mxu0 0.0
  %2523 = vmatmul.mubr.f32.gmra.mrb[0].mxu0 %v2398
  %v2524 = vpop.f32.mrb[0].mxu0
  %v2525 = vadd.f32 %v628, %v2524
  %v2526 = vpop.f32.mrb[0].mxu0
  %2527 = vmatprep.mubr.f32.mxu0 0.0
  %2528 = vmatmul.mubr.f32.gmra.mrb[0].mxu0 %v2399
  %v2529 = vpop.f32.mrb[0].mxu0
  %v2530 = vadd.f32 %v628, %v2529
  %v2531 = vpop.f32.mrb[0].mxu0
  %2532 = vmatprep.mubr.f32.mxu0 0.0
  %2533 = vmatmul.mubr.f32.gmra.mrb[0].mxu0 %v2400
  %v2534 = vpop.f32.mrb[0].mxu0
  %v2535 = vadd.f32 %v628, %v2534
  %v2536 = vpop.f32.mrb[0].mxu0
  %2537 = vmatprep.mubr.f32.mxu0 0.0
  %2538 = vmatmul.mubr.f32.gmra.mrb[0].mxu0 %v2401
  %v2539 = vpop.f32.mrb[0].mxu0
  %v2540 = vadd.f32 %v628, %v2539
  %v2541 = vpop.f32.mrb[0].mxu0
  %2542 = vmatprep.mubr.f32.mxu0 0.0
  %2543 = vmatmul.mubr.f32.gmra.mrb[0].mxu0 %v2402
  %v2544 = vpop.f32.mrb[0].mxu0
  %v2545 = vadd.f32 %v628, %v2544
  %v2546 = vpop.f32.mrb[0].mxu0
  %2547 = vdwg.mxu0
  %v2548 = vmax.f32 %v2470, 0.0
  %v2549 = vmax.f32 %v2475, 0.0
  %v2550 = vmax.f32 %v2480, 0.0
  %v2551 = vmax.f32 %v2485, 0.0
  %v2552 = vmax.f32 %v2490, 0.0
  %v2553 = vmax.f32 %v2495, 0.0
  %v2554 = vmax.f32 %v2500, 0.0
  %v2555 = vmax.f32 %v2505, 0.0
  %v2556 = vmax.f32 %v2510, 0.0
  %v2557 = vmax.f32 %v2515, 0.0
  %v2558 = vmax.f32 %v2520, 0.0
  %v2559 = vmax.f32 %v2525, 0.0
  %v2560 = vmax.f32 %v2530, 0.0
  %v2561 = vmax.f32 %v2535, 0.0
  %v2562 = vmax.f32 %v2540, 0.0
  %v2563 = vmax.f32 %v2545, 0.0
  %2564 = vmatprep.subr.mxu0 0.0
  %2565 = vmatpush1.msra.mxu0 %v75
  %2566 = vmatprep.subr.mxu0 0.0
  %2567 = vmatpush1.msra.mxu0 %v76
  %2568 = vmatprep.subr.mxu0 0.0
  %2569 = vmatpush1.msra.mxu0 %v77
  %2570 = vmatprep.subr.mxu0 0.0
  %2571 = vmatpush1.msra.mxu0 %v78
  %2572 = vmatprep.subr.mxu0 0.0
  %2573 = vmatpush1.msra.mxu0 %v79
  %2574 = vmatprep.subr.mxu0 0.0
  %2575 = vmatpush1.msra.mxu0 %v80
  %2576 = vmatprep.subr.mxu0 0.0
  %2577 = vmatpush1.msra.mxu0 %v81
  %2578 = vmatprep.subr.mxu0 0.0
  %2579 = vmatpush1.msra.mxu0 %v82
  %2580 = vmatprep.subr.mxu0 0.0
  %2581 = vmatpush1.msra.mxu0 %v83
  %2582 = vmatprep.subr.mxu0 0.0
  %2583 = vmatpush1.msra.mxu0 %v84
  %2584 = vmatprep.subr.mxu0 0.0
  %2585 = vmatpush1.msra.mxu0 %v85
  %2586 = vmatprep.subr.mxu0 0.0
  %2587 = vmatpush1.msra.mxu0 %v86
  %2588 = vmatprep.subr.mxu0 0.0
  %2589 = vmatpush1.msra.mxu0 %v87
  %2590 = vmatprep.subr.mxu0 0.0
  %2591 = vmatpush1.msra.mxu0 %v88
  %2592 = vmatprep.subr.mxu0 0.0
  %2593 = vmatpush1.msra.mxu0 %v89
  %2594 = vmatprep.subr.mxu0 0.0
  %2595 = vmatpush1.msra.mxu0 %v90
  %2596 = vmatprep.subr.mxu0 0.0
  %2597 = vmatpush1.msra.mxu0 0.0
  %2598 = vmatprep.subr.mxu0 0.0
  %2599 = vmatpush1.msra.mxu0 0.0
  %2600 = vmatprep.subr.mxu0 0.0
  %2601 = vmatpush1.msra.mxu0 0.0
  %2602 = vmatprep.subr.mxu0 0.0
  %2603 = vmatpush1.msra.mxu0 0.0
  %2604 = vmatprep.subr.mxu0 0.0
  %2605 = vmatpush1.msra.mxu0 0.0
  %2606 = vmatprep.subr.mxu0 0.0
  %2607 = vmatpush1.msra.mxu0 0.0
  %2608 = vmatprep.subr.mxu0 0.0
  %2609 = vmatpush1.msra.mxu0 0.0
  %2610 = vmatprep.subr.mxu0 0.0
  %2611 = vmatpush1.msra.mxu0 0.0
  %2612 = vmatprep.subr.mxu0 0.0
  %2613 = vmatpush1.msra.mxu0 0.0
  %2614 = vmatprep.subr.mxu0 0.0
  %2615 = vmatpush1.msra.mxu0 0.0
  %2616 = vmatprep.subr.mxu0 0.0
  %2617 = vmatpush1.msra.mxu0 0.0
  %2618 = vmatprep.subr.mxu0 0.0
  %2619 = vmatpush1.msra.mxu0 0.0
  %2620 = vmatprep.subr.mxu0 0.0
  %2621 = vmatpush1.msra.mxu0 0.0
  %2622 = vmatprep.subr.mxu0 0.0
  %2623 = vmatpush1.msra.mxu0 0.0
  %2624 = vmatprep.subr.mxu0 0.0
  %2625 = vmatpush1.msra.mxu0 0.0
  %2626 = vmatprep.subr.mxu0 0.0
  %2627 = vmatpush1.msra.mxu0 0.0
  %2628 = vmatprep.mubr.f32.mxu0 0.0
  %2629 = vmatmul.mubr.f32.gmra.mrb[0].mxu0 %v2548
  %v2630 = vpop.f32.mrb[0].mxu0
  %v2631 = vadd.f32 %v793, %v2630
  %v2632 = vpop.f32.mrb[0].mxu0
  %2633 = vmatprep.mubr.f32.mxu0 0.0
  %2634 = vmatmul.mubr.f32.gmra.mrb[0].mxu0 %v2549
  %v2635 = vpop.f32.mrb[0].mxu0
  %v2636 = vadd.f32 %v793, %v2635
  %v2637 = vpop.f32.mrb[0].mxu0
  %2638 = vmatprep.mubr.f32.mxu0 0.0
  %2639 = vmatmul.mubr.f32.gmra.mrb[0].mxu0 %v2550
  %v2640 = vpop.f32.mrb[0].mxu0
  %v2641 = vadd.f32 %v793, %v2640
  %v2642 = vpop.f32.mrb[0].mxu0
  %2643 = vmatprep.mubr.f32.mxu0 0.0
  %2644 = vmatmul.mubr.f32.gmra.mrb[0].mxu0 %v2551
  %v2645 = vpop.f32.mrb[0].mxu0
  %v2646 = vadd.f32 %v793, %v2645
  %v2647 = vpop.f32.mrb[0].mxu0
  %2648 = vmatprep.mubr.f32.mxu0 0.0
  %2649 = vmatmul.mubr.f32.gmra.mrb[0].mxu0 %v2552
  %v2650 = vpop.f32.mrb[0].mxu0
  %v2651 = vadd.f32 %v793, %v2650
  %v2652 = vpop.f32.mrb[0].mxu0
  %2653 = vmatprep.mubr.f32.mxu0 0.0
  %2654 = vmatmul.mubr.f32.gmra.mrb[0].mxu0 %v2553
  %v2655 = vpop.f32.mrb[0].mxu0
  %v2656 = vadd.f32 %v793, %v2655
  %v2657 = vpop.f32.mrb[0].mxu0
  %2658 = vmatprep.mubr.f32.mxu0 0.0
  %2659 = vmatmul.mubr.f32.gmra.mrb[0].mxu0 %v2554
  %v2660 = vpop.f32.mrb[0].mxu0
  %v2661 = vadd.f32 %v793, %v2660
  %v2662 = vpop.f32.mrb[0].mxu0
  %2663 = vmatprep.mubr.f32.mxu0 0.0
  %2664 = vmatmul.mubr.f32.gmra.mrb[0].mxu0 %v2555
  %v2665 = vpop.f32.mrb[0].mxu0
  %v2666 = vadd.f32 %v793, %v2665
  %v2667 = vpop.f32.mrb[0].mxu0
  %2668 = vmatprep.mubr.f32.mxu0 0.0
  %2669 = vmatmul.mubr.f32.gmra.mrb[0].mxu0 %v2556
  %v2670 = vpop.f32.mrb[0].mxu0
  %v2671 = vadd.f32 %v793, %v2670
  %v2672 = vpop.f32.mrb[0].mxu0
  %2673 = vmatprep.mubr.f32.mxu0 0.0
  %2674 = vmatmul.mubr.f32.gmra.mrb[0].mxu0 %v2557
  %v2675 = vpop.f32.mrb[0].mxu0
  %v2676 = vadd.f32 %v793, %v2675
  %v2677 = vpop.f32.mrb[0].mxu0
  %2678 = vmatprep.mubr.f32.mxu0 0.0
  %2679 = vmatmul.mubr.f32.gmra.mrb[0].mxu0 %v2558
  %v2680 = vpop.f32.mrb[0].mxu0
  %v2681 = vadd.f32 %v793, %v2680
  %v2682 = vpop.f32.mrb[0].mxu0
  %2683 = vmatprep.mubr.f32.mxu0 0.0
  %2684 = vmatmul.mubr.f32.gmra.mrb[0].mxu0 %v2559
  %v2685 = vpop.f32.mrb[0].mxu0
  %v2686 = vadd.f32 %v793, %v2685
  %v2687 = vpop.f32.mrb[0].mxu0
  %2688 = vmatprep.mubr.f32.mxu0 0.0
  %2689 = vmatmul.mubr.f32.gmra.mrb[0].mxu0 %v2560
  %v2690 = vpop.f32.mrb[0].mxu0
  %v2691 = vadd.f32 %v793, %v2690
  %v2692 = vpop.f32.mrb[0].mxu0
  %2693 = vmatprep.mubr.f32.mxu0 0.0
  %2694 = vmatmul.mubr.f32.gmra.mrb[0].mxu0 %v2561
  %v2695 = vpop.f32.mrb[0].mxu0
  %v2696 = vadd.f32 %v793, %v2695
  %v2697 = vpop.f32.mrb[0].mxu0
  %2698 = vmatprep.mubr.f32.mxu0 0.0
  %2699 = vmatmul.mubr.f32.gmra.mrb[0].mxu0 %v2562
  %v2700 = vpop.f32.mrb[0].mxu0
  %v2701 = vadd.f32 %v793, %v2700
  %v2702 = vpop.f32.mrb[0].mxu0
  %2703 = vmatprep.mubr.f32.mxu0 0.0
  %2704 = vmatmul.mubr.f32.gmra.mrb[0].mxu0 %v2563
  %v2705 = vpop.f32.mrb[0].mxu0
  %v2706 = vadd.f32 %v793, %v2705
  %v2707 = vpop.f32.mrb[0].mxu0
  %2708 = vdwg.mxu0
  %v2709 = vmax.f32 %v2631, 0.0
  %v2710 = vmax.f32 %v2636, 0.0
  %v2711 = vmax.f32 %v2641, 0.0
  %v2712 = vmax.f32 %v2646, 0.0
  %v2713 = vmax.f32 %v2651, 0.0
  %v2714 = vmax.f32 %v2656, 0.0
  %v2715 = vmax.f32 %v2661, 0.0
  %v2716 = vmax.f32 %v2666, 0.0
  %v2717 = vmax.f32 %v2671, 0.0
  %v2718 = vmax.f32 %v2676, 0.0
  %v2719 = vmax.f32 %v2681, 0.0
  %v2720 = vmax.f32 %v2686, 0.0
  %v2721 = vmax.f32 %v2691, 0.0
  %v2722 = vmax.f32 %v2696, 0.0
  %v2723 = vmax.f32 %v2701, 0.0
  %v2724 = vmax.f32 %v2706, 0.0
  %v2725 = vmax.f32 %v2709, %v2711
  %v2726 = vmax.f32 %v2710, %v2712
  %v2727 = vmax.f32 %v2725, %v2713
  %v2728 = vmax.f32 %v2726, %v2714
  %v2729 = vmax.f32 %v2727, %v2715
  %v2730 = vmax.f32 %v2728, %v2716
  %v2731 = vmax.f32 %v2729, %v2730
  %v2732 = vrot.slane %v2731, 4
  %v2733 = vmax.f32 %v2731, %v2732
  %v2734 = vrot.slane %v2733, 2
  %v2735 = vmax.f32 %v2733, %v2734
  %v2736 = vrot.slane %v2735, 1
  %v2737 = vmax.f32 %v2735, %v2736
  %v2738 = vmax.f32 %v2717, %v2719
  %v2739 = vmax.f32 %v2718, %v2720
  %v2740 = vmax.f32 %v2738, %v2721
  %v2741 = vmax.f32 %v2739, %v2722
  %v2742 = vmax.f32 %v2740, %v2723
  %v2743 = vmax.f32 %v2741, %v2724
  %v2744 = vmax.f32 %v2742, %v2743
  %v2745 = vrot.slane %v2744, 4
  %v2746 = vmax.f32 %v2744, %v2745
  %v2747 = vrot.slane %v2746, 2
  %v2748 = vmax.f32 %v2746, %v2747
  %v2749 = vrot.slane %v2748, 1
  %v2750 = vmax.f32 %v2748, %v2749
  %2752 = vset.pattern.permute.xlu0 0
  %2753 = vperm.xlu0 %2752, %v46
  %v2754 = vpop.permute.xlu0 %2753
  %2757 = vset.pattern.permute.xlu0 0
  %2758 = vperm.xlu0 %2757, %v53
  %v2759 = vpop.permute.xlu0 %2758
  %v2761 = vmul.f32 %v2754, %v104
  %v2762 = vmul.f32 %v2759, %v104
  %v2763 = vadd.f32 %v2761, 0.0
  %v2764 = vadd.f32 %v2762, 0.0
  %2765 = vset.pattern.permute.xlu0 1
  %2766 = vperm.xlu0 %2765, %v46
  %v2767 = vpop.permute.xlu0 %2766
  %2769 = vset.pattern.permute.xlu0 1
  %2770 = vperm.xlu0 %2769, %v53
  %v2771 = vpop.permute.xlu0 %2770
  %v2773 = vmul.f32 %v2767, %v120
  %v2774 = vmul.f32 %v2771, %v120
  %v2775 = vadd.f32 %v2763, %v2773
  %v2776 = vadd.f32 %v2764, %v2774
  %2777 = vset.pattern.permute.xlu0 2
  %2778 = vperm.xlu0 %2777, %v46
  %v2779 = vpop.permute.xlu0 %2778
  %2781 = vset.pattern.permute.xlu0 2
  %2782 = vperm.xlu0 %2781, %v53
  %v2783 = vpop.permute.xlu0 %2782
  %v2785 = vmul.f32 %v2779, %v136
  %v2786 = vmul.f32 %v2783, %v136
  %v2787 = vadd.f32 %v2775, %v2785
  %v2788 = vadd.f32 %v2776, %v2786
  %2789 = vset.pattern.permute.xlu0 3
  %2790 = vperm.xlu0 %2789, %v46
  %v2791 = vpop.permute.xlu0 %2790
  %2793 = vset.pattern.permute.xlu0 3
  %2794 = vperm.xlu0 %2793, %v53
  %v2795 = vpop.permute.xlu0 %2794
  %v2797 = vmul.f32 %v2791, %v152
  %v2798 = vmul.f32 %v2795, %v152
  %v2799 = vadd.f32 %v2787, %v2797
  %v2800 = vadd.f32 %v2788, %v2798
  %v2801 = vlaneseq
  %v2802 = vshrl.u32 %v2801, 7
  %v2803 = vsub.s32 0, %v2802
  %v2804 = vrot.slane %v2799, %v2803
  %v2805 = vlaneseq
  %v2806 = vshrl.u32 %v2805, 7
  %v2807 = vsub.s32 0, %v2806
  %v2808 = vrot.slane %v2800, %v2807
  %v2809 = vmul.f32 %v160, %v2804
  %v2810 = vmul.f32 %v165, %v2804
  %v2811 = vmul.f32 %v170, %v2804
  %v2812 = vmul.f32 %v175, %v2804
  %v2813 = vmul.f32 %v180, %v2804
  %v2814 = vmul.f32 %v185, %v2804
  %v2815 = vmul.f32 %v190, %v2804
  %v2816 = vmul.f32 %v195, %v2804
  %v2817 = vmul.f32 %v200, %v2808
  %v2818 = vmul.f32 %v205, %v2808
  %v2819 = vmul.f32 %v210, %v2808
  %v2820 = vmul.f32 %v215, %v2808
  %v2821 = vmul.f32 %v220, %v2808
  %v2822 = vmul.f32 %v225, %v2808
  %v2823 = vmul.f32 %v230, %v2808
  %v2824 = vmul.f32 %v235, %v2808
  %v2825 = vadd.f32 %v2809, 0.0
  %v2826 = vadd.f32 %v2810, 0.0
  %v2827 = vadd.f32 %v2811, 0.0
  %v2828 = vadd.f32 %v2812, 0.0
  %v2829 = vadd.f32 %v2813, 0.0
  %v2830 = vadd.f32 %v2814, 0.0
  %v2831 = vadd.f32 %v2815, 0.0
  %v2832 = vadd.f32 %v2816, 0.0
  %v2833 = vadd.f32 %v2817, 0.0
  %v2834 = vadd.f32 %v2818, 0.0
  %v2835 = vadd.f32 %v2819, 0.0
  %v2836 = vadd.f32 %v2820, 0.0
  %v2837 = vadd.f32 %v2821, 0.0
  %v2838 = vadd.f32 %v2822, 0.0
  %v2839 = vadd.f32 %v2823, 0.0
  %v2840 = vadd.f32 %v2824, 0.0
  %v2841 = vlaneseq
  %v2842 = vshrl.u32 %v2841, 7
  %v2843 = vsub.s32 1, %v2842
  %v2844 = vrot.slane %v2799, %v2843
  %v2845 = vlaneseq
  %v2846 = vshrl.u32 %v2845, 7
  %v2847 = vsub.s32 1, %v2846
  %v2848 = vrot.slane %v2800, %v2847
  %v2849 = vmul.f32 %v279, %v2844
  %v2850 = vmul.f32 %v283, %v2844
  %v2851 = vmul.f32 %v287, %v2844
  %v2852 = vmul.f32 %v291, %v2844
  %v2853 = vmul.f32 %v295, %v2844
  %v2854 = vmul.f32 %v299, %v2844
  %v2855 = vmul.f32 %v303, %v2844
  %v2856 = vmul.f32 %v307, %v2844
  %v2857 = vmul.f32 %v311, %v2848
  %v2858 = vmul.f32 %v315, %v2848
  %v2859 = vmul.f32 %v319, %v2848
  %v2860 = vmul.f32 %v323, %v2848
  %v2861 = vmul.f32 %v327, %v2848
  %v2862 = vmul.f32 %v331, %v2848
  %v2863 = vmul.f32 %v335, %v2848
  %v2864 = vmul.f32 %v339, %v2848
  %v2865 = vadd.f32 %v2825, %v2849
  %v2866 = vadd.f32 %v2826, %v2850
  %v2867 = vadd.f32 %v2827, %v2851
  %v2868 = vadd.f32 %v2828, %v2852
  %v2869 = vadd.f32 %v2829, %v2853
  %v2870 = vadd.f32 %v2830, %v2854
  %v2871 = vadd.f32 %v2831, %v2855
  %v2872 = vadd.f32 %v2832, %v2856
  %v2873 = vadd.f32 %v2833, %v2857
  %v2874 = vadd.f32 %v2834, %v2858
  %v2875 = vadd.f32 %v2835, %v2859
  %v2876 = vadd.f32 %v2836, %v2860
  %v2877 = vadd.f32 %v2837, %v2861
  %v2878 = vadd.f32 %v2838, %v2862
  %v2879 = vadd.f32 %v2839, %v2863
  %v2880 = vadd.f32 %v2840, %v2864
  %v2881 = vlaneseq
  %v2882 = vshrl.u32 %v2881, 7
  %v2883 = vsub.s32 2, %v2882
  %v2884 = vrot.slane %v2799, %v2883
  %v2885 = vlaneseq
  %v2886 = vshrl.u32 %v2885, 7
  %v2887 = vsub.s32 2, %v2886
  %v2888 = vrot.slane %v2800, %v2887
  %v2889 = vmul.f32 %v383, %v2884
  %v2890 = vmul.f32 %v387, %v2884
  %v2891 = vmul.f32 %v391, %v2884
  %v2892 = vmul.f32 %v395, %v2884
  %v2893 = vmul.f32 %v399, %v2884
  %v2894 = vmul.f32 %v403, %v2884
  %v2895 = vmul.f32 %v407, %v2884
  %v2896 = vmul.f32 %v411, %v2884
  %v2897 = vmul.f32 %v415, %v2888
  %v2898 = vmul.f32 %v419, %v2888
  %v2899 = vmul.f32 %v423, %v2888
  %v2900 = vmul.f32 %v427, %v2888
  %v2901 = vmul.f32 %v431, %v2888
  %v2902 = vmul.f32 %v435, %v2888
  %v2903 = vmul.f32 %v439, %v2888
  %v2904 = vmul.f32 %v443, %v2888
  %v2905 = vadd.f32 %v2865, %v2889
  %v2906 = vadd.f32 %v2866, %v2890
  %v2907 = vadd.f32 %v2867, %v2891
  %v2908 = vadd.f32 %v2868, %v2892
  %v2909 = vadd.f32 %v2869, %v2893
  %v2910 = vadd.f32 %v2870, %v2894
  %v2911 = vadd.f32 %v2871, %v2895
  %v2912 = vadd.f32 %v2872, %v2896
  %v2913 = vadd.f32 %v2873, %v2897
  %v2914 = vadd.f32 %v2874, %v2898
  %v2915 = vadd.f32 %v2875, %v2899
  %v2916 = vadd.f32 %v2876, %v2900
  %v2917 = vadd.f32 %v2877, %v2901
  %v2918 = vadd.f32 %v2878, %v2902
  %v2919 = vadd.f32 %v2879, %v2903
  %v2920 = vadd.f32 %v2880, %v2904
  %v2921 = vlaneseq
  %v2922 = vshrl.u32 %v2921, 7
  %v2923 = vsub.s32 3, %v2922
  %v2924 = vrot.slane %v2799, %v2923
  %v2925 = vlaneseq
  %v2926 = vshrl.u32 %v2925, 7
  %v2927 = vsub.s32 3, %v2926
  %v2928 = vrot.slane %v2800, %v2927
  %v2929 = vmul.f32 %v487, %v2924
  %v2930 = vmul.f32 %v491, %v2924
  %v2931 = vmul.f32 %v495, %v2924
  %v2932 = vmul.f32 %v499, %v2924
  %v2933 = vmul.f32 %v503, %v2924
  %v2934 = vmul.f32 %v507, %v2924
  %v2935 = vmul.f32 %v511, %v2924
  %v2936 = vmul.f32 %v515, %v2924
  %v2937 = vmul.f32 %v519, %v2928
  %v2938 = vmul.f32 %v523, %v2928
  %v2939 = vmul.f32 %v527, %v2928
  %v2940 = vmul.f32 %v531, %v2928
  %v2941 = vmul.f32 %v535, %v2928
  %v2942 = vmul.f32 %v539, %v2928
  %v2943 = vmul.f32 %v543, %v2928
  %v2944 = vmul.f32 %v547, %v2928
  %v2945 = vadd.f32 %v2905, %v2929
  %v2946 = vadd.f32 %v2906, %v2930
  %v2947 = vadd.f32 %v2907, %v2931
  %v2948 = vadd.f32 %v2908, %v2932
  %v2949 = vadd.f32 %v2909, %v2933
  %v2950 = vadd.f32 %v2910, %v2934
  %v2951 = vadd.f32 %v2911, %v2935
  %v2952 = vadd.f32 %v2912, %v2936
  %v2953 = vadd.f32 %v2913, %v2937
  %v2954 = vadd.f32 %v2914, %v2938
  %v2955 = vadd.f32 %v2915, %v2939
  %v2956 = vadd.f32 %v2916, %v2940
  %v2957 = vadd.f32 %v2917, %v2941
  %v2958 = vadd.f32 %v2918, %v2942
  %v2959 = vadd.f32 %v2919, %v2943
  %v2960 = vadd.f32 %v2920, %v2944
  %v2961 = vadd.f32 %v2945, %v592
  %v2962 = vadd.f32 %v2946, %v592
  %v2963 = vadd.f32 %v2947, %v592
  %v2964 = vadd.f32 %v2948, %v592
  %v2965 = vadd.f32 %v2949, %v592
  %v2966 = vadd.f32 %v2950, %v592
  %v2967 = vadd.f32 %v2951, %v592
  %v2968 = vadd.f32 %v2952, %v592
  %v2969 = vadd.f32 %v2953, %v592
  %v2970 = vadd.f32 %v2954, %v592
  %v2971 = vadd.f32 %v2955, %v592
  %v2972 = vadd.f32 %v2956, %v592
  %v2973 = vadd.f32 %v2957, %v592
  %v2974 = vadd.f32 %v2958, %v592
  %v2975 = vadd.f32 %v2959, %v592
  %v2976 = vadd.f32 %v2960, %v592
  %v2977 = vmax.f32 %v2961, 0.0
  %v2978 = vmax.f32 %v2962, 0.0
  %v2979 = vmax.f32 %v2963, 0.0
  %v2980 = vmax.f32 %v2964, 0.0
  %v2981 = vmax.f32 %v2965, 0.0
  %v2982 = vmax.f32 %v2966, 0.0
  %v2983 = vmax.f32 %v2967, 0.0
  %v2984 = vmax.f32 %v2968, 0.0
  %v2985 = vmax.f32 %v2969, 0.0
  %v2986 = vmax.f32 %v2970, 0.0
  %v2987 = vmax.f32 %v2971, 0.0
  %v2988 = vmax.f32 %v2972, 0.0
  %v2989 = vmax.f32 %v2973, 0.0
  %v2990 = vmax.f32 %v2974, 0.0
  %v2991 = vmax.f32 %v2975, 0.0
  %v2992 = vmax.f32 %v2976, 0.0
  %2993 = vmatprep.subr.mxu0 0.0
  %2994 = vmatpush1.msra.mxu0 %v58
  %2995 = vmatprep.subr.mxu0 0.0
  %2996 = vmatpush1.msra.mxu0 %v59
  %2997 = vmatprep.subr.mxu0 0.0
  %2998 = vmatpush1.msra.mxu0 %v60
  %2999 = vmatprep.subr.mxu0 0.0
  %3000 = vmatpush1.msra.mxu0 %v61
  %3001 = vmatprep.subr.mxu0 0.0
  %3002 = vmatpush1.msra.mxu0 %v62
  %3003 = vmatprep.subr.mxu0 0.0
  %3004 = vmatpush1.msra.mxu0 %v63
  %3005 = vmatprep.subr.mxu0 0.0
  %3006 = vmatpush1.msra.mxu0 %v64
  %3007 = vmatprep.subr.mxu0 0.0
  %3008 = vmatpush1.msra.mxu0 %v65
  %3009 = vmatprep.subr.mxu0 0.0
  %3010 = vmatpush1.msra.mxu0 %v66
  %3011 = vmatprep.subr.mxu0 0.0
  %3012 = vmatpush1.msra.mxu0 %v67
  %3013 = vmatprep.subr.mxu0 0.0
  %3014 = vmatpush1.msra.mxu0 %v68
  %3015 = vmatprep.subr.mxu0 0.0
  %3016 = vmatpush1.msra.mxu0 %v69
  %3017 = vmatprep.subr.mxu0 0.0
  %3018 = vmatpush1.msra.mxu0 %v70
  %3019 = vmatprep.subr.mxu0 0.0
  %3020 = vmatpush1.msra.mxu0 %v71
  %3021 = vmatprep.subr.mxu0 0.0
  %3022 = vmatpush1.msra.mxu0 %v72
  %3023 = vmatprep.subr.mxu0 0.0
  %3024 = vmatpush1.msra.mxu0 %v73
  %3025 = vmatprep.subr.mxu0 0.0
  %3026 = vmatpush1.msra.mxu0 0.0
  %3027 = vmatprep.subr.mxu0 0.0
  %3028 = vmatpush1.msra.mxu0 0.0
  %3029 = vmatprep.subr.mxu0 0.0
  %3030 = vmatpush1.msra.mxu0 0.0
  %3031 = vmatprep.subr.mxu0 0.0
  %3032 = vmatpush1.msra.mxu0 0.0
  %3033 = vmatprep.subr.mxu0 0.0
  %3034 = vmatpush1.msra.mxu0 0.0
  %3035 = vmatprep.subr.mxu0 0.0
  %3036 = vmatpush1.msra.mxu0 0.0
  %3037 = vmatprep.subr.mxu0 0.0
  %3038 = vmatpush1.msra.mxu0 0.0
  %3039 = vmatprep.subr.mxu0 0.0
  %3040 = vmatpush1.msra.mxu0 0.0
  %3041 = vmatprep.subr.mxu0 0.0
  %3042 = vmatpush1.msra.mxu0 0.0
  %3043 = vmatprep.subr.mxu0 0.0
  %3044 = vmatpush1.msra.mxu0 0.0
  %3045 = vmatprep.subr.mxu0 0.0
  %3046 = vmatpush1.msra.mxu0 0.0
  %3047 = vmatprep.subr.mxu0 0.0
  %3048 = vmatpush1.msra.mxu0 0.0
  %3049 = vmatprep.subr.mxu0 0.0
  %3050 = vmatpush1.msra.mxu0 0.0
  %3051 = vmatprep.subr.mxu0 0.0
  %3052 = vmatpush1.msra.mxu0 0.0
  %3053 = vmatprep.subr.mxu0 0.0
  %3054 = vmatpush1.msra.mxu0 0.0
  %3055 = vmatprep.subr.mxu0 0.0
  %3056 = vmatpush1.msra.mxu0 0.0
  %3057 = vmatprep.mubr.f32.mxu0 0.0
  %3058 = vmatmul.mubr.f32.gmra.mrb[0].mxu0 %v2977
  %v3059 = vpop.f32.mrb[0].mxu0
  %v3060 = vadd.f32 %v628, %v3059
  %v3061 = vpop.f32.mrb[0].mxu0
  %3062 = vmatprep.mubr.f32.mxu0 0.0
  %3063 = vmatmul.mubr.f32.gmra.mrb[0].mxu0 %v2978
  %v3064 = vpop.f32.mrb[0].mxu0
  %v3065 = vadd.f32 %v628, %v3064
  %v3066 = vpop.f32.mrb[0].mxu0
  %3067 = vmatprep.mubr.f32.mxu0 0.0
  %3068 = vmatmul.mubr.f32.gmra.mrb[0].mxu0 %v2979
  %v3069 = vpop.f32.mrb[0].mxu0
  %v3070 = vadd.f32 %v628, %v3069
  %v3071 = vpop.f32.mrb[0].mxu0
  %3072 = vmatprep.mubr.f32.mxu0 0.0
  %3073 = vmatmul.mubr.f32.gmra.mrb[0].mxu0 %v2980
  %v3074 = vpop.f32.mrb[0].mxu0
  %v3075 = vadd.f32 %v628, %v3074
  %v3076 = vpop.f32.mrb[0].mxu0
  %3077 = vmatprep.mubr.f32.mxu0 0.0
  %3078 = vmatmul.mubr.f32.gmra.mrb[0].mxu0 %v2981
  %v3079 = vpop.f32.mrb[0].mxu0
  %v3080 = vadd.f32 %v628, %v3079
  %v3081 = vpop.f32.mrb[0].mxu0
  %3082 = vmatprep.mubr.f32.mxu0 0.0
  %3083 = vmatmul.mubr.f32.gmra.mrb[0].mxu0 %v2982
  %v3084 = vpop.f32.mrb[0].mxu0
  %v3085 = vadd.f32 %v628, %v3084
  %v3086 = vpop.f32.mrb[0].mxu0
  %3087 = vmatprep.mubr.f32.mxu0 0.0
  %3088 = vmatmul.mubr.f32.gmra.mrb[0].mxu0 %v2983
  %v3089 = vpop.f32.mrb[0].mxu0
  %v3090 = vadd.f32 %v628, %v3089
  %v3091 = vpop.f32.mrb[0].mxu0
  %3092 = vmatprep.mubr.f32.mxu0 0.0
  %3093 = vmatmul.mubr.f32.gmra.mrb[0].mxu0 %v2984
  %v3094 = vpop.f32.mrb[0].mxu0
  %v3095 = vadd.f32 %v628, %v3094
  %v3096 = vpop.f32.mrb[0].mxu0
  %3097 = vmatprep.mubr.f32.mxu0 0.0
  %3098 = vmatmul.mubr.f32.gmra.mrb[0].mxu0 %v2985
  %v3099 = vpop.f32.mrb[0].mxu0
  %v3100 = vadd.f32 %v628, %v3099
  %v3101 = vpop.f32.mrb[0].mxu0
  %3102 = vmatprep.mubr.f32.mxu0 0.0
  %3103 = vmatmul.mubr.f32.gmra.mrb[0].mxu0 %v2986
  %v3104 = vpop.f32.mrb[0].mxu0
  %v3105 = vadd.f32 %v628, %v3104
  %v3106 = vpop.f32.mrb[0].mxu0
  %3107 = vmatprep.mubr.f32.mxu0 0.0
  %3108 = vmatmul.mubr.f32.gmra.mrb[0].mxu0 %v2987
  %v3109 = vpop.f32.mrb[0].mxu0
  %v3110 = vadd.f32 %v628, %v3109
  %v3111 = vpop.f32.mrb[0].mxu0
  %3112 = vmatprep.mubr.f32.mxu0 0.0
  %3113 = vmatmul.mubr.f32.gmra.mrb[0].mxu0 %v2988
  %v3114 = vpop.f32.mrb[0].mxu0
  %v3115 = vadd.f32 %v628, %v3114
  %v3116 = vpop.f32.mrb[0].mxu0
  %3117 = vmatprep.mubr.f32.mxu0 0.0
  %3118 = vmatmul.mubr.f32.gmra.mrb[0].mxu0 %v2989
  %v3119 = vpop.f32.mrb[0].mxu0
  %v3120 = vadd.f32 %v628, %v3119
  %v3121 = vpop.f32.mrb[0].mxu0
  %3122 = vmatprep.mubr.f32.mxu0 0.0
  %3123 = vmatmul.mubr.f32.gmra.mrb[0].mxu0 %v2990
  %v3124 = vpop.f32.mrb[0].mxu0
  %v3125 = vadd.f32 %v628, %v3124
  %v3126 = vpop.f32.mrb[0].mxu0
  %3127 = vmatprep.mubr.f32.mxu0 0.0
  %3128 = vmatmul.mubr.f32.gmra.mrb[0].mxu0 %v2991
  %v3129 = vpop.f32.mrb[0].mxu0
  %v3130 = vadd.f32 %v628, %v3129
  %v3131 = vpop.f32.mrb[0].mxu0
  %3132 = vmatprep.mubr.f32.mxu0 0.0
  %3133 = vmatmul.mubr.f32.gmra.mrb[0].mxu0 %v2992
  %v3134 = vpop.f32.mrb[0].mxu0
  %v3135 = vadd.f32 %v628, %v3134
  %v3136 = vpop.f32.mrb[0].mxu0
  %3137 = vdwg.mxu0
  %v3138 = vmax.f32 %v3060, 0.0
  %v3139 = vmax.f32 %v3065, 0.0
  %v3140 = vmax.f32 %v3070, 0.0
  %v3141 = vmax.f32 %v3075, 0.0
  %v3142 = vmax.f32 %v3080, 0.0
  %v3143 = vmax.f32 %v3085, 0.0
  %v3144 = vmax.f32 %v3090, 0.0
  %v3145 = vmax.f32 %v3095, 0.0
  %v3146 = vmax.f32 %v3100, 0.0
  %v3147 = vmax.f32 %v3105, 0.0
  %v3148 = vmax.f32 %v3110, 0.0
  %v3149 = vmax.f32 %v3115, 0.0
  %v3150 = vmax.f32 %v3120, 0.0
  %v3151 = vmax.f32 %v3125, 0.0
  %v3152 = vmax.f32 %v3130, 0.0
  %v3153 = vmax.f32 %v3135, 0.0
  %3154 = vmatprep.subr.mxu0 0.0
  %3155 = vmatpush1.msra.mxu0 %v75
  %3156 = vmatprep.subr.mxu0 0.0
  %3157 = vmatpush1.msra.mxu0 %v76
  %3158 = vmatprep.subr.mxu0 0.0
  %3159 = vmatpush1.msra.mxu0 %v77
  %3160 = vmatprep.subr.mxu0 0.0
  %3161 = vmatpush1.msra.mxu0 %v78
  %3162 = vmatprep.subr.mxu0 0.0
  %3163 = vmatpush1.msra.mxu0 %v79
  %3164 = vmatprep.subr.mxu0 0.0
  %3165 = vmatpush1.msra.mxu0 %v80
  %3166 = vmatprep.subr.mxu0 0.0
  %3167 = vmatpush1.msra.mxu0 %v81
  %3168 = vmatprep.subr.mxu0 0.0
  %3169 = vmatpush1.msra.mxu0 %v82
  %3170 = vmatprep.subr.mxu0 0.0
  %3171 = vmatpush1.msra.mxu0 %v83
  %3172 = vmatprep.subr.mxu0 0.0
  %3173 = vmatpush1.msra.mxu0 %v84
  %3174 = vmatprep.subr.mxu0 0.0
  %3175 = vmatpush1.msra.mxu0 %v85
  %3176 = vmatprep.subr.mxu0 0.0
  %3177 = vmatpush1.msra.mxu0 %v86
  %3178 = vmatprep.subr.mxu0 0.0
  %3179 = vmatpush1.msra.mxu0 %v87
  %3180 = vmatprep.subr.mxu0 0.0
  %3181 = vmatpush1.msra.mxu0 %v88
  %3182 = vmatprep.subr.mxu0 0.0
  %3183 = vmatpush1.msra.mxu0 %v89
  %3184 = vmatprep.subr.mxu0 0.0
  %3185 = vmatpush1.msra.mxu0 %v90
  %3186 = vmatprep.subr.mxu0 0.0
  %3187 = vmatpush1.msra.mxu0 0.0
  %3188 = vmatprep.subr.mxu0 0.0
  %3189 = vmatpush1.msra.mxu0 0.0
  %3190 = vmatprep.subr.mxu0 0.0
  %3191 = vmatpush1.msra.mxu0 0.0
  %3192 = vmatprep.subr.mxu0 0.0
  %3193 = vmatpush1.msra.mxu0 0.0
  %3194 = vmatprep.subr.mxu0 0.0
  %3195 = vmatpush1.msra.mxu0 0.0
  %3196 = vmatprep.subr.mxu0 0.0
  %3197 = vmatpush1.msra.mxu0 0.0
  %3198 = vmatprep.subr.mxu0 0.0
  %3199 = vmatpush1.msra.mxu0 0.0
  %3200 = vmatprep.subr.mxu0 0.0
  %3201 = vmatpush1.msra.mxu0 0.0
  %3202 = vmatprep.subr.mxu0 0.0
  %3203 = vmatpush1.msra.mxu0 0.0
  %3204 = vmatprep.subr.mxu0 0.0
  %3205 = vmatpush1.msra.mxu0 0.0
  %3206 = vmatprep.subr.mxu0 0.0
  %3207 = vmatpush1.msra.mxu0 0.0
  %3208 = vmatprep.subr.mxu0 0.0
  %3209 = vmatpush1.msra.mxu0 0.0
  %3210 = vmatprep.subr.mxu0 0.0
  %3211 = vmatpush1.msra.mxu0 0.0
  %3212 = vmatprep.subr.mxu0 0.0
  %3213 = vmatpush1.msra.mxu0 0.0
  %3214 = vmatprep.subr.mxu0 0.0
  %3215 = vmatpush1.msra.mxu0 0.0
  %3216 = vmatprep.subr.mxu0 0.0
  %3217 = vmatpush1.msra.mxu0 0.0
  %3218 = vmatprep.mubr.f32.mxu0 0.0
  %3219 = vmatmul.mubr.f32.gmra.mrb[0].mxu0 %v3138
  %v3220 = vpop.f32.mrb[0].mxu0
  %v3221 = vadd.f32 %v793, %v3220
  %v3222 = vpop.f32.mrb[0].mxu0
  %3223 = vmatprep.mubr.f32.mxu0 0.0
  %3224 = vmatmul.mubr.f32.gmra.mrb[0].mxu0 %v3139
  %v3225 = vpop.f32.mrb[0].mxu0
  %v3226 = vadd.f32 %v793, %v3225
  %v3227 = vpop.f32.mrb[0].mxu0
  %3228 = vmatprep.mubr.f32.mxu0 0.0
  %3229 = vmatmul.mubr.f32.gmra.mrb[0].mxu0 %v3140
  %v3230 = vpop.f32.mrb[0].mxu0
  %v3231 = vadd.f32 %v793, %v3230
  %v3232 = vpop.f32.mrb[0].mxu0
  %3233 = vmatprep.mubr.f32.mxu0 0.0
  %3234 = vmatmul.mubr.f32.gmra.mrb[0].mxu0 %v3141
  %v3235 = vpop.f32.mrb[0].mxu0
  %v3236 = vadd.f32 %v793, %v3235
  %v3237 = vpop.f32.mrb[0].mxu0
  %3238 = vmatprep.mubr.f32.mxu0 0.0
  %3239 = vmatmul.mubr.f32.gmra.mrb[0].mxu0 %v3142
  %v3240 = vpop.f32.mrb[0].mxu0
  %v3241 = vadd.f32 %v793, %v3240
  %v3242 = vpop.f32.mrb[0].mxu0
  %3243 = vmatprep.mubr.f32.mxu0 0.0
  %3244 = vmatmul.mubr.f32.gmra.mrb[0].mxu0 %v3143
  %v3245 = vpop.f32.mrb[0].mxu0
  %v3246 = vadd.f32 %v793, %v3245
  %v3247 = vpop.f32.mrb[0].mxu0
  %3248 = vmatprep.mubr.f32.mxu0 0.0
  %3249 = vmatmul.mubr.f32.gmra.mrb[0].mxu0 %v3144
  %v3250 = vpop.f32.mrb[0].mxu0
  %v3251 = vadd.f32 %v793, %v3250
  %v3252 = vpop.f32.mrb[0].mxu0
  %3253 = vmatprep.mubr.f32.mxu0 0.0
  %3254 = vmatmul.mubr.f32.gmra.mrb[0].mxu0 %v3145
  %v3255 = vpop.f32.mrb[0].mxu0
  %v3256 = vadd.f32 %v793, %v3255
  %v3257 = vpop.f32.mrb[0].mxu0
  %3258 = vmatprep.mubr.f32.mxu0 0.0
  %3259 = vmatmul.mubr.f32.gmra.mrb[0].mxu0 %v3146
  %v3260 = vpop.f32.mrb[0].mxu0
  %v3261 = vadd.f32 %v793, %v3260
  %v3262 = vpop.f32.mrb[0].mxu0
  %3263 = vmatprep.mubr.f32.mxu0 0.0
  %3264 = vmatmul.mubr.f32.gmra.mrb[0].mxu0 %v3147
  %v3265 = vpop.f32.mrb[0].mxu0
  %v3266 = vadd.f32 %v793, %v3265
  %v3267 = vpop.f32.mrb[0].mxu0
  %3268 = vmatprep.mubr.f32.mxu0 0.0
  %3269 = vmatmul.mubr.f32.gmra.mrb[0].mxu0 %v3148
  %v3270 = vpop.f32.mrb[0].mxu0
  %v3271 = vadd.f32 %v793, %v3270
  %v3272 = vpop.f32.mrb[0].mxu0
  %3273 = vmatprep.mubr.f32.mxu0 0.0
  %3274 = vmatmul.mubr.f32.gmra.mrb[0].mxu0 %v3149
  %v3275 = vpop.f32.mrb[0].mxu0
  %v3276 = vadd.f32 %v793, %v3275
  %v3277 = vpop.f32.mrb[0].mxu0
  %3278 = vmatprep.mubr.f32.mxu0 0.0
  %3279 = vmatmul.mubr.f32.gmra.mrb[0].mxu0 %v3150
  %v3280 = vpop.f32.mrb[0].mxu0
  %v3281 = vadd.f32 %v793, %v3280
  %v3282 = vpop.f32.mrb[0].mxu0
  %3283 = vmatprep.mubr.f32.mxu0 0.0
  %3284 = vmatmul.mubr.f32.gmra.mrb[0].mxu0 %v3151
  %v3285 = vpop.f32.mrb[0].mxu0
  %v3286 = vadd.f32 %v793, %v3285
  %v3287 = vpop.f32.mrb[0].mxu0
  %3288 = vmatprep.mubr.f32.mxu0 0.0
  %3289 = vmatmul.mubr.f32.gmra.mrb[0].mxu0 %v3152
  %v3290 = vpop.f32.mrb[0].mxu0
  %v3291 = vadd.f32 %v793, %v3290
  %v3292 = vpop.f32.mrb[0].mxu0
  %3293 = vmatprep.mubr.f32.mxu0 0.0
  %3294 = vmatmul.mubr.f32.gmra.mrb[0].mxu0 %v3153
  %v3295 = vpop.f32.mrb[0].mxu0
  %v3296 = vadd.f32 %v793, %v3295
  %v3297 = vpop.f32.mrb[0].mxu0
  %3298 = vdwg.mxu0
  %v3299 = vmax.f32 %v3221, 0.0
  %v3300 = vmax.f32 %v3226, 0.0
  %v3301 = vmax.f32 %v3231, 0.0
  %v3302 = vmax.f32 %v3236, 0.0
  %v3303 = vmax.f32 %v3241, 0.0
  %v3304 = vmax.f32 %v3246, 0.0
  %v3305 = vmax.f32 %v3251, 0.0
  %v3306 = vmax.f32 %v3256, 0.0
  %v3307 = vmax.f32 %v3261, 0.0
  %v3308 = vmax.f32 %v3266, 0.0
  %v3309 = vmax.f32 %v3271, 0.0
  %v3310 = vmax.f32 %v3276, 0.0
  %v3311 = vmax.f32 %v3281, 0.0
  %v3312 = vmax.f32 %v3286, 0.0
  %v3313 = vmax.f32 %v3291, 0.0
  %v3314 = vmax.f32 %v3296, 0.0
  %v3315 = vmax.f32 %v3299, %v3301
  %v3316 = vmax.f32 %v3300, %v3302
  %v3317 = vmax.f32 %v3315, %v3303
  %v3318 = vmax.f32 %v3316, %v3304
  %v3319 = vmax.f32 %v3317, %v3305
  %v3320 = vmax.f32 %v3318, %v3306
  %v3321 = vmax.f32 %v3319, %v3320
  %v3322 = vrot.slane %v3321, 4
  %v3323 = vmax.f32 %v3321, %v3322
  %v3324 = vrot.slane %v3323, 2
  %v3325 = vmax.f32 %v3323, %v3324
  %v3326 = vrot.slane %v3325, 1
  %v3327 = vmax.f32 %v3325, %v3326
  %v3328 = vmax.f32 %v3307, %v3309
  %v3329 = vmax.f32 %v3308, %v3310
  %v3330 = vmax.f32 %v3328, %v3311
  %v3331 = vmax.f32 %v3329, %v3312
  %v3332 = vmax.f32 %v3330, %v3313
  %v3333 = vmax.f32 %v3331, %v3314
  %v3334 = vmax.f32 %v3332, %v3333
  %v3335 = vrot.slane %v3334, 4
  %v3336 = vmax.f32 %v3334, %v3335
  %v3337 = vrot.slane %v3336, 2
  %v3338 = vmax.f32 %v3336, %v3337
  %v3339 = vrot.slane %v3338, 1
  %v3340 = vmax.f32 %v3338, %v3339
  %3342 = vset.pattern.permute.xlu0 0
  %3343 = vperm.xlu0 %3342, %v47
  %v3344 = vpop.permute.xlu0 %3343
  %3347 = vset.pattern.permute.xlu0 0
  %3348 = vperm.xlu0 %3347, %v54
  %v3349 = vpop.permute.xlu0 %3348
  %v3351 = vmul.f32 %v3344, %v104
  %v3352 = vmul.f32 %v3349, %v104
  %v3353 = vadd.f32 %v3351, 0.0
  %v3354 = vadd.f32 %v3352, 0.0
  %3355 = vset.pattern.permute.xlu0 1
  %3356 = vperm.xlu0 %3355, %v47
  %v3357 = vpop.permute.xlu0 %3356
  %3359 = vset.pattern.permute.xlu0 1
  %3360 = vperm.xlu0 %3359, %v54
  %v3361 = vpop.permute.xlu0 %3360
  %v3363 = vmul.f32 %v3357, %v120
  %v3364 = vmul.f32 %v3361, %v120
  %v3365 = vadd.f32 %v3353, %v3363
  %v3366 = vadd.f32 %v3354, %v3364
  %3367 = vset.pattern.permute.xlu0 2
  %3368 = vperm.xlu0 %3367, %v47
  %v3369 = vpop.permute.xlu0 %3368
  %3371 = vset.pattern.permute.xlu0 2
  %3372 = vperm.xlu0 %3371, %v54
  %v3373 = vpop.permute.xlu0 %3372
  %v3375 = vmul.f32 %v3369, %v136
  %v3376 = vmul.f32 %v3373, %v136
  %v3377 = vadd.f32 %v3365, %v3375
  %v3378 = vadd.f32 %v3366, %v3376
  %3379 = vset.pattern.permute.xlu0 3
  %3380 = vperm.xlu0 %3379, %v47
  %v3381 = vpop.permute.xlu0 %3380
  %3383 = vset.pattern.permute.xlu0 3
  %3384 = vperm.xlu0 %3383, %v54
  %v3385 = vpop.permute.xlu0 %3384
  %v3387 = vmul.f32 %v3381, %v152
  %v3388 = vmul.f32 %v3385, %v152
  %v3389 = vadd.f32 %v3377, %v3387
  %v3390 = vadd.f32 %v3378, %v3388
  %v3391 = vlaneseq
  %v3392 = vshrl.u32 %v3391, 7
  %v3393 = vsub.s32 0, %v3392
  %v3394 = vrot.slane %v3389, %v3393
  %v3395 = vlaneseq
  %v3396 = vshrl.u32 %v3395, 7
  %v3397 = vsub.s32 0, %v3396
  %v3398 = vrot.slane %v3390, %v3397
  %v3399 = vmul.f32 %v160, %v3394
  %v3400 = vmul.f32 %v165, %v3394
  %v3401 = vmul.f32 %v170, %v3394
  %v3402 = vmul.f32 %v175, %v3394
  %v3403 = vmul.f32 %v180, %v3394
  %v3404 = vmul.f32 %v185, %v3394
  %v3405 = vmul.f32 %v190, %v3394
  %v3406 = vmul.f32 %v195, %v3394
  %v3407 = vmul.f32 %v200, %v3398
  %v3408 = vmul.f32 %v205, %v3398
  %v3409 = vmul.f32 %v210, %v3398
  %v3410 = vmul.f32 %v215, %v3398
  %v3411 = vmul.f32 %v220, %v3398
  %v3412 = vmul.f32 %v225, %v3398
  %v3413 = vmul.f32 %v230, %v3398
  %v3414 = vmul.f32 %v235, %v3398
  %v3415 = vadd.f32 %v3399, 0.0
  %v3416 = vadd.f32 %v3400, 0.0
  %v3417 = vadd.f32 %v3401, 0.0
  %v3418 = vadd.f32 %v3402, 0.0
  %v3419 = vadd.f32 %v3403, 0.0
  %v3420 = vadd.f32 %v3404, 0.0
  %v3421 = vadd.f32 %v3405, 0.0
  %v3422 = vadd.f32 %v3406, 0.0
  %v3423 = vadd.f32 %v3407, 0.0
  %v3424 = vadd.f32 %v3408, 0.0
  %v3425 = vadd.f32 %v3409, 0.0
  %v3426 = vadd.f32 %v3410, 0.0
  %v3427 = vadd.f32 %v3411, 0.0
  %v3428 = vadd.f32 %v3412, 0.0
  %v3429 = vadd.f32 %v3413, 0.0
  %v3430 = vadd.f32 %v3414, 0.0
  %v3431 = vlaneseq
  %v3432 = vshrl.u32 %v3431, 7
  %v3433 = vsub.s32 1, %v3432
  %v3434 = vrot.slane %v3389, %v3433
  %v3435 = vlaneseq
  %v3436 = vshrl.u32 %v3435, 7
  %v3437 = vsub.s32 1, %v3436
  %v3438 = vrot.slane %v3390, %v3437
  %v3439 = vmul.f32 %v279, %v3434
  %v3440 = vmul.f32 %v283, %v3434
  %v3441 = vmul.f32 %v287, %v3434
  %v3442 = vmul.f32 %v291, %v3434
  %v3443 = vmul.f32 %v295, %v3434
  %v3444 = vmul.f32 %v299, %v3434
  %v3445 = vmul.f32 %v303, %v3434
  %v3446 = vmul.f32 %v307, %v3434
  %v3447 = vmul.f32 %v311, %v3438
  %v3448 = vmul.f32 %v315, %v3438
  %v3449 = vmul.f32 %v319, %v3438
  %v3450 = vmul.f32 %v323, %v3438
  %v3451 = vmul.f32 %v327, %v3438
  %v3452 = vmul.f32 %v331, %v3438
  %v3453 = vmul.f32 %v335, %v3438
  %v3454 = vmul.f32 %v339, %v3438
  %v3455 = vadd.f32 %v3415, %v3439
  %v3456 = vadd.f32 %v3416, %v3440
  %v3457 = vadd.f32 %v3417, %v3441
  %v3458 = vadd.f32 %v3418, %v3442
  %v3459 = vadd.f32 %v3419, %v3443
  %v3460 = vadd.f32 %v3420, %v3444
  %v3461 = vadd.f32 %v3421, %v3445
  %v3462 = vadd.f32 %v3422, %v3446
  %v3463 = vadd.f32 %v3423, %v3447
  %v3464 = vadd.f32 %v3424, %v3448
  %v3465 = vadd.f32 %v3425, %v3449
  %v3466 = vadd.f32 %v3426, %v3450
  %v3467 = vadd.f32 %v3427, %v3451
  %v3468 = vadd.f32 %v3428, %v3452
  %v3469 = vadd.f32 %v3429, %v3453
  %v3470 = vadd.f32 %v3430, %v3454
  %v3471 = vlaneseq
  %v3472 = vshrl.u32 %v3471, 7
  %v3473 = vsub.s32 2, %v3472
  %v3474 = vrot.slane %v3389, %v3473
  %v3475 = vlaneseq
  %v3476 = vshrl.u32 %v3475, 7
  %v3477 = vsub.s32 2, %v3476
  %v3478 = vrot.slane %v3390, %v3477
  %v3479 = vmul.f32 %v383, %v3474
  %v3480 = vmul.f32 %v387, %v3474
  %v3481 = vmul.f32 %v391, %v3474
  %v3482 = vmul.f32 %v395, %v3474
  %v3483 = vmul.f32 %v399, %v3474
  %v3484 = vmul.f32 %v403, %v3474
  %v3485 = vmul.f32 %v407, %v3474
  %v3486 = vmul.f32 %v411, %v3474
  %v3487 = vmul.f32 %v415, %v3478
  %v3488 = vmul.f32 %v419, %v3478
  %v3489 = vmul.f32 %v423, %v3478
  %v3490 = vmul.f32 %v427, %v3478
  %v3491 = vmul.f32 %v431, %v3478
  %v3492 = vmul.f32 %v435, %v3478
  %v3493 = vmul.f32 %v439, %v3478
  %v3494 = vmul.f32 %v443, %v3478
  %v3495 = vadd.f32 %v3455, %v3479
  %v3496 = vadd.f32 %v3456, %v3480
  %v3497 = vadd.f32 %v3457, %v3481
  %v3498 = vadd.f32 %v3458, %v3482
  %v3499 = vadd.f32 %v3459, %v3483
  %v3500 = vadd.f32 %v3460, %v3484
  %v3501 = vadd.f32 %v3461, %v3485
  %v3502 = vadd.f32 %v3462, %v3486
  %v3503 = vadd.f32 %v3463, %v3487
  %v3504 = vadd.f32 %v3464, %v3488
  %v3505 = vadd.f32 %v3465, %v3489
  %v3506 = vadd.f32 %v3466, %v3490
  %v3507 = vadd.f32 %v3467, %v3491
  %v3508 = vadd.f32 %v3468, %v3492
  %v3509 = vadd.f32 %v3469, %v3493
  %v3510 = vadd.f32 %v3470, %v3494
  %v3511 = vlaneseq
  %v3512 = vshrl.u32 %v3511, 7
  %v3513 = vsub.s32 3, %v3512
  %v3514 = vrot.slane %v3389, %v3513
  %v3515 = vlaneseq
  %v3516 = vshrl.u32 %v3515, 7
  %v3517 = vsub.s32 3, %v3516
  %v3518 = vrot.slane %v3390, %v3517
  %v3519 = vmul.f32 %v487, %v3514
  %v3520 = vmul.f32 %v491, %v3514
  %v3521 = vmul.f32 %v495, %v3514
  %v3522 = vmul.f32 %v499, %v3514
  %v3523 = vmul.f32 %v503, %v3514
  %v3524 = vmul.f32 %v507, %v3514
  %v3525 = vmul.f32 %v511, %v3514
  %v3526 = vmul.f32 %v515, %v3514
  %v3527 = vmul.f32 %v519, %v3518
  %v3528 = vmul.f32 %v523, %v3518
  %v3529 = vmul.f32 %v527, %v3518
  %v3530 = vmul.f32 %v531, %v3518
  %v3531 = vmul.f32 %v535, %v3518
  %v3532 = vmul.f32 %v539, %v3518
  %v3533 = vmul.f32 %v543, %v3518
  %v3534 = vmul.f32 %v547, %v3518
  %v3535 = vadd.f32 %v3495, %v3519
  %v3536 = vadd.f32 %v3496, %v3520
  %v3537 = vadd.f32 %v3497, %v3521
  %v3538 = vadd.f32 %v3498, %v3522
  %v3539 = vadd.f32 %v3499, %v3523
  %v3540 = vadd.f32 %v3500, %v3524
  %v3541 = vadd.f32 %v3501, %v3525
  %v3542 = vadd.f32 %v3502, %v3526
  %v3543 = vadd.f32 %v3503, %v3527
  %v3544 = vadd.f32 %v3504, %v3528
  %v3545 = vadd.f32 %v3505, %v3529
  %v3546 = vadd.f32 %v3506, %v3530
  %v3547 = vadd.f32 %v3507, %v3531
  %v3548 = vadd.f32 %v3508, %v3532
  %v3549 = vadd.f32 %v3509, %v3533
  %v3550 = vadd.f32 %v3510, %v3534
  %v3551 = vadd.f32 %v3535, %v592
  %v3552 = vadd.f32 %v3536, %v592
  %v3553 = vadd.f32 %v3537, %v592
  %v3554 = vadd.f32 %v3538, %v592
  %v3555 = vadd.f32 %v3539, %v592
  %v3556 = vadd.f32 %v3540, %v592
  %v3557 = vadd.f32 %v3541, %v592
  %v3558 = vadd.f32 %v3542, %v592
  %v3559 = vadd.f32 %v3543, %v592
  %v3560 = vadd.f32 %v3544, %v592
  %v3561 = vadd.f32 %v3545, %v592
  %v3562 = vadd.f32 %v3546, %v592
  %v3563 = vadd.f32 %v3547, %v592
  %v3564 = vadd.f32 %v3548, %v592
  %v3565 = vadd.f32 %v3549, %v592
  %v3566 = vadd.f32 %v3550, %v592
  %v3567 = vmax.f32 %v3551, 0.0
  %v3568 = vmax.f32 %v3552, 0.0
  %v3569 = vmax.f32 %v3553, 0.0
  %v3570 = vmax.f32 %v3554, 0.0
  %v3571 = vmax.f32 %v3555, 0.0
  %v3572 = vmax.f32 %v3556, 0.0
  %v3573 = vmax.f32 %v3557, 0.0
  %v3574 = vmax.f32 %v3558, 0.0
  %v3575 = vmax.f32 %v3559, 0.0
  %v3576 = vmax.f32 %v3560, 0.0
  %v3577 = vmax.f32 %v3561, 0.0
  %v3578 = vmax.f32 %v3562, 0.0
  %v3579 = vmax.f32 %v3563, 0.0
  %v3580 = vmax.f32 %v3564, 0.0
  %v3581 = vmax.f32 %v3565, 0.0
  %v3582 = vmax.f32 %v3566, 0.0
  %3583 = vmatprep.subr.mxu0 0.0
  %3584 = vmatpush1.msra.mxu0 %v58
  %3585 = vmatprep.subr.mxu0 0.0
  %3586 = vmatpush1.msra.mxu0 %v59
  %3587 = vmatprep.subr.mxu0 0.0
  %3588 = vmatpush1.msra.mxu0 %v60
  %3589 = vmatprep.subr.mxu0 0.0
  %3590 = vmatpush1.msra.mxu0 %v61
  %3591 = vmatprep.subr.mxu0 0.0
  %3592 = vmatpush1.msra.mxu0 %v62
  %3593 = vmatprep.subr.mxu0 0.0
  %3594 = vmatpush1.msra.mxu0 %v63
  %3595 = vmatprep.subr.mxu0 0.0
  %3596 = vmatpush1.msra.mxu0 %v64
  %3597 = vmatprep.subr.mxu0 0.0
  %3598 = vmatpush1.msra.mxu0 %v65
  %3599 = vmatprep.subr.mxu0 0.0
  %3600 = vmatpush1.msra.mxu0 %v66
  %3601 = vmatprep.subr.mxu0 0.0
  %3602 = vmatpush1.msra.mxu0 %v67
  %3603 = vmatprep.subr.mxu0 0.0
  %3604 = vmatpush1.msra.mxu0 %v68
  %3605 = vmatprep.subr.mxu0 0.0
  %3606 = vmatpush1.msra.mxu0 %v69
  %3607 = vmatprep.subr.mxu0 0.0
  %3608 = vmatpush1.msra.mxu0 %v70
  %3609 = vmatprep.subr.mxu0 0.0
  %3610 = vmatpush1.msra.mxu0 %v71
  %3611 = vmatprep.subr.mxu0 0.0
  %3612 = vmatpush1.msra.mxu0 %v72
  %3613 = vmatprep.subr.mxu0 0.0
  %3614 = vmatpush1.msra.mxu0 %v73
  %3615 = vmatprep.subr.mxu0 0.0
  %3616 = vmatpush1.msra.mxu0 0.0
  %3617 = vmatprep.subr.mxu0 0.0
  %3618 = vmatpush1.msra.mxu0 0.0
  %3619 = vmatprep.subr.mxu0 0.0
  %3620 = vmatpush1.msra.mxu0 0.0
  %3621 = vmatprep.subr.mxu0 0.0
  %3622 = vmatpush1.msra.mxu0 0.0
  %3623 = vmatprep.subr.mxu0 0.0
  %3624 = vmatpush1.msra.mxu0 0.0
  %3625 = vmatprep.subr.mxu0 0.0
  %3626 = vmatpush1.msra.mxu0 0.0
  %3627 = vmatprep.subr.mxu0 0.0
  %3628 = vmatpush1.msra.mxu0 0.0
  %3629 = vmatprep.subr.mxu0 0.0
  %3630 = vmatpush1.msra.mxu0 0.0
  %3631 = vmatprep.subr.mxu0 0.0
  %3632 = vmatpush1.msra.mxu0 0.0
  %3633 = vmatprep.subr.mxu0 0.0
  %3634 = vmatpush1.msra.mxu0 0.0
  %3635 = vmatprep.subr.mxu0 0.0
  %3636 = vmatpush1.msra.mxu0 0.0
  %3637 = vmatprep.subr.mxu0 0.0
  %3638 = vmatpush1.msra.mxu0 0.0
  %3639 = vmatprep.subr.mxu0 0.0
  %3640 = vmatpush1.msra.mxu0 0.0
  %3641 = vmatprep.subr.mxu0 0.0
  %3642 = vmatpush1.msra.mxu0 0.0
  %3643 = vmatprep.subr.mxu0 0.0
  %3644 = vmatpush1.msra.mxu0 0.0
  %3645 = vmatprep.subr.mxu0 0.0
  %3646 = vmatpush1.msra.mxu0 0.0
  %3647 = vmatprep.mubr.f32.mxu0 0.0
  %3648 = vmatmul.mubr.f32.gmra.mrb[0].mxu0 %v3567
  %v3649 = vpop.f32.mrb[0].mxu0
  %v3650 = vadd.f32 %v628, %v3649
  %v3651 = vpop.f32.mrb[0].mxu0
  %3652 = vmatprep.mubr.f32.mxu0 0.0
  %3653 = vmatmul.mubr.f32.gmra.mrb[0].mxu0 %v3568
  %v3654 = vpop.f32.mrb[0].mxu0
  %v3655 = vadd.f32 %v628, %v3654
  %v3656 = vpop.f32.mrb[0].mxu0
  %3657 = vmatprep.mubr.f32.mxu0 0.0
  %3658 = vmatmul.mubr.f32.gmra.mrb[0].mxu0 %v3569
  %v3659 = vpop.f32.mrb[0].mxu0
  %v3660 = vadd.f32 %v628, %v3659
  %v3661 = vpop.f32.mrb[0].mxu0
  %3662 = vmatprep.mubr.f32.mxu0 0.0
  %3663 = vmatmul.mubr.f32.gmra.mrb[0].mxu0 %v3570
  %v3664 = vpop.f32.mrb[0].mxu0
  %v3665 = vadd.f32 %v628, %v3664
  %v3666 = vpop.f32.mrb[0].mxu0
  %3667 = vmatprep.mubr.f32.mxu0 0.0
  %3668 = vmatmul.mubr.f32.gmra.mrb[0].mxu0 %v3571
  %v3669 = vpop.f32.mrb[0].mxu0
  %v3670 = vadd.f32 %v628, %v3669
  %v3671 = vpop.f32.mrb[0].mxu0
  %3672 = vmatprep.mubr.f32.mxu0 0.0
  %3673 = vmatmul.mubr.f32.gmra.mrb[0].mxu0 %v3572
  %v3674 = vpop.f32.mrb[0].mxu0
  %v3675 = vadd.f32 %v628, %v3674
  %v3676 = vpop.f32.mrb[0].mxu0
  %3677 = vmatprep.mubr.f32.mxu0 0.0
  %3678 = vmatmul.mubr.f32.gmra.mrb[0].mxu0 %v3573
  %v3679 = vpop.f32.mrb[0].mxu0
  %v3680 = vadd.f32 %v628, %v3679
  %v3681 = vpop.f32.mrb[0].mxu0
  %3682 = vmatprep.mubr.f32.mxu0 0.0
  %3683 = vmatmul.mubr.f32.gmra.mrb[0].mxu0 %v3574
  %v3684 = vpop.f32.mrb[0].mxu0
  %v3685 = vadd.f32 %v628, %v3684
  %v3686 = vpop.f32.mrb[0].mxu0
  %3687 = vmatprep.mubr.f32.mxu0 0.0
  %3688 = vmatmul.mubr.f32.gmra.mrb[0].mxu0 %v3575
  %v3689 = vpop.f32.mrb[0].mxu0
  %v3690 = vadd.f32 %v628, %v3689
  %v3691 = vpop.f32.mrb[0].mxu0
  %3692 = vmatprep.mubr.f32.mxu0 0.0
  %3693 = vmatmul.mubr.f32.gmra.mrb[0].mxu0 %v3576
  %v3694 = vpop.f32.mrb[0].mxu0
  %v3695 = vadd.f32 %v628, %v3694
  %v3696 = vpop.f32.mrb[0].mxu0
  %3697 = vmatprep.mubr.f32.mxu0 0.0
  %3698 = vmatmul.mubr.f32.gmra.mrb[0].mxu0 %v3577
  %v3699 = vpop.f32.mrb[0].mxu0
  %v3700 = vadd.f32 %v628, %v3699
  %v3701 = vpop.f32.mrb[0].mxu0
  %3702 = vmatprep.mubr.f32.mxu0 0.0
  %3703 = vmatmul.mubr.f32.gmra.mrb[0].mxu0 %v3578
  %v3704 = vpop.f32.mrb[0].mxu0
  %v3705 = vadd.f32 %v628, %v3704
  %v3706 = vpop.f32.mrb[0].mxu0
  %3707 = vmatprep.mubr.f32.mxu0 0.0
  %3708 = vmatmul.mubr.f32.gmra.mrb[0].mxu0 %v3579
  %v3709 = vpop.f32.mrb[0].mxu0
  %v3710 = vadd.f32 %v628, %v3709
  %v3711 = vpop.f32.mrb[0].mxu0
  %3712 = vmatprep.mubr.f32.mxu0 0.0
  %3713 = vmatmul.mubr.f32.gmra.mrb[0].mxu0 %v3580
  %v3714 = vpop.f32.mrb[0].mxu0
  %v3715 = vadd.f32 %v628, %v3714
  %v3716 = vpop.f32.mrb[0].mxu0
  %3717 = vmatprep.mubr.f32.mxu0 0.0
  %3718 = vmatmul.mubr.f32.gmra.mrb[0].mxu0 %v3581
  %v3719 = vpop.f32.mrb[0].mxu0
  %v3720 = vadd.f32 %v628, %v3719
  %v3721 = vpop.f32.mrb[0].mxu0
  %3722 = vmatprep.mubr.f32.mxu0 0.0
  %3723 = vmatmul.mubr.f32.gmra.mrb[0].mxu0 %v3582
  %v3724 = vpop.f32.mrb[0].mxu0
  %v3725 = vadd.f32 %v628, %v3724
  %v3726 = vpop.f32.mrb[0].mxu0
  %3727 = vdwg.mxu0
  %v3728 = vmax.f32 %v3650, 0.0
  %v3729 = vmax.f32 %v3655, 0.0
  %v3730 = vmax.f32 %v3660, 0.0
  %v3731 = vmax.f32 %v3665, 0.0
  %v3732 = vmax.f32 %v3670, 0.0
  %v3733 = vmax.f32 %v3675, 0.0
  %v3734 = vmax.f32 %v3680, 0.0
  %v3735 = vmax.f32 %v3685, 0.0
  %v3736 = vmax.f32 %v3690, 0.0
  %v3737 = vmax.f32 %v3695, 0.0
  %v3738 = vmax.f32 %v3700, 0.0
  %v3739 = vmax.f32 %v3705, 0.0
  %v3740 = vmax.f32 %v3710, 0.0
  %v3741 = vmax.f32 %v3715, 0.0
  %v3742 = vmax.f32 %v3720, 0.0
  %v3743 = vmax.f32 %v3725, 0.0
  %3744 = vmatprep.subr.mxu0 0.0
  %3745 = vmatpush1.msra.mxu0 %v75
  %3746 = vmatprep.subr.mxu0 0.0
  %3747 = vmatpush1.msra.mxu0 %v76
  %3748 = vmatprep.subr.mxu0 0.0
  %3749 = vmatpush1.msra.mxu0 %v77
  %3750 = vmatprep.subr.mxu0 0.0
  %3751 = vmatpush1.msra.mxu0 %v78
  %3752 = vmatprep.subr.mxu0 0.0
  %3753 = vmatpush1.msra.mxu0 %v79
  %3754 = vmatprep.subr.mxu0 0.0
  %3755 = vmatpush1.msra.mxu0 %v80
  %3756 = vmatprep.subr.mxu0 0.0
  %3757 = vmatpush1.msra.mxu0 %v81
  %3758 = vmatprep.subr.mxu0 0.0
  %3759 = vmatpush1.msra.mxu0 %v82
  %3760 = vmatprep.subr.mxu0 0.0
  %3761 = vmatpush1.msra.mxu0 %v83
  %3762 = vmatprep.subr.mxu0 0.0
  %3763 = vmatpush1.msra.mxu0 %v84
  %3764 = vmatprep.subr.mxu0 0.0
  %3765 = vmatpush1.msra.mxu0 %v85
  %3766 = vmatprep.subr.mxu0 0.0
  %3767 = vmatpush1.msra.mxu0 %v86
  %3768 = vmatprep.subr.mxu0 0.0
  %3769 = vmatpush1.msra.mxu0 %v87
  %3770 = vmatprep.subr.mxu0 0.0
  %3771 = vmatpush1.msra.mxu0 %v88
  %3772 = vmatprep.subr.mxu0 0.0
  %3773 = vmatpush1.msra.mxu0 %v89
  %3774 = vmatprep.subr.mxu0 0.0
  %3775 = vmatpush1.msra.mxu0 %v90
  %3776 = vmatprep.subr.mxu0 0.0
  %3777 = vmatpush1.msra.mxu0 0.0
  %3778 = vmatprep.subr.mxu0 0.0
  %3779 = vmatpush1.msra.mxu0 0.0
  %3780 = vmatprep.subr.mxu0 0.0
  %3781 = vmatpush1.msra.mxu0 0.0
  %3782 = vmatprep.subr.mxu0 0.0
  %3783 = vmatpush1.msra.mxu0 0.0
  %3784 = vmatprep.subr.mxu0 0.0
  %3785 = vmatpush1.msra.mxu0 0.0
  %3786 = vmatprep.subr.mxu0 0.0
  %3787 = vmatpush1.msra.mxu0 0.0
  %3788 = vmatprep.subr.mxu0 0.0
  %3789 = vmatpush1.msra.mxu0 0.0
  %3790 = vmatprep.subr.mxu0 0.0
  %3791 = vmatpush1.msra.mxu0 0.0
  %3792 = vmatprep.subr.mxu0 0.0
  %3793 = vmatpush1.msra.mxu0 0.0
  %3794 = vmatprep.subr.mxu0 0.0
  %3795 = vmatpush1.msra.mxu0 0.0
  %3796 = vmatprep.subr.mxu0 0.0
  %3797 = vmatpush1.msra.mxu0 0.0
  %3798 = vmatprep.subr.mxu0 0.0
  %3799 = vmatpush1.msra.mxu0 0.0
  %3800 = vmatprep.subr.mxu0 0.0
  %3801 = vmatpush1.msra.mxu0 0.0
  %3802 = vmatprep.subr.mxu0 0.0
  %3803 = vmatpush1.msra.mxu0 0.0
  %3804 = vmatprep.subr.mxu0 0.0
  %3805 = vmatpush1.msra.mxu0 0.0
  %3806 = vmatprep.subr.mxu0 0.0
  %3807 = vmatpush1.msra.mxu0 0.0
  %3808 = vmatprep.mubr.f32.mxu0 0.0
  %3809 = vmatmul.mubr.f32.gmra.mrb[0].mxu0 %v3728
  %v3810 = vpop.f32.mrb[0].mxu0
  %v3811 = vadd.f32 %v793, %v3810
  %v3812 = vpop.f32.mrb[0].mxu0
  %3813 = vmatprep.mubr.f32.mxu0 0.0
  %3814 = vmatmul.mubr.f32.gmra.mrb[0].mxu0 %v3729
  %v3815 = vpop.f32.mrb[0].mxu0
  %v3816 = vadd.f32 %v793, %v3815
  %v3817 = vpop.f32.mrb[0].mxu0
  %3818 = vmatprep.mubr.f32.mxu0 0.0
  %3819 = vmatmul.mubr.f32.gmra.mrb[0].mxu0 %v3730
  %v3820 = vpop.f32.mrb[0].mxu0
  %v3821 = vadd.f32 %v793, %v3820
  %v3822 = vpop.f32.mrb[0].mxu0
  %3823 = vmatprep.mubr.f32.mxu0 0.0
  %3824 = vmatmul.mubr.f32.gmra.mrb[0].mxu0 %v3731
  %v3825 = vpop.f32.mrb[0].mxu0
  %v3826 = vadd.f32 %v793, %v3825
  %v3827 = vpop.f32.mrb[0].mxu0
  %3828 = vmatprep.mubr.f32.mxu0 0.0
  %3829 = vmatmul.mubr.f32.gmra.mrb[0].mxu0 %v3732
  %v3830 = vpop.f32.mrb[0].mxu0
  %v3831 = vadd.f32 %v793, %v3830
  %v3832 = vpop.f32.mrb[0].mxu0
  %3833 = vmatprep.mubr.f32.mxu0 0.0
  %3834 = vmatmul.mubr.f32.gmra.mrb[0].mxu0 %v3733
  %v3835 = vpop.f32.mrb[0].mxu0
  %v3836 = vadd.f32 %v793, %v3835
  %v3837 = vpop.f32.mrb[0].mxu0
  %3838 = vmatprep.mubr.f32.mxu0 0.0
  %3839 = vmatmul.mubr.f32.gmra.mrb[0].mxu0 %v3734
  %v3840 = vpop.f32.mrb[0].mxu0
  %v3841 = vadd.f32 %v793, %v3840
  %v3842 = vpop.f32.mrb[0].mxu0
  %3843 = vmatprep.mubr.f32.mxu0 0.0
  %3844 = vmatmul.mubr.f32.gmra.mrb[0].mxu0 %v3735
  %v3845 = vpop.f32.mrb[0].mxu0
  %v3846 = vadd.f32 %v793, %v3845
  %v3847 = vpop.f32.mrb[0].mxu0
  %3848 = vmatprep.mubr.f32.mxu0 0.0
  %3849 = vmatmul.mubr.f32.gmra.mrb[0].mxu0 %v3736
  %v3850 = vpop.f32.mrb[0].mxu0
  %v3851 = vadd.f32 %v793, %v3850
  %v3852 = vpop.f32.mrb[0].mxu0
  %3853 = vmatprep.mubr.f32.mxu0 0.0
  %3854 = vmatmul.mubr.f32.gmra.mrb[0].mxu0 %v3737
  %v3855 = vpop.f32.mrb[0].mxu0
  %v3856 = vadd.f32 %v793, %v3855
  %v3857 = vpop.f32.mrb[0].mxu0
  %3858 = vmatprep.mubr.f32.mxu0 0.0
  %3859 = vmatmul.mubr.f32.gmra.mrb[0].mxu0 %v3738
  %v3860 = vpop.f32.mrb[0].mxu0
  %v3861 = vadd.f32 %v793, %v3860
  %v3862 = vpop.f32.mrb[0].mxu0
  %3863 = vmatprep.mubr.f32.mxu0 0.0
  %3864 = vmatmul.mubr.f32.gmra.mrb[0].mxu0 %v3739
  %v3865 = vpop.f32.mrb[0].mxu0
  %v3866 = vadd.f32 %v793, %v3865
  %v3867 = vpop.f32.mrb[0].mxu0
  %3868 = vmatprep.mubr.f32.mxu0 0.0
  %3869 = vmatmul.mubr.f32.gmra.mrb[0].mxu0 %v3740
  %v3870 = vpop.f32.mrb[0].mxu0
  %v3871 = vadd.f32 %v793, %v3870
  %v3872 = vpop.f32.mrb[0].mxu0
  %3873 = vmatprep.mubr.f32.mxu0 0.0
  %3874 = vmatmul.mubr.f32.gmra.mrb[0].mxu0 %v3741
  %v3875 = vpop.f32.mrb[0].mxu0
  %v3876 = vadd.f32 %v793, %v3875
  %v3877 = vpop.f32.mrb[0].mxu0
  %3878 = vmatprep.mubr.f32.mxu0 0.0
  %3879 = vmatmul.mubr.f32.gmra.mrb[0].mxu0 %v3742
  %v3880 = vpop.f32.mrb[0].mxu0
  %v3881 = vadd.f32 %v793, %v3880
  %v3882 = vpop.f32.mrb[0].mxu0
  %3883 = vmatprep.mubr.f32.mxu0 0.0
  %3884 = vmatmul.mubr.f32.gmra.mrb[0].mxu0 %v3743
  %v3885 = vpop.f32.mrb[0].mxu0
  %v3886 = vadd.f32 %v793, %v3885
  %v3887 = vpop.f32.mrb[0].mxu0
  %3888 = vdwg.mxu0
  %v3889 = vmax.f32 %v3811, 0.0
  %v3890 = vmax.f32 %v3816, 0.0
  %v3891 = vmax.f32 %v3821, 0.0
  %v3892 = vmax.f32 %v3826, 0.0
  %v3893 = vmax.f32 %v3831, 0.0
  %v3894 = vmax.f32 %v3836, 0.0
  %v3895 = vmax.f32 %v3841, 0.0
  %v3896 = vmax.f32 %v3846, 0.0
  %v3897 = vmax.f32 %v3851, 0.0
  %v3898 = vmax.f32 %v3856, 0.0
  %v3899 = vmax.f32 %v3861, 0.0
  %v3900 = vmax.f32 %v3866, 0.0
  %v3901 = vmax.f32 %v3871, 0.0
  %v3902 = vmax.f32 %v3876, 0.0
  %v3903 = vmax.f32 %v3881, 0.0
  %v3904 = vmax.f32 %v3886, 0.0
  %v3905 = vmax.f32 %v3889, %v3891
  %v3906 = vmax.f32 %v3890, %v3892
  %v3907 = vmax.f32 %v3905, %v3893
  %v3908 = vmax.f32 %v3906, %v3894
  %v3909 = vmax.f32 %v3907, %v3895
  %v3910 = vmax.f32 %v3908, %v3896
  %v3911 = vmax.f32 %v3909, %v3910
  %v3912 = vrot.slane %v3911, 4
  %v3913 = vmax.f32 %v3911, %v3912
  %v3914 = vrot.slane %v3913, 2
  %v3915 = vmax.f32 %v3913, %v3914
  %v3916 = vrot.slane %v3915, 1
  %v3917 = vmax.f32 %v3915, %v3916
  %v3918 = vmax.f32 %v3897, %v3899
  %v3919 = vmax.f32 %v3898, %v3900
  %v3920 = vmax.f32 %v3918, %v3901
  %v3921 = vmax.f32 %v3919, %v3902
  %v3922 = vmax.f32 %v3920, %v3903
  %v3923 = vmax.f32 %v3921, %v3904
  %v3924 = vmax.f32 %v3922, %v3923
  %v3925 = vrot.slane %v3924, 4
  %v3926 = vmax.f32 %v3924, %v3925
  %v3927 = vrot.slane %v3926, 2
  %v3928 = vmax.f32 %v3926, %v3927
  %v3929 = vrot.slane %v3928, 1
  %v3930 = vmax.f32 %v3928, %v3929
  %3932 = vset.pattern.permute.xlu0 0
  %3933 = vperm.xlu0 %3932, %v48
  %v3934 = vpop.permute.xlu0 %3933
  %3937 = vset.pattern.permute.xlu0 0
  %3938 = vperm.xlu0 %3937, %v55
  %v3939 = vpop.permute.xlu0 %3938
  %v3941 = vmul.f32 %v3934, %v104
  %v3942 = vmul.f32 %v3939, %v104
  %v3943 = vadd.f32 %v3941, 0.0
  %v3944 = vadd.f32 %v3942, 0.0
  %3945 = vset.pattern.permute.xlu0 1
  %3946 = vperm.xlu0 %3945, %v48
  %v3947 = vpop.permute.xlu0 %3946
  %3949 = vset.pattern.permute.xlu0 1
  %3950 = vperm.xlu0 %3949, %v55
  %v3951 = vpop.permute.xlu0 %3950
  %v3953 = vmul.f32 %v3947, %v120
  %v3954 = vmul.f32 %v3951, %v120
  %v3955 = vadd.f32 %v3943, %v3953
  %v3956 = vadd.f32 %v3944, %v3954
  %3957 = vset.pattern.permute.xlu0 2
  %3958 = vperm.xlu0 %3957, %v48
  %v3959 = vpop.permute.xlu0 %3958
  %3961 = vset.pattern.permute.xlu0 2
  %3962 = vperm.xlu0 %3961, %v55
  %v3963 = vpop.permute.xlu0 %3962
  %v3965 = vmul.f32 %v3959, %v136
  %v3966 = vmul.f32 %v3963, %v136
  %v3967 = vadd.f32 %v3955, %v3965
  %v3968 = vadd.f32 %v3956, %v3966
  %3969 = vset.pattern.permute.xlu0 3
  %3970 = vperm.xlu0 %3969, %v48
  %v3971 = vpop.permute.xlu0 %3970
  %3973 = vset.pattern.permute.xlu0 3
  %3974 = vperm.xlu0 %3973, %v55
  %v3975 = vpop.permute.xlu0 %3974
  %v3977 = vmul.f32 %v3971, %v152
  %v3978 = vmul.f32 %v3975, %v152
  %v3979 = vadd.f32 %v3967, %v3977
  %v3980 = vadd.f32 %v3968, %v3978
  %v3981 = vlaneseq
  %v3982 = vshrl.u32 %v3981, 7
  %v3983 = vsub.s32 0, %v3982
  %v3984 = vrot.slane %v3979, %v3983
  %v3985 = vlaneseq
  %v3986 = vshrl.u32 %v3985, 7
  %v3987 = vsub.s32 0, %v3986
  %v3988 = vrot.slane %v3980, %v3987
  %v3989 = vmul.f32 %v160, %v3984
  %v3990 = vmul.f32 %v165, %v3984
  %v3991 = vmul.f32 %v170, %v3984
  %v3992 = vmul.f32 %v175, %v3984
  %v3993 = vmul.f32 %v180, %v3984
  %v3994 = vmul.f32 %v185, %v3984
  %v3995 = vmul.f32 %v190, %v3984
  %v3996 = vmul.f32 %v195, %v3984
  %v3997 = vmul.f32 %v200, %v3988
  %v3998 = vmul.f32 %v205, %v3988
  %v3999 = vmul.f32 %v210, %v3988
  %v4000 = vmul.f32 %v215, %v3988
  %v4001 = vmul.f32 %v220, %v3988
  %v4002 = vmul.f32 %v225, %v3988
  %v4003 = vmul.f32 %v230, %v3988
  %v4004 = vmul.f32 %v235, %v3988
  %v4005 = vadd.f32 %v3989, 0.0
  %v4006 = vadd.f32 %v3990, 0.0
  %v4007 = vadd.f32 %v3991, 0.0
  %v4008 = vadd.f32 %v3992, 0.0
  %v4009 = vadd.f32 %v3993, 0.0
  %v4010 = vadd.f32 %v3994, 0.0
  %v4011 = vadd.f32 %v3995, 0.0
  %v4012 = vadd.f32 %v3996, 0.0
  %v4013 = vadd.f32 %v3997, 0.0
  %v4014 = vadd.f32 %v3998, 0.0
  %v4015 = vadd.f32 %v3999, 0.0
  %v4016 = vadd.f32 %v4000, 0.0
  %v4017 = vadd.f32 %v4001, 0.0
  %v4018 = vadd.f32 %v4002, 0.0
  %v4019 = vadd.f32 %v4003, 0.0
  %v4020 = vadd.f32 %v4004, 0.0
  %v4021 = vlaneseq
  %v4022 = vshrl.u32 %v4021, 7
  %v4023 = vsub.s32 1, %v4022
  %v4024 = vrot.slane %v3979, %v4023
  %v4025 = vlaneseq
  %v4026 = vshrl.u32 %v4025, 7
  %v4027 = vsub.s32 1, %v4026
  %v4028 = vrot.slane %v3980, %v4027
  %v4029 = vmul.f32 %v279, %v4024
  %v4030 = vmul.f32 %v283, %v4024
  %v4031 = vmul.f32 %v287, %v4024
  %v4032 = vmul.f32 %v291, %v4024
  %v4033 = vmul.f32 %v295, %v4024
  %v4034 = vmul.f32 %v299, %v4024
  %v4035 = vmul.f32 %v303, %v4024
  %v4036 = vmul.f32 %v307, %v4024
  %v4037 = vmul.f32 %v311, %v4028
  %v4038 = vmul.f32 %v315, %v4028
  %v4039 = vmul.f32 %v319, %v4028
  %v4040 = vmul.f32 %v323, %v4028
  %v4041 = vmul.f32 %v327, %v4028
  %v4042 = vmul.f32 %v331, %v4028
  %v4043 = vmul.f32 %v335, %v4028
  %v4044 = vmul.f32 %v339, %v4028
  %v4045 = vadd.f32 %v4005, %v4029
  %v4046 = vadd.f32 %v4006, %v4030
  %v4047 = vadd.f32 %v4007, %v4031
  %v4048 = vadd.f32 %v4008, %v4032
  %v4049 = vadd.f32 %v4009, %v4033
  %v4050 = vadd.f32 %v4010, %v4034
  %v4051 = vadd.f32 %v4011, %v4035
  %v4052 = vadd.f32 %v4012, %v4036
  %v4053 = vadd.f32 %v4013, %v4037
  %v4054 = vadd.f32 %v4014, %v4038
  %v4055 = vadd.f32 %v4015, %v4039
  %v4056 = vadd.f32 %v4016, %v4040
  %v4057 = vadd.f32 %v4017, %v4041
  %v4058 = vadd.f32 %v4018, %v4042
  %v4059 = vadd.f32 %v4019, %v4043
  %v4060 = vadd.f32 %v4020, %v4044
  %v4061 = vlaneseq
  %v4062 = vshrl.u32 %v4061, 7
  %v4063 = vsub.s32 2, %v4062
  %v4064 = vrot.slane %v3979, %v4063
  %v4065 = vlaneseq
  %v4066 = vshrl.u32 %v4065, 7
  %v4067 = vsub.s32 2, %v4066
  %v4068 = vrot.slane %v3980, %v4067
  %v4069 = vmul.f32 %v383, %v4064
  %v4070 = vmul.f32 %v387, %v4064
  %v4071 = vmul.f32 %v391, %v4064
  %v4072 = vmul.f32 %v395, %v4064
  %v4073 = vmul.f32 %v399, %v4064
  %v4074 = vmul.f32 %v403, %v4064
  %v4075 = vmul.f32 %v407, %v4064
  %v4076 = vmul.f32 %v411, %v4064
  %v4077 = vmul.f32 %v415, %v4068
  %v4078 = vmul.f32 %v419, %v4068
  %v4079 = vmul.f32 %v423, %v4068
  %v4080 = vmul.f32 %v427, %v4068
  %v4081 = vmul.f32 %v431, %v4068
  %v4082 = vmul.f32 %v435, %v4068
  %v4083 = vmul.f32 %v439, %v4068
  %v4084 = vmul.f32 %v443, %v4068
  %v4085 = vadd.f32 %v4045, %v4069
  %v4086 = vadd.f32 %v4046, %v4070
  %v4087 = vadd.f32 %v4047, %v4071
  %v4088 = vadd.f32 %v4048, %v4072
  %v4089 = vadd.f32 %v4049, %v4073
  %v4090 = vadd.f32 %v4050, %v4074
  %v4091 = vadd.f32 %v4051, %v4075
  %v4092 = vadd.f32 %v4052, %v4076
  %v4093 = vadd.f32 %v4053, %v4077
  %v4094 = vadd.f32 %v4054, %v4078
  %v4095 = vadd.f32 %v4055, %v4079
  %v4096 = vadd.f32 %v4056, %v4080
  %v4097 = vadd.f32 %v4057, %v4081
  %v4098 = vadd.f32 %v4058, %v4082
  %v4099 = vadd.f32 %v4059, %v4083
  %v4100 = vadd.f32 %v4060, %v4084
  %v4101 = vlaneseq
  %v4102 = vshrl.u32 %v4101, 7
  %v4103 = vsub.s32 3, %v4102
  %v4104 = vrot.slane %v3979, %v4103
  %v4105 = vlaneseq
  %v4106 = vshrl.u32 %v4105, 7
  %v4107 = vsub.s32 3, %v4106
  %v4108 = vrot.slane %v3980, %v4107
  %v4109 = vmul.f32 %v487, %v4104
  %v4110 = vmul.f32 %v491, %v4104
  %v4111 = vmul.f32 %v495, %v4104
  %v4112 = vmul.f32 %v499, %v4104
  %v4113 = vmul.f32 %v503, %v4104
  %v4114 = vmul.f32 %v507, %v4104
  %v4115 = vmul.f32 %v511, %v4104
  %v4116 = vmul.f32 %v515, %v4104
  %v4117 = vmul.f32 %v519, %v4108
  %v4118 = vmul.f32 %v523, %v4108
  %v4119 = vmul.f32 %v527, %v4108
  %v4120 = vmul.f32 %v531, %v4108
  %v4121 = vmul.f32 %v535, %v4108
  %v4122 = vmul.f32 %v539, %v4108
  %v4123 = vmul.f32 %v543, %v4108
  %v4124 = vmul.f32 %v547, %v4108
  %v4125 = vadd.f32 %v4085, %v4109
  %v4126 = vadd.f32 %v4086, %v4110
  %v4127 = vadd.f32 %v4087, %v4111
  %v4128 = vadd.f32 %v4088, %v4112
  %v4129 = vadd.f32 %v4089, %v4113
  %v4130 = vadd.f32 %v4090, %v4114
  %v4131 = vadd.f32 %v4091, %v4115
  %v4132 = vadd.f32 %v4092, %v4116
  %v4133 = vadd.f32 %v4093, %v4117
  %v4134 = vadd.f32 %v4094, %v4118
  %v4135 = vadd.f32 %v4095, %v4119
  %v4136 = vadd.f32 %v4096, %v4120
  %v4137 = vadd.f32 %v4097, %v4121
  %v4138 = vadd.f32 %v4098, %v4122
  %v4139 = vadd.f32 %v4099, %v4123
  %v4140 = vadd.f32 %v4100, %v4124
  %v4141 = vadd.f32 %v4125, %v592
  %v4142 = vadd.f32 %v4126, %v592
  %v4143 = vadd.f32 %v4127, %v592
  %v4144 = vadd.f32 %v4128, %v592
  %v4145 = vadd.f32 %v4129, %v592
  %v4146 = vadd.f32 %v4130, %v592
  %v4147 = vadd.f32 %v4131, %v592
  %v4148 = vadd.f32 %v4132, %v592
  %v4149 = vadd.f32 %v4133, %v592
  %v4150 = vadd.f32 %v4134, %v592
  %v4151 = vadd.f32 %v4135, %v592
  %v4152 = vadd.f32 %v4136, %v592
  %v4153 = vadd.f32 %v4137, %v592
  %v4154 = vadd.f32 %v4138, %v592
  %v4155 = vadd.f32 %v4139, %v592
  %v4156 = vadd.f32 %v4140, %v592
  %v4157 = vmax.f32 %v4141, 0.0
  %v4158 = vmax.f32 %v4142, 0.0
  %v4159 = vmax.f32 %v4143, 0.0
  %v4160 = vmax.f32 %v4144, 0.0
  %v4161 = vmax.f32 %v4145, 0.0
  %v4162 = vmax.f32 %v4146, 0.0
  %v4163 = vmax.f32 %v4147, 0.0
  %v4164 = vmax.f32 %v4148, 0.0
  %v4165 = vmax.f32 %v4149, 0.0
  %v4166 = vmax.f32 %v4150, 0.0
  %v4167 = vmax.f32 %v4151, 0.0
  %v4168 = vmax.f32 %v4152, 0.0
  %v4169 = vmax.f32 %v4153, 0.0
  %v4170 = vmax.f32 %v4154, 0.0
  %v4171 = vmax.f32 %v4155, 0.0
  %v4172 = vmax.f32 %v4156, 0.0
  %4173 = vmatprep.subr.mxu0 0.0
  %4174 = vmatpush1.msra.mxu0 %v58
  %4175 = vmatprep.subr.mxu0 0.0
  %4176 = vmatpush1.msra.mxu0 %v59
  %4177 = vmatprep.subr.mxu0 0.0
  %4178 = vmatpush1.msra.mxu0 %v60
  %4179 = vmatprep.subr.mxu0 0.0
  %4180 = vmatpush1.msra.mxu0 %v61
  %4181 = vmatprep.subr.mxu0 0.0
  %4182 = vmatpush1.msra.mxu0 %v62
  %4183 = vmatprep.subr.mxu0 0.0
  %4184 = vmatpush1.msra.mxu0 %v63
  %4185 = vmatprep.subr.mxu0 0.0
  %4186 = vmatpush1.msra.mxu0 %v64
  %4187 = vmatprep.subr.mxu0 0.0
  %4188 = vmatpush1.msra.mxu0 %v65
  %4189 = vmatprep.subr.mxu0 0.0
  %4190 = vmatpush1.msra.mxu0 %v66
  %4191 = vmatprep.subr.mxu0 0.0
  %4192 = vmatpush1.msra.mxu0 %v67
  %4193 = vmatprep.subr.mxu0 0.0
  %4194 = vmatpush1.msra.mxu0 %v68
  %4195 = vmatprep.subr.mxu0 0.0
  %4196 = vmatpush1.msra.mxu0 %v69
  %4197 = vmatprep.subr.mxu0 0.0
  %4198 = vmatpush1.msra.mxu0 %v70
  %4199 = vmatprep.subr.mxu0 0.0
  %4200 = vmatpush1.msra.mxu0 %v71
  %4201 = vmatprep.subr.mxu0 0.0
  %4202 = vmatpush1.msra.mxu0 %v72
  %4203 = vmatprep.subr.mxu0 0.0
  %4204 = vmatpush1.msra.mxu0 %v73
  %4205 = vmatprep.subr.mxu0 0.0
  %4206 = vmatpush1.msra.mxu0 0.0
  %4207 = vmatprep.subr.mxu0 0.0
  %4208 = vmatpush1.msra.mxu0 0.0
  %4209 = vmatprep.subr.mxu0 0.0
  %4210 = vmatpush1.msra.mxu0 0.0
  %4211 = vmatprep.subr.mxu0 0.0
  %4212 = vmatpush1.msra.mxu0 0.0
  %4213 = vmatprep.subr.mxu0 0.0
  %4214 = vmatpush1.msra.mxu0 0.0
  %4215 = vmatprep.subr.mxu0 0.0
  %4216 = vmatpush1.msra.mxu0 0.0
  %4217 = vmatprep.subr.mxu0 0.0
  %4218 = vmatpush1.msra.mxu0 0.0
  %4219 = vmatprep.subr.mxu0 0.0
  %4220 = vmatpush1.msra.mxu0 0.0
  %4221 = vmatprep.subr.mxu0 0.0
  %4222 = vmatpush1.msra.mxu0 0.0
  %4223 = vmatprep.subr.mxu0 0.0
  %4224 = vmatpush1.msra.mxu0 0.0
  %4225 = vmatprep.subr.mxu0 0.0
  %4226 = vmatpush1.msra.mxu0 0.0
  %4227 = vmatprep.subr.mxu0 0.0
  %4228 = vmatpush1.msra.mxu0 0.0
  %4229 = vmatprep.subr.mxu0 0.0
  %4230 = vmatpush1.msra.mxu0 0.0
  %4231 = vmatprep.subr.mxu0 0.0
  %4232 = vmatpush1.msra.mxu0 0.0
  %4233 = vmatprep.subr.mxu0 0.0
  %4234 = vmatpush1.msra.mxu0 0.0
  %4235 = vmatprep.subr.mxu0 0.0
  %4236 = vmatpush1.msra.mxu0 0.0
  %4237 = vmatprep.mubr.f32.mxu0 0.0
  %4238 = vmatmul.mubr.f32.gmra.mrb[0].mxu0 %v4157
  %v4239 = vpop.f32.mrb[0].mxu0
  %v4240 = vadd.f32 %v628, %v4239
  %v4241 = vpop.f32.mrb[0].mxu0
  %4242 = vmatprep.mubr.f32.mxu0 0.0
  %4243 = vmatmul.mubr.f32.gmra.mrb[0].mxu0 %v4158
  %v4244 = vpop.f32.mrb[0].mxu0
  %v4245 = vadd.f32 %v628, %v4244
  %v4246 = vpop.f32.mrb[0].mxu0
  %4247 = vmatprep.mubr.f32.mxu0 0.0
  %4248 = vmatmul.mubr.f32.gmra.mrb[0].mxu0 %v4159
  %v4249 = vpop.f32.mrb[0].mxu0
  %v4250 = vadd.f32 %v628, %v4249
  %v4251 = vpop.f32.mrb[0].mxu0
  %4252 = vmatprep.mubr.f32.mxu0 0.0
  %4253 = vmatmul.mubr.f32.gmra.mrb[0].mxu0 %v4160
  %v4254 = vpop.f32.mrb[0].mxu0
  %v4255 = vadd.f32 %v628, %v4254
  %v4256 = vpop.f32.mrb[0].mxu0
  %4257 = vmatprep.mubr.f32.mxu0 0.0
  %4258 = vmatmul.mubr.f32.gmra.mrb[0].mxu0 %v4161
  %v4259 = vpop.f32.mrb[0].mxu0
  %v4260 = vadd.f32 %v628, %v4259
  %v4261 = vpop.f32.mrb[0].mxu0
  %4262 = vmatprep.mubr.f32.mxu0 0.0
  %4263 = vmatmul.mubr.f32.gmra.mrb[0].mxu0 %v4162
  %v4264 = vpop.f32.mrb[0].mxu0
  %v4265 = vadd.f32 %v628, %v4264
  %v4266 = vpop.f32.mrb[0].mxu0
  %4267 = vmatprep.mubr.f32.mxu0 0.0
  %4268 = vmatmul.mubr.f32.gmra.mrb[0].mxu0 %v4163
  %v4269 = vpop.f32.mrb[0].mxu0
  %v4270 = vadd.f32 %v628, %v4269
  %v4271 = vpop.f32.mrb[0].mxu0
  %4272 = vmatprep.mubr.f32.mxu0 0.0
  %4273 = vmatmul.mubr.f32.gmra.mrb[0].mxu0 %v4164
  %v4274 = vpop.f32.mrb[0].mxu0
  %v4275 = vadd.f32 %v628, %v4274
  %v4276 = vpop.f32.mrb[0].mxu0
  %4277 = vmatprep.mubr.f32.mxu0 0.0
  %4278 = vmatmul.mubr.f32.gmra.mrb[0].mxu0 %v4165
  %v4279 = vpop.f32.mrb[0].mxu0
  %v4280 = vadd.f32 %v628, %v4279
  %v4281 = vpop.f32.mrb[0].mxu0
  %4282 = vmatprep.mubr.f32.mxu0 0.0
  %4283 = vmatmul.mubr.f32.gmra.mrb[0].mxu0 %v4166
  %v4284 = vpop.f32.mrb[0].mxu0
  %v4285 = vadd.f32 %v628, %v4284
  %v4286 = vpop.f32.mrb[0].mxu0
  %4287 = vmatprep.mubr.f32.mxu0 0.0
  %4288 = vmatmul.mubr.f32.gmra.mrb[0].mxu0 %v4167
  %v4289 = vpop.f32.mrb[0].mxu0
  %v4290 = vadd.f32 %v628, %v4289
  %v4291 = vpop.f32.mrb[0].mxu0
  %4292 = vmatprep.mubr.f32.mxu0 0.0
  %4293 = vmatmul.mubr.f32.gmra.mrb[0].mxu0 %v4168
  %v4294 = vpop.f32.mrb[0].mxu0
  %v4295 = vadd.f32 %v628, %v4294
  %v4296 = vpop.f32.mrb[0].mxu0
  %4297 = vmatprep.mubr.f32.mxu0 0.0
  %4298 = vmatmul.mubr.f32.gmra.mrb[0].mxu0 %v4169
  %v4299 = vpop.f32.mrb[0].mxu0
  %v4300 = vadd.f32 %v628, %v4299
  %v4301 = vpop.f32.mrb[0].mxu0
  %4302 = vmatprep.mubr.f32.mxu0 0.0
  %4303 = vmatmul.mubr.f32.gmra.mrb[0].mxu0 %v4170
  %v4304 = vpop.f32.mrb[0].mxu0
  %v4305 = vadd.f32 %v628, %v4304
  %v4306 = vpop.f32.mrb[0].mxu0
  %4307 = vmatprep.mubr.f32.mxu0 0.0
  %4308 = vmatmul.mubr.f32.gmra.mrb[0].mxu0 %v4171
  %v4309 = vpop.f32.mrb[0].mxu0
  %v4310 = vadd.f32 %v628, %v4309
  %v4311 = vpop.f32.mrb[0].mxu0
  %4312 = vmatprep.mubr.f32.mxu0 0.0
  %4313 = vmatmul.mubr.f32.gmra.mrb[0].mxu0 %v4172
  %v4314 = vpop.f32.mrb[0].mxu0
  %v4315 = vadd.f32 %v628, %v4314
  %v4316 = vpop.f32.mrb[0].mxu0
  %4317 = vdwg.mxu0
  %v4318 = vmax.f32 %v4240, 0.0
  %v4319 = vmax.f32 %v4245, 0.0
  %v4320 = vmax.f32 %v4250, 0.0
  %v4321 = vmax.f32 %v4255, 0.0
  %v4322 = vmax.f32 %v4260, 0.0
  %v4323 = vmax.f32 %v4265, 0.0
  %v4324 = vmax.f32 %v4270, 0.0
  %v4325 = vmax.f32 %v4275, 0.0
  %v4326 = vmax.f32 %v4280, 0.0
  %v4327 = vmax.f32 %v4285, 0.0
  %v4328 = vmax.f32 %v4290, 0.0
  %v4329 = vmax.f32 %v4295, 0.0
  %v4330 = vmax.f32 %v4300, 0.0
  %v4331 = vmax.f32 %v4305, 0.0
  %v4332 = vmax.f32 %v4310, 0.0
  %v4333 = vmax.f32 %v4315, 0.0
  %4334 = vmatprep.subr.mxu0 0.0
  %4335 = vmatpush1.msra.mxu0 %v75
  %4336 = vmatprep.subr.mxu0 0.0
  %4337 = vmatpush1.msra.mxu0 %v76
  %4338 = vmatprep.subr.mxu0 0.0
  %4339 = vmatpush1.msra.mxu0 %v77
  %4340 = vmatprep.subr.mxu0 0.0
  %4341 = vmatpush1.msra.mxu0 %v78
  %4342 = vmatprep.subr.mxu0 0.0
  %4343 = vmatpush1.msra.mxu0 %v79
  %4344 = vmatprep.subr.mxu0 0.0
  %4345 = vmatpush1.msra.mxu0 %v80
  %4346 = vmatprep.subr.mxu0 0.0
  %4347 = vmatpush1.msra.mxu0 %v81
  %4348 = vmatprep.subr.mxu0 0.0
  %4349 = vmatpush1.msra.mxu0 %v82
  %4350 = vmatprep.subr.mxu0 0.0
  %4351 = vmatpush1.msra.mxu0 %v83
  %4352 = vmatprep.subr.mxu0 0.0
  %4353 = vmatpush1.msra.mxu0 %v84
  %4354 = vmatprep.subr.mxu0 0.0
  %4355 = vmatpush1.msra.mxu0 %v85
  %4356 = vmatprep.subr.mxu0 0.0
  %4357 = vmatpush1.msra.mxu0 %v86
  %4358 = vmatprep.subr.mxu0 0.0
  %4359 = vmatpush1.msra.mxu0 %v87
  %4360 = vmatprep.subr.mxu0 0.0
  %4361 = vmatpush1.msra.mxu0 %v88
  %4362 = vmatprep.subr.mxu0 0.0
  %4363 = vmatpush1.msra.mxu0 %v89
  %4364 = vmatprep.subr.mxu0 0.0
  %4365 = vmatpush1.msra.mxu0 %v90
  %4366 = vmatprep.subr.mxu0 0.0
  %4367 = vmatpush1.msra.mxu0 0.0
  %4368 = vmatprep.subr.mxu0 0.0
  %4369 = vmatpush1.msra.mxu0 0.0
  %4370 = vmatprep.subr.mxu0 0.0
  %4371 = vmatpush1.msra.mxu0 0.0
  %4372 = vmatprep.subr.mxu0 0.0
  %4373 = vmatpush1.msra.mxu0 0.0
  %4374 = vmatprep.subr.mxu0 0.0
  %4375 = vmatpush1.msra.mxu0 0.0
  %4376 = vmatprep.subr.mxu0 0.0
  %4377 = vmatpush1.msra.mxu0 0.0
  %4378 = vmatprep.subr.mxu0 0.0
  %4379 = vmatpush1.msra.mxu0 0.0
  %4380 = vmatprep.subr.mxu0 0.0
  %4381 = vmatpush1.msra.mxu0 0.0
  %4382 = vmatprep.subr.mxu0 0.0
  %4383 = vmatpush1.msra.mxu0 0.0
  %4384 = vmatprep.subr.mxu0 0.0
  %4385 = vmatpush1.msra.mxu0 0.0
  %4386 = vmatprep.subr.mxu0 0.0
  %4387 = vmatpush1.msra.mxu0 0.0
  %4388 = vmatprep.subr.mxu0 0.0
  %4389 = vmatpush1.msra.mxu0 0.0
  %4390 = vmatprep.subr.mxu0 0.0
  %4391 = vmatpush1.msra.mxu0 0.0
  %4392 = vmatprep.subr.mxu0 0.0
  %4393 = vmatpush1.msra.mxu0 0.0
  %4394 = vmatprep.subr.mxu0 0.0
  %4395 = vmatpush1.msra.mxu0 0.0
  %4396 = vmatprep.subr.mxu0 0.0
  %4397 = vmatpush1.msra.mxu0 0.0
  %4398 = vmatprep.mubr.f32.mxu0 0.0
  %4399 = vmatmul.mubr.f32.gmra.mrb[0].mxu0 %v4318
  %v4400 = vpop.f32.mrb[0].mxu0
  %v4401 = vadd.f32 %v793, %v4400
  %v4402 = vpop.f32.mrb[0].mxu0
  %4403 = vmatprep.mubr.f32.mxu0 0.0
  %4404 = vmatmul.mubr.f32.gmra.mrb[0].mxu0 %v4319
  %v4405 = vpop.f32.mrb[0].mxu0
  %v4406 = vadd.f32 %v793, %v4405
  %v4407 = vpop.f32.mrb[0].mxu0
  %4408 = vmatprep.mubr.f32.mxu0 0.0
  %4409 = vmatmul.mubr.f32.gmra.mrb[0].mxu0 %v4320
  %v4410 = vpop.f32.mrb[0].mxu0
  %v4411 = vadd.f32 %v793, %v4410
  %v4412 = vpop.f32.mrb[0].mxu0
  %4413 = vmatprep.mubr.f32.mxu0 0.0
  %4414 = vmatmul.mubr.f32.gmra.mrb[0].mxu0 %v4321
  %v4415 = vpop.f32.mrb[0].mxu0
  %v4416 = vadd.f32 %v793, %v4415
  %v4417 = vpop.f32.mrb[0].mxu0
  %4418 = vmatprep.mubr.f32.mxu0 0.0
  %4419 = vmatmul.mubr.f32.gmra.mrb[0].mxu0 %v4322
  %v4420 = vpop.f32.mrb[0].mxu0
  %v4421 = vadd.f32 %v793, %v4420
  %v4422 = vpop.f32.mrb[0].mxu0
  %4423 = vmatprep.mubr.f32.mxu0 0.0
  %4424 = vmatmul.mubr.f32.gmra.mrb[0].mxu0 %v4323
  %v4425 = vpop.f32.mrb[0].mxu0
  %v4426 = vadd.f32 %v793, %v4425
  %v4427 = vpop.f32.mrb[0].mxu0
  %4428 = vmatprep.mubr.f32.mxu0 0.0
  %4429 = vmatmul.mubr.f32.gmra.mrb[0].mxu0 %v4324
  %v4430 = vpop.f32.mrb[0].mxu0
  %v4431 = vadd.f32 %v793, %v4430
  %v4432 = vpop.f32.mrb[0].mxu0
  %4433 = vmatprep.mubr.f32.mxu0 0.0
  %4434 = vmatmul.mubr.f32.gmra.mrb[0].mxu0 %v4325
  %v4435 = vpop.f32.mrb[0].mxu0
  %v4436 = vadd.f32 %v793, %v4435
  %v4437 = vpop.f32.mrb[0].mxu0
  %4438 = vmatprep.mubr.f32.mxu0 0.0
  %4439 = vmatmul.mubr.f32.gmra.mrb[0].mxu0 %v4326
  %v4440 = vpop.f32.mrb[0].mxu0
  %v4441 = vadd.f32 %v793, %v4440
  %v4442 = vpop.f32.mrb[0].mxu0
  %4443 = vmatprep.mubr.f32.mxu0 0.0
  %4444 = vmatmul.mubr.f32.gmra.mrb[0].mxu0 %v4327
  %v4445 = vpop.f32.mrb[0].mxu0
  %v4446 = vadd.f32 %v793, %v4445
  %v4447 = vpop.f32.mrb[0].mxu0
  %4448 = vmatprep.mubr.f32.mxu0 0.0
  %4449 = vmatmul.mubr.f32.gmra.mrb[0].mxu0 %v4328
  %v4450 = vpop.f32.mrb[0].mxu0
  %v4451 = vadd.f32 %v793, %v4450
  %v4452 = vpop.f32.mrb[0].mxu0
  %4453 = vmatprep.mubr.f32.mxu0 0.0
  %4454 = vmatmul.mubr.f32.gmra.mrb[0].mxu0 %v4329
  %v4455 = vpop.f32.mrb[0].mxu0
  %v4456 = vadd.f32 %v793, %v4455
  %v4457 = vpop.f32.mrb[0].mxu0
  %4458 = vmatprep.mubr.f32.mxu0 0.0
  %4459 = vmatmul.mubr.f32.gmra.mrb[0].mxu0 %v4330
  %v4460 = vpop.f32.mrb[0].mxu0
  %v4461 = vadd.f32 %v793, %v4460
  %v4462 = vpop.f32.mrb[0].mxu0
  %4463 = vmatprep.mubr.f32.mxu0 0.0
  %4464 = vmatmul.mubr.f32.gmra.mrb[0].mxu0 %v4331
  %v4465 = vpop.f32.mrb[0].mxu0
  %v4466 = vadd.f32 %v793, %v4465
  %v4467 = vpop.f32.mrb[0].mxu0
  %4468 = vmatprep.mubr.f32.mxu0 0.0
  %4469 = vmatmul.mubr.f32.gmra.mrb[0].mxu0 %v4332
  %v4470 = vpop.f32.mrb[0].mxu0
  %v4471 = vadd.f32 %v793, %v4470
  %v4472 = vpop.f32.mrb[0].mxu0
  %4473 = vmatprep.mubr.f32.mxu0 0.0
  %4474 = vmatmul.mubr.f32.gmra.mrb[0].mxu0 %v4333
  %v4475 = vpop.f32.mrb[0].mxu0
  %v4476 = vadd.f32 %v793, %v4475
  %v4477 = vpop.f32.mrb[0].mxu0
  %4478 = vdwg.mxu0
  %v4479 = vmax.f32 %v4401, 0.0
  %v4480 = vmax.f32 %v4406, 0.0
  %v4481 = vmax.f32 %v4411, 0.0
  %v4482 = vmax.f32 %v4416, 0.0
  %v4483 = vmax.f32 %v4421, 0.0
  %v4484 = vmax.f32 %v4426, 0.0
  %v4485 = vmax.f32 %v4431, 0.0
  %v4486 = vmax.f32 %v4436, 0.0
  %v4487 = vmax.f32 %v4441, 0.0
  %v4488 = vmax.f32 %v4446, 0.0
  %v4489 = vmax.f32 %v4451, 0.0
  %v4490 = vmax.f32 %v4456, 0.0
  %v4491 = vmax.f32 %v4461, 0.0
  %v4492 = vmax.f32 %v4466, 0.0
  %v4493 = vmax.f32 %v4471, 0.0
  %v4494 = vmax.f32 %v4476, 0.0
  %v4495 = vmax.f32 %v4479, %v4481
  %v4496 = vmax.f32 %v4480, %v4482
  %v4497 = vmax.f32 %v4495, %v4483
  %v4498 = vmax.f32 %v4496, %v4484
  %v4499 = vmax.f32 %v4497, %v4485
  %v4500 = vmax.f32 %v4498, %v4486
  %v4501 = vmax.f32 %v4499, %v4500
  %v4502 = vrot.slane %v4501, 4
  %v4503 = vmax.f32 %v4501, %v4502
  %v4504 = vrot.slane %v4503, 2
  %v4505 = vmax.f32 %v4503, %v4504
  %v4506 = vrot.slane %v4505, 1
  %v4507 = vmax.f32 %v4505, %v4506
  %v4508 = vmax.f32 %v4487, %v4489
  %v4509 = vmax.f32 %v4488, %v4490
  %v4510 = vmax.f32 %v4508, %v4491
  %v4511 = vmax.f32 %v4509, %v4492
  %v4512 = vmax.f32 %v4510, %v4493
  %v4513 = vmax.f32 %v4511, %v4494
  %v4514 = vmax.f32 %v4512, %v4513
  %v4515 = vrot.slane %v4514, 4
  %v4516 = vmax.f32 %v4514, %v4515
  %v4517 = vrot.slane %v4516, 2
  %v4518 = vmax.f32 %v4516, %v4517
  %v4519 = vrot.slane %v4518, 1
  %v4520 = vmax.f32 %v4518, %v4519
  %v4521 = vld [vmem:[%s5] sm:$0x7f]
  %v4522 = vld [vmem:[%s5 + $0x8] sm:$0x7f]
  %vm4523 = vcmask 1040384
  %v4524 = vsel %vm4523, %v967, %v1557
  %v4525 = vsel %vm4523, %v980, %v1570
  %vm4526 = vcmask 1041408
  %v4527 = vsel %vm4526, %v4524, %v2147
  %v4528 = vsel %vm4526, %v4525, %v2160
  %vm4529 = vcmask 1042432
  %v4530 = vsel %vm4529, %v4527, %v2737
  %v4531 = vsel %vm4529, %v4528, %v2750
  %vm4532 = vcmask 1043456
  %v4533 = vsel %vm4532, %v4530, %v3327
  %v4534 = vsel %vm4532, %v4531, %v3340
  %vm4535 = vcmask 1044480
  %v4536 = vsel %vm4535, %v4533, %v3917
  %v4537 = vsel %vm4535, %v4534, %v3930
  %vm4538 = vcmask 1045504
  %v4539 = vsel %vm4538, %v4536, %v4507
  %v4540 = vsel %vm4538, %v4537, %v4520
  %v4541 = vmax.f32 %v4521, %v4539
  %v4542 = vmax.f32 %v4522, %v4540
  %4543 = vst [vmem:[%s5] sm:$0x7f] %v4541
  %4544 = vst [vmem:[%s5 + $0x8] sm:$0x7f] %v4542
  // Predicated region
  $region26: #{pointnetlk_forward.1} parent=0 // pred_check
    _
  $region27: #{pointnetlk_forward.1} parent=0 // pred_check_branch
    %4546 = sbr.rel (0) target = $region29
  $region28: #{pointnetlk_forward.1} parent=0 // pred_region
    _
  $region29: #{pointnetlk_forward.1} parent=0 // pred_fallthru
    _
  // Predicated region
  $region30: #{pointnetlk_forward.1} parent=0 // pred_check
    _
  $region31: #{pointnetlk_forward.1} parent=0 // pred_check_branch
    %4548 = sbr.rel (0) target = $region33
  $region32: #{pointnetlk_forward.1} parent=0 // pred_region
    _
  $region33: #{pointnetlk_forward.1} parent=0 // pred_fallthru
    _

</llo_original>
